<compile_context>
chip_gen: v7x
topology: tpu7x:2x2x1
jax: 0.10.0
libtpu: 0.0.40
codegen_flags: <defaults>
</compile_context>

<pallas_src>
import math
import jax
import jax.numpy as jnp
from jax.experimental import pallas as pl
from jax.experimental.pallas import tpu as pltpu


# ----------------------------------------------------------------------------
# Kernel (feature-major / transposed activation layout)
# ----------------------------------------------------------------------------
def modulated_mlp_kernel(
    x_ref,       # (input_size, tile_n)            f32  lane-dense batch stream
    w0_ref,      # (hidden, input_size)            f32  (input normalization folded in)
    b0_ref,      # (hidden, 1)                     f32
    wm1_ref,     # (nfeat_mod, hidden)             cdt
    bm1_ref,     # (nfeat_mod, 1)                  f32
    wm2_ref,     # (num_hidden*hidden, nfeat_mod)  cdt  all modulation blocks fused
    bm2_ref,     # (num_hidden*hidden, 1)          f32
    wh_ref,      # (num_hidden, hidden, hidden)    cdt  PyTorch (out, in) layout
    bh_ref,      # (num_hidden, hidden, 1)         f32
    wout_ref,    # (output_size, hidden)           cdt
    bout_ref,    # (output_size, 1)                f32
    o_ref,       # (output_size, tile_n)           f32  lane-dense (transposed) output
):
    num_hidden = wh_ref.shape[0]
    hidden = wh_ref.shape[1]
    cdt = wm1_ref.dtype   # matmul-input dtype for everything past layer 0

    # Layer 0 (+ pre-folded normalization); f32 matmul, K = input_size is tiny.
    h = jnp.tanh(
        jnp.dot(w0_ref[...], x_ref[...], preferred_element_type=jnp.float32)
        + b0_ref[...]
    )

    # Modulation trunk (independent of the evolving h): Linear -> ReLU ->
    # one fused Linear for all num_hidden blocks -> sigmoid, all lane-dense.
    m = jnp.maximum(
        jnp.dot(wm1_ref[...], h.astype(cdt), preferred_element_type=jnp.float32)
        + bm1_ref[...],
        0.0,
    )
    mod_all = jax.nn.sigmoid(
        jnp.dot(wm2_ref[...], m.astype(cdt), preferred_element_type=jnp.float32)
        + bm2_ref[...]
    )

    # Modulated residual hidden layers (static unroll; sublane slices at
    # multiples of 8 are free).
    for i in range(num_hidden):
        mod_i = mod_all[i * hidden:(i + 1) * hidden, :]
        h = h * mod_i
        h = h + (
            jnp.dot(wh_ref[i], h.astype(cdt), preferred_element_type=jnp.float32)
            + bh_ref[i]
        )
        h = jnp.tanh(h)

    # Output layer -- already lane-dense in the transposed layout.
    o_ref[...] = (
        jnp.dot(wout_ref[...], h.astype(cdt), preferred_element_type=jnp.float32)
        + bout_ref[...]
    ).astype(o_ref.dtype)


# ----------------------------------------------------------------------------
# Wrapper
# ----------------------------------------------------------------------------
def modulated_mlp_forward(x, kp, *, tile_n=2048):
    """x: (N, input_size) float32; kp: dict from prepare_kernel_params."""
    N, input_size = x.shape
    output_size = kp["wout"].shape[0]

    n_tiles = pl.cdiv(N, tile_n)
    n_pad = n_tiles * tile_n

    # Transpose once on the host so the streamed block is (input_size, tile_n):
    # contiguous and lane-dense (the (tile_n, 2) layout would be 64x lane-padded).
    x_t = x.T
    if n_pad != N:
        x_t = jnp.pad(x_t, ((0, 0), (0, n_pad - N)))

    def const_spec(shape):
        z = (0,) * len(shape)
        return pl.BlockSpec(shape, lambda i, _z=z: _z)

    in_specs = [
        pl.BlockSpec((input_size, tile_n), lambda i: (0, i)),   # x (batch-tiled, lane-dense)
        const_spec(kp["w0"].shape), const_spec(kp["b0"].shape),
        const_spec(kp["wm1"].shape), const_spec(kp["bm1"].shape),
        const_spec(kp["wm2"].shape), const_spec(kp["bm2"].shape),
        const_spec(kp["wh"].shape), const_spec(kp["bh"].shape),
        const_spec(kp["wout"].shape), const_spec(kp["bout"].shape),
    ]
    out_spec = pl.BlockSpec((output_size, tile_n), lambda i: (0, i))

    out_t = pl.pallas_call(
        modulated_mlp_kernel,
        out_shape=jax.ShapeDtypeStruct((output_size, n_pad), jnp.float32),
        grid_spec=pltpu.PrefetchScalarGridSpec(
            num_scalar_prefetch=0,
            grid=(n_tiles,),
            in_specs=in_specs,
            out_specs=out_spec,
        ),
        compiler_params=pltpu.CompilerParams(
            dimension_semantics=("parallel",),   # batch axis shards across TCs (v7x)
        ),
    )(
        x_t,
        kp["w0"], kp["b0"],
        kp["wm1"], kp["bm1"],
        kp["wm2"], kp["bm2"],
        kp["wh"], kp["bh"],
        kp["wout"], kp["bout"],
    )

    return out_t[:, :N].T


# ----------------------------------------------------------------------------
# Parameter construction / preparation
# ----------------------------------------------------------------------------
def xavier_normal(key, out_features, in_features):
    # torch.nn.init.xavier_normal_ : std = sqrt(2 / (fan_in + fan_out)).
    # Stored in PyTorch-native (out, in) layout -- exactly what W @ h needs.
    std = math.sqrt(2.0 / (in_features + out_features))
    return jax.random.normal(key, (out_features, in_features), jnp.float32) * std


def make_params(key, input_size, output_size, hidden, num_hidden, nfeat_mod, lb, ub):
    keys = jax.random.split(key, 4 + num_hidden)
    return {
        "lb": jnp.asarray(lb, jnp.float32).reshape(1, input_size),
        "ub": jnp.asarray(ub, jnp.float32).reshape(1, input_size),
        "w0": xavier_normal(keys[0], hidden, input_size),
        "b0": jnp.zeros((hidden,), jnp.float32),
        "wm1": xavier_normal(keys[1], nfeat_mod, hidden),
        "bm1": jnp.zeros((nfeat_mod,), jnp.float32),
        "wm2": xavier_normal(keys[2], hidden * num_hidden, nfeat_mod),
        "bm2": jnp.zeros((hidden * num_hidden,), jnp.float32),
        "wh": jnp.stack([xavier_normal(keys[3 + i], hidden, hidden)
                         for i in range(num_hidden)]),
        "bh": jnp.zeros((num_hidden, hidden), jnp.float32),
        "wout": xavier_normal(keys[3 + num_hidden], output_size, hidden),
        "bout": jnp.zeros((output_size,), jnp.float32),
    }


def prepare_kernel_params(p, *, compute_dtype=jnp.float32):
    """One-time host-side prep: fold input normalization into layer 0, reshape
    biases to (features, 1) columns for the feature-major layout, and optionally
    cast matmul weights (except layer 0) to bf16.  Biases stay f32 and all
    accumulation inside the kernel is f32."""
    input_size = p["w0"].shape[1]
    num_hidden = p["wh"].shape[0]

    lb = p["lb"].reshape(input_size)
    ub = p["ub"].reshape(input_size)
    s = 2.0 / (ub - lb)                       # x_norm = s * x + t
    t = -2.0 * lb / (ub - lb) - 1.0
    w0f = p["w0"] * s[None, :]                # W0 @ diag(s)
    b0f = p["w0"] @ t + p["b0"]               # W0 @ t + b0

    cdt = compute_dtype
    return {
        # Layer 0 stays f32 on every path: K=2 is negligible and x is un-normalized.
        "w0": w0f.astype(jnp.float32),
        "b0": b0f.reshape(-1, 1).astype(jnp.float32),
        "wm1": p["wm1"].astype(cdt),
        "bm1": p["bm1"].reshape(-1, 1).astype(jnp.float32),
        "wm2": p["wm2"].astype(cdt),          # fused (num_hidden*hidden, nfeat_mod)
        "bm2": p["bm2"].reshape(-1, 1).astype(jnp.float32),
        "wh": p["wh"].astype(cdt),
        "bh": p["bh"].reshape(num_hidden, -1, 1).astype(jnp.float32),
        "wout": p["wout"].astype(cdt),
        "bout": p["bout"].reshape(-1, 1).astype(jnp.float32),
    }


def reference_forward(x, p):
    """Pure-JAX reference matching the PyTorch forward (f32, batch-major)."""
    hidden = p["wh"].shape[1]
    num_hidden = p["wh"].shape[0]
    x = 2.0 * (x - p["lb"]) / (p["ub"] - p["lb"]) - 1.0
    h = jnp.tanh(x @ p["w0"].T + p["b0"])
    m = jnp.maximum(h @ p["wm1"].T + p["bm1"], 0.0)
    mod = jax.nn.sigmoid(m @ p["wm2"].T + p["bm2"])
    mod = mod.reshape(-1, num_hidden, hidden)
    for i in range(num_hidden):
        h = h * mod[:, i]
        h = h + h @ p["wh"][i].T + p["bh"][i]
        h = jnp.tanh(h)
    return h @ p["wout"].T + p["bout"]


# ----------------------------------------------------------------------------
# Demo / self-check
# ----------------------------------------------------------------------------
if __name__ == "__main__":
    # Module-consistent shapes; N=8192 with tile_n=2048 gives a 4-step grid
    # (even, >=4) so the "parallel" batch axis splits cleanly across v7x TCs.
    N = 8192
    input_size = 2
    output_size = 1
    hidden = 32
    num_hidden = 3
    nfeat_mod = 128
    lb = [-1.0, 0.0]
    ub = [1.0, 1.0]

    key = jax.random.PRNGKey(0)
    k_x, k_p = jax.random.split(key)
    x = jax.random.uniform(
        k_x, (N, input_size), jnp.float32,
        minval=jnp.asarray(lb), maxval=jnp.asarray(ub),
    )
    params = make_params(k_p, input_size, output_size, hidden, num_hidden,
                         nfeat_mod, lb, ub)
    ref = reference_forward(x, params)

    # --- f32 matmul inputs: matches the PyTorch/f32 reference tightly. ---
    kp_f32 = prepare_kernel_params(params, compute_dtype=jnp.float32)
    out_f32 = jax.block_until_ready(modulated_mlp_forward(x, kp_f32, tile_n=2048))
    assert out_f32.shape == (N, output_size)
    assert jnp.allclose(out_f32, ref, atol=1e-4, rtol=1e-4), "f32 mismatch vs reference"

    # --- bf16 matmul inputs (f32 accumulate, f32 elementwise): MXU-friendly path. ---
    kp_bf16 = prepare_kernel_params(params, compute_dtype=jnp.bfloat16)
    out_bf16 = jax.block_until_ready(modulated_mlp_forward(x, kp_bf16, tile_n=2048))
    assert out_bf16.shape == (N, output_size)
    assert bool(jnp.all(jnp.isfinite(out_bf16)))
    assert float(jnp.max(jnp.abs(out_bf16 - ref))) < 0.1, "bf16 path diverged from reference"

    print("KERNEL_OK")
</pallas_src>

<mosaic_0001>
module attributes {stable_mosaic.version = 11 : i64} {
  func.func @modulated_mlp_kernel(%arg0: i32, %arg1: memref<2x2048xf32, #tpu.memory_space<vmem>>, %arg2: memref<32x2xf32, #tpu.memory_space<vmem>>, %arg3: memref<32x1xf32, #tpu.memory_space<vmem>>, %arg4: memref<128x32xf32, #tpu.memory_space<vmem>>, %arg5: memref<128x1xf32, #tpu.memory_space<vmem>>, %arg6: memref<96x128xf32, #tpu.memory_space<vmem>>, %arg7: memref<96x1xf32, #tpu.memory_space<vmem>>, %arg8: memref<3x32x32xf32, #tpu.memory_space<vmem>>, %arg9: memref<3x32x1xf32, #tpu.memory_space<vmem>>, %arg10: memref<1x32xf32, #tpu.memory_space<vmem>>, %arg11: memref<1x1xf32, #tpu.memory_space<vmem>>, %arg12: memref<1x2048xf32, #tpu.memory_space<vmem>>) attributes {dimension_semantics = [#tpu.dimension_semantics<parallel>], iteration_bounds = array<i64: 4>, scalar_prefetch = 0 : i64, scratch_operands = 0 : i64, tpu.core_type = #tpu.core_type<tc>, window_params = [{transform_indices = @transform_0, window_bounds = array<i64: 2, 2048>}, {pipeline_mode = #tpu.pipeline_mode<synchronous>, transform_indices = @transform_1, window_bounds = array<i64: 32, 2>}, {pipeline_mode = #tpu.pipeline_mode<synchronous>, transform_indices = @transform_2, window_bounds = array<i64: 32, 1>}, {pipeline_mode = #tpu.pipeline_mode<synchronous>, transform_indices = @transform_3, window_bounds = array<i64: 128, 32>}, {pipeline_mode = #tpu.pipeline_mode<synchronous>, transform_indices = @transform_4, window_bounds = array<i64: 128, 1>}, {pipeline_mode = #tpu.pipeline_mode<synchronous>, transform_indices = @transform_5, window_bounds = array<i64: 96, 128>}, {pipeline_mode = #tpu.pipeline_mode<synchronous>, transform_indices = @transform_6, window_bounds = array<i64: 96, 1>}, {pipeline_mode = #tpu.pipeline_mode<synchronous>, transform_indices = @transform_7, window_bounds = array<i64: 3, 32, 32>}, {pipeline_mode = #tpu.pipeline_mode<synchronous>, transform_indices = @transform_8, window_bounds = array<i64: 3, 32, 1>}, {pipeline_mode = #tpu.pipeline_mode<synchronous>, transform_indices = @transform_9, window_bounds = array<i64: 1, 32>}, {pipeline_mode = #tpu.pipeline_mode<synchronous>, transform_indices = @transform_10, window_bounds = array<i64: 1, 1>}, {transform_indices = @transform_11, window_bounds = array<i64: 1, 2048>}]} {
    %c0 = arith.constant 0 : index
    %c0_0 = arith.constant 0 : index
    %0 = vector.load %arg2[%c0, %c0_0] : memref<32x2xf32, #tpu.memory_space<vmem>>, vector<32x2xf32>
    %c0_1 = arith.constant 0 : index
    %c0_2 = arith.constant 0 : index
    %1 = vector.load %arg1[%c0_1, %c0_2] : memref<2x2048xf32, #tpu.memory_space<vmem>>, vector<2x2048xf32>
    %cst = arith.constant dense<0.000000e+00> : vector<32x2048xf32>
    %2 = tpu.matmul %0, %1, %cst {dimension_numbers = #tpu.dot_dimension_numbers<[1], [0], [0], [1], [0, 0, 1, 1], [], []>} : vector<32x2xf32>, vector<2x2048xf32>, vector<32x2048xf32> -> vector<32x2048xf32>
    %c0_3 = arith.constant 0 : index
    %c0_4 = arith.constant 0 : index
    %3 = vector.load %arg3[%c0_3, %c0_4] : memref<32x1xf32, #tpu.memory_space<vmem>>, vector<32x1xf32>
    %4 = vector.broadcast %3 : vector<32x1xf32> to vector<32x2048xf32>
    %5 = arith.addf %2, %4 : vector<32x2048xf32>
    %6 = math.tanh %5 : vector<32x2048xf32>
    %c0_5 = arith.constant 0 : index
    %c0_6 = arith.constant 0 : index
    %7 = vector.load %arg4[%c0_5, %c0_6] : memref<128x32xf32, #tpu.memory_space<vmem>>, vector<128x32xf32>
    %cst_7 = arith.constant dense<0.000000e+00> : vector<128x2048xf32>
    %8 = tpu.matmul %7, %6, %cst_7 {dimension_numbers = #tpu.dot_dimension_numbers<[1], [0], [0], [1], [0, 0, 1, 1], [], []>} : vector<128x32xf32>, vector<32x2048xf32>, vector<128x2048xf32> -> vector<128x2048xf32>
    %c0_8 = arith.constant 0 : index
    %c0_9 = arith.constant 0 : index
    %9 = vector.load %arg5[%c0_8, %c0_9] : memref<128x1xf32, #tpu.memory_space<vmem>>, vector<128x1xf32>
    %10 = vector.broadcast %9 : vector<128x1xf32> to vector<128x2048xf32>
    %11 = arith.addf %8, %10 : vector<128x2048xf32>
    %cst_10 = arith.constant 0.000000e+00 : f32
    %12 = vector.broadcast %cst_10 : f32 to vector<128x2048xf32>
    %13 = arith.maximumf %11, %12 : vector<128x2048xf32>
    %c0_11 = arith.constant 0 : index
    %c0_12 = arith.constant 0 : index
    %14 = vector.load %arg6[%c0_11, %c0_12] : memref<96x128xf32, #tpu.memory_space<vmem>>, vector<96x128xf32>
    %cst_13 = arith.constant dense<0.000000e+00> : vector<96x2048xf32>
    %15 = tpu.matmul %14, %13, %cst_13 {dimension_numbers = #tpu.dot_dimension_numbers<[1], [0], [0], [1], [0, 0, 1, 1], [], []>} : vector<96x128xf32>, vector<128x2048xf32>, vector<96x2048xf32> -> vector<96x2048xf32>
    %c0_14 = arith.constant 0 : index
    %c0_15 = arith.constant 0 : index
    %16 = vector.load %arg7[%c0_14, %c0_15] : memref<96x1xf32, #tpu.memory_space<vmem>>, vector<96x1xf32>
    %17 = vector.broadcast %16 : vector<96x1xf32> to vector<96x2048xf32>
    %18 = arith.addf %15, %17 : vector<96x2048xf32>
    %19 = arith.negf %18 : vector<96x2048xf32>
    %20 = math.exp %19 : vector<96x2048xf32>
    %cst_16 = arith.constant 1.000000e+00 : f32
    %21 = vector.broadcast %cst_16 : f32 to vector<96x2048xf32>
    %22 = arith.addf %21, %20 : vector<96x2048xf32>
    %23 = arith.divf %21, %22 : vector<96x2048xf32>
    %24 = vector.extract_strided_slice %23 {offsets = [0, 0], sizes = [32, 2048], strides = [1, 1]} : vector<96x2048xf32> to vector<32x2048xf32>
    %25 = arith.mulf %6, %24 : vector<32x2048xf32>
    %c0_17 = arith.constant 0 : index
    %c0_18 = arith.constant 0 : index
    %c0_19 = arith.constant 0 : index
    %26 = vector.load %arg8[%c0_17, %c0_18, %c0_19] : memref<3x32x32xf32, #tpu.memory_space<vmem>>, vector<1x32x32xf32>
    %27 = vector.shape_cast %26 : vector<1x32x32xf32> to vector<32x32xf32>
    %cst_20 = arith.constant dense<0.000000e+00> : vector<32x2048xf32>
    %28 = tpu.matmul %27, %25, %cst_20 {dimension_numbers = #tpu.dot_dimension_numbers<[1], [0], [0], [1], [0, 0, 1, 1], [], []>} : vector<32x32xf32>, vector<32x2048xf32>, vector<32x2048xf32> -> vector<32x2048xf32>
    %c0_21 = arith.constant 0 : index
    %c0_22 = arith.constant 0 : index
    %c0_23 = arith.constant 0 : index
    %29 = vector.load %arg9[%c0_21, %c0_22, %c0_23] : memref<3x32x1xf32, #tpu.memory_space<vmem>>, vector<1x32x1xf32>
    %30 = vector.shape_cast %29 : vector<1x32x1xf32> to vector<32x1xf32>
    %31 = vector.broadcast %30 : vector<32x1xf32> to vector<32x2048xf32>
    %32 = arith.addf %28, %31 : vector<32x2048xf32>
    %33 = arith.addf %25, %32 : vector<32x2048xf32>
    %34 = math.tanh %33 : vector<32x2048xf32>
    %35 = vector.extract_strided_slice %23 {offsets = [32, 0], sizes = [32, 2048], strides = [1, 1]} : vector<96x2048xf32> to vector<32x2048xf32>
    %36 = arith.mulf %34, %35 : vector<32x2048xf32>
    %c1 = arith.constant 1 : index
    %c0_24 = arith.constant 0 : index
    %c0_25 = arith.constant 0 : index
    %37 = vector.load %arg8[%c1, %c0_24, %c0_25] : memref<3x32x32xf32, #tpu.memory_space<vmem>>, vector<1x32x32xf32>
    %38 = vector.shape_cast %37 : vector<1x32x32xf32> to vector<32x32xf32>
    %cst_26 = arith.constant dense<0.000000e+00> : vector<32x2048xf32>
    %39 = tpu.matmul %38, %36, %cst_26 {dimension_numbers = #tpu.dot_dimension_numbers<[1], [0], [0], [1], [0, 0, 1, 1], [], []>} : vector<32x32xf32>, vector<32x2048xf32>, vector<32x2048xf32> -> vector<32x2048xf32>
    %c1_27 = arith.constant 1 : index
    %c0_28 = arith.constant 0 : index
    %c0_29 = arith.constant 0 : index
    %40 = vector.load %arg9[%c1_27, %c0_28, %c0_29] : memref<3x32x1xf32, #tpu.memory_space<vmem>>, vector<1x32x1xf32>
    %41 = vector.shape_cast %40 : vector<1x32x1xf32> to vector<32x1xf32>
    %42 = vector.broadcast %41 : vector<32x1xf32> to vector<32x2048xf32>
    %43 = arith.addf %39, %42 : vector<32x2048xf32>
    %44 = arith.addf %36, %43 : vector<32x2048xf32>
    %45 = math.tanh %44 : vector<32x2048xf32>
    %46 = vector.extract_strided_slice %23 {offsets = [64, 0], sizes = [32, 2048], strides = [1, 1]} : vector<96x2048xf32> to vector<32x2048xf32>
    %47 = arith.mulf %45, %46 : vector<32x2048xf32>
    %c2 = arith.constant 2 : index
    %c0_30 = arith.constant 0 : index
    %c0_31 = arith.constant 0 : index
    %48 = vector.load %arg8[%c2, %c0_30, %c0_31] : memref<3x32x32xf32, #tpu.memory_space<vmem>>, vector<1x32x32xf32>
    %49 = vector.shape_cast %48 : vector<1x32x32xf32> to vector<32x32xf32>
    %cst_32 = arith.constant dense<0.000000e+00> : vector<32x2048xf32>
    %50 = tpu.matmul %49, %47, %cst_32 {dimension_numbers = #tpu.dot_dimension_numbers<[1], [0], [0], [1], [0, 0, 1, 1], [], []>} : vector<32x32xf32>, vector<32x2048xf32>, vector<32x2048xf32> -> vector<32x2048xf32>
    %c2_33 = arith.constant 2 : index
    %c0_34 = arith.constant 0 : index
    %c0_35 = arith.constant 0 : index
    %51 = vector.load %arg9[%c2_33, %c0_34, %c0_35] : memref<3x32x1xf32, #tpu.memory_space<vmem>>, vector<1x32x1xf32>
    %52 = vector.shape_cast %51 : vector<1x32x1xf32> to vector<32x1xf32>
    %53 = vector.broadcast %52 : vector<32x1xf32> to vector<32x2048xf32>
    %54 = arith.addf %50, %53 : vector<32x2048xf32>
    %55 = arith.addf %47, %54 : vector<32x2048xf32>
    %56 = math.tanh %55 : vector<32x2048xf32>
    %c0_36 = arith.constant 0 : index
    %c0_37 = arith.constant 0 : index
    %57 = vector.load %arg10[%c0_36, %c0_37] : memref<1x32xf32, #tpu.memory_space<vmem>>, vector<1x32xf32>
    %cst_38 = arith.constant dense<0.000000e+00> : vector<1x2048xf32>
    %58 = tpu.matmul %57, %56, %cst_38 {dimension_numbers = #tpu.dot_dimension_numbers<[1], [0], [0], [1], [0, 0, 1, 1], [], []>} : vector<1x32xf32>, vector<32x2048xf32>, vector<1x2048xf32> -> vector<1x2048xf32>
    %c0_39 = arith.constant 0 : index
    %c0_40 = arith.constant 0 : index
    %59 = vector.load %arg11[%c0_39, %c0_40] : memref<1x1xf32, #tpu.memory_space<vmem>>, vector<1x1xf32>
    %60 = vector.broadcast %59 : vector<1x1xf32> to vector<1x2048xf32>
    %61 = arith.addf %58, %60 : vector<1x2048xf32>
    %c0_41 = arith.constant 0 : index
    %c0_42 = arith.constant 0 : index
    %62 = vector.load %arg12[%c0_41, %c0_42] : memref<1x2048xf32, #tpu.memory_space<vmem>>, vector<1x2048xf32>
    tpu.vector_store %arg12[%c0_41, %c0_42], %61 {strides = array<i32>} : memref<1x2048xf32, #tpu.memory_space<vmem>>, vector<1x2048xf32>,
    return
  }
  func.func @transform_0(%arg0: i32) -> (i32, i32) {
    %c0_i32 = arith.constant 0 : i32
    %c0_i32_0 = arith.constant 0 : i32
    return %c0_i32, %arg0 : i32, i32
  }
  func.func @transform_1(%arg0: i32) -> (i32, i32) {
    %c0_i32 = arith.constant 0 : i32
    %c0_i32_0 = arith.constant 0 : i32
    %c0_i32_1 = arith.constant 0 : i32
    return %c0_i32, %c0_i32_0 : i32, i32
  }
  func.func @transform_2(%arg0: i32) -> (i32, i32) {
    %c0_i32 = arith.constant 0 : i32
    %c0_i32_0 = arith.constant 0 : i32
    %c0_i32_1 = arith.constant 0 : i32
    return %c0_i32, %c0_i32_0 : i32, i32
  }
  func.func @transform_3(%arg0: i32) -> (i32, i32) {
    %c0_i32 = arith.constant 0 : i32
    %c0_i32_0 = arith.constant 0 : i32
    %c0_i32_1 = arith.constant 0 : i32
    return %c0_i32, %c0_i32_0 : i32, i32
  }
  func.func @transform_4(%arg0: i32) -> (i32, i32) {
    %c0_i32 = arith.constant 0 : i32
    %c0_i32_0 = arith.constant 0 : i32
    %c0_i32_1 = arith.constant 0 : i32
    return %c0_i32, %c0_i32_0 : i32, i32
  }
  func.func @transform_5(%arg0: i32) -> (i32, i32) {
    %c0_i32 = arith.constant 0 : i32
    %c0_i32_0 = arith.constant 0 : i32
    %c0_i32_1 = arith.constant 0 : i32
    return %c0_i32, %c0_i32_0 : i32, i32
  }
  func.func @transform_6(%arg0: i32) -> (i32, i32) {
    %c0_i32 = arith.constant 0 : i32
    %c0_i32_0 = arith.constant 0 : i32
    %c0_i32_1 = arith.constant 0 : i32
    return %c0_i32, %c0_i32_0 : i32, i32
  }
  func.func @transform_7(%arg0: i32) -> (i32, i32, i32) {
    %c0_i32 = arith.constant 0 : i32
    %c0_i32_0 = arith.constant 0 : i32
    %c0_i32_1 = arith.constant 0 : i32
    %c0_i32_2 = arith.constant 0 : i32
    return %c0_i32, %c0_i32_0, %c0_i32_1 : i32, i32, i32
  }
  func.func @transform_8(%arg0: i32) -> (i32, i32, i32) {
    %c0_i32 = arith.constant 0 : i32
    %c0_i32_0 = arith.constant 0 : i32
    %c0_i32_1 = arith.constant 0 : i32
    %c0_i32_2 = arith.constant 0 : i32
    return %c0_i32, %c0_i32_0, %c0_i32_1 : i32, i32, i32
  }
  func.func @transform_9(%arg0: i32) -> (i32, i32) {
    %c0_i32 = arith.constant 0 : i32
    %c0_i32_0 = arith.constant 0 : i32
    %c0_i32_1 = arith.constant 0 : i32
    return %c0_i32, %c0_i32_0 : i32, i32
  }
  func.func @transform_10(%arg0: i32) -> (i32, i32) {
    %c0_i32 = arith.constant 0 : i32
    %c0_i32_0 = arith.constant 0 : i32
    %c0_i32_1 = arith.constant 0 : i32
    return %c0_i32, %c0_i32_0 : i32, i32
  }
  func.func @transform_11(%arg0: i32) -> (i32, i32) {
    %c0_i32 = arith.constant 0 : i32
    %c0_i32_0 = arith.constant 0 : i32
    return %c0_i32, %arg0 : i32, i32
  }
}

</mosaic_0001>

<llo_original>
// kernel: tpu_custom_call.1
$region0: #{tpu_custom_call.1}
  #allocation0 [shape = 'u32[]', space=smem, size = 0x4, offset = 0x4, fixed_abs, tag = 'smem constant byte address 0x4 - core index']
  #allocation1 [shape = 'u32[144,128]{1,0:T(1,128)}', space=vmem, size = 0x12000, scoped, tag = 'internal scratch']
  #allocation2 [shape = 'f32[1,1]{1,0:T(1,128)S(1)}', space=vmem, size = 0x200, scoped, tag = 'scoped memory for tpu_custom_call.1']
  %s0 = inlined_call_operand.vmem [shape: f32[2,8192], index: 0, kind: input, shape index: {}]
  %s1 = inlined_call_operand.vmem [shape: f32[32,2], index: 1, kind: input, shape index: {}]
  %s2 = inlined_call_operand.vmem [shape: f32[32,1], index: 2, kind: input, shape index: {}]
  %s3 = inlined_call_operand.vmem [shape: f32[128,32], index: 3, kind: input, shape index: {}]
  %s4 = inlined_call_operand.vmem [shape: f32[128,1], index: 4, kind: input, shape index: {}]
  %s5 = inlined_call_operand.vmem [shape: f32[96,128], index: 5, kind: input, shape index: {}]
  %s6 = inlined_call_operand.vmem [shape: f32[96,1], index: 6, kind: input, shape index: {}]
  %s7 = inlined_call_operand.vmem [shape: f32[3,32,32], index: 7, kind: input, shape index: {}]
  %s8 = inlined_call_operand.vmem [shape: f32[3,32,1], index: 8, kind: input, shape index: {}]
  %s9 = inlined_call_operand.vmem [shape: f32[1,32], index: 9, kind: input, shape index: {}]
  %s10 = inlined_call_operand.<no memory space> [shape: f32[1,1], index: 10, kind: input, shape index: {}]
  %s11 = inlined_call_operand.hbm [shape: f32[1,8192], index: 11, kind: output, shape index: {}]
  %s12 = sld [smem:[#allocation0]]
  $region77: #{tpu_custom_call.1} parent=0
    _
  %s14 = ssub.s32 1, %s12
  %s15 = scalar_select 0, %s14, %s12
  %v16 = vstv %s10
  %17 = vst [vmem:[#allocation2] sm:$0x1] %v16
  $region1: #{tpu_custom_call.1} parent=0
    #allocation3 [shape = 'u8[16384]{0}', space=vmem, size = 0x4000, scoped, tag = 'output window, operand 0']
    #allocation4 [shape = 's32[2]{0}', space=sflag, size = 0x8, scoped, tag = 'scoped memory for tpu_custom_call.1']
    %18 = vsyncpa [#allocation4], 0
    %s19 = scalar_lea.sflag [#allocation4], 1
    %20 = vsyncpa %s19, 0
    loop: start=0, step=1, limit=6
    $region2: #{tpu_custom_call.1} parent=1 // loop_pre_header
      _
    $region3: #{tpu_custom_call.1} parent=1 // loop_header
      %s22 = sphi 0, %s26
      %p23 = scmp.ge.s32.totalorder %s22, 6
      %s32 = sphi 0, %s34
      %s35 = sphi 0, %s32
      %s36 = sphi 0, %s35
      %s52 = sphi 0, %s36
      %s56 = sphi 0, %s56
      %s58 = sphi 0, %s56
      %s59 = sphi 0, %s58
      %s73 = sphi 0, %s59
      %s77 = sphi 0, %s77
      %s79 = sphi 0, %s77
      %s80 = sphi 0, %s79
      %s94 = sphi 0, %s80
      %s98 = sphi 0, %s98
      %s100 = sphi 0, %s98
      %s101 = sphi 0, %s100
      %s115 = sphi 0, %s101
      %s119 = sphi 0, %s119
      %s121 = sphi 0, %s119
      %s122 = sphi 0, %s121
      %s136 = sphi 0, %s122
      %s140 = sphi 0, %s140
      %s142 = sphi 0, %s140
      %s143 = sphi 0, %s142
      %s157 = sphi 0, %s143
      %s161 = sphi 0, %s161
      %s163 = sphi 0, %s161
      %s164 = sphi 0, %s163
      %s178 = sphi 0, %s164
      %s182 = sphi 0, %s182
      %s184 = sphi 0, %s182
      %s185 = sphi 0, %s184
      %s199 = sphi 0, %s185
      %s203 = sphi 0, %s203
      %s205 = sphi 0, %s203
      %s206 = sphi 0, %s205
      %s220 = sphi 0, %s206
      %s224 = sphi 0, %s224
      %s226 = sphi 0, %s224
      %s227 = sphi 0, %s226
      %s241 = sphi 0, %s227
      %s245 = sphi 0, %s245
      %s247 = sphi 0, %s245
      %s248 = sphi 0, %s247
      %s262 = sphi 0, %s248
      %s268 = sphi 0, %s270
      %s271 = sphi 0, %s268
      %s272 = sphi 0, %s271
      %s288 = sphi 0, %s272
    $region4: #{tpu_custom_call.1} parent=1 // loop_header_branch
      %25 = sbr.rel (%p23) target = $region8
    $region5: #{tpu_custom_call.1} parent=1 // loop_body
      %s27 = ssub.s32 %s22, 1
      %s28 = ssub.s32 %s22, 2
      %s29 = sadd.s32 %s22, 1
      %s30 = ssub.s32 %s22, %s29
      %p31 = scmp.eq.s32.totalorder %s30, 0
      %s33 = sadd.s32 %s32, 1
      %s34 = scalar_select %p31, %s32, %s33
      %p37 = pneg %p31
      %p38 = scmp.eq.s32.totalorder %s22, 3
      %p39 = por %p37, %p38
      %p40 = scmp.ne.s32.totalorder %s32, %s35
      %p41 = scmp.eq.s32.totalorder %s22, 0
      %p42 = por %p40, %p41
      %p43 = scmp.ne.s32.totalorder %s32, %s35
      %p44 = scmp.eq.s32.totalorder %s27, 3
      %p45 = por %p43, %p44
      %p46 = scmp.ne.s32.totalorder %s35, %s36
      %p47 = scmp.eq.s32.totalorder %s27, 0
      %p48 = por %p46, %p47
      %p49 = scmp.ne.s32.totalorder %s35, %s36
      %p50 = scmp.eq.s32.totalorder %s28, 3
      %p51 = por %p49, %p50
      %p53 = scmp.ne.s32.totalorder %s36, %s52
      %p54 = scmp.eq.s32.totalorder %s28, 0
      %p55 = por %p53, %p54
      %s57 = sadd.s32 %s56, 1
      %p60 = scmp.eq.s32.totalorder %s22, 3
      %p61 = scmp.ne.s32.totalorder %s56, %s58
      %p62 = scmp.eq.s32.totalorder %s22, 0
      %p63 = por %p61, %p62
      %p64 = scmp.ne.s32.totalorder %s56, %s58
      %p65 = scmp.eq.s32.totalorder %s27, 3
      %p66 = por %p64, %p65
      %p67 = scmp.ne.s32.totalorder %s58, %s59
      %p68 = scmp.eq.s32.totalorder %s27, 0
      %p69 = por %p67, %p68
      %p70 = scmp.ne.s32.totalorder %s58, %s59
      %p71 = scmp.eq.s32.totalorder %s28, 3
      %p72 = por %p70, %p71
      %p74 = scmp.ne.s32.totalorder %s59, %s73
      %p75 = scmp.eq.s32.totalorder %s28, 0
      %p76 = por %p74, %p75
      %s78 = sadd.s32 %s77, 1
      %p81 = scmp.eq.s32.totalorder %s22, 3
      %p82 = scmp.ne.s32.totalorder %s77, %s79
      %p83 = scmp.eq.s32.totalorder %s22, 0
      %p84 = por %p82, %p83
      %p85 = scmp.ne.s32.totalorder %s77, %s79
      %p86 = scmp.eq.s32.totalorder %s27, 3
      %p87 = por %p85, %p86
      %p88 = scmp.ne.s32.totalorder %s79, %s80
      %p89 = scmp.eq.s32.totalorder %s27, 0
      %p90 = por %p88, %p89
      %p91 = scmp.ne.s32.totalorder %s79, %s80
      %p92 = scmp.eq.s32.totalorder %s28, 3
      %p93 = por %p91, %p92
      %p95 = scmp.ne.s32.totalorder %s80, %s94
      %p96 = scmp.eq.s32.totalorder %s28, 0
      %p97 = por %p95, %p96
      %s99 = sadd.s32 %s98, 1
      %p102 = scmp.eq.s32.totalorder %s22, 3
      %p103 = scmp.ne.s32.totalorder %s98, %s100
      %p104 = scmp.eq.s32.totalorder %s22, 0
      %p105 = por %p103, %p104
      %p106 = scmp.ne.s32.totalorder %s98, %s100
      %p107 = scmp.eq.s32.totalorder %s27, 3
      %p108 = por %p106, %p107
      %p109 = scmp.ne.s32.totalorder %s100, %s101
      %p110 = scmp.eq.s32.totalorder %s27, 0
      %p111 = por %p109, %p110
      %p112 = scmp.ne.s32.totalorder %s100, %s101
      %p113 = scmp.eq.s32.totalorder %s28, 3
      %p114 = por %p112, %p113
      %p116 = scmp.ne.s32.totalorder %s101, %s115
      %p117 = scmp.eq.s32.totalorder %s28, 0
      %p118 = por %p116, %p117
      %s120 = sadd.s32 %s119, 1
      %p123 = scmp.eq.s32.totalorder %s22, 3
      %p124 = scmp.ne.s32.totalorder %s119, %s121
      %p125 = scmp.eq.s32.totalorder %s22, 0
      %p126 = por %p124, %p125
      %p127 = scmp.ne.s32.totalorder %s119, %s121
      %p128 = scmp.eq.s32.totalorder %s27, 3
      %p129 = por %p127, %p128
      %p130 = scmp.ne.s32.totalorder %s121, %s122
      %p131 = scmp.eq.s32.totalorder %s27, 0
      %p132 = por %p130, %p131
      %p133 = scmp.ne.s32.totalorder %s121, %s122
      %p134 = scmp.eq.s32.totalorder %s28, 3
      %p135 = por %p133, %p134
      %p137 = scmp.ne.s32.totalorder %s122, %s136
      %p138 = scmp.eq.s32.totalorder %s28, 0
      %p139 = por %p137, %p138
      %s141 = sadd.s32 %s140, 1
      %p144 = scmp.eq.s32.totalorder %s22, 3
      %p145 = scmp.ne.s32.totalorder %s140, %s142
      %p146 = scmp.eq.s32.totalorder %s22, 0
      %p147 = por %p145, %p146
      %p148 = scmp.ne.s32.totalorder %s140, %s142
      %p149 = scmp.eq.s32.totalorder %s27, 3
      %p150 = por %p148, %p149
      %p151 = scmp.ne.s32.totalorder %s142, %s143
      %p152 = scmp.eq.s32.totalorder %s27, 0
      %p153 = por %p151, %p152
      %p154 = scmp.ne.s32.totalorder %s142, %s143
      %p155 = scmp.eq.s32.totalorder %s28, 3
      %p156 = por %p154, %p155
      %p158 = scmp.ne.s32.totalorder %s143, %s157
      %p159 = scmp.eq.s32.totalorder %s28, 0
      %p160 = por %p158, %p159
      %s162 = sadd.s32 %s161, 1
      %p165 = scmp.eq.s32.totalorder %s22, 3
      %p166 = scmp.ne.s32.totalorder %s161, %s163
      %p167 = scmp.eq.s32.totalorder %s22, 0
      %p168 = por %p166, %p167
      %p169 = scmp.ne.s32.totalorder %s161, %s163
      %p170 = scmp.eq.s32.totalorder %s27, 3
      %p171 = por %p169, %p170
      %p172 = scmp.ne.s32.totalorder %s163, %s164
      %p173 = scmp.eq.s32.totalorder %s27, 0
      %p174 = por %p172, %p173
      %p175 = scmp.ne.s32.totalorder %s163, %s164
      %p176 = scmp.eq.s32.totalorder %s28, 3
      %p177 = por %p175, %p176
      %p179 = scmp.ne.s32.totalorder %s164, %s178
      %p180 = scmp.eq.s32.totalorder %s28, 0
      %p181 = por %p179, %p180
      %s183 = sadd.s32 %s182, 1
      %p186 = scmp.eq.s32.totalorder %s22, 3
      %p187 = scmp.ne.s32.totalorder %s182, %s184
      %p188 = scmp.eq.s32.totalorder %s22, 0
      %p189 = por %p187, %p188
      %p190 = scmp.ne.s32.totalorder %s182, %s184
      %p191 = scmp.eq.s32.totalorder %s27, 3
      %p192 = por %p190, %p191
      %p193 = scmp.ne.s32.totalorder %s184, %s185
      %p194 = scmp.eq.s32.totalorder %s27, 0
      %p195 = por %p193, %p194
      %p196 = scmp.ne.s32.totalorder %s184, %s185
      %p197 = scmp.eq.s32.totalorder %s28, 3
      %p198 = por %p196, %p197
      %p200 = scmp.ne.s32.totalorder %s185, %s199
      %p201 = scmp.eq.s32.totalorder %s28, 0
      %p202 = por %p200, %p201
      %s204 = sadd.s32 %s203, 1
      %p207 = scmp.eq.s32.totalorder %s22, 3
      %p208 = scmp.ne.s32.totalorder %s203, %s205
      %p209 = scmp.eq.s32.totalorder %s22, 0
      %p210 = por %p208, %p209
      %p211 = scmp.ne.s32.totalorder %s203, %s205
      %p212 = scmp.eq.s32.totalorder %s27, 3
      %p213 = por %p211, %p212
      %p214 = scmp.ne.s32.totalorder %s205, %s206
      %p215 = scmp.eq.s32.totalorder %s27, 0
      %p216 = por %p214, %p215
      %p217 = scmp.ne.s32.totalorder %s205, %s206
      %p218 = scmp.eq.s32.totalorder %s28, 3
      %p219 = por %p217, %p218
      %p221 = scmp.ne.s32.totalorder %s206, %s220
      %p222 = scmp.eq.s32.totalorder %s28, 0
      %p223 = por %p221, %p222
      %s225 = sadd.s32 %s224, 1
      %p228 = scmp.eq.s32.totalorder %s22, 3
      %p229 = scmp.ne.s32.totalorder %s224, %s226
      %p230 = scmp.eq.s32.totalorder %s22, 0
      %p231 = por %p229, %p230
      %p232 = scmp.ne.s32.totalorder %s224, %s226
      %p233 = scmp.eq.s32.totalorder %s27, 3
      %p234 = por %p232, %p233
      %p235 = scmp.ne.s32.totalorder %s226, %s227
      %p236 = scmp.eq.s32.totalorder %s27, 0
      %p237 = por %p235, %p236
      %p238 = scmp.ne.s32.totalorder %s226, %s227
      %p239 = scmp.eq.s32.totalorder %s28, 3
      %p240 = por %p238, %p239
      %p242 = scmp.ne.s32.totalorder %s227, %s241
      %p243 = scmp.eq.s32.totalorder %s28, 0
      %p244 = por %p242, %p243
      %s246 = sadd.s32 %s245, 1
      %p249 = scmp.eq.s32.totalorder %s22, 3
      %p250 = scmp.ne.s32.totalorder %s245, %s247
      %p251 = scmp.eq.s32.totalorder %s22, 0
      %p252 = por %p250, %p251
      %p253 = scmp.ne.s32.totalorder %s245, %s247
      %p254 = scmp.eq.s32.totalorder %s27, 3
      %p255 = por %p253, %p254
      %p256 = scmp.ne.s32.totalorder %s247, %s248
      %p257 = scmp.eq.s32.totalorder %s27, 0
      %p258 = por %p256, %p257
      %p259 = scmp.ne.s32.totalorder %s247, %s248
      %p260 = scmp.eq.s32.totalorder %s28, 3
      %p261 = por %p259, %p260
      %p263 = scmp.ne.s32.totalorder %s248, %s262
      %p264 = scmp.eq.s32.totalorder %s28, 0
      %p265 = por %p263, %p264
      %s266 = ssub.s32 %s22, %s29
      %p267 = scmp.eq.s32.totalorder %s266, 0
      %s269 = sadd.s32 %s268, 1
      %s270 = scalar_select %p267, %s268, %s269
      %p273 = pneg %p267
      %p274 = scmp.eq.s32.totalorder %s22, 3
      %p275 = por %p273, %p274
      %p276 = scmp.ne.s32.totalorder %s268, %s271
      %p277 = scmp.eq.s32.totalorder %s22, 0
      %p278 = por %p276, %p277
      %p279 = scmp.ne.s32.totalorder %s268, %s271
      %p280 = scmp.eq.s32.totalorder %s27, 3
      %p281 = por %p279, %p280
      %p282 = scmp.ne.s32.totalorder %s271, %s272
      %p283 = scmp.eq.s32.totalorder %s27, 0
      %p284 = por %p282, %p283
      %p285 = scmp.ne.s32.totalorder %s271, %s272
      %p286 = scmp.eq.s32.totalorder %s28, 3
      %p287 = por %p285, %p286
      %p289 = scmp.ne.s32.totalorder %s272, %s288
      %p290 = scmp.eq.s32.totalorder %s28, 0
      %p291 = por %p289, %p290
      %p292 = scmp.le.s32.totalorder 1, %s22
      %p293 = scmp.lt.s32.totalorder %s22, 5
      %p294 = pnand %p292, %p293
      %p295 = pneg %p294
      // Predicated region
      $region9: #{tpu_custom_call.1} parent=5 // pred_check
        _
      $region10: #{tpu_custom_call.1} parent=5 // pred_check_branch
        %297 = sbr.rel (%p294) target = $region12
      $region11: #{tpu_custom_call.1} parent=5 // pred_region
        %s298 = ssub.s32 %s22, 1
        // Predicated region
        $region13: #{tpu_custom_call.1} parent=11 // pred_check
          %p299 = pneg %p69
        $region14: #{tpu_custom_call.1} parent=11 // pred_check_branch
          %301 = sbr.rel (%p299) target = $region16
        $region15: #{tpu_custom_call.1} parent=11 // pred_region
          _
        $region16: #{tpu_custom_call.1} parent=11 // pred_fallthru
          _
        // Predicated region
        $region17: #{tpu_custom_call.1} parent=11 // pred_check
          %p302 = pneg %p90
        $region18: #{tpu_custom_call.1} parent=11 // pred_check_branch
          %304 = sbr.rel (%p302) target = $region20
        $region19: #{tpu_custom_call.1} parent=11 // pred_region
          _
        $region20: #{tpu_custom_call.1} parent=11 // pred_fallthru
          _
        // Predicated region
        $region21: #{tpu_custom_call.1} parent=11 // pred_check
          %p305 = pneg %p111
        $region22: #{tpu_custom_call.1} parent=11 // pred_check_branch
          %307 = sbr.rel (%p305) target = $region24
        $region23: #{tpu_custom_call.1} parent=11 // pred_region
          _
        $region24: #{tpu_custom_call.1} parent=11 // pred_fallthru
          _
        // Predicated region
        $region25: #{tpu_custom_call.1} parent=11 // pred_check
          %p308 = pneg %p132
        $region26: #{tpu_custom_call.1} parent=11 // pred_check_branch
          %310 = sbr.rel (%p308) target = $region28
        $region27: #{tpu_custom_call.1} parent=11 // pred_region
          _
        $region28: #{tpu_custom_call.1} parent=11 // pred_fallthru
          _
        // Predicated region
        $region29: #{tpu_custom_call.1} parent=11 // pred_check
          %p311 = pneg %p153
        $region30: #{tpu_custom_call.1} parent=11 // pred_check_branch
          %313 = sbr.rel (%p311) target = $region32
        $region31: #{tpu_custom_call.1} parent=11 // pred_region
          _
        $region32: #{tpu_custom_call.1} parent=11 // pred_fallthru
          _
        // Predicated region
        $region33: #{tpu_custom_call.1} parent=11 // pred_check
          %p314 = pneg %p174
        $region34: #{tpu_custom_call.1} parent=11 // pred_check_branch
          %316 = sbr.rel (%p314) target = $region36
        $region35: #{tpu_custom_call.1} parent=11 // pred_region
          _
        $region36: #{tpu_custom_call.1} parent=11 // pred_fallthru
          _
        // Predicated region
        $region37: #{tpu_custom_call.1} parent=11 // pred_check
          %p317 = pneg %p195
        $region38: #{tpu_custom_call.1} parent=11 // pred_check_branch
          %319 = sbr.rel (%p317) target = $region40
        $region39: #{tpu_custom_call.1} parent=11 // pred_region
          _
        $region40: #{tpu_custom_call.1} parent=11 // pred_fallthru
          _
        // Predicated region
        $region41: #{tpu_custom_call.1} parent=11 // pred_check
          %p320 = pneg %p216
        $region42: #{tpu_custom_call.1} parent=11 // pred_check_branch
          %322 = sbr.rel (%p320) target = $region44
        $region43: #{tpu_custom_call.1} parent=11 // pred_region
          _
        $region44: #{tpu_custom_call.1} parent=11 // pred_fallthru
          _
        // Predicated region
        $region45: #{tpu_custom_call.1} parent=11 // pred_check
          %p323 = pneg %p237
        $region46: #{tpu_custom_call.1} parent=11 // pred_check_branch
          %325 = sbr.rel (%p323) target = $region48
        $region47: #{tpu_custom_call.1} parent=11 // pred_region
          _
        $region48: #{tpu_custom_call.1} parent=11 // pred_fallthru
          _
        // Predicated region
        $region49: #{tpu_custom_call.1} parent=11 // pred_check
          %p326 = pneg %p258
        $region50: #{tpu_custom_call.1} parent=11 // pred_check_branch
          %328 = sbr.rel (%p326) target = $region52
        $region51: #{tpu_custom_call.1} parent=11 // pred_region
          _
        $region52: #{tpu_custom_call.1} parent=11 // pred_fallthru
          _
      $region12: #{tpu_custom_call.1} parent=5 // pred_fallthru
        _
      %p329 = scmp.lt.s32.totalorder %s22, 4
      // Predicated region
      $region53: #{tpu_custom_call.1} parent=5 // pred_check
        %p330 = pneg %p329
      $region54: #{tpu_custom_call.1} parent=5 // pred_check_branch
        %332 = sbr.rel (%p330) target = $region56
      $region55: #{tpu_custom_call.1} parent=5 // pred_region
        // Predicated region
        $region57: #{tpu_custom_call.1} parent=55 // pred_check
          %p333 = pneg %p42
        $region58: #{tpu_custom_call.1} parent=55 // pred_check_branch
          %335 = sbr.rel (%p333) target = $region60
        $region59: #{tpu_custom_call.1} parent=55 // pred_region
          %s336 = smul.u32 16, %s22
          %p337 = scmp.lt.s32.totalorder %s336, 63
          %s338 = scalar_select %p337, %s336, 63
          %s339 = smul.addr %s338, 2
          %s340 = scalar_lea.vmem %s0, %s339
          %s341 = smul.u32 16, %s22
        $region60: #{tpu_custom_call.1} parent=55 // pred_fallthru
          _
      $region56: #{tpu_custom_call.1} parent=5 // pred_fallthru
        _
      %p342 = scmp.le.s32.totalorder 1, %s22
      %p343 = scmp.lt.s32.totalorder %s22, 5
      %p344 = pnand %p342, %p343
      %p345 = pneg %p344
      // Predicated region
      $region61: #{tpu_custom_call.1} parent=5 // pred_check
        _
      $region62: #{tpu_custom_call.1} parent=5 // pred_check_branch
        %347 = sbr.rel (%p344) target = $region64
      $region63: #{tpu_custom_call.1} parent=5 // pred_region
        %s348 = ssub.s32 %s22, 1
        %s349 = smul.u32 16, %s27
        %p350 = scmp.lt.s32.totalorder %s349, 63
        %s351 = scalar_select %p350, %s349, 63
        %s352 = smul.addr %s351, 2
        %s353 = scalar_lea.vmem %s0, %s352
        %p354 = pneg %p48
        %p355 = pneg %p45
        %p356 = pneg %p69
        %p357 = pneg %p66
        %p358 = pneg %p90
        %p359 = pneg %p87
        %p360 = pneg %p111
        %p361 = pneg %p108
        %p362 = pneg %p132
        %p363 = pneg %p129
        %p364 = pneg %p153
        %p365 = pneg %p150
        %p366 = pneg %p174
        %p367 = pneg %p171
        %p368 = pneg %p195
        %p369 = pneg %p192
        %p370 = pneg %p216
        %p371 = pneg %p213
        %p372 = pneg %p237
        %p373 = pneg %p234
        %p374 = pneg %p258
        %p375 = pneg %p255
        %p376 = pneg %p284
        %p377 = pneg %p281
        %s378 = sand.u32 %s271, 1
        %s379 = scalar_lea.sflag [#allocation4], %s378
        %s380 = sand.u32 %s271, 1
        %s381 = smul.addr %s380, 16
        %s382 = scalar_lea.vmem [#allocation3], %s381
        %s383 = smul.u32 16, %s27
        %p384 = scmp.lt.s32.totalorder %s383, 63
        %s385 = scalar_select %p384, %s383, 63
        %s386 = smul.addr %s385, 2
        %s387 = scalar_lea.vmem %s0, %s386
        %s388 = smul.u32 16, %s27
        %s389 = smul.u32 16, %s27
        %v390 = vld [vmem:[%s1] sm:$0xff]
        %v391 = vld [vmem:[%s1 + $0x8] sm:$0xff]
        %v392 = vld [vmem:[%s1 + $0x10] sm:$0xff]
        %v393 = vld [vmem:[%s1 + $0x18] sm:$0xff]
        %v394 = vld [vmem:[%s387] sm:$0xff]
        %v395 = vld [vmem:[%s387 + $0x8] sm:$0xff]
        %v396 = vld [vmem:[%s387 + $0x10] sm:$0xff]
        %v397 = vld [vmem:[%s387 + $0x18] sm:$0xff]
        %v398 = vld [vmem:[%s2] sm:$0xff]
        %v399 = vld [vmem:[%s2 + $0x8] sm:$0xff]
        %v400 = vld [vmem:[%s2 + $0x10] sm:$0xff]
        %v401 = vld [vmem:[%s2 + $0x18] sm:$0xff]
        %403 = vset.pattern.permute.xlu0 0
        %404 = vperm.xlu0 %403, %v398
        %v405 = vpop.permute.xlu0 %404
        %408 = vset.pattern.permute.xlu0 0
        %409 = vperm.xlu0 %408, %v399
        %v410 = vpop.permute.xlu0 %409
        %413 = vset.pattern.permute.xlu0 0
        %414 = vperm.xlu0 %413, %v400
        %v415 = vpop.permute.xlu0 %414
        %418 = vset.pattern.permute.xlu0 0
        %419 = vperm.xlu0 %418, %v401
        %v420 = vpop.permute.xlu0 %419
        %v426 = vcombine.high %v394, %v394
        %v428 = vunpack.c.l.s4 1983009808
        %v429 = vunpack.c.0.s8 %v428
        %v430 = vlaneseq
        %v431 = vshrl.u32 %v430, 7
        %v432 = vsub.s32 %v429, %v431
        %v433 = vrot.slane %v394, %v432
        %v435 = vunpack.c.l.s4 1983009808
        %v436 = vunpack.c.0.s8 %v435
        %v437 = vlaneseq
        %v438 = vshrl.u32 %v437, 7
        %v439 = vsub.s32 %v436, %v438
        %v440 = vrot.slane %v426, %v439
        %v441 = vcombine.high %v433, %v433
        %v442 = vcombine.high %v440, %v440
        %v443 = vcombine.high %v395, %v395
        %v445 = vunpack.c.l.s4 1983009808
        %v446 = vunpack.c.0.s8 %v445
        %v447 = vlaneseq
        %v448 = vshrl.u32 %v447, 7
        %v449 = vsub.s32 %v446, %v448
        %v450 = vrot.slane %v395, %v449
        %v452 = vunpack.c.l.s4 1983009808
        %v453 = vunpack.c.0.s8 %v452
        %v454 = vlaneseq
        %v455 = vshrl.u32 %v454, 7
        %v456 = vsub.s32 %v453, %v455
        %v457 = vrot.slane %v443, %v456
        %v458 = vcombine.high %v450, %v450
        %v459 = vcombine.high %v457, %v457
        %v460 = vcombine.high %v396, %v396
        %v462 = vunpack.c.l.s4 1983009808
        %v463 = vunpack.c.0.s8 %v462
        %v464 = vlaneseq
        %v465 = vshrl.u32 %v464, 7
        %v466 = vsub.s32 %v463, %v465
        %v467 = vrot.slane %v396, %v466
        %v469 = vunpack.c.l.s4 1983009808
        %v470 = vunpack.c.0.s8 %v469
        %v471 = vlaneseq
        %v472 = vshrl.u32 %v471, 7
        %v473 = vsub.s32 %v470, %v472
        %v474 = vrot.slane %v460, %v473
        %v475 = vcombine.high %v467, %v467
        %v476 = vcombine.high %v474, %v474
        %v477 = vcombine.high %v397, %v397
        %v479 = vunpack.c.l.s4 1983009808
        %v480 = vunpack.c.0.s8 %v479
        %v481 = vlaneseq
        %v482 = vshrl.u32 %v481, 7
        %v483 = vsub.s32 %v480, %v482
        %v484 = vrot.slane %v397, %v483
        %v486 = vunpack.c.l.s4 1983009808
        %v487 = vunpack.c.0.s8 %v486
        %v488 = vlaneseq
        %v489 = vshrl.u32 %v488, 7
        %v490 = vsub.s32 %v487, %v489
        %v491 = vrot.slane %v477, %v490
        %v492 = vcombine.high %v484, %v484
        %v493 = vcombine.high %v491, %v491
        %vm494 = vcmask 15360
        %v496 = vsel %vm494, %v390, 0
        %v499 = vsel %vm494, %v391, 0
        %v502 = vsel %vm494, %v392, 0
        %v505 = vsel %vm494, %v393, 0
        %vm507 = vcmask 1041408
        %v508 = vsel %vm507, %v433, 0
        %v510 = vsel %vm507, %v441, 0
        %v512 = vsel %vm507, %v440, 0
        %v514 = vsel %vm507, %v442, 0
        %v516 = vsel %vm507, %v450, 0
        %v518 = vsel %vm507, %v458, 0
        %v520 = vsel %vm507, %v457, 0
        %v522 = vsel %vm507, %v459, 0
        %v524 = vsel %vm507, %v467, 0
        %v526 = vsel %vm507, %v475, 0
        %v528 = vsel %vm507, %v474, 0
        %v530 = vsel %vm507, %v476, 0
        %v532 = vsel %vm507, %v484, 0
        %v534 = vsel %vm507, %v492, 0
        %v536 = vsel %vm507, %v491, 0
        %v538 = vsel %vm507, %v493, 0
        %540 = vmatprep.subr.mxu0 %v510
        %541 = vmatpush1.msra.mxu0 %v508
        %542 = vmatprep.subr.mxu0 0.0
        %543 = vmatpush1.msra.mxu0 0.0
        %544 = vmatprep.subr.mxu0 0.0
        %545 = vmatpush1.msra.mxu0 0.0
        %546 = vmatprep.subr.mxu0 0.0
        %547 = vmatpush1.msra.mxu0 0.0
        %548 = vmatprep.subr.mxu0 0.0
        %549 = vmatpush1.msra.mxu0 0.0
        %550 = vmatprep.subr.mxu0 0.0
        %551 = vmatpush1.msra.mxu0 0.0
        %552 = vmatprep.subr.mxu0 0.0
        %553 = vmatpush1.msra.mxu0 0.0
        %554 = vmatprep.subr.mxu0 0.0
        %555 = vmatpush1.msra.mxu0 0.0
        %556 = vmatprep.subr.mxu0 0.0
        %557 = vmatpush1.msra.mxu0 0.0
        %558 = vmatprep.subr.mxu0 0.0
        %559 = vmatpush1.msra.mxu0 0.0
        %560 = vmatprep.subr.mxu0 0.0
        %561 = vmatpush1.msra.mxu0 0.0
        %562 = vmatprep.subr.mxu0 0.0
        %563 = vmatpush1.msra.mxu0 0.0
        %564 = vmatprep.subr.mxu0 0.0
        %565 = vmatpush1.msra.mxu0 0.0
        %566 = vmatprep.subr.mxu0 0.0
        %567 = vmatpush1.msra.mxu0 0.0
        %568 = vmatprep.subr.mxu0 0.0
        %569 = vmatpush1.msra.mxu0 0.0
        %570 = vmatprep.subr.mxu0 0.0
        %571 = vmatpush1.msra.mxu0 0.0
        %572 = vmatprep.subr.mxu0 0.0
        %573 = vmatpush1.msra.mxu0 0.0
        %574 = vmatprep.subr.mxu0 0.0
        %575 = vmatpush1.msra.mxu0 0.0
        %576 = vmatprep.subr.mxu0 0.0
        %577 = vmatpush1.msra.mxu0 0.0
        %578 = vmatprep.subr.mxu0 0.0
        %579 = vmatpush1.msra.mxu0 0.0
        %580 = vmatprep.subr.mxu0 0.0
        %581 = vmatpush1.msra.mxu0 0.0
        %582 = vmatprep.subr.mxu0 0.0
        %583 = vmatpush1.msra.mxu0 0.0
        %584 = vmatprep.subr.mxu0 0.0
        %585 = vmatpush1.msra.mxu0 0.0
        %586 = vmatprep.subr.mxu0 0.0
        %587 = vmatpush1.msra.mxu0 0.0
        %588 = vmatprep.subr.mxu0 0.0
        %589 = vmatpush1.msra.mxu0 0.0
        %590 = vmatprep.subr.mxu0 0.0
        %591 = vmatpush1.msra.mxu0 0.0
        %592 = vmatprep.subr.mxu0 0.0
        %593 = vmatpush1.msra.mxu0 0.0
        %594 = vmatprep.subr.mxu0 0.0
        %595 = vmatpush1.msra.mxu0 0.0
        %596 = vmatprep.subr.mxu0 0.0
        %597 = vmatpush1.msra.mxu0 0.0
        %598 = vmatprep.subr.mxu0 0.0
        %599 = vmatpush1.msra.mxu0 0.0
        %600 = vmatprep.subr.mxu0 0.0
        %601 = vmatpush1.msra.mxu0 0.0
        %602 = vmatprep.subr.mxu0 0.0
        %603 = vmatpush1.msra.mxu0 0.0
        %604 = vmatprep.mubr.f32.mxu0 0.0
        %605 = vmatmul.mubr.f32.gmra.mrb[0].mxu0 %v496
        %v606 = vpop.f32.mrb[0].mxu0
        %v607 = vadd.f32 %v405, %v606
        %v608 = vpop.f32.mrb[0].mxu0
        %v609 = vadd.f32 %v405, %v608
        %610 = vmatprep.mubr.f32.mxu0 0.0
        %611 = vmatmul.mubr.f32.gmra.mrb[0].mxu0 %v499
        %v612 = vpop.f32.mrb[0].mxu0
        %v613 = vadd.f32 %v410, %v612
        %v614 = vpop.f32.mrb[0].mxu0
        %v615 = vadd.f32 %v410, %v614
        %616 = vmatprep.mubr.f32.mxu0 0.0
        %617 = vmatmul.mubr.f32.gmra.mrb[0].mxu0 %v502
        %v618 = vpop.f32.mrb[0].mxu0
        %v619 = vadd.f32 %v415, %v618
        %v620 = vpop.f32.mrb[0].mxu0
        %v621 = vadd.f32 %v415, %v620
        %622 = vmatprep.mubr.f32.mxu0 0.0
        %623 = vmatmul.mubr.f32.gmra.mrb[0].mxu0 %v505
        %v624 = vpop.f32.mrb[0].mxu0
        %v625 = vadd.f32 %v420, %v624
        %v626 = vpop.f32.mrb[0].mxu0
        %v627 = vadd.f32 %v420, %v626
        %628 = vdwg.mxu0
        %629 = vmatprep.subr.mxu0 %v514
        %630 = vmatpush1.msra.mxu0 %v512
        %631 = vmatprep.subr.mxu0 0.0
        %632 = vmatpush1.msra.mxu0 0.0
        %633 = vmatprep.subr.mxu0 0.0
        %634 = vmatpush1.msra.mxu0 0.0
        %635 = vmatprep.subr.mxu0 0.0
        %636 = vmatpush1.msra.mxu0 0.0
        %637 = vmatprep.subr.mxu0 0.0
        %638 = vmatpush1.msra.mxu0 0.0
        %639 = vmatprep.subr.mxu0 0.0
        %640 = vmatpush1.msra.mxu0 0.0
        %641 = vmatprep.subr.mxu0 0.0
        %642 = vmatpush1.msra.mxu0 0.0
        %643 = vmatprep.subr.mxu0 0.0
        %644 = vmatpush1.msra.mxu0 0.0
        %645 = vmatprep.subr.mxu0 0.0
        %646 = vmatpush1.msra.mxu0 0.0
        %647 = vmatprep.subr.mxu0 0.0
        %648 = vmatpush1.msra.mxu0 0.0
        %649 = vmatprep.subr.mxu0 0.0
        %650 = vmatpush1.msra.mxu0 0.0
        %651 = vmatprep.subr.mxu0 0.0
        %652 = vmatpush1.msra.mxu0 0.0
        %653 = vmatprep.subr.mxu0 0.0
        %654 = vmatpush1.msra.mxu0 0.0
        %655 = vmatprep.subr.mxu0 0.0
        %656 = vmatpush1.msra.mxu0 0.0
        %657 = vmatprep.subr.mxu0 0.0
        %658 = vmatpush1.msra.mxu0 0.0
        %659 = vmatprep.subr.mxu0 0.0
        %660 = vmatpush1.msra.mxu0 0.0
        %661 = vmatprep.subr.mxu0 0.0
        %662 = vmatpush1.msra.mxu0 0.0
        %663 = vmatprep.subr.mxu0 0.0
        %664 = vmatpush1.msra.mxu0 0.0
        %665 = vmatprep.subr.mxu0 0.0
        %666 = vmatpush1.msra.mxu0 0.0
        %667 = vmatprep.subr.mxu0 0.0
        %668 = vmatpush1.msra.mxu0 0.0
        %669 = vmatprep.subr.mxu0 0.0
        %670 = vmatpush1.msra.mxu0 0.0
        %671 = vmatprep.subr.mxu0 0.0
        %672 = vmatpush1.msra.mxu0 0.0
        %673 = vmatprep.subr.mxu0 0.0
        %674 = vmatpush1.msra.mxu0 0.0
        %675 = vmatprep.subr.mxu0 0.0
        %676 = vmatpush1.msra.mxu0 0.0
        %677 = vmatprep.subr.mxu0 0.0
        %678 = vmatpush1.msra.mxu0 0.0
        %679 = vmatprep.subr.mxu0 0.0
        %680 = vmatpush1.msra.mxu0 0.0
        %681 = vmatprep.subr.mxu0 0.0
        %682 = vmatpush1.msra.mxu0 0.0
        %683 = vmatprep.subr.mxu0 0.0
        %684 = vmatpush1.msra.mxu0 0.0
        %685 = vmatprep.subr.mxu0 0.0
        %686 = vmatpush1.msra.mxu0 0.0
        %687 = vmatprep.subr.mxu0 0.0
        %688 = vmatpush1.msra.mxu0 0.0
        %689 = vmatprep.subr.mxu0 0.0
        %690 = vmatpush1.msra.mxu0 0.0
        %691 = vmatprep.subr.mxu0 0.0
        %692 = vmatpush1.msra.mxu0 0.0
        %693 = vmatprep.mubr.f32.mxu0 0.0
        %694 = vmatmul.mubr.f32.gmra.mrb[0].mxu0 %v496
        %v695 = vpop.f32.mrb[0].mxu0
        %v696 = vadd.f32 %v405, %v695
        %v697 = vpop.f32.mrb[0].mxu0
        %v698 = vadd.f32 %v405, %v697
        %699 = vmatprep.mubr.f32.mxu0 0.0
        %700 = vmatmul.mubr.f32.gmra.mrb[0].mxu0 %v499
        %v701 = vpop.f32.mrb[0].mxu0
        %v702 = vadd.f32 %v410, %v701
        %v703 = vpop.f32.mrb[0].mxu0
        %v704 = vadd.f32 %v410, %v703
        %705 = vmatprep.mubr.f32.mxu0 0.0
        %706 = vmatmul.mubr.f32.gmra.mrb[0].mxu0 %v502
        %v707 = vpop.f32.mrb[0].mxu0
        %v708 = vadd.f32 %v415, %v707
        %v709 = vpop.f32.mrb[0].mxu0
        %v710 = vadd.f32 %v415, %v709
        %711 = vmatprep.mubr.f32.mxu0 0.0
        %712 = vmatmul.mubr.f32.gmra.mrb[0].mxu0 %v505
        %v713 = vpop.f32.mrb[0].mxu0
        %v714 = vadd.f32 %v420, %v713
        %v715 = vpop.f32.mrb[0].mxu0
        %v716 = vadd.f32 %v420, %v715
        %717 = vdwg.mxu0
        %718 = vmatprep.subr.mxu0 %v518
        %719 = vmatpush1.msra.mxu0 %v516
        %720 = vmatprep.subr.mxu0 0.0
        %721 = vmatpush1.msra.mxu0 0.0
        %722 = vmatprep.subr.mxu0 0.0
        %723 = vmatpush1.msra.mxu0 0.0
        %724 = vmatprep.subr.mxu0 0.0
        %725 = vmatpush1.msra.mxu0 0.0
        %726 = vmatprep.subr.mxu0 0.0
        %727 = vmatpush1.msra.mxu0 0.0
        %728 = vmatprep.subr.mxu0 0.0
        %729 = vmatpush1.msra.mxu0 0.0
        %730 = vmatprep.subr.mxu0 0.0
        %731 = vmatpush1.msra.mxu0 0.0
        %732 = vmatprep.subr.mxu0 0.0
        %733 = vmatpush1.msra.mxu0 0.0
        %734 = vmatprep.subr.mxu0 0.0
        %735 = vmatpush1.msra.mxu0 0.0
        %736 = vmatprep.subr.mxu0 0.0
        %737 = vmatpush1.msra.mxu0 0.0
        %738 = vmatprep.subr.mxu0 0.0
        %739 = vmatpush1.msra.mxu0 0.0
        %740 = vmatprep.subr.mxu0 0.0
        %741 = vmatpush1.msra.mxu0 0.0
        %742 = vmatprep.subr.mxu0 0.0
        %743 = vmatpush1.msra.mxu0 0.0
        %744 = vmatprep.subr.mxu0 0.0
        %745 = vmatpush1.msra.mxu0 0.0
        %746 = vmatprep.subr.mxu0 0.0
        %747 = vmatpush1.msra.mxu0 0.0
        %748 = vmatprep.subr.mxu0 0.0
        %749 = vmatpush1.msra.mxu0 0.0
        %750 = vmatprep.subr.mxu0 0.0
        %751 = vmatpush1.msra.mxu0 0.0
        %752 = vmatprep.subr.mxu0 0.0
        %753 = vmatpush1.msra.mxu0 0.0
        %754 = vmatprep.subr.mxu0 0.0
        %755 = vmatpush1.msra.mxu0 0.0
        %756 = vmatprep.subr.mxu0 0.0
        %757 = vmatpush1.msra.mxu0 0.0
        %758 = vmatprep.subr.mxu0 0.0
        %759 = vmatpush1.msra.mxu0 0.0
        %760 = vmatprep.subr.mxu0 0.0
        %761 = vmatpush1.msra.mxu0 0.0
        %762 = vmatprep.subr.mxu0 0.0
        %763 = vmatpush1.msra.mxu0 0.0
        %764 = vmatprep.subr.mxu0 0.0
        %765 = vmatpush1.msra.mxu0 0.0
        %766 = vmatprep.subr.mxu0 0.0
        %767 = vmatpush1.msra.mxu0 0.0
        %768 = vmatprep.subr.mxu0 0.0
        %769 = vmatpush1.msra.mxu0 0.0
        %770 = vmatprep.subr.mxu0 0.0
        %771 = vmatpush1.msra.mxu0 0.0
        %772 = vmatprep.subr.mxu0 0.0
        %773 = vmatpush1.msra.mxu0 0.0
        %774 = vmatprep.subr.mxu0 0.0
        %775 = vmatpush1.msra.mxu0 0.0
        %776 = vmatprep.subr.mxu0 0.0
        %777 = vmatpush1.msra.mxu0 0.0
        %778 = vmatprep.subr.mxu0 0.0
        %779 = vmatpush1.msra.mxu0 0.0
        %780 = vmatprep.subr.mxu0 0.0
        %781 = vmatpush1.msra.mxu0 0.0
        %782 = vmatprep.mubr.f32.mxu0 0.0
        %783 = vmatmul.mubr.f32.gmra.mrb[0].mxu0 %v496
        %v784 = vpop.f32.mrb[0].mxu0
        %v785 = vadd.f32 %v405, %v784
        %v786 = vpop.f32.mrb[0].mxu0
        %v787 = vadd.f32 %v405, %v786
        %788 = vmatprep.mubr.f32.mxu0 0.0
        %789 = vmatmul.mubr.f32.gmra.mrb[0].mxu0 %v499
        %v790 = vpop.f32.mrb[0].mxu0
        %v791 = vadd.f32 %v410, %v790
        %v792 = vpop.f32.mrb[0].mxu0
        %v793 = vadd.f32 %v410, %v792
        %794 = vmatprep.mubr.f32.mxu0 0.0
        %795 = vmatmul.mubr.f32.gmra.mrb[0].mxu0 %v502
        %v796 = vpop.f32.mrb[0].mxu0
        %v797 = vadd.f32 %v415, %v796
        %v798 = vpop.f32.mrb[0].mxu0
        %v799 = vadd.f32 %v415, %v798
        %800 = vmatprep.mubr.f32.mxu0 0.0
        %801 = vmatmul.mubr.f32.gmra.mrb[0].mxu0 %v505
        %v802 = vpop.f32.mrb[0].mxu0
        %v803 = vadd.f32 %v420, %v802
        %v804 = vpop.f32.mrb[0].mxu0
        %v805 = vadd.f32 %v420, %v804
        %806 = vdwg.mxu0
        %807 = vmatprep.subr.mxu0 %v522
        %808 = vmatpush1.msra.mxu0 %v520
        %809 = vmatprep.subr.mxu0 0.0
        %810 = vmatpush1.msra.mxu0 0.0
        %811 = vmatprep.subr.mxu0 0.0
        %812 = vmatpush1.msra.mxu0 0.0
        %813 = vmatprep.subr.mxu0 0.0
        %814 = vmatpush1.msra.mxu0 0.0
        %815 = vmatprep.subr.mxu0 0.0
        %816 = vmatpush1.msra.mxu0 0.0
        %817 = vmatprep.subr.mxu0 0.0
        %818 = vmatpush1.msra.mxu0 0.0
        %819 = vmatprep.subr.mxu0 0.0
        %820 = vmatpush1.msra.mxu0 0.0
        %821 = vmatprep.subr.mxu0 0.0
        %822 = vmatpush1.msra.mxu0 0.0
        %823 = vmatprep.subr.mxu0 0.0
        %824 = vmatpush1.msra.mxu0 0.0
        %825 = vmatprep.subr.mxu0 0.0
        %826 = vmatpush1.msra.mxu0 0.0
        %827 = vmatprep.subr.mxu0 0.0
        %828 = vmatpush1.msra.mxu0 0.0
        %829 = vmatprep.subr.mxu0 0.0
        %830 = vmatpush1.msra.mxu0 0.0
        %831 = vmatprep.subr.mxu0 0.0
        %832 = vmatpush1.msra.mxu0 0.0
        %833 = vmatprep.subr.mxu0 0.0
        %834 = vmatpush1.msra.mxu0 0.0
        %835 = vmatprep.subr.mxu0 0.0
        %836 = vmatpush1.msra.mxu0 0.0
        %837 = vmatprep.subr.mxu0 0.0
        %838 = vmatpush1.msra.mxu0 0.0
        %839 = vmatprep.subr.mxu0 0.0
        %840 = vmatpush1.msra.mxu0 0.0
        %841 = vmatprep.subr.mxu0 0.0
        %842 = vmatpush1.msra.mxu0 0.0
        %843 = vmatprep.subr.mxu0 0.0
        %844 = vmatpush1.msra.mxu0 0.0
        %845 = vmatprep.subr.mxu0 0.0
        %846 = vmatpush1.msra.mxu0 0.0
        %847 = vmatprep.subr.mxu0 0.0
        %848 = vmatpush1.msra.mxu0 0.0
        %849 = vmatprep.subr.mxu0 0.0
        %850 = vmatpush1.msra.mxu0 0.0
        %851 = vmatprep.subr.mxu0 0.0
        %852 = vmatpush1.msra.mxu0 0.0
        %853 = vmatprep.subr.mxu0 0.0
        %854 = vmatpush1.msra.mxu0 0.0
        %855 = vmatprep.subr.mxu0 0.0
        %856 = vmatpush1.msra.mxu0 0.0
        %857 = vmatprep.subr.mxu0 0.0
        %858 = vmatpush1.msra.mxu0 0.0
        %859 = vmatprep.subr.mxu0 0.0
        %860 = vmatpush1.msra.mxu0 0.0
        %861 = vmatprep.subr.mxu0 0.0
        %862 = vmatpush1.msra.mxu0 0.0
        %863 = vmatprep.subr.mxu0 0.0
        %864 = vmatpush1.msra.mxu0 0.0
        %865 = vmatprep.subr.mxu0 0.0
        %866 = vmatpush1.msra.mxu0 0.0
        %867 = vmatprep.subr.mxu0 0.0
        %868 = vmatpush1.msra.mxu0 0.0
        %869 = vmatprep.subr.mxu0 0.0
        %870 = vmatpush1.msra.mxu0 0.0
        %871 = vmatprep.mubr.f32.mxu0 0.0
        %872 = vmatmul.mubr.f32.gmra.mrb[0].mxu0 %v496
        %v873 = vpop.f32.mrb[0].mxu0
        %v874 = vadd.f32 %v405, %v873
        %v875 = vpop.f32.mrb[0].mxu0
        %v876 = vadd.f32 %v405, %v875
        %877 = vmatprep.mubr.f32.mxu0 0.0
        %878 = vmatmul.mubr.f32.gmra.mrb[0].mxu0 %v499
        %v879 = vpop.f32.mrb[0].mxu0
        %v880 = vadd.f32 %v410, %v879
        %v881 = vpop.f32.mrb[0].mxu0
        %v882 = vadd.f32 %v410, %v881
        %883 = vmatprep.mubr.f32.mxu0 0.0
        %884 = vmatmul.mubr.f32.gmra.mrb[0].mxu0 %v502
        %v885 = vpop.f32.mrb[0].mxu0
        %v886 = vadd.f32 %v415, %v885
        %v887 = vpop.f32.mrb[0].mxu0
        %v888 = vadd.f32 %v415, %v887
        %889 = vmatprep.mubr.f32.mxu0 0.0
        %890 = vmatmul.mubr.f32.gmra.mrb[0].mxu0 %v505
        %v891 = vpop.f32.mrb[0].mxu0
        %v892 = vadd.f32 %v420, %v891
        %v893 = vpop.f32.mrb[0].mxu0
        %v894 = vadd.f32 %v420, %v893
        %895 = vdwg.mxu0
        %896 = vmatprep.subr.mxu0 %v526
        %897 = vmatpush1.msra.mxu0 %v524
        %898 = vmatprep.subr.mxu0 0.0
        %899 = vmatpush1.msra.mxu0 0.0
        %900 = vmatprep.subr.mxu0 0.0
        %901 = vmatpush1.msra.mxu0 0.0
        %902 = vmatprep.subr.mxu0 0.0
        %903 = vmatpush1.msra.mxu0 0.0
        %904 = vmatprep.subr.mxu0 0.0
        %905 = vmatpush1.msra.mxu0 0.0
        %906 = vmatprep.subr.mxu0 0.0
        %907 = vmatpush1.msra.mxu0 0.0
        %908 = vmatprep.subr.mxu0 0.0
        %909 = vmatpush1.msra.mxu0 0.0
        %910 = vmatprep.subr.mxu0 0.0
        %911 = vmatpush1.msra.mxu0 0.0
        %912 = vmatprep.subr.mxu0 0.0
        %913 = vmatpush1.msra.mxu0 0.0
        %914 = vmatprep.subr.mxu0 0.0
        %915 = vmatpush1.msra.mxu0 0.0
        %916 = vmatprep.subr.mxu0 0.0
        %917 = vmatpush1.msra.mxu0 0.0
        %918 = vmatprep.subr.mxu0 0.0
        %919 = vmatpush1.msra.mxu0 0.0
        %920 = vmatprep.subr.mxu0 0.0
        %921 = vmatpush1.msra.mxu0 0.0
        %922 = vmatprep.subr.mxu0 0.0
        %923 = vmatpush1.msra.mxu0 0.0
        %924 = vmatprep.subr.mxu0 0.0
        %925 = vmatpush1.msra.mxu0 0.0
        %926 = vmatprep.subr.mxu0 0.0
        %927 = vmatpush1.msra.mxu0 0.0
        %928 = vmatprep.subr.mxu0 0.0
        %929 = vmatpush1.msra.mxu0 0.0
        %930 = vmatprep.subr.mxu0 0.0
        %931 = vmatpush1.msra.mxu0 0.0
        %932 = vmatprep.subr.mxu0 0.0
        %933 = vmatpush1.msra.mxu0 0.0
        %934 = vmatprep.subr.mxu0 0.0
        %935 = vmatpush1.msra.mxu0 0.0
        %936 = vmatprep.subr.mxu0 0.0
        %937 = vmatpush1.msra.mxu0 0.0
        %938 = vmatprep.subr.mxu0 0.0
        %939 = vmatpush1.msra.mxu0 0.0
        %940 = vmatprep.subr.mxu0 0.0
        %941 = vmatpush1.msra.mxu0 0.0
        %942 = vmatprep.subr.mxu0 0.0
        %943 = vmatpush1.msra.mxu0 0.0
        %944 = vmatprep.subr.mxu0 0.0
        %945 = vmatpush1.msra.mxu0 0.0
        %946 = vmatprep.subr.mxu0 0.0
        %947 = vmatpush1.msra.mxu0 0.0
        %948 = vmatprep.subr.mxu0 0.0
        %949 = vmatpush1.msra.mxu0 0.0
        %950 = vmatprep.subr.mxu0 0.0
        %951 = vmatpush1.msra.mxu0 0.0
        %952 = vmatprep.subr.mxu0 0.0
        %953 = vmatpush1.msra.mxu0 0.0
        %954 = vmatprep.subr.mxu0 0.0
        %955 = vmatpush1.msra.mxu0 0.0
        %956 = vmatprep.subr.mxu0 0.0
        %957 = vmatpush1.msra.mxu0 0.0
        %958 = vmatprep.subr.mxu0 0.0
        %959 = vmatpush1.msra.mxu0 0.0
        %960 = vmatprep.mubr.f32.mxu0 0.0
        %961 = vmatmul.mubr.f32.gmra.mrb[0].mxu0 %v496
        %v962 = vpop.f32.mrb[0].mxu0
        %v963 = vadd.f32 %v405, %v962
        %v964 = vpop.f32.mrb[0].mxu0
        %v965 = vadd.f32 %v405, %v964
        %966 = vmatprep.mubr.f32.mxu0 0.0
        %967 = vmatmul.mubr.f32.gmra.mrb[0].mxu0 %v499
        %v968 = vpop.f32.mrb[0].mxu0
        %v969 = vadd.f32 %v410, %v968
        %v970 = vpop.f32.mrb[0].mxu0
        %v971 = vadd.f32 %v410, %v970
        %972 = vmatprep.mubr.f32.mxu0 0.0
        %973 = vmatmul.mubr.f32.gmra.mrb[0].mxu0 %v502
        %v974 = vpop.f32.mrb[0].mxu0
        %v975 = vadd.f32 %v415, %v974
        %v976 = vpop.f32.mrb[0].mxu0
        %v977 = vadd.f32 %v415, %v976
        %978 = vmatprep.mubr.f32.mxu0 0.0
        %979 = vmatmul.mubr.f32.gmra.mrb[0].mxu0 %v505
        %v980 = vpop.f32.mrb[0].mxu0
        %v981 = vadd.f32 %v420, %v980
        %v982 = vpop.f32.mrb[0].mxu0
        %v983 = vadd.f32 %v420, %v982
        %984 = vdwg.mxu0
        %985 = vmatprep.subr.mxu0 %v530
        %986 = vmatpush1.msra.mxu0 %v528
        %987 = vmatprep.subr.mxu0 0.0
        %988 = vmatpush1.msra.mxu0 0.0
        %989 = vmatprep.subr.mxu0 0.0
        %990 = vmatpush1.msra.mxu0 0.0
        %991 = vmatprep.subr.mxu0 0.0
        %992 = vmatpush1.msra.mxu0 0.0
        %993 = vmatprep.subr.mxu0 0.0
        %994 = vmatpush1.msra.mxu0 0.0
        %995 = vmatprep.subr.mxu0 0.0
        %996 = vmatpush1.msra.mxu0 0.0
        %997 = vmatprep.subr.mxu0 0.0
        %998 = vmatpush1.msra.mxu0 0.0
        %999 = vmatprep.subr.mxu0 0.0
        %1000 = vmatpush1.msra.mxu0 0.0
        %1001 = vmatprep.subr.mxu0 0.0
        %1002 = vmatpush1.msra.mxu0 0.0
        %1003 = vmatprep.subr.mxu0 0.0
        %1004 = vmatpush1.msra.mxu0 0.0
        %1005 = vmatprep.subr.mxu0 0.0
        %1006 = vmatpush1.msra.mxu0 0.0
        %1007 = vmatprep.subr.mxu0 0.0
        %1008 = vmatpush1.msra.mxu0 0.0
        %1009 = vmatprep.subr.mxu0 0.0
        %1010 = vmatpush1.msra.mxu0 0.0
        %1011 = vmatprep.subr.mxu0 0.0
        %1012 = vmatpush1.msra.mxu0 0.0
        %1013 = vmatprep.subr.mxu0 0.0
        %1014 = vmatpush1.msra.mxu0 0.0
        %1015 = vmatprep.subr.mxu0 0.0
        %1016 = vmatpush1.msra.mxu0 0.0
        %1017 = vmatprep.subr.mxu0 0.0
        %1018 = vmatpush1.msra.mxu0 0.0
        %1019 = vmatprep.subr.mxu0 0.0
        %1020 = vmatpush1.msra.mxu0 0.0
        %1021 = vmatprep.subr.mxu0 0.0
        %1022 = vmatpush1.msra.mxu0 0.0
        %1023 = vmatprep.subr.mxu0 0.0
        %1024 = vmatpush1.msra.mxu0 0.0
        %1025 = vmatprep.subr.mxu0 0.0
        %1026 = vmatpush1.msra.mxu0 0.0
        %1027 = vmatprep.subr.mxu0 0.0
        %1028 = vmatpush1.msra.mxu0 0.0
        %1029 = vmatprep.subr.mxu0 0.0
        %1030 = vmatpush1.msra.mxu0 0.0
        %1031 = vmatprep.subr.mxu0 0.0
        %1032 = vmatpush1.msra.mxu0 0.0
        %1033 = vmatprep.subr.mxu0 0.0
        %1034 = vmatpush1.msra.mxu0 0.0
        %1035 = vmatprep.subr.mxu0 0.0
        %1036 = vmatpush1.msra.mxu0 0.0
        %1037 = vmatprep.subr.mxu0 0.0
        %1038 = vmatpush1.msra.mxu0 0.0
        %1039 = vmatprep.subr.mxu0 0.0
        %1040 = vmatpush1.msra.mxu0 0.0
        %1041 = vmatprep.subr.mxu0 0.0
        %1042 = vmatpush1.msra.mxu0 0.0
        %1043 = vmatprep.subr.mxu0 0.0
        %1044 = vmatpush1.msra.mxu0 0.0
        %1045 = vmatprep.subr.mxu0 0.0
        %1046 = vmatpush1.msra.mxu0 0.0
        %1047 = vmatprep.subr.mxu0 0.0
        %1048 = vmatpush1.msra.mxu0 0.0
        %1049 = vmatprep.mubr.f32.mxu0 0.0
        %1050 = vmatmul.mubr.f32.gmra.mrb[0].mxu0 %v496
        %v1051 = vpop.f32.mrb[0].mxu0
        %v1052 = vadd.f32 %v405, %v1051
        %v1053 = vpop.f32.mrb[0].mxu0
        %v1054 = vadd.f32 %v405, %v1053
        %1055 = vmatprep.mubr.f32.mxu0 0.0
        %1056 = vmatmul.mubr.f32.gmra.mrb[0].mxu0 %v499
        %v1057 = vpop.f32.mrb[0].mxu0
        %v1058 = vadd.f32 %v410, %v1057
        %v1059 = vpop.f32.mrb[0].mxu0
        %v1060 = vadd.f32 %v410, %v1059
        %1061 = vmatprep.mubr.f32.mxu0 0.0
        %1062 = vmatmul.mubr.f32.gmra.mrb[0].mxu0 %v502
        %v1063 = vpop.f32.mrb[0].mxu0
        %v1064 = vadd.f32 %v415, %v1063
        %v1065 = vpop.f32.mrb[0].mxu0
        %v1066 = vadd.f32 %v415, %v1065
        %1067 = vmatprep.mubr.f32.mxu0 0.0
        %1068 = vmatmul.mubr.f32.gmra.mrb[0].mxu0 %v505
        %v1069 = vpop.f32.mrb[0].mxu0
        %v1070 = vadd.f32 %v420, %v1069
        %v1071 = vpop.f32.mrb[0].mxu0
        %v1072 = vadd.f32 %v420, %v1071
        %1073 = vdwg.mxu0
        %1074 = vmatprep.subr.mxu0 %v534
        %1075 = vmatpush1.msra.mxu0 %v532
        %1076 = vmatprep.subr.mxu0 0.0
        %1077 = vmatpush1.msra.mxu0 0.0
        %1078 = vmatprep.subr.mxu0 0.0
        %1079 = vmatpush1.msra.mxu0 0.0
        %1080 = vmatprep.subr.mxu0 0.0
        %1081 = vmatpush1.msra.mxu0 0.0
        %1082 = vmatprep.subr.mxu0 0.0
        %1083 = vmatpush1.msra.mxu0 0.0
        %1084 = vmatprep.subr.mxu0 0.0
        %1085 = vmatpush1.msra.mxu0 0.0
        %1086 = vmatprep.subr.mxu0 0.0
        %1087 = vmatpush1.msra.mxu0 0.0
        %1088 = vmatprep.subr.mxu0 0.0
        %1089 = vmatpush1.msra.mxu0 0.0
        %1090 = vmatprep.subr.mxu0 0.0
        %1091 = vmatpush1.msra.mxu0 0.0
        %1092 = vmatprep.subr.mxu0 0.0
        %1093 = vmatpush1.msra.mxu0 0.0
        %1094 = vmatprep.subr.mxu0 0.0
        %1095 = vmatpush1.msra.mxu0 0.0
        %1096 = vmatprep.subr.mxu0 0.0
        %1097 = vmatpush1.msra.mxu0 0.0
        %1098 = vmatprep.subr.mxu0 0.0
        %1099 = vmatpush1.msra.mxu0 0.0
        %1100 = vmatprep.subr.mxu0 0.0
        %1101 = vmatpush1.msra.mxu0 0.0
        %1102 = vmatprep.subr.mxu0 0.0
        %1103 = vmatpush1.msra.mxu0 0.0
        %1104 = vmatprep.subr.mxu0 0.0
        %1105 = vmatpush1.msra.mxu0 0.0
        %1106 = vmatprep.subr.mxu0 0.0
        %1107 = vmatpush1.msra.mxu0 0.0
        %1108 = vmatprep.subr.mxu0 0.0
        %1109 = vmatpush1.msra.mxu0 0.0
        %1110 = vmatprep.subr.mxu0 0.0
        %1111 = vmatpush1.msra.mxu0 0.0
        %1112 = vmatprep.subr.mxu0 0.0
        %1113 = vmatpush1.msra.mxu0 0.0
        %1114 = vmatprep.subr.mxu0 0.0
        %1115 = vmatpush1.msra.mxu0 0.0
        %1116 = vmatprep.subr.mxu0 0.0
        %1117 = vmatpush1.msra.mxu0 0.0
        %1118 = vmatprep.subr.mxu0 0.0
        %1119 = vmatpush1.msra.mxu0 0.0
        %1120 = vmatprep.subr.mxu0 0.0
        %1121 = vmatpush1.msra.mxu0 0.0
        %1122 = vmatprep.subr.mxu0 0.0
        %1123 = vmatpush1.msra.mxu0 0.0
        %1124 = vmatprep.subr.mxu0 0.0
        %1125 = vmatpush1.msra.mxu0 0.0
        %1126 = vmatprep.subr.mxu0 0.0
        %1127 = vmatpush1.msra.mxu0 0.0
        %1128 = vmatprep.subr.mxu0 0.0
        %1129 = vmatpush1.msra.mxu0 0.0
        %1130 = vmatprep.subr.mxu0 0.0
        %1131 = vmatpush1.msra.mxu0 0.0
        %1132 = vmatprep.subr.mxu0 0.0
        %1133 = vmatpush1.msra.mxu0 0.0
        %1134 = vmatprep.subr.mxu0 0.0
        %1135 = vmatpush1.msra.mxu0 0.0
        %1136 = vmatprep.subr.mxu0 0.0
        %1137 = vmatpush1.msra.mxu0 0.0
        %1138 = vmatprep.mubr.f32.mxu0 0.0
        %1139 = vmatmul.mubr.f32.gmra.mrb[0].mxu0 %v496
        %v1140 = vpop.f32.mrb[0].mxu0
        %v1141 = vadd.f32 %v405, %v1140
        %v1142 = vpop.f32.mrb[0].mxu0
        %v1143 = vadd.f32 %v405, %v1142
        %1144 = vmatprep.mubr.f32.mxu0 0.0
        %1145 = vmatmul.mubr.f32.gmra.mrb[0].mxu0 %v499
        %v1146 = vpop.f32.mrb[0].mxu0
        %v1147 = vadd.f32 %v410, %v1146
        %v1148 = vpop.f32.mrb[0].mxu0
        %v1149 = vadd.f32 %v410, %v1148
        %1150 = vmatprep.mubr.f32.mxu0 0.0
        %1151 = vmatmul.mubr.f32.gmra.mrb[0].mxu0 %v502
        %v1152 = vpop.f32.mrb[0].mxu0
        %v1153 = vadd.f32 %v415, %v1152
        %v1154 = vpop.f32.mrb[0].mxu0
        %v1155 = vadd.f32 %v415, %v1154
        %1156 = vmatprep.mubr.f32.mxu0 0.0
        %1157 = vmatmul.mubr.f32.gmra.mrb[0].mxu0 %v505
        %v1158 = vpop.f32.mrb[0].mxu0
        %v1159 = vadd.f32 %v420, %v1158
        %v1160 = vpop.f32.mrb[0].mxu0
        %v1161 = vadd.f32 %v420, %v1160
        %1162 = vdwg.mxu0
        %1163 = vmatprep.subr.mxu0 %v538
        %1164 = vmatpush1.msra.mxu0 %v536
        %1165 = vmatprep.subr.mxu0 0.0
        %1166 = vmatpush1.msra.mxu0 0.0
        %1167 = vmatprep.subr.mxu0 0.0
        %1168 = vmatpush1.msra.mxu0 0.0
        %1169 = vmatprep.subr.mxu0 0.0
        %1170 = vmatpush1.msra.mxu0 0.0
        %1171 = vmatprep.subr.mxu0 0.0
        %1172 = vmatpush1.msra.mxu0 0.0
        %1173 = vmatprep.subr.mxu0 0.0
        %1174 = vmatpush1.msra.mxu0 0.0
        %1175 = vmatprep.subr.mxu0 0.0
        %1176 = vmatpush1.msra.mxu0 0.0
        %1177 = vmatprep.subr.mxu0 0.0
        %1178 = vmatpush1.msra.mxu0 0.0
        %1179 = vmatprep.subr.mxu0 0.0
        %1180 = vmatpush1.msra.mxu0 0.0
        %1181 = vmatprep.subr.mxu0 0.0
        %1182 = vmatpush1.msra.mxu0 0.0
        %1183 = vmatprep.subr.mxu0 0.0
        %1184 = vmatpush1.msra.mxu0 0.0
        %1185 = vmatprep.subr.mxu0 0.0
        %1186 = vmatpush1.msra.mxu0 0.0
        %1187 = vmatprep.subr.mxu0 0.0
        %1188 = vmatpush1.msra.mxu0 0.0
        %1189 = vmatprep.subr.mxu0 0.0
        %1190 = vmatpush1.msra.mxu0 0.0
        %1191 = vmatprep.subr.mxu0 0.0
        %1192 = vmatpush1.msra.mxu0 0.0
        %1193 = vmatprep.subr.mxu0 0.0
        %1194 = vmatpush1.msra.mxu0 0.0
        %1195 = vmatprep.subr.mxu0 0.0
        %1196 = vmatpush1.msra.mxu0 0.0
        %1197 = vmatprep.subr.mxu0 0.0
        %1198 = vmatpush1.msra.mxu0 0.0
        %1199 = vmatprep.subr.mxu0 0.0
        %1200 = vmatpush1.msra.mxu0 0.0
        %1201 = vmatprep.subr.mxu0 0.0
        %1202 = vmatpush1.msra.mxu0 0.0
        %1203 = vmatprep.subr.mxu0 0.0
        %1204 = vmatpush1.msra.mxu0 0.0
        %1205 = vmatprep.subr.mxu0 0.0
        %1206 = vmatpush1.msra.mxu0 0.0
        %1207 = vmatprep.subr.mxu0 0.0
        %1208 = vmatpush1.msra.mxu0 0.0
        %1209 = vmatprep.subr.mxu0 0.0
        %1210 = vmatpush1.msra.mxu0 0.0
        %1211 = vmatprep.subr.mxu0 0.0
        %1212 = vmatpush1.msra.mxu0 0.0
        %1213 = vmatprep.subr.mxu0 0.0
        %1214 = vmatpush1.msra.mxu0 0.0
        %1215 = vmatprep.subr.mxu0 0.0
        %1216 = vmatpush1.msra.mxu0 0.0
        %1217 = vmatprep.subr.mxu0 0.0
        %1218 = vmatpush1.msra.mxu0 0.0
        %1219 = vmatprep.subr.mxu0 0.0
        %1220 = vmatpush1.msra.mxu0 0.0
        %1221 = vmatprep.subr.mxu0 0.0
        %1222 = vmatpush1.msra.mxu0 0.0
        %1223 = vmatprep.subr.mxu0 0.0
        %1224 = vmatpush1.msra.mxu0 0.0
        %1225 = vmatprep.subr.mxu0 0.0
        %1226 = vmatpush1.msra.mxu0 0.0
        %1227 = vmatprep.mubr.f32.mxu0 0.0
        %1228 = vmatmul.mubr.f32.gmra.mrb[0].mxu0 %v496
        %v1229 = vpop.f32.mrb[0].mxu0
        %v1230 = vadd.f32 %v405, %v1229
        %v1231 = vpop.f32.mrb[0].mxu0
        %v1232 = vadd.f32 %v405, %v1231
        %1233 = vmatprep.mubr.f32.mxu0 0.0
        %1234 = vmatmul.mubr.f32.gmra.mrb[0].mxu0 %v499
        %v1235 = vpop.f32.mrb[0].mxu0
        %v1236 = vadd.f32 %v410, %v1235
        %v1237 = vpop.f32.mrb[0].mxu0
        %v1238 = vadd.f32 %v410, %v1237
        %1239 = vmatprep.mubr.f32.mxu0 0.0
        %1240 = vmatmul.mubr.f32.gmra.mrb[0].mxu0 %v502
        %v1241 = vpop.f32.mrb[0].mxu0
        %v1242 = vadd.f32 %v415, %v1241
        %v1243 = vpop.f32.mrb[0].mxu0
        %v1244 = vadd.f32 %v415, %v1243
        %1245 = vmatprep.mubr.f32.mxu0 0.0
        %1246 = vmatmul.mubr.f32.gmra.mrb[0].mxu0 %v505
        %v1247 = vpop.f32.mrb[0].mxu0
        %v1248 = vadd.f32 %v420, %v1247
        %v1249 = vpop.f32.mrb[0].mxu0
        %v1250 = vadd.f32 %v420, %v1249
        %1251 = vdwg.mxu0
        %v1252 = vtanh.pop %v607
        %v1253 = vtanh.pop %v609
        %v1254 = vtanh.pop %v696
        %v1255 = vtanh.pop %v698
        %v1256 = vtanh.pop %v785
        %v1257 = vtanh.pop %v787
        %v1258 = vtanh.pop %v874
        %v1259 = vtanh.pop %v876
        %v1260 = vtanh.pop %v963
        %v1261 = vtanh.pop %v965
        %v1262 = vtanh.pop %v1052
        %v1263 = vtanh.pop %v1054
        %v1264 = vtanh.pop %v1141
        %v1265 = vtanh.pop %v1143
        %v1266 = vtanh.pop %v1230
        %v1267 = vtanh.pop %v1232
        %v1268 = vtanh.pop %v613
        %v1269 = vtanh.pop %v615
        %v1270 = vtanh.pop %v702
        %v1271 = vtanh.pop %v704
        %v1272 = vtanh.pop %v791
        %v1273 = vtanh.pop %v793
        %v1274 = vtanh.pop %v880
        %v1275 = vtanh.pop %v882
        %v1276 = vtanh.pop %v969
        %v1277 = vtanh.pop %v971
        %v1278 = vtanh.pop %v1058
        %v1279 = vtanh.pop %v1060
        %v1280 = vtanh.pop %v1147
        %v1281 = vtanh.pop %v1149
        %v1282 = vtanh.pop %v1236
        %v1283 = vtanh.pop %v1238
        %v1284 = vtanh.pop %v619
        %v1285 = vtanh.pop %v621
        %v1286 = vtanh.pop %v708
        %v1287 = vtanh.pop %v710
        %v1288 = vtanh.pop %v797
        %v1289 = vtanh.pop %v799
        %v1290 = vtanh.pop %v886
        %v1291 = vtanh.pop %v888
        %v1292 = vtanh.pop %v975
        %v1293 = vtanh.pop %v977
        %v1294 = vtanh.pop %v1064
        %v1295 = vtanh.pop %v1066
        %v1296 = vtanh.pop %v1153
        %v1297 = vtanh.pop %v1155
        %v1298 = vtanh.pop %v1242
        %v1299 = vtanh.pop %v1244
        %v1300 = vtanh.pop %v625
        %v1301 = vtanh.pop %v627
        %v1302 = vtanh.pop %v714
        %v1303 = vtanh.pop %v716
        %v1304 = vtanh.pop %v803
        %v1305 = vtanh.pop %v805
        %v1306 = vtanh.pop %v892
        %v1307 = vtanh.pop %v894
        %v1308 = vtanh.pop %v981
        %v1309 = vtanh.pop %v983
        %v1310 = vtanh.pop %v1070
        %v1311 = vtanh.pop %v1072
        %v1312 = vtanh.pop %v1159
        %v1313 = vtanh.pop %v1161
        %v1314 = vtanh.pop %v1248
        %v1315 = vtanh.pop %v1250
        %v1316 = vld [vmem:[%s3] sm:$0xff]
        %v1317 = vld [vmem:[%s3 + $0x8] sm:$0xff]
        %v1318 = vld [vmem:[%s3 + $0x10] sm:$0xff]
        %v1319 = vld [vmem:[%s3 + $0x18] sm:$0xff]
        %v1320 = vld [vmem:[%s3 + $0x20] sm:$0xff]
        %v1321 = vld [vmem:[%s3 + $0x28] sm:$0xff]
        %v1322 = vld [vmem:[%s3 + $0x30] sm:$0xff]
        %v1323 = vld [vmem:[%s3 + $0x38] sm:$0xff]
        %v1324 = vld [vmem:[%s3 + $0x40] sm:$0xff]
        %v1325 = vld [vmem:[%s3 + $0x48] sm:$0xff]
        %v1326 = vld [vmem:[%s3 + $0x50] sm:$0xff]
        %v1327 = vld [vmem:[%s3 + $0x58] sm:$0xff]
        %v1328 = vld [vmem:[%s3 + $0x60] sm:$0xff]
        %v1329 = vld [vmem:[%s3 + $0x68] sm:$0xff]
        %v1330 = vld [vmem:[%s3 + $0x70] sm:$0xff]
        %v1331 = vld [vmem:[%s3 + $0x78] sm:$0xff]
        %v1332 = vld [vmem:[%s4] sm:$0xff]
        %v1333 = vld [vmem:[%s4 + $0x8] sm:$0xff]
        %v1334 = vld [vmem:[%s4 + $0x10] sm:$0xff]
        %v1335 = vld [vmem:[%s4 + $0x18] sm:$0xff]
        %v1336 = vld [vmem:[%s4 + $0x20] sm:$0xff]
        %v1337 = vld [vmem:[%s4 + $0x28] sm:$0xff]
        %v1338 = vld [vmem:[%s4 + $0x30] sm:$0xff]
        %v1339 = vld [vmem:[%s4 + $0x38] sm:$0xff]
        %v1340 = vld [vmem:[%s4 + $0x40] sm:$0xff]
        %v1341 = vld [vmem:[%s4 + $0x48] sm:$0xff]
        %v1342 = vld [vmem:[%s4 + $0x50] sm:$0xff]
        %v1343 = vld [vmem:[%s4 + $0x58] sm:$0xff]
        %v1344 = vld [vmem:[%s4 + $0x60] sm:$0xff]
        %v1345 = vld [vmem:[%s4 + $0x68] sm:$0xff]
        %v1346 = vld [vmem:[%s4 + $0x70] sm:$0xff]
        %v1347 = vld [vmem:[%s4 + $0x78] sm:$0xff]
        %1349 = vset.pattern.permute.xlu0 0
        %1350 = vperm.xlu0 %1349, %v1332
        %v1351 = vpop.permute.xlu0 %1350
        %1354 = vset.pattern.permute.xlu0 0
        %1355 = vperm.xlu0 %1354, %v1333
        %v1356 = vpop.permute.xlu0 %1355
        %1359 = vset.pattern.permute.xlu0 0
        %1360 = vperm.xlu0 %1359, %v1334
        %v1361 = vpop.permute.xlu0 %1360
        %1364 = vset.pattern.permute.xlu0 0
        %1365 = vperm.xlu0 %1364, %v1335
        %v1366 = vpop.permute.xlu0 %1365
        %1369 = vset.pattern.permute.xlu0 0
        %1370 = vperm.xlu0 %1369, %v1336
        %v1371 = vpop.permute.xlu0 %1370
        %1374 = vset.pattern.permute.xlu0 0
        %1375 = vperm.xlu0 %1374, %v1337
        %v1376 = vpop.permute.xlu0 %1375
        %1379 = vset.pattern.permute.xlu0 0
        %1380 = vperm.xlu0 %1379, %v1338
        %v1381 = vpop.permute.xlu0 %1380
        %1384 = vset.pattern.permute.xlu0 0
        %1385 = vperm.xlu0 %1384, %v1339
        %v1386 = vpop.permute.xlu0 %1385
        %1389 = vset.pattern.permute.xlu0 0
        %1390 = vperm.xlu0 %1389, %v1340
        %v1391 = vpop.permute.xlu0 %1390
        %1394 = vset.pattern.permute.xlu0 0
        %1395 = vperm.xlu0 %1394, %v1341
        %v1396 = vpop.permute.xlu0 %1395
        %1399 = vset.pattern.permute.xlu0 0
        %1400 = vperm.xlu0 %1399, %v1342
        %v1401 = vpop.permute.xlu0 %1400
        %1404 = vset.pattern.permute.xlu0 0
        %1405 = vperm.xlu0 %1404, %v1343
        %v1406 = vpop.permute.xlu0 %1405
        %1409 = vset.pattern.permute.xlu0 0
        %1410 = vperm.xlu0 %1409, %v1344
        %v1411 = vpop.permute.xlu0 %1410
        %1414 = vset.pattern.permute.xlu0 0
        %1415 = vperm.xlu0 %1414, %v1345
        %v1416 = vpop.permute.xlu0 %1415
        %1419 = vset.pattern.permute.xlu0 0
        %1420 = vperm.xlu0 %1419, %v1346
        %v1421 = vpop.permute.xlu0 %1420
        %1424 = vset.pattern.permute.xlu0 0
        %1425 = vperm.xlu0 %1424, %v1347
        %v1426 = vpop.permute.xlu0 %1425
        %vm1428 = vcmask 261120
        %v1430 = vsel %vm1428, %v1316, 0
        %v1433 = vsel %vm1428, %v1317, 0
        %v1436 = vsel %vm1428, %v1318, 0
        %v1439 = vsel %vm1428, %v1319, 0
        %v1442 = vsel %vm1428, %v1320, 0
        %v1445 = vsel %vm1428, %v1321, 0
        %v1448 = vsel %vm1428, %v1322, 0
        %v1451 = vsel %vm1428, %v1323, 0
        %v1454 = vsel %vm1428, %v1324, 0
        %v1457 = vsel %vm1428, %v1325, 0
        %v1460 = vsel %vm1428, %v1326, 0
        %v1463 = vsel %vm1428, %v1327, 0
        %v1466 = vsel %vm1428, %v1328, 0
        %v1469 = vsel %vm1428, %v1329, 0
        %v1472 = vsel %vm1428, %v1330, 0
        %v1475 = vsel %vm1428, %v1331, 0
        %1477 = vmatprep.subr.mxu0 %v1253
        %1478 = vmatpush1.msra.mxu0 %v1252
        %1479 = vmatprep.subr.mxu0 %v1269
        %1480 = vmatpush1.msra.mxu0 %v1268
        %1481 = vmatprep.subr.mxu0 %v1285
        %1482 = vmatpush1.msra.mxu0 %v1284
        %1483 = vmatprep.subr.mxu0 %v1301
        %1484 = vmatpush1.msra.mxu0 %v1300
        %1485 = vmatprep.subr.mxu0 0.0
        %1486 = vmatpush1.msra.mxu0 0.0
        %1487 = vmatprep.subr.mxu0 0.0
        %1488 = vmatpush1.msra.mxu0 0.0
        %1489 = vmatprep.subr.mxu0 0.0
        %1490 = vmatpush1.msra.mxu0 0.0
        %1491 = vmatprep.subr.mxu0 0.0
        %1492 = vmatpush1.msra.mxu0 0.0
        %1493 = vmatprep.subr.mxu0 0.0
        %1494 = vmatpush1.msra.mxu0 0.0
        %1495 = vmatprep.subr.mxu0 0.0
        %1496 = vmatpush1.msra.mxu0 0.0
        %1497 = vmatprep.subr.mxu0 0.0
        %1498 = vmatpush1.msra.mxu0 0.0
        %1499 = vmatprep.subr.mxu0 0.0
        %1500 = vmatpush1.msra.mxu0 0.0
        %1501 = vmatprep.subr.mxu0 0.0
        %1502 = vmatpush1.msra.mxu0 0.0
        %1503 = vmatprep.subr.mxu0 0.0
        %1504 = vmatpush1.msra.mxu0 0.0
        %1505 = vmatprep.subr.mxu0 0.0
        %1506 = vmatpush1.msra.mxu0 0.0
        %1507 = vmatprep.subr.mxu0 0.0
        %1508 = vmatpush1.msra.mxu0 0.0
        %1509 = vmatprep.subr.mxu0 0.0
        %1510 = vmatpush1.msra.mxu0 0.0
        %1511 = vmatprep.subr.mxu0 0.0
        %1512 = vmatpush1.msra.mxu0 0.0
        %1513 = vmatprep.subr.mxu0 0.0
        %1514 = vmatpush1.msra.mxu0 0.0
        %1515 = vmatprep.subr.mxu0 0.0
        %1516 = vmatpush1.msra.mxu0 0.0
        %1517 = vmatprep.subr.mxu0 0.0
        %1518 = vmatpush1.msra.mxu0 0.0
        %1519 = vmatprep.subr.mxu0 0.0
        %1520 = vmatpush1.msra.mxu0 0.0
        %1521 = vmatprep.subr.mxu0 0.0
        %1522 = vmatpush1.msra.mxu0 0.0
        %1523 = vmatprep.subr.mxu0 0.0
        %1524 = vmatpush1.msra.mxu0 0.0
        %1525 = vmatprep.subr.mxu0 0.0
        %1526 = vmatpush1.msra.mxu0 0.0
        %1527 = vmatprep.subr.mxu0 0.0
        %1528 = vmatpush1.msra.mxu0 0.0
        %1529 = vmatprep.subr.mxu0 0.0
        %1530 = vmatpush1.msra.mxu0 0.0
        %1531 = vmatprep.subr.mxu0 0.0
        %1532 = vmatpush1.msra.mxu0 0.0
        %1533 = vmatprep.subr.mxu0 0.0
        %1534 = vmatpush1.msra.mxu0 0.0
        %1535 = vmatprep.subr.mxu0 0.0
        %1536 = vmatpush1.msra.mxu0 0.0
        %1537 = vmatprep.subr.mxu0 0.0
        %1538 = vmatpush1.msra.mxu0 0.0
        %1539 = vmatprep.subr.mxu0 0.0
        %1540 = vmatpush1.msra.mxu0 0.0
        %1541 = vmatprep.mubr.f32.mxu0 0.0
        %1542 = vmatmul.mubr.f32.gmra.mrb[0].mxu0 %v1430
        %v1543 = vpop.f32.mrb[0].mxu0
        %v1544 = vadd.f32 %v1351, %v1543
        %v1545 = vpop.f32.mrb[0].mxu0
        %v1546 = vadd.f32 %v1351, %v1545
        %1547 = vmatprep.mubr.f32.mxu0 0.0
        %1548 = vmatmul.mubr.f32.gmra.mrb[0].mxu0 %v1433
        %v1549 = vpop.f32.mrb[0].mxu0
        %v1550 = vadd.f32 %v1356, %v1549
        %v1551 = vpop.f32.mrb[0].mxu0
        %v1552 = vadd.f32 %v1356, %v1551
        %1553 = vmatprep.mubr.f32.mxu0 0.0
        %1554 = vmatmul.mubr.f32.gmra.mrb[0].mxu0 %v1436
        %v1555 = vpop.f32.mrb[0].mxu0
        %v1556 = vadd.f32 %v1361, %v1555
        %v1557 = vpop.f32.mrb[0].mxu0
        %v1558 = vadd.f32 %v1361, %v1557
        %1559 = vmatprep.mubr.f32.mxu0 0.0
        %1560 = vmatmul.mubr.f32.gmra.mrb[0].mxu0 %v1439
        %v1561 = vpop.f32.mrb[0].mxu0
        %v1562 = vadd.f32 %v1366, %v1561
        %v1563 = vpop.f32.mrb[0].mxu0
        %v1564 = vadd.f32 %v1366, %v1563
        %1565 = vmatprep.mubr.f32.mxu0 0.0
        %1566 = vmatmul.mubr.f32.gmra.mrb[0].mxu0 %v1442
        %v1567 = vpop.f32.mrb[0].mxu0
        %v1568 = vadd.f32 %v1371, %v1567
        %v1569 = vpop.f32.mrb[0].mxu0
        %v1570 = vadd.f32 %v1371, %v1569
        %1571 = vmatprep.mubr.f32.mxu0 0.0
        %1572 = vmatmul.mubr.f32.gmra.mrb[0].mxu0 %v1445
        %v1573 = vpop.f32.mrb[0].mxu0
        %v1574 = vadd.f32 %v1376, %v1573
        %v1575 = vpop.f32.mrb[0].mxu0
        %v1576 = vadd.f32 %v1376, %v1575
        %1577 = vmatprep.mubr.f32.mxu0 0.0
        %1578 = vmatmul.mubr.f32.gmra.mrb[0].mxu0 %v1448
        %v1579 = vpop.f32.mrb[0].mxu0
        %v1580 = vadd.f32 %v1381, %v1579
        %v1581 = vpop.f32.mrb[0].mxu0
        %v1582 = vadd.f32 %v1381, %v1581
        %1583 = vmatprep.mubr.f32.mxu0 0.0
        %1584 = vmatmul.mubr.f32.gmra.mrb[0].mxu0 %v1451
        %v1585 = vpop.f32.mrb[0].mxu0
        %v1586 = vadd.f32 %v1386, %v1585
        %v1587 = vpop.f32.mrb[0].mxu0
        %v1588 = vadd.f32 %v1386, %v1587
        %1589 = vmatprep.mubr.f32.mxu0 0.0
        %1590 = vmatmul.mubr.f32.gmra.mrb[0].mxu0 %v1454
        %v1591 = vpop.f32.mrb[0].mxu0
        %v1592 = vadd.f32 %v1391, %v1591
        %v1593 = vpop.f32.mrb[0].mxu0
        %v1594 = vadd.f32 %v1391, %v1593
        %1595 = vmatprep.mubr.f32.mxu0 0.0
        %1596 = vmatmul.mubr.f32.gmra.mrb[0].mxu0 %v1457
        %v1597 = vpop.f32.mrb[0].mxu0
        %v1598 = vadd.f32 %v1396, %v1597
        %v1599 = vpop.f32.mrb[0].mxu0
        %v1600 = vadd.f32 %v1396, %v1599
        %1601 = vmatprep.mubr.f32.mxu0 0.0
        %1602 = vmatmul.mubr.f32.gmra.mrb[0].mxu0 %v1460
        %v1603 = vpop.f32.mrb[0].mxu0
        %v1604 = vadd.f32 %v1401, %v1603
        %v1605 = vpop.f32.mrb[0].mxu0
        %v1606 = vadd.f32 %v1401, %v1605
        %1607 = vmatprep.mubr.f32.mxu0 0.0
        %1608 = vmatmul.mubr.f32.gmra.mrb[0].mxu0 %v1463
        %v1609 = vpop.f32.mrb[0].mxu0
        %v1610 = vadd.f32 %v1406, %v1609
        %v1611 = vpop.f32.mrb[0].mxu0
        %v1612 = vadd.f32 %v1406, %v1611
        %1613 = vmatprep.mubr.f32.mxu0 0.0
        %1614 = vmatmul.mubr.f32.gmra.mrb[0].mxu0 %v1466
        %v1615 = vpop.f32.mrb[0].mxu0
        %v1616 = vadd.f32 %v1411, %v1615
        %v1617 = vpop.f32.mrb[0].mxu0
        %v1618 = vadd.f32 %v1411, %v1617
        %1619 = vmatprep.mubr.f32.mxu0 0.0
        %1620 = vmatmul.mubr.f32.gmra.mrb[0].mxu0 %v1469
        %v1621 = vpop.f32.mrb[0].mxu0
        %v1622 = vadd.f32 %v1416, %v1621
        %v1623 = vpop.f32.mrb[0].mxu0
        %v1624 = vadd.f32 %v1416, %v1623
        %1625 = vmatprep.mubr.f32.mxu0 0.0
        %1626 = vmatmul.mubr.f32.gmra.mrb[0].mxu0 %v1472
        %v1627 = vpop.f32.mrb[0].mxu0
        %v1628 = vadd.f32 %v1421, %v1627
        %v1629 = vpop.f32.mrb[0].mxu0
        %v1630 = vadd.f32 %v1421, %v1629
        %1631 = vmatprep.mubr.f32.mxu0 0.0
        %1632 = vmatmul.mubr.f32.gmra.mrb[0].mxu0 %v1475
        %v1633 = vpop.f32.mrb[0].mxu0
        %v1634 = vadd.f32 %v1426, %v1633
        %v1635 = vpop.f32.mrb[0].mxu0
        %v1636 = vadd.f32 %v1426, %v1635
        %1637 = vdwg.mxu0
        %1638 = vmatprep.subr.mxu0 %v1255
        %1639 = vmatpush1.msra.mxu0 %v1254
        %1640 = vmatprep.subr.mxu0 %v1271
        %1641 = vmatpush1.msra.mxu0 %v1270
        %1642 = vmatprep.subr.mxu0 %v1287
        %1643 = vmatpush1.msra.mxu0 %v1286
        %1644 = vmatprep.subr.mxu0 %v1303
        %1645 = vmatpush1.msra.mxu0 %v1302
        %1646 = vmatprep.subr.mxu0 0.0
        %1647 = vmatpush1.msra.mxu0 0.0
        %1648 = vmatprep.subr.mxu0 0.0
        %1649 = vmatpush1.msra.mxu0 0.0
        %1650 = vmatprep.subr.mxu0 0.0
        %1651 = vmatpush1.msra.mxu0 0.0
        %1652 = vmatprep.subr.mxu0 0.0
        %1653 = vmatpush1.msra.mxu0 0.0
        %1654 = vmatprep.subr.mxu0 0.0
        %1655 = vmatpush1.msra.mxu0 0.0
        %1656 = vmatprep.subr.mxu0 0.0
        %1657 = vmatpush1.msra.mxu0 0.0
        %1658 = vmatprep.subr.mxu0 0.0
        %1659 = vmatpush1.msra.mxu0 0.0
        %1660 = vmatprep.subr.mxu0 0.0
        %1661 = vmatpush1.msra.mxu0 0.0
        %1662 = vmatprep.subr.mxu0 0.0
        %1663 = vmatpush1.msra.mxu0 0.0
        %1664 = vmatprep.subr.mxu0 0.0
        %1665 = vmatpush1.msra.mxu0 0.0
        %1666 = vmatprep.subr.mxu0 0.0
        %1667 = vmatpush1.msra.mxu0 0.0
        %1668 = vmatprep.subr.mxu0 0.0
        %1669 = vmatpush1.msra.mxu0 0.0
        %1670 = vmatprep.subr.mxu0 0.0
        %1671 = vmatpush1.msra.mxu0 0.0
        %1672 = vmatprep.subr.mxu0 0.0
        %1673 = vmatpush1.msra.mxu0 0.0
        %1674 = vmatprep.subr.mxu0 0.0
        %1675 = vmatpush1.msra.mxu0 0.0
        %1676 = vmatprep.subr.mxu0 0.0
        %1677 = vmatpush1.msra.mxu0 0.0
        %1678 = vmatprep.subr.mxu0 0.0
        %1679 = vmatpush1.msra.mxu0 0.0
        %1680 = vmatprep.subr.mxu0 0.0
        %1681 = vmatpush1.msra.mxu0 0.0
        %1682 = vmatprep.subr.mxu0 0.0
        %1683 = vmatpush1.msra.mxu0 0.0
        %1684 = vmatprep.subr.mxu0 0.0
        %1685 = vmatpush1.msra.mxu0 0.0
        %1686 = vmatprep.subr.mxu0 0.0
        %1687 = vmatpush1.msra.mxu0 0.0
        %1688 = vmatprep.subr.mxu0 0.0
        %1689 = vmatpush1.msra.mxu0 0.0
        %1690 = vmatprep.subr.mxu0 0.0
        %1691 = vmatpush1.msra.mxu0 0.0
        %1692 = vmatprep.subr.mxu0 0.0
        %1693 = vmatpush1.msra.mxu0 0.0
        %1694 = vmatprep.subr.mxu0 0.0
        %1695 = vmatpush1.msra.mxu0 0.0
        %1696 = vmatprep.subr.mxu0 0.0
        %1697 = vmatpush1.msra.mxu0 0.0
        %1698 = vmatprep.subr.mxu0 0.0
        %1699 = vmatpush1.msra.mxu0 0.0
        %1700 = vmatprep.subr.mxu0 0.0
        %1701 = vmatpush1.msra.mxu0 0.0
        %1702 = vmatprep.mubr.f32.mxu0 0.0
        %1703 = vmatmul.mubr.f32.gmra.mrb[0].mxu0 %v1430
        %v1704 = vpop.f32.mrb[0].mxu0
        %v1705 = vadd.f32 %v1351, %v1704
        %v1706 = vpop.f32.mrb[0].mxu0
        %v1707 = vadd.f32 %v1351, %v1706
        %1708 = vmatprep.mubr.f32.mxu0 0.0
        %1709 = vmatmul.mubr.f32.gmra.mrb[0].mxu0 %v1433
        %v1710 = vpop.f32.mrb[0].mxu0
        %v1711 = vadd.f32 %v1356, %v1710
        %v1712 = vpop.f32.mrb[0].mxu0
        %v1713 = vadd.f32 %v1356, %v1712
        %1714 = vmatprep.mubr.f32.mxu0 0.0
        %1715 = vmatmul.mubr.f32.gmra.mrb[0].mxu0 %v1436
        %v1716 = vpop.f32.mrb[0].mxu0
        %v1717 = vadd.f32 %v1361, %v1716
        %v1718 = vpop.f32.mrb[0].mxu0
        %v1719 = vadd.f32 %v1361, %v1718
        %1720 = vmatprep.mubr.f32.mxu0 0.0
        %1721 = vmatmul.mubr.f32.gmra.mrb[0].mxu0 %v1439
        %v1722 = vpop.f32.mrb[0].mxu0
        %v1723 = vadd.f32 %v1366, %v1722
        %v1724 = vpop.f32.mrb[0].mxu0
        %v1725 = vadd.f32 %v1366, %v1724
        %1726 = vmatprep.mubr.f32.mxu0 0.0
        %1727 = vmatmul.mubr.f32.gmra.mrb[0].mxu0 %v1442
        %v1728 = vpop.f32.mrb[0].mxu0
        %v1729 = vadd.f32 %v1371, %v1728
        %v1730 = vpop.f32.mrb[0].mxu0
        %v1731 = vadd.f32 %v1371, %v1730
        %1732 = vmatprep.mubr.f32.mxu0 0.0
        %1733 = vmatmul.mubr.f32.gmra.mrb[0].mxu0 %v1445
        %v1734 = vpop.f32.mrb[0].mxu0
        %v1735 = vadd.f32 %v1376, %v1734
        %v1736 = vpop.f32.mrb[0].mxu0
        %v1737 = vadd.f32 %v1376, %v1736
        %1738 = vmatprep.mubr.f32.mxu0 0.0
        %1739 = vmatmul.mubr.f32.gmra.mrb[0].mxu0 %v1448
        %v1740 = vpop.f32.mrb[0].mxu0
        %v1741 = vadd.f32 %v1381, %v1740
        %v1742 = vpop.f32.mrb[0].mxu0
        %v1743 = vadd.f32 %v1381, %v1742
        %1744 = vmatprep.mubr.f32.mxu0 0.0
        %1745 = vmatmul.mubr.f32.gmra.mrb[0].mxu0 %v1451
        %v1746 = vpop.f32.mrb[0].mxu0
        %v1747 = vadd.f32 %v1386, %v1746
        %v1748 = vpop.f32.mrb[0].mxu0
        %v1749 = vadd.f32 %v1386, %v1748
        %1750 = vmatprep.mubr.f32.mxu0 0.0
        %1751 = vmatmul.mubr.f32.gmra.mrb[0].mxu0 %v1454
        %v1752 = vpop.f32.mrb[0].mxu0
        %v1753 = vadd.f32 %v1391, %v1752
        %v1754 = vpop.f32.mrb[0].mxu0
        %v1755 = vadd.f32 %v1391, %v1754
        %1756 = vmatprep.mubr.f32.mxu0 0.0
        %1757 = vmatmul.mubr.f32.gmra.mrb[0].mxu0 %v1457
        %v1758 = vpop.f32.mrb[0].mxu0
        %v1759 = vadd.f32 %v1396, %v1758
        %v1760 = vpop.f32.mrb[0].mxu0
        %v1761 = vadd.f32 %v1396, %v1760
        %1762 = vmatprep.mubr.f32.mxu0 0.0
        %1763 = vmatmul.mubr.f32.gmra.mrb[0].mxu0 %v1460
        %v1764 = vpop.f32.mrb[0].mxu0
        %v1765 = vadd.f32 %v1401, %v1764
        %v1766 = vpop.f32.mrb[0].mxu0
        %v1767 = vadd.f32 %v1401, %v1766
        %1768 = vmatprep.mubr.f32.mxu0 0.0
        %1769 = vmatmul.mubr.f32.gmra.mrb[0].mxu0 %v1463
        %v1770 = vpop.f32.mrb[0].mxu0
        %v1771 = vadd.f32 %v1406, %v1770
        %v1772 = vpop.f32.mrb[0].mxu0
        %v1773 = vadd.f32 %v1406, %v1772
        %1774 = vmatprep.mubr.f32.mxu0 0.0
        %1775 = vmatmul.mubr.f32.gmra.mrb[0].mxu0 %v1466
        %v1776 = vpop.f32.mrb[0].mxu0
        %v1777 = vadd.f32 %v1411, %v1776
        %v1778 = vpop.f32.mrb[0].mxu0
        %v1779 = vadd.f32 %v1411, %v1778
        %1780 = vmatprep.mubr.f32.mxu0 0.0
        %1781 = vmatmul.mubr.f32.gmra.mrb[0].mxu0 %v1469
        %v1782 = vpop.f32.mrb[0].mxu0
        %v1783 = vadd.f32 %v1416, %v1782
        %v1784 = vpop.f32.mrb[0].mxu0
        %v1785 = vadd.f32 %v1416, %v1784
        %1786 = vmatprep.mubr.f32.mxu0 0.0
        %1787 = vmatmul.mubr.f32.gmra.mrb[0].mxu0 %v1472
        %v1788 = vpop.f32.mrb[0].mxu0
        %v1789 = vadd.f32 %v1421, %v1788
        %v1790 = vpop.f32.mrb[0].mxu0
        %v1791 = vadd.f32 %v1421, %v1790
        %1792 = vmatprep.mubr.f32.mxu0 0.0
        %1793 = vmatmul.mubr.f32.gmra.mrb[0].mxu0 %v1475
        %v1794 = vpop.f32.mrb[0].mxu0
        %v1795 = vadd.f32 %v1426, %v1794
        %v1796 = vpop.f32.mrb[0].mxu0
        %v1797 = vadd.f32 %v1426, %v1796
        %1798 = vdwg.mxu0
        %1799 = vmatprep.subr.mxu0 %v1257
        %1800 = vmatpush1.msra.mxu0 %v1256
        %1801 = vmatprep.subr.mxu0 %v1273
        %1802 = vmatpush1.msra.mxu0 %v1272
        %1803 = vmatprep.subr.mxu0 %v1289
        %1804 = vmatpush1.msra.mxu0 %v1288
        %1805 = vmatprep.subr.mxu0 %v1305
        %1806 = vmatpush1.msra.mxu0 %v1304
        %1807 = vmatprep.subr.mxu0 0.0
        %1808 = vmatpush1.msra.mxu0 0.0
        %1809 = vmatprep.subr.mxu0 0.0
        %1810 = vmatpush1.msra.mxu0 0.0
        %1811 = vmatprep.subr.mxu0 0.0
        %1812 = vmatpush1.msra.mxu0 0.0
        %1813 = vmatprep.subr.mxu0 0.0
        %1814 = vmatpush1.msra.mxu0 0.0
        %1815 = vmatprep.subr.mxu0 0.0
        %1816 = vmatpush1.msra.mxu0 0.0
        %1817 = vmatprep.subr.mxu0 0.0
        %1818 = vmatpush1.msra.mxu0 0.0
        %1819 = vmatprep.subr.mxu0 0.0
        %1820 = vmatpush1.msra.mxu0 0.0
        %1821 = vmatprep.subr.mxu0 0.0
        %1822 = vmatpush1.msra.mxu0 0.0
        %1823 = vmatprep.subr.mxu0 0.0
        %1824 = vmatpush1.msra.mxu0 0.0
        %1825 = vmatprep.subr.mxu0 0.0
        %1826 = vmatpush1.msra.mxu0 0.0
        %1827 = vmatprep.subr.mxu0 0.0
        %1828 = vmatpush1.msra.mxu0 0.0
        %1829 = vmatprep.subr.mxu0 0.0
        %1830 = vmatpush1.msra.mxu0 0.0
        %1831 = vmatprep.subr.mxu0 0.0
        %1832 = vmatpush1.msra.mxu0 0.0
        %1833 = vmatprep.subr.mxu0 0.0
        %1834 = vmatpush1.msra.mxu0 0.0
        %1835 = vmatprep.subr.mxu0 0.0
        %1836 = vmatpush1.msra.mxu0 0.0
        %1837 = vmatprep.subr.mxu0 0.0
        %1838 = vmatpush1.msra.mxu0 0.0
        %1839 = vmatprep.subr.mxu0 0.0
        %1840 = vmatpush1.msra.mxu0 0.0
        %1841 = vmatprep.subr.mxu0 0.0
        %1842 = vmatpush1.msra.mxu0 0.0
        %1843 = vmatprep.subr.mxu0 0.0
        %1844 = vmatpush1.msra.mxu0 0.0
        %1845 = vmatprep.subr.mxu0 0.0
        %1846 = vmatpush1.msra.mxu0 0.0
        %1847 = vmatprep.subr.mxu0 0.0
        %1848 = vmatpush1.msra.mxu0 0.0
        %1849 = vmatprep.subr.mxu0 0.0
        %1850 = vmatpush1.msra.mxu0 0.0
        %1851 = vmatprep.subr.mxu0 0.0
        %1852 = vmatpush1.msra.mxu0 0.0
        %1853 = vmatprep.subr.mxu0 0.0
        %1854 = vmatpush1.msra.mxu0 0.0
        %1855 = vmatprep.subr.mxu0 0.0
        %1856 = vmatpush1.msra.mxu0 0.0
        %1857 = vmatprep.subr.mxu0 0.0
        %1858 = vmatpush1.msra.mxu0 0.0
        %1859 = vmatprep.subr.mxu0 0.0
        %1860 = vmatpush1.msra.mxu0 0.0
        %1861 = vmatprep.subr.mxu0 0.0
        %1862 = vmatpush1.msra.mxu0 0.0
        %1863 = vmatprep.mubr.f32.mxu0 0.0
        %1864 = vmatmul.mubr.f32.gmra.mrb[0].mxu0 %v1430
        %v1865 = vpop.f32.mrb[0].mxu0
        %v1866 = vadd.f32 %v1351, %v1865
        %v1867 = vpop.f32.mrb[0].mxu0
        %v1868 = vadd.f32 %v1351, %v1867
        %1869 = vmatprep.mubr.f32.mxu0 0.0
        %1870 = vmatmul.mubr.f32.gmra.mrb[0].mxu0 %v1433
        %v1871 = vpop.f32.mrb[0].mxu0
        %v1872 = vadd.f32 %v1356, %v1871
        %v1873 = vpop.f32.mrb[0].mxu0
        %v1874 = vadd.f32 %v1356, %v1873
        %1875 = vmatprep.mubr.f32.mxu0 0.0
        %1876 = vmatmul.mubr.f32.gmra.mrb[0].mxu0 %v1436
        %v1877 = vpop.f32.mrb[0].mxu0
        %v1878 = vadd.f32 %v1361, %v1877
        %v1879 = vpop.f32.mrb[0].mxu0
        %v1880 = vadd.f32 %v1361, %v1879
        %1881 = vmatprep.mubr.f32.mxu0 0.0
        %1882 = vmatmul.mubr.f32.gmra.mrb[0].mxu0 %v1439
        %v1883 = vpop.f32.mrb[0].mxu0
        %v1884 = vadd.f32 %v1366, %v1883
        %v1885 = vpop.f32.mrb[0].mxu0
        %v1886 = vadd.f32 %v1366, %v1885
        %1887 = vmatprep.mubr.f32.mxu0 0.0
        %1888 = vmatmul.mubr.f32.gmra.mrb[0].mxu0 %v1442
        %v1889 = vpop.f32.mrb[0].mxu0
        %v1890 = vadd.f32 %v1371, %v1889
        %v1891 = vpop.f32.mrb[0].mxu0
        %v1892 = vadd.f32 %v1371, %v1891
        %1893 = vmatprep.mubr.f32.mxu0 0.0
        %1894 = vmatmul.mubr.f32.gmra.mrb[0].mxu0 %v1445
        %v1895 = vpop.f32.mrb[0].mxu0
        %v1896 = vadd.f32 %v1376, %v1895
        %v1897 = vpop.f32.mrb[0].mxu0
        %v1898 = vadd.f32 %v1376, %v1897
        %1899 = vmatprep.mubr.f32.mxu0 0.0
        %1900 = vmatmul.mubr.f32.gmra.mrb[0].mxu0 %v1448
        %v1901 = vpop.f32.mrb[0].mxu0
        %v1902 = vadd.f32 %v1381, %v1901
        %v1903 = vpop.f32.mrb[0].mxu0
        %v1904 = vadd.f32 %v1381, %v1903
        %1905 = vmatprep.mubr.f32.mxu0 0.0
        %1906 = vmatmul.mubr.f32.gmra.mrb[0].mxu0 %v1451
        %v1907 = vpop.f32.mrb[0].mxu0
        %v1908 = vadd.f32 %v1386, %v1907
        %v1909 = vpop.f32.mrb[0].mxu0
        %v1910 = vadd.f32 %v1386, %v1909
        %1911 = vmatprep.mubr.f32.mxu0 0.0
        %1912 = vmatmul.mubr.f32.gmra.mrb[0].mxu0 %v1454
        %v1913 = vpop.f32.mrb[0].mxu0
        %v1914 = vadd.f32 %v1391, %v1913
        %v1915 = vpop.f32.mrb[0].mxu0
        %v1916 = vadd.f32 %v1391, %v1915
        %1917 = vmatprep.mubr.f32.mxu0 0.0
        %1918 = vmatmul.mubr.f32.gmra.mrb[0].mxu0 %v1457
        %v1919 = vpop.f32.mrb[0].mxu0
        %v1920 = vadd.f32 %v1396, %v1919
        %v1921 = vpop.f32.mrb[0].mxu0
        %v1922 = vadd.f32 %v1396, %v1921
        %1923 = vmatprep.mubr.f32.mxu0 0.0
        %1924 = vmatmul.mubr.f32.gmra.mrb[0].mxu0 %v1460
        %v1925 = vpop.f32.mrb[0].mxu0
        %v1926 = vadd.f32 %v1401, %v1925
        %v1927 = vpop.f32.mrb[0].mxu0
        %v1928 = vadd.f32 %v1401, %v1927
        %1929 = vmatprep.mubr.f32.mxu0 0.0
        %1930 = vmatmul.mubr.f32.gmra.mrb[0].mxu0 %v1463
        %v1931 = vpop.f32.mrb[0].mxu0
        %v1932 = vadd.f32 %v1406, %v1931
        %v1933 = vpop.f32.mrb[0].mxu0
        %v1934 = vadd.f32 %v1406, %v1933
        %1935 = vmatprep.mubr.f32.mxu0 0.0
        %1936 = vmatmul.mubr.f32.gmra.mrb[0].mxu0 %v1466
        %v1937 = vpop.f32.mrb[0].mxu0
        %v1938 = vadd.f32 %v1411, %v1937
        %v1939 = vpop.f32.mrb[0].mxu0
        %v1940 = vadd.f32 %v1411, %v1939
        %1941 = vmatprep.mubr.f32.mxu0 0.0
        %1942 = vmatmul.mubr.f32.gmra.mrb[0].mxu0 %v1469
        %v1943 = vpop.f32.mrb[0].mxu0
        %v1944 = vadd.f32 %v1416, %v1943
        %v1945 = vpop.f32.mrb[0].mxu0
        %v1946 = vadd.f32 %v1416, %v1945
        %1947 = vmatprep.mubr.f32.mxu0 0.0
        %1948 = vmatmul.mubr.f32.gmra.mrb[0].mxu0 %v1472
        %v1949 = vpop.f32.mrb[0].mxu0
        %v1950 = vadd.f32 %v1421, %v1949
        %v1951 = vpop.f32.mrb[0].mxu0
        %v1952 = vadd.f32 %v1421, %v1951
        %1953 = vmatprep.mubr.f32.mxu0 0.0
        %1954 = vmatmul.mubr.f32.gmra.mrb[0].mxu0 %v1475
        %v1955 = vpop.f32.mrb[0].mxu0
        %v1956 = vadd.f32 %v1426, %v1955
        %v1957 = vpop.f32.mrb[0].mxu0
        %v1958 = vadd.f32 %v1426, %v1957
        %1959 = vdwg.mxu0
        %1960 = vmatprep.subr.mxu0 %v1259
        %1961 = vmatpush1.msra.mxu0 %v1258
        %1962 = vmatprep.subr.mxu0 %v1275
        %1963 = vmatpush1.msra.mxu0 %v1274
        %1964 = vmatprep.subr.mxu0 %v1291
        %1965 = vmatpush1.msra.mxu0 %v1290
        %1966 = vmatprep.subr.mxu0 %v1307
        %1967 = vmatpush1.msra.mxu0 %v1306
        %1968 = vmatprep.subr.mxu0 0.0
        %1969 = vmatpush1.msra.mxu0 0.0
        %1970 = vmatprep.subr.mxu0 0.0
        %1971 = vmatpush1.msra.mxu0 0.0
        %1972 = vmatprep.subr.mxu0 0.0
        %1973 = vmatpush1.msra.mxu0 0.0
        %1974 = vmatprep.subr.mxu0 0.0
        %1975 = vmatpush1.msra.mxu0 0.0
        %1976 = vmatprep.subr.mxu0 0.0
        %1977 = vmatpush1.msra.mxu0 0.0
        %1978 = vmatprep.subr.mxu0 0.0
        %1979 = vmatpush1.msra.mxu0 0.0
        %1980 = vmatprep.subr.mxu0 0.0
        %1981 = vmatpush1.msra.mxu0 0.0
        %1982 = vmatprep.subr.mxu0 0.0
        %1983 = vmatpush1.msra.mxu0 0.0
        %1984 = vmatprep.subr.mxu0 0.0
        %1985 = vmatpush1.msra.mxu0 0.0
        %1986 = vmatprep.subr.mxu0 0.0
        %1987 = vmatpush1.msra.mxu0 0.0
        %1988 = vmatprep.subr.mxu0 0.0
        %1989 = vmatpush1.msra.mxu0 0.0
        %1990 = vmatprep.subr.mxu0 0.0
        %1991 = vmatpush1.msra.mxu0 0.0
        %1992 = vmatprep.subr.mxu0 0.0
        %1993 = vmatpush1.msra.mxu0 0.0
        %1994 = vmatprep.subr.mxu0 0.0
        %1995 = vmatpush1.msra.mxu0 0.0
        %1996 = vmatprep.subr.mxu0 0.0
        %1997 = vmatpush1.msra.mxu0 0.0
        %1998 = vmatprep.subr.mxu0 0.0
        %1999 = vmatpush1.msra.mxu0 0.0
        %2000 = vmatprep.subr.mxu0 0.0
        %2001 = vmatpush1.msra.mxu0 0.0
        %2002 = vmatprep.subr.mxu0 0.0
        %2003 = vmatpush1.msra.mxu0 0.0
        %2004 = vmatprep.subr.mxu0 0.0
        %2005 = vmatpush1.msra.mxu0 0.0
        %2006 = vmatprep.subr.mxu0 0.0
        %2007 = vmatpush1.msra.mxu0 0.0
        %2008 = vmatprep.subr.mxu0 0.0
        %2009 = vmatpush1.msra.mxu0 0.0
        %2010 = vmatprep.subr.mxu0 0.0
        %2011 = vmatpush1.msra.mxu0 0.0
        %2012 = vmatprep.subr.mxu0 0.0
        %2013 = vmatpush1.msra.mxu0 0.0
        %2014 = vmatprep.subr.mxu0 0.0
        %2015 = vmatpush1.msra.mxu0 0.0
        %2016 = vmatprep.subr.mxu0 0.0
        %2017 = vmatpush1.msra.mxu0 0.0
        %2018 = vmatprep.subr.mxu0 0.0
        %2019 = vmatpush1.msra.mxu0 0.0
        %2020 = vmatprep.subr.mxu0 0.0
        %2021 = vmatpush1.msra.mxu0 0.0
        %2022 = vmatprep.subr.mxu0 0.0
        %2023 = vmatpush1.msra.mxu0 0.0
        %2024 = vmatprep.mubr.f32.mxu0 0.0
        %2025 = vmatmul.mubr.f32.gmra.mrb[0].mxu0 %v1430
        %v2026 = vpop.f32.mrb[0].mxu0
        %v2027 = vadd.f32 %v1351, %v2026
        %v2028 = vpop.f32.mrb[0].mxu0
        %v2029 = vadd.f32 %v1351, %v2028
        %2030 = vmatprep.mubr.f32.mxu0 0.0
        %2031 = vmatmul.mubr.f32.gmra.mrb[0].mxu0 %v1433
        %v2032 = vpop.f32.mrb[0].mxu0
        %v2033 = vadd.f32 %v1356, %v2032
        %v2034 = vpop.f32.mrb[0].mxu0
        %v2035 = vadd.f32 %v1356, %v2034
        %2036 = vmatprep.mubr.f32.mxu0 0.0
        %2037 = vmatmul.mubr.f32.gmra.mrb[0].mxu0 %v1436
        %v2038 = vpop.f32.mrb[0].mxu0
        %v2039 = vadd.f32 %v1361, %v2038
        %v2040 = vpop.f32.mrb[0].mxu0
        %v2041 = vadd.f32 %v1361, %v2040
        %2042 = vmatprep.mubr.f32.mxu0 0.0
        %2043 = vmatmul.mubr.f32.gmra.mrb[0].mxu0 %v1439
        %v2044 = vpop.f32.mrb[0].mxu0
        %v2045 = vadd.f32 %v1366, %v2044
        %v2046 = vpop.f32.mrb[0].mxu0
        %v2047 = vadd.f32 %v1366, %v2046
        %2048 = vmatprep.mubr.f32.mxu0 0.0
        %2049 = vmatmul.mubr.f32.gmra.mrb[0].mxu0 %v1442
        %v2050 = vpop.f32.mrb[0].mxu0
        %v2051 = vadd.f32 %v1371, %v2050
        %v2052 = vpop.f32.mrb[0].mxu0
        %v2053 = vadd.f32 %v1371, %v2052
        %2054 = vmatprep.mubr.f32.mxu0 0.0
        %2055 = vmatmul.mubr.f32.gmra.mrb[0].mxu0 %v1445
        %v2056 = vpop.f32.mrb[0].mxu0
        %v2057 = vadd.f32 %v1376, %v2056
        %v2058 = vpop.f32.mrb[0].mxu0
        %v2059 = vadd.f32 %v1376, %v2058
        %2060 = vmatprep.mubr.f32.mxu0 0.0
        %2061 = vmatmul.mubr.f32.gmra.mrb[0].mxu0 %v1448
        %v2062 = vpop.f32.mrb[0].mxu0
        %v2063 = vadd.f32 %v1381, %v2062
        %v2064 = vpop.f32.mrb[0].mxu0
        %v2065 = vadd.f32 %v1381, %v2064
        %2066 = vmatprep.mubr.f32.mxu0 0.0
        %2067 = vmatmul.mubr.f32.gmra.mrb[0].mxu0 %v1451
        %v2068 = vpop.f32.mrb[0].mxu0
        %v2069 = vadd.f32 %v1386, %v2068
        %v2070 = vpop.f32.mrb[0].mxu0
        %v2071 = vadd.f32 %v1386, %v2070
        %2072 = vmatprep.mubr.f32.mxu0 0.0
        %2073 = vmatmul.mubr.f32.gmra.mrb[0].mxu0 %v1454
        %v2074 = vpop.f32.mrb[0].mxu0
        %v2075 = vadd.f32 %v1391, %v2074
        %v2076 = vpop.f32.mrb[0].mxu0
        %v2077 = vadd.f32 %v1391, %v2076
        %2078 = vmatprep.mubr.f32.mxu0 0.0
        %2079 = vmatmul.mubr.f32.gmra.mrb[0].mxu0 %v1457
        %v2080 = vpop.f32.mrb[0].mxu0
        %v2081 = vadd.f32 %v1396, %v2080
        %v2082 = vpop.f32.mrb[0].mxu0
        %v2083 = vadd.f32 %v1396, %v2082
        %2084 = vmatprep.mubr.f32.mxu0 0.0
        %2085 = vmatmul.mubr.f32.gmra.mrb[0].mxu0 %v1460
        %v2086 = vpop.f32.mrb[0].mxu0
        %v2087 = vadd.f32 %v1401, %v2086
        %v2088 = vpop.f32.mrb[0].mxu0
        %v2089 = vadd.f32 %v1401, %v2088
        %2090 = vmatprep.mubr.f32.mxu0 0.0
        %2091 = vmatmul.mubr.f32.gmra.mrb[0].mxu0 %v1463
        %v2092 = vpop.f32.mrb[0].mxu0
        %v2093 = vadd.f32 %v1406, %v2092
        %v2094 = vpop.f32.mrb[0].mxu0
        %v2095 = vadd.f32 %v1406, %v2094
        %2096 = vmatprep.mubr.f32.mxu0 0.0
        %2097 = vmatmul.mubr.f32.gmra.mrb[0].mxu0 %v1466
        %v2098 = vpop.f32.mrb[0].mxu0
        %v2099 = vadd.f32 %v1411, %v2098
        %v2100 = vpop.f32.mrb[0].mxu0
        %v2101 = vadd.f32 %v1411, %v2100
        %2102 = vmatprep.mubr.f32.mxu0 0.0
        %2103 = vmatmul.mubr.f32.gmra.mrb[0].mxu0 %v1469
        %v2104 = vpop.f32.mrb[0].mxu0
        %v2105 = vadd.f32 %v1416, %v2104
        %v2106 = vpop.f32.mrb[0].mxu0
        %v2107 = vadd.f32 %v1416, %v2106
        %2108 = vmatprep.mubr.f32.mxu0 0.0
        %2109 = vmatmul.mubr.f32.gmra.mrb[0].mxu0 %v1472
        %v2110 = vpop.f32.mrb[0].mxu0
        %v2111 = vadd.f32 %v1421, %v2110
        %v2112 = vpop.f32.mrb[0].mxu0
        %v2113 = vadd.f32 %v1421, %v2112
        %2114 = vmatprep.mubr.f32.mxu0 0.0
        %2115 = vmatmul.mubr.f32.gmra.mrb[0].mxu0 %v1475
        %v2116 = vpop.f32.mrb[0].mxu0
        %v2117 = vadd.f32 %v1426, %v2116
        %v2118 = vpop.f32.mrb[0].mxu0
        %v2119 = vadd.f32 %v1426, %v2118
        %2120 = vdwg.mxu0
        %2121 = vmatprep.subr.mxu0 %v1261
        %2122 = vmatpush1.msra.mxu0 %v1260
        %2123 = vmatprep.subr.mxu0 %v1277
        %2124 = vmatpush1.msra.mxu0 %v1276
        %2125 = vmatprep.subr.mxu0 %v1293
        %2126 = vmatpush1.msra.mxu0 %v1292
        %2127 = vmatprep.subr.mxu0 %v1309
        %2128 = vmatpush1.msra.mxu0 %v1308
        %2129 = vmatprep.subr.mxu0 0.0
        %2130 = vmatpush1.msra.mxu0 0.0
        %2131 = vmatprep.subr.mxu0 0.0
        %2132 = vmatpush1.msra.mxu0 0.0
        %2133 = vmatprep.subr.mxu0 0.0
        %2134 = vmatpush1.msra.mxu0 0.0
        %2135 = vmatprep.subr.mxu0 0.0
        %2136 = vmatpush1.msra.mxu0 0.0
        %2137 = vmatprep.subr.mxu0 0.0
        %2138 = vmatpush1.msra.mxu0 0.0
        %2139 = vmatprep.subr.mxu0 0.0
        %2140 = vmatpush1.msra.mxu0 0.0
        %2141 = vmatprep.subr.mxu0 0.0
        %2142 = vmatpush1.msra.mxu0 0.0
        %2143 = vmatprep.subr.mxu0 0.0
        %2144 = vmatpush1.msra.mxu0 0.0
        %2145 = vmatprep.subr.mxu0 0.0
        %2146 = vmatpush1.msra.mxu0 0.0
        %2147 = vmatprep.subr.mxu0 0.0
        %2148 = vmatpush1.msra.mxu0 0.0
        %2149 = vmatprep.subr.mxu0 0.0
        %2150 = vmatpush1.msra.mxu0 0.0
        %2151 = vmatprep.subr.mxu0 0.0
        %2152 = vmatpush1.msra.mxu0 0.0
        %2153 = vmatprep.subr.mxu0 0.0
        %2154 = vmatpush1.msra.mxu0 0.0
        %2155 = vmatprep.subr.mxu0 0.0
        %2156 = vmatpush1.msra.mxu0 0.0
        %2157 = vmatprep.subr.mxu0 0.0
        %2158 = vmatpush1.msra.mxu0 0.0
        %2159 = vmatprep.subr.mxu0 0.0
        %2160 = vmatpush1.msra.mxu0 0.0
        %2161 = vmatprep.subr.mxu0 0.0
        %2162 = vmatpush1.msra.mxu0 0.0
        %2163 = vmatprep.subr.mxu0 0.0
        %2164 = vmatpush1.msra.mxu0 0.0
        %2165 = vmatprep.subr.mxu0 0.0
        %2166 = vmatpush1.msra.mxu0 0.0
        %2167 = vmatprep.subr.mxu0 0.0
        %2168 = vmatpush1.msra.mxu0 0.0
        %2169 = vmatprep.subr.mxu0 0.0
        %2170 = vmatpush1.msra.mxu0 0.0
        %2171 = vmatprep.subr.mxu0 0.0
        %2172 = vmatpush1.msra.mxu0 0.0
        %2173 = vmatprep.subr.mxu0 0.0
        %2174 = vmatpush1.msra.mxu0 0.0
        %2175 = vmatprep.subr.mxu0 0.0
        %2176 = vmatpush1.msra.mxu0 0.0
        %2177 = vmatprep.subr.mxu0 0.0
        %2178 = vmatpush1.msra.mxu0 0.0
        %2179 = vmatprep.subr.mxu0 0.0
        %2180 = vmatpush1.msra.mxu0 0.0
        %2181 = vmatprep.subr.mxu0 0.0
        %2182 = vmatpush1.msra.mxu0 0.0
        %2183 = vmatprep.subr.mxu0 0.0
        %2184 = vmatpush1.msra.mxu0 0.0
        %2185 = vmatprep.mubr.f32.mxu0 0.0
        %2186 = vmatmul.mubr.f32.gmra.mrb[0].mxu0 %v1430
        %v2187 = vpop.f32.mrb[0].mxu0
        %v2188 = vadd.f32 %v1351, %v2187
        %v2189 = vpop.f32.mrb[0].mxu0
        %v2190 = vadd.f32 %v1351, %v2189
        %2191 = vmatprep.mubr.f32.mxu0 0.0
        %2192 = vmatmul.mubr.f32.gmra.mrb[0].mxu0 %v1433
        %v2193 = vpop.f32.mrb[0].mxu0
        %v2194 = vadd.f32 %v1356, %v2193
        %v2195 = vpop.f32.mrb[0].mxu0
        %v2196 = vadd.f32 %v1356, %v2195
        %2197 = vmatprep.mubr.f32.mxu0 0.0
        %2198 = vmatmul.mubr.f32.gmra.mrb[0].mxu0 %v1436
        %v2199 = vpop.f32.mrb[0].mxu0
        %v2200 = vadd.f32 %v1361, %v2199
        %v2201 = vpop.f32.mrb[0].mxu0
        %v2202 = vadd.f32 %v1361, %v2201
        %2203 = vmatprep.mubr.f32.mxu0 0.0
        %2204 = vmatmul.mubr.f32.gmra.mrb[0].mxu0 %v1439
        %v2205 = vpop.f32.mrb[0].mxu0
        %v2206 = vadd.f32 %v1366, %v2205
        %v2207 = vpop.f32.mrb[0].mxu0
        %v2208 = vadd.f32 %v1366, %v2207
        %2209 = vmatprep.mubr.f32.mxu0 0.0
        %2210 = vmatmul.mubr.f32.gmra.mrb[0].mxu0 %v1442
        %v2211 = vpop.f32.mrb[0].mxu0
        %v2212 = vadd.f32 %v1371, %v2211
        %v2213 = vpop.f32.mrb[0].mxu0
        %v2214 = vadd.f32 %v1371, %v2213
        %2215 = vmatprep.mubr.f32.mxu0 0.0
        %2216 = vmatmul.mubr.f32.gmra.mrb[0].mxu0 %v1445
        %v2217 = vpop.f32.mrb[0].mxu0
        %v2218 = vadd.f32 %v1376, %v2217
        %v2219 = vpop.f32.mrb[0].mxu0
        %v2220 = vadd.f32 %v1376, %v2219
        %2221 = vmatprep.mubr.f32.mxu0 0.0
        %2222 = vmatmul.mubr.f32.gmra.mrb[0].mxu0 %v1448
        %v2223 = vpop.f32.mrb[0].mxu0
        %v2224 = vadd.f32 %v1381, %v2223
        %v2225 = vpop.f32.mrb[0].mxu0
        %v2226 = vadd.f32 %v1381, %v2225
        %2227 = vmatprep.mubr.f32.mxu0 0.0
        %2228 = vmatmul.mubr.f32.gmra.mrb[0].mxu0 %v1451
        %v2229 = vpop.f32.mrb[0].mxu0
        %v2230 = vadd.f32 %v1386, %v2229
        %v2231 = vpop.f32.mrb[0].mxu0
        %v2232 = vadd.f32 %v1386, %v2231
        %2233 = vmatprep.mubr.f32.mxu0 0.0
        %2234 = vmatmul.mubr.f32.gmra.mrb[0].mxu0 %v1454
        %v2235 = vpop.f32.mrb[0].mxu0
        %v2236 = vadd.f32 %v1391, %v2235
        %v2237 = vpop.f32.mrb[0].mxu0
        %v2238 = vadd.f32 %v1391, %v2237
        %2239 = vmatprep.mubr.f32.mxu0 0.0
        %2240 = vmatmul.mubr.f32.gmra.mrb[0].mxu0 %v1457
        %v2241 = vpop.f32.mrb[0].mxu0
        %v2242 = vadd.f32 %v1396, %v2241
        %v2243 = vpop.f32.mrb[0].mxu0
        %v2244 = vadd.f32 %v1396, %v2243
        %2245 = vmatprep.mubr.f32.mxu0 0.0
        %2246 = vmatmul.mubr.f32.gmra.mrb[0].mxu0 %v1460
        %v2247 = vpop.f32.mrb[0].mxu0
        %v2248 = vadd.f32 %v1401, %v2247
        %v2249 = vpop.f32.mrb[0].mxu0
        %v2250 = vadd.f32 %v1401, %v2249
        %2251 = vmatprep.mubr.f32.mxu0 0.0
        %2252 = vmatmul.mubr.f32.gmra.mrb[0].mxu0 %v1463
        %v2253 = vpop.f32.mrb[0].mxu0
        %v2254 = vadd.f32 %v1406, %v2253
        %v2255 = vpop.f32.mrb[0].mxu0
        %v2256 = vadd.f32 %v1406, %v2255
        %2257 = vmatprep.mubr.f32.mxu0 0.0
        %2258 = vmatmul.mubr.f32.gmra.mrb[0].mxu0 %v1466
        %v2259 = vpop.f32.mrb[0].mxu0
        %v2260 = vadd.f32 %v1411, %v2259
        %v2261 = vpop.f32.mrb[0].mxu0
        %v2262 = vadd.f32 %v1411, %v2261
        %2263 = vmatprep.mubr.f32.mxu0 0.0
        %2264 = vmatmul.mubr.f32.gmra.mrb[0].mxu0 %v1469
        %v2265 = vpop.f32.mrb[0].mxu0
        %v2266 = vadd.f32 %v1416, %v2265
        %v2267 = vpop.f32.mrb[0].mxu0
        %v2268 = vadd.f32 %v1416, %v2267
        %2269 = vmatprep.mubr.f32.mxu0 0.0
        %2270 = vmatmul.mubr.f32.gmra.mrb[0].mxu0 %v1472
        %v2271 = vpop.f32.mrb[0].mxu0
        %v2272 = vadd.f32 %v1421, %v2271
        %v2273 = vpop.f32.mrb[0].mxu0
        %v2274 = vadd.f32 %v1421, %v2273
        %2275 = vmatprep.mubr.f32.mxu0 0.0
        %2276 = vmatmul.mubr.f32.gmra.mrb[0].mxu0 %v1475
        %v2277 = vpop.f32.mrb[0].mxu0
        %v2278 = vadd.f32 %v1426, %v2277
        %v2279 = vpop.f32.mrb[0].mxu0
        %v2280 = vadd.f32 %v1426, %v2279
        %2281 = vdwg.mxu0
        %2282 = vmatprep.subr.mxu0 %v1263
        %2283 = vmatpush1.msra.mxu0 %v1262
        %2284 = vmatprep.subr.mxu0 %v1279
        %2285 = vmatpush1.msra.mxu0 %v1278
        %2286 = vmatprep.subr.mxu0 %v1295
        %2287 = vmatpush1.msra.mxu0 %v1294
        %2288 = vmatprep.subr.mxu0 %v1311
        %2289 = vmatpush1.msra.mxu0 %v1310
        %2290 = vmatprep.subr.mxu0 0.0
        %2291 = vmatpush1.msra.mxu0 0.0
        %2292 = vmatprep.subr.mxu0 0.0
        %2293 = vmatpush1.msra.mxu0 0.0
        %2294 = vmatprep.subr.mxu0 0.0
        %2295 = vmatpush1.msra.mxu0 0.0
        %2296 = vmatprep.subr.mxu0 0.0
        %2297 = vmatpush1.msra.mxu0 0.0
        %2298 = vmatprep.subr.mxu0 0.0
        %2299 = vmatpush1.msra.mxu0 0.0
        %2300 = vmatprep.subr.mxu0 0.0
        %2301 = vmatpush1.msra.mxu0 0.0
        %2302 = vmatprep.subr.mxu0 0.0
        %2303 = vmatpush1.msra.mxu0 0.0
        %2304 = vmatprep.subr.mxu0 0.0
        %2305 = vmatpush1.msra.mxu0 0.0
        %2306 = vmatprep.subr.mxu0 0.0
        %2307 = vmatpush1.msra.mxu0 0.0
        %2308 = vmatprep.subr.mxu0 0.0
        %2309 = vmatpush1.msra.mxu0 0.0
        %2310 = vmatprep.subr.mxu0 0.0
        %2311 = vmatpush1.msra.mxu0 0.0
        %2312 = vmatprep.subr.mxu0 0.0
        %2313 = vmatpush1.msra.mxu0 0.0
        %2314 = vmatprep.subr.mxu0 0.0
        %2315 = vmatpush1.msra.mxu0 0.0
        %2316 = vmatprep.subr.mxu0 0.0
        %2317 = vmatpush1.msra.mxu0 0.0
        %2318 = vmatprep.subr.mxu0 0.0
        %2319 = vmatpush1.msra.mxu0 0.0
        %2320 = vmatprep.subr.mxu0 0.0
        %2321 = vmatpush1.msra.mxu0 0.0
        %2322 = vmatprep.subr.mxu0 0.0
        %2323 = vmatpush1.msra.mxu0 0.0
        %2324 = vmatprep.subr.mxu0 0.0
        %2325 = vmatpush1.msra.mxu0 0.0
        %2326 = vmatprep.subr.mxu0 0.0
        %2327 = vmatpush1.msra.mxu0 0.0
        %2328 = vmatprep.subr.mxu0 0.0
        %2329 = vmatpush1.msra.mxu0 0.0
        %2330 = vmatprep.subr.mxu0 0.0
        %2331 = vmatpush1.msra.mxu0 0.0
        %2332 = vmatprep.subr.mxu0 0.0
        %2333 = vmatpush1.msra.mxu0 0.0
        %2334 = vmatprep.subr.mxu0 0.0
        %2335 = vmatpush1.msra.mxu0 0.0
        %2336 = vmatprep.subr.mxu0 0.0
        %2337 = vmatpush1.msra.mxu0 0.0
        %2338 = vmatprep.subr.mxu0 0.0
        %2339 = vmatpush1.msra.mxu0 0.0
        %2340 = vmatprep.subr.mxu0 0.0
        %2341 = vmatpush1.msra.mxu0 0.0
        %2342 = vmatprep.subr.mxu0 0.0
        %2343 = vmatpush1.msra.mxu0 0.0
        %2344 = vmatprep.subr.mxu0 0.0
        %2345 = vmatpush1.msra.mxu0 0.0
        %2346 = vmatprep.mubr.f32.mxu0 0.0
        %2347 = vmatmul.mubr.f32.gmra.mrb[0].mxu0 %v1430
        %v2348 = vpop.f32.mrb[0].mxu0
        %v2349 = vadd.f32 %v1351, %v2348
        %v2350 = vpop.f32.mrb[0].mxu0
        %v2351 = vadd.f32 %v1351, %v2350
        %2352 = vmatprep.mubr.f32.mxu0 0.0
        %2353 = vmatmul.mubr.f32.gmra.mrb[0].mxu0 %v1433
        %v2354 = vpop.f32.mrb[0].mxu0
        %v2355 = vadd.f32 %v1356, %v2354
        %v2356 = vpop.f32.mrb[0].mxu0
        %v2357 = vadd.f32 %v1356, %v2356
        %2358 = vmatprep.mubr.f32.mxu0 0.0
        %2359 = vmatmul.mubr.f32.gmra.mrb[0].mxu0 %v1436
        %v2360 = vpop.f32.mrb[0].mxu0
        %v2361 = vadd.f32 %v1361, %v2360
        %v2362 = vpop.f32.mrb[0].mxu0
        %v2363 = vadd.f32 %v1361, %v2362
        %2364 = vmatprep.mubr.f32.mxu0 0.0
        %2365 = vmatmul.mubr.f32.gmra.mrb[0].mxu0 %v1439
        %v2366 = vpop.f32.mrb[0].mxu0
        %v2367 = vadd.f32 %v1366, %v2366
        %v2368 = vpop.f32.mrb[0].mxu0
        %v2369 = vadd.f32 %v1366, %v2368
        %2370 = vmatprep.mubr.f32.mxu0 0.0
        %2371 = vmatmul.mubr.f32.gmra.mrb[0].mxu0 %v1442
        %v2372 = vpop.f32.mrb[0].mxu0
        %v2373 = vadd.f32 %v1371, %v2372
        %v2374 = vpop.f32.mrb[0].mxu0
        %v2375 = vadd.f32 %v1371, %v2374
        %2376 = vmatprep.mubr.f32.mxu0 0.0
        %2377 = vmatmul.mubr.f32.gmra.mrb[0].mxu0 %v1445
        %v2378 = vpop.f32.mrb[0].mxu0
        %v2379 = vadd.f32 %v1376, %v2378
        %v2380 = vpop.f32.mrb[0].mxu0
        %v2381 = vadd.f32 %v1376, %v2380
        %2382 = vmatprep.mubr.f32.mxu0 0.0
        %2383 = vmatmul.mubr.f32.gmra.mrb[0].mxu0 %v1448
        %v2384 = vpop.f32.mrb[0].mxu0
        %v2385 = vadd.f32 %v1381, %v2384
        %v2386 = vpop.f32.mrb[0].mxu0
        %v2387 = vadd.f32 %v1381, %v2386
        %2388 = vmatprep.mubr.f32.mxu0 0.0
        %2389 = vmatmul.mubr.f32.gmra.mrb[0].mxu0 %v1451
        %v2390 = vpop.f32.mrb[0].mxu0
        %v2391 = vadd.f32 %v1386, %v2390
        %v2392 = vpop.f32.mrb[0].mxu0
        %v2393 = vadd.f32 %v1386, %v2392
        %2394 = vmatprep.mubr.f32.mxu0 0.0
        %2395 = vmatmul.mubr.f32.gmra.mrb[0].mxu0 %v1454
        %v2396 = vpop.f32.mrb[0].mxu0
        %v2397 = vadd.f32 %v1391, %v2396
        %v2398 = vpop.f32.mrb[0].mxu0
        %v2399 = vadd.f32 %v1391, %v2398
        %2400 = vmatprep.mubr.f32.mxu0 0.0
        %2401 = vmatmul.mubr.f32.gmra.mrb[0].mxu0 %v1457
        %v2402 = vpop.f32.mrb[0].mxu0
        %v2403 = vadd.f32 %v1396, %v2402
        %v2404 = vpop.f32.mrb[0].mxu0
        %v2405 = vadd.f32 %v1396, %v2404
        %2406 = vmatprep.mubr.f32.mxu0 0.0
        %2407 = vmatmul.mubr.f32.gmra.mrb[0].mxu0 %v1460
        %v2408 = vpop.f32.mrb[0].mxu0
        %v2409 = vadd.f32 %v1401, %v2408
        %v2410 = vpop.f32.mrb[0].mxu0
        %v2411 = vadd.f32 %v1401, %v2410
        %2412 = vmatprep.mubr.f32.mxu0 0.0
        %2413 = vmatmul.mubr.f32.gmra.mrb[0].mxu0 %v1463
        %v2414 = vpop.f32.mrb[0].mxu0
        %v2415 = vadd.f32 %v1406, %v2414
        %v2416 = vpop.f32.mrb[0].mxu0
        %v2417 = vadd.f32 %v1406, %v2416
        %2418 = vmatprep.mubr.f32.mxu0 0.0
        %2419 = vmatmul.mubr.f32.gmra.mrb[0].mxu0 %v1466
        %v2420 = vpop.f32.mrb[0].mxu0
        %v2421 = vadd.f32 %v1411, %v2420
        %v2422 = vpop.f32.mrb[0].mxu0
        %v2423 = vadd.f32 %v1411, %v2422
        %2424 = vmatprep.mubr.f32.mxu0 0.0
        %2425 = vmatmul.mubr.f32.gmra.mrb[0].mxu0 %v1469
        %v2426 = vpop.f32.mrb[0].mxu0
        %v2427 = vadd.f32 %v1416, %v2426
        %v2428 = vpop.f32.mrb[0].mxu0
        %v2429 = vadd.f32 %v1416, %v2428
        %2430 = vmatprep.mubr.f32.mxu0 0.0
        %2431 = vmatmul.mubr.f32.gmra.mrb[0].mxu0 %v1472
        %v2432 = vpop.f32.mrb[0].mxu0
        %v2433 = vadd.f32 %v1421, %v2432
        %v2434 = vpop.f32.mrb[0].mxu0
        %v2435 = vadd.f32 %v1421, %v2434
        %2436 = vmatprep.mubr.f32.mxu0 0.0
        %2437 = vmatmul.mubr.f32.gmra.mrb[0].mxu0 %v1475
        %v2438 = vpop.f32.mrb[0].mxu0
        %v2439 = vadd.f32 %v1426, %v2438
        %v2440 = vpop.f32.mrb[0].mxu0
        %v2441 = vadd.f32 %v1426, %v2440
        %2442 = vdwg.mxu0
        %2443 = vmatprep.subr.mxu0 %v1265
        %2444 = vmatpush1.msra.mxu0 %v1264
        %2445 = vmatprep.subr.mxu0 %v1281
        %2446 = vmatpush1.msra.mxu0 %v1280
        %2447 = vmatprep.subr.mxu0 %v1297
        %2448 = vmatpush1.msra.mxu0 %v1296
        %2449 = vmatprep.subr.mxu0 %v1313
        %2450 = vmatpush1.msra.mxu0 %v1312
        %2451 = vmatprep.subr.mxu0 0.0
        %2452 = vmatpush1.msra.mxu0 0.0
        %2453 = vmatprep.subr.mxu0 0.0
        %2454 = vmatpush1.msra.mxu0 0.0
        %2455 = vmatprep.subr.mxu0 0.0
        %2456 = vmatpush1.msra.mxu0 0.0
        %2457 = vmatprep.subr.mxu0 0.0
        %2458 = vmatpush1.msra.mxu0 0.0
        %2459 = vmatprep.subr.mxu0 0.0
        %2460 = vmatpush1.msra.mxu0 0.0
        %2461 = vmatprep.subr.mxu0 0.0
        %2462 = vmatpush1.msra.mxu0 0.0
        %2463 = vmatprep.subr.mxu0 0.0
        %2464 = vmatpush1.msra.mxu0 0.0
        %2465 = vmatprep.subr.mxu0 0.0
        %2466 = vmatpush1.msra.mxu0 0.0
        %2467 = vmatprep.subr.mxu0 0.0
        %2468 = vmatpush1.msra.mxu0 0.0
        %2469 = vmatprep.subr.mxu0 0.0
        %2470 = vmatpush1.msra.mxu0 0.0
        %2471 = vmatprep.subr.mxu0 0.0
        %2472 = vmatpush1.msra.mxu0 0.0
        %2473 = vmatprep.subr.mxu0 0.0
        %2474 = vmatpush1.msra.mxu0 0.0
        %2475 = vmatprep.subr.mxu0 0.0
        %2476 = vmatpush1.msra.mxu0 0.0
        %2477 = vmatprep.subr.mxu0 0.0
        %2478 = vmatpush1.msra.mxu0 0.0
        %2479 = vmatprep.subr.mxu0 0.0
        %2480 = vmatpush1.msra.mxu0 0.0
        %2481 = vmatprep.subr.mxu0 0.0
        %2482 = vmatpush1.msra.mxu0 0.0
        %2483 = vmatprep.subr.mxu0 0.0
        %2484 = vmatpush1.msra.mxu0 0.0
        %2485 = vmatprep.subr.mxu0 0.0
        %2486 = vmatpush1.msra.mxu0 0.0
        %2487 = vmatprep.subr.mxu0 0.0
        %2488 = vmatpush1.msra.mxu0 0.0
        %2489 = vmatprep.subr.mxu0 0.0
        %2490 = vmatpush1.msra.mxu0 0.0
        %2491 = vmatprep.subr.mxu0 0.0
        %2492 = vmatpush1.msra.mxu0 0.0
        %2493 = vmatprep.subr.mxu0 0.0
        %2494 = vmatpush1.msra.mxu0 0.0
        %2495 = vmatprep.subr.mxu0 0.0
        %2496 = vmatpush1.msra.mxu0 0.0
        %2497 = vmatprep.subr.mxu0 0.0
        %2498 = vmatpush1.msra.mxu0 0.0
        %2499 = vmatprep.subr.mxu0 0.0
        %2500 = vmatpush1.msra.mxu0 0.0
        %2501 = vmatprep.subr.mxu0 0.0
        %2502 = vmatpush1.msra.mxu0 0.0
        %2503 = vmatprep.subr.mxu0 0.0
        %2504 = vmatpush1.msra.mxu0 0.0
        %2505 = vmatprep.subr.mxu0 0.0
        %2506 = vmatpush1.msra.mxu0 0.0
        %2507 = vmatprep.mubr.f32.mxu0 0.0
        %2508 = vmatmul.mubr.f32.gmra.mrb[0].mxu0 %v1430
        %v2509 = vpop.f32.mrb[0].mxu0
        %v2510 = vadd.f32 %v1351, %v2509
        %v2511 = vpop.f32.mrb[0].mxu0
        %v2512 = vadd.f32 %v1351, %v2511
        %2513 = vmatprep.mubr.f32.mxu0 0.0
        %2514 = vmatmul.mubr.f32.gmra.mrb[0].mxu0 %v1433
        %v2515 = vpop.f32.mrb[0].mxu0
        %v2516 = vadd.f32 %v1356, %v2515
        %v2517 = vpop.f32.mrb[0].mxu0
        %v2518 = vadd.f32 %v1356, %v2517
        %2519 = vmatprep.mubr.f32.mxu0 0.0
        %2520 = vmatmul.mubr.f32.gmra.mrb[0].mxu0 %v1436
        %v2521 = vpop.f32.mrb[0].mxu0
        %v2522 = vadd.f32 %v1361, %v2521
        %v2523 = vpop.f32.mrb[0].mxu0
        %v2524 = vadd.f32 %v1361, %v2523
        %2525 = vmatprep.mubr.f32.mxu0 0.0
        %2526 = vmatmul.mubr.f32.gmra.mrb[0].mxu0 %v1439
        %v2527 = vpop.f32.mrb[0].mxu0
        %v2528 = vadd.f32 %v1366, %v2527
        %v2529 = vpop.f32.mrb[0].mxu0
        %v2530 = vadd.f32 %v1366, %v2529
        %2531 = vmatprep.mubr.f32.mxu0 0.0
        %2532 = vmatmul.mubr.f32.gmra.mrb[0].mxu0 %v1442
        %v2533 = vpop.f32.mrb[0].mxu0
        %v2534 = vadd.f32 %v1371, %v2533
        %v2535 = vpop.f32.mrb[0].mxu0
        %v2536 = vadd.f32 %v1371, %v2535
        %2537 = vmatprep.mubr.f32.mxu0 0.0
        %2538 = vmatmul.mubr.f32.gmra.mrb[0].mxu0 %v1445
        %v2539 = vpop.f32.mrb[0].mxu0
        %v2540 = vadd.f32 %v1376, %v2539
        %v2541 = vpop.f32.mrb[0].mxu0
        %v2542 = vadd.f32 %v1376, %v2541
        %2543 = vmatprep.mubr.f32.mxu0 0.0
        %2544 = vmatmul.mubr.f32.gmra.mrb[0].mxu0 %v1448
        %v2545 = vpop.f32.mrb[0].mxu0
        %v2546 = vadd.f32 %v1381, %v2545
        %v2547 = vpop.f32.mrb[0].mxu0
        %v2548 = vadd.f32 %v1381, %v2547
        %2549 = vmatprep.mubr.f32.mxu0 0.0
        %2550 = vmatmul.mubr.f32.gmra.mrb[0].mxu0 %v1451
        %v2551 = vpop.f32.mrb[0].mxu0
        %v2552 = vadd.f32 %v1386, %v2551
        %v2553 = vpop.f32.mrb[0].mxu0
        %v2554 = vadd.f32 %v1386, %v2553
        %2555 = vmatprep.mubr.f32.mxu0 0.0
        %2556 = vmatmul.mubr.f32.gmra.mrb[0].mxu0 %v1454
        %v2557 = vpop.f32.mrb[0].mxu0
        %v2558 = vadd.f32 %v1391, %v2557
        %v2559 = vpop.f32.mrb[0].mxu0
        %v2560 = vadd.f32 %v1391, %v2559
        %2561 = vmatprep.mubr.f32.mxu0 0.0
        %2562 = vmatmul.mubr.f32.gmra.mrb[0].mxu0 %v1457
        %v2563 = vpop.f32.mrb[0].mxu0
        %v2564 = vadd.f32 %v1396, %v2563
        %v2565 = vpop.f32.mrb[0].mxu0
        %v2566 = vadd.f32 %v1396, %v2565
        %2567 = vmatprep.mubr.f32.mxu0 0.0
        %2568 = vmatmul.mubr.f32.gmra.mrb[0].mxu0 %v1460
        %v2569 = vpop.f32.mrb[0].mxu0
        %v2570 = vadd.f32 %v1401, %v2569
        %v2571 = vpop.f32.mrb[0].mxu0
        %v2572 = vadd.f32 %v1401, %v2571
        %2573 = vmatprep.mubr.f32.mxu0 0.0
        %2574 = vmatmul.mubr.f32.gmra.mrb[0].mxu0 %v1463
        %v2575 = vpop.f32.mrb[0].mxu0
        %v2576 = vadd.f32 %v1406, %v2575
        %v2577 = vpop.f32.mrb[0].mxu0
        %v2578 = vadd.f32 %v1406, %v2577
        %2579 = vmatprep.mubr.f32.mxu0 0.0
        %2580 = vmatmul.mubr.f32.gmra.mrb[0].mxu0 %v1466
        %v2581 = vpop.f32.mrb[0].mxu0
        %v2582 = vadd.f32 %v1411, %v2581
        %v2583 = vpop.f32.mrb[0].mxu0
        %v2584 = vadd.f32 %v1411, %v2583
        %2585 = vmatprep.mubr.f32.mxu0 0.0
        %2586 = vmatmul.mubr.f32.gmra.mrb[0].mxu0 %v1469
        %v2587 = vpop.f32.mrb[0].mxu0
        %v2588 = vadd.f32 %v1416, %v2587
        %v2589 = vpop.f32.mrb[0].mxu0
        %v2590 = vadd.f32 %v1416, %v2589
        %2591 = vmatprep.mubr.f32.mxu0 0.0
        %2592 = vmatmul.mubr.f32.gmra.mrb[0].mxu0 %v1472
        %v2593 = vpop.f32.mrb[0].mxu0
        %v2594 = vadd.f32 %v1421, %v2593
        %v2595 = vpop.f32.mrb[0].mxu0
        %v2596 = vadd.f32 %v1421, %v2595
        %2597 = vmatprep.mubr.f32.mxu0 0.0
        %2598 = vmatmul.mubr.f32.gmra.mrb[0].mxu0 %v1475
        %v2599 = vpop.f32.mrb[0].mxu0
        %v2600 = vadd.f32 %v1426, %v2599
        %v2601 = vpop.f32.mrb[0].mxu0
        %v2602 = vadd.f32 %v1426, %v2601
        %2603 = vdwg.mxu0
        %2604 = vmatprep.subr.mxu0 %v1267
        %2605 = vmatpush1.msra.mxu0 %v1266
        %2606 = vmatprep.subr.mxu0 %v1283
        %2607 = vmatpush1.msra.mxu0 %v1282
        %2608 = vmatprep.subr.mxu0 %v1299
        %2609 = vmatpush1.msra.mxu0 %v1298
        %2610 = vmatprep.subr.mxu0 %v1315
        %2611 = vmatpush1.msra.mxu0 %v1314
        %2612 = vmatprep.subr.mxu0 0.0
        %2613 = vmatpush1.msra.mxu0 0.0
        %2614 = vmatprep.subr.mxu0 0.0
        %2615 = vmatpush1.msra.mxu0 0.0
        %2616 = vmatprep.subr.mxu0 0.0
        %2617 = vmatpush1.msra.mxu0 0.0
        %2618 = vmatprep.subr.mxu0 0.0
        %2619 = vmatpush1.msra.mxu0 0.0
        %2620 = vmatprep.subr.mxu0 0.0
        %2621 = vmatpush1.msra.mxu0 0.0
        %2622 = vmatprep.subr.mxu0 0.0
        %2623 = vmatpush1.msra.mxu0 0.0
        %2624 = vmatprep.subr.mxu0 0.0
        %2625 = vmatpush1.msra.mxu0 0.0
        %2626 = vmatprep.subr.mxu0 0.0
        %2627 = vmatpush1.msra.mxu0 0.0
        %2628 = vmatprep.subr.mxu0 0.0
        %2629 = vmatpush1.msra.mxu0 0.0
        %2630 = vmatprep.subr.mxu0 0.0
        %2631 = vmatpush1.msra.mxu0 0.0
        %2632 = vmatprep.subr.mxu0 0.0
        %2633 = vmatpush1.msra.mxu0 0.0
        %2634 = vmatprep.subr.mxu0 0.0
        %2635 = vmatpush1.msra.mxu0 0.0
        %2636 = vmatprep.subr.mxu0 0.0
        %2637 = vmatpush1.msra.mxu0 0.0
        %2638 = vmatprep.subr.mxu0 0.0
        %2639 = vmatpush1.msra.mxu0 0.0
        %2640 = vmatprep.subr.mxu0 0.0
        %2641 = vmatpush1.msra.mxu0 0.0
        %2642 = vmatprep.subr.mxu0 0.0
        %2643 = vmatpush1.msra.mxu0 0.0
        %2644 = vmatprep.subr.mxu0 0.0
        %2645 = vmatpush1.msra.mxu0 0.0
        %2646 = vmatprep.subr.mxu0 0.0
        %2647 = vmatpush1.msra.mxu0 0.0
        %2648 = vmatprep.subr.mxu0 0.0
        %2649 = vmatpush1.msra.mxu0 0.0
        %2650 = vmatprep.subr.mxu0 0.0
        %2651 = vmatpush1.msra.mxu0 0.0
        %2652 = vmatprep.subr.mxu0 0.0
        %2653 = vmatpush1.msra.mxu0 0.0
        %2654 = vmatprep.subr.mxu0 0.0
        %2655 = vmatpush1.msra.mxu0 0.0
        %2656 = vmatprep.subr.mxu0 0.0
        %2657 = vmatpush1.msra.mxu0 0.0
        %2658 = vmatprep.subr.mxu0 0.0
        %2659 = vmatpush1.msra.mxu0 0.0
        %2660 = vmatprep.subr.mxu0 0.0
        %2661 = vmatpush1.msra.mxu0 0.0
        %2662 = vmatprep.subr.mxu0 0.0
        %2663 = vmatpush1.msra.mxu0 0.0
        %2664 = vmatprep.subr.mxu0 0.0
        %2665 = vmatpush1.msra.mxu0 0.0
        %2666 = vmatprep.subr.mxu0 0.0
        %2667 = vmatpush1.msra.mxu0 0.0
        %2668 = vmatprep.mubr.f32.mxu0 0.0
        %2669 = vmatmul.mubr.f32.gmra.mrb[0].mxu0 %v1430
        %v2670 = vpop.f32.mrb[0].mxu0
        %v2671 = vadd.f32 %v1351, %v2670
        %v2672 = vpop.f32.mrb[0].mxu0
        %v2673 = vadd.f32 %v1351, %v2672
        %2674 = vmatprep.mubr.f32.mxu0 0.0
        %2675 = vmatmul.mubr.f32.gmra.mrb[0].mxu0 %v1433
        %v2676 = vpop.f32.mrb[0].mxu0
        %v2677 = vadd.f32 %v1356, %v2676
        %v2678 = vpop.f32.mrb[0].mxu0
        %v2679 = vadd.f32 %v1356, %v2678
        %2680 = vmatprep.mubr.f32.mxu0 0.0
        %2681 = vmatmul.mubr.f32.gmra.mrb[0].mxu0 %v1436
        %v2682 = vpop.f32.mrb[0].mxu0
        %v2683 = vadd.f32 %v1361, %v2682
        %v2684 = vpop.f32.mrb[0].mxu0
        %v2685 = vadd.f32 %v1361, %v2684
        %2686 = vmatprep.mubr.f32.mxu0 0.0
        %2687 = vmatmul.mubr.f32.gmra.mrb[0].mxu0 %v1439
        %v2688 = vpop.f32.mrb[0].mxu0
        %v2689 = vadd.f32 %v1366, %v2688
        %v2690 = vpop.f32.mrb[0].mxu0
        %v2691 = vadd.f32 %v1366, %v2690
        %2692 = vmatprep.mubr.f32.mxu0 0.0
        %2693 = vmatmul.mubr.f32.gmra.mrb[0].mxu0 %v1442
        %v2694 = vpop.f32.mrb[0].mxu0
        %v2695 = vadd.f32 %v1371, %v2694
        %v2696 = vpop.f32.mrb[0].mxu0
        %v2697 = vadd.f32 %v1371, %v2696
        %2698 = vmatprep.mubr.f32.mxu0 0.0
        %2699 = vmatmul.mubr.f32.gmra.mrb[0].mxu0 %v1445
        %v2700 = vpop.f32.mrb[0].mxu0
        %v2701 = vadd.f32 %v1376, %v2700
        %v2702 = vpop.f32.mrb[0].mxu0
        %v2703 = vadd.f32 %v1376, %v2702
        %2704 = vmatprep.mubr.f32.mxu0 0.0
        %2705 = vmatmul.mubr.f32.gmra.mrb[0].mxu0 %v1448
        %v2706 = vpop.f32.mrb[0].mxu0
        %v2707 = vadd.f32 %v1381, %v2706
        %v2708 = vpop.f32.mrb[0].mxu0
        %v2709 = vadd.f32 %v1381, %v2708
        %2710 = vmatprep.mubr.f32.mxu0 0.0
        %2711 = vmatmul.mubr.f32.gmra.mrb[0].mxu0 %v1451
        %v2712 = vpop.f32.mrb[0].mxu0
        %v2713 = vadd.f32 %v1386, %v2712
        %v2714 = vpop.f32.mrb[0].mxu0
        %v2715 = vadd.f32 %v1386, %v2714
        %2716 = vmatprep.mubr.f32.mxu0 0.0
        %2717 = vmatmul.mubr.f32.gmra.mrb[0].mxu0 %v1454
        %v2718 = vpop.f32.mrb[0].mxu0
        %v2719 = vadd.f32 %v1391, %v2718
        %v2720 = vpop.f32.mrb[0].mxu0
        %v2721 = vadd.f32 %v1391, %v2720
        %2722 = vmatprep.mubr.f32.mxu0 0.0
        %2723 = vmatmul.mubr.f32.gmra.mrb[0].mxu0 %v1457
        %v2724 = vpop.f32.mrb[0].mxu0
        %v2725 = vadd.f32 %v1396, %v2724
        %v2726 = vpop.f32.mrb[0].mxu0
        %v2727 = vadd.f32 %v1396, %v2726
        %2728 = vmatprep.mubr.f32.mxu0 0.0
        %2729 = vmatmul.mubr.f32.gmra.mrb[0].mxu0 %v1460
        %v2730 = vpop.f32.mrb[0].mxu0
        %v2731 = vadd.f32 %v1401, %v2730
        %v2732 = vpop.f32.mrb[0].mxu0
        %v2733 = vadd.f32 %v1401, %v2732
        %2734 = vmatprep.mubr.f32.mxu0 0.0
        %2735 = vmatmul.mubr.f32.gmra.mrb[0].mxu0 %v1463
        %v2736 = vpop.f32.mrb[0].mxu0
        %v2737 = vadd.f32 %v1406, %v2736
        %v2738 = vpop.f32.mrb[0].mxu0
        %v2739 = vadd.f32 %v1406, %v2738
        %2740 = vmatprep.mubr.f32.mxu0 0.0
        %2741 = vmatmul.mubr.f32.gmra.mrb[0].mxu0 %v1466
        %v2742 = vpop.f32.mrb[0].mxu0
        %v2743 = vadd.f32 %v1411, %v2742
        %v2744 = vpop.f32.mrb[0].mxu0
        %v2745 = vadd.f32 %v1411, %v2744
        %2746 = vmatprep.mubr.f32.mxu0 0.0
        %2747 = vmatmul.mubr.f32.gmra.mrb[0].mxu0 %v1469
        %v2748 = vpop.f32.mrb[0].mxu0
        %v2749 = vadd.f32 %v1416, %v2748
        %v2750 = vpop.f32.mrb[0].mxu0
        %v2751 = vadd.f32 %v1416, %v2750
        %2752 = vmatprep.mubr.f32.mxu0 0.0
        %2753 = vmatmul.mubr.f32.gmra.mrb[0].mxu0 %v1472
        %v2754 = vpop.f32.mrb[0].mxu0
        %v2755 = vadd.f32 %v1421, %v2754
        %v2756 = vpop.f32.mrb[0].mxu0
        %v2757 = vadd.f32 %v1421, %v2756
        %2758 = vmatprep.mubr.f32.mxu0 0.0
        %2759 = vmatmul.mubr.f32.gmra.mrb[0].mxu0 %v1475
        %v2760 = vpop.f32.mrb[0].mxu0
        %v2761 = vadd.f32 %v1426, %v2760
        %v2762 = vpop.f32.mrb[0].mxu0
        %v2763 = vadd.f32 %v1426, %v2762
        %2764 = vdwg.mxu0
        %v2765 = vmax.f32 %v1544, 0.0
        %v2766 = vmax.f32 %v1546, 0.0
        %v2767 = vmax.f32 %v1705, 0.0
        %v2768 = vmax.f32 %v1707, 0.0
        %v2769 = vmax.f32 %v1866, 0.0
        %v2770 = vmax.f32 %v1868, 0.0
        %v2771 = vmax.f32 %v2027, 0.0
        %v2772 = vmax.f32 %v2029, 0.0
        %v2773 = vmax.f32 %v2188, 0.0
        %v2774 = vmax.f32 %v2190, 0.0
        %v2775 = vmax.f32 %v2349, 0.0
        %v2776 = vmax.f32 %v2351, 0.0
        %v2777 = vmax.f32 %v2510, 0.0
        %v2778 = vmax.f32 %v2512, 0.0
        %v2779 = vmax.f32 %v2671, 0.0
        %v2780 = vmax.f32 %v2673, 0.0
        %v2781 = vmax.f32 %v1550, 0.0
        %v2782 = vmax.f32 %v1552, 0.0
        %v2783 = vmax.f32 %v1711, 0.0
        %v2784 = vmax.f32 %v1713, 0.0
        %v2785 = vmax.f32 %v1872, 0.0
        %v2786 = vmax.f32 %v1874, 0.0
        %v2787 = vmax.f32 %v2033, 0.0
        %v2788 = vmax.f32 %v2035, 0.0
        %v2789 = vmax.f32 %v2194, 0.0
        %v2790 = vmax.f32 %v2196, 0.0
        %v2791 = vmax.f32 %v2355, 0.0
        %v2792 = vmax.f32 %v2357, 0.0
        %v2793 = vmax.f32 %v2516, 0.0
        %v2794 = vmax.f32 %v2518, 0.0
        %v2795 = vmax.f32 %v2677, 0.0
        %v2796 = vmax.f32 %v2679, 0.0
        %v2797 = vmax.f32 %v1556, 0.0
        %v2798 = vmax.f32 %v1558, 0.0
        %v2799 = vmax.f32 %v1717, 0.0
        %v2800 = vmax.f32 %v1719, 0.0
        %v2801 = vmax.f32 %v1878, 0.0
        %v2802 = vmax.f32 %v1880, 0.0
        %v2803 = vmax.f32 %v2039, 0.0
        %v2804 = vmax.f32 %v2041, 0.0
        %v2805 = vmax.f32 %v2200, 0.0
        %v2806 = vmax.f32 %v2202, 0.0
        %v2807 = vmax.f32 %v2361, 0.0
        %v2808 = vmax.f32 %v2363, 0.0
        %v2809 = vmax.f32 %v2522, 0.0
        %v2810 = vmax.f32 %v2524, 0.0
        %v2811 = vmax.f32 %v2683, 0.0
        %v2812 = vmax.f32 %v2685, 0.0
        %v2813 = vmax.f32 %v1562, 0.0
        %v2814 = vmax.f32 %v1564, 0.0
        %v2815 = vmax.f32 %v1723, 0.0
        %v2816 = vmax.f32 %v1725, 0.0
        %v2817 = vmax.f32 %v1884, 0.0
        %v2818 = vmax.f32 %v1886, 0.0
        %v2819 = vmax.f32 %v2045, 0.0
        %v2820 = vmax.f32 %v2047, 0.0
        %v2821 = vmax.f32 %v2206, 0.0
        %v2822 = vmax.f32 %v2208, 0.0
        %v2823 = vmax.f32 %v2367, 0.0
        %v2824 = vmax.f32 %v2369, 0.0
        %v2825 = vmax.f32 %v2528, 0.0
        %v2826 = vmax.f32 %v2530, 0.0
        %v2827 = vmax.f32 %v2689, 0.0
        %v2828 = vmax.f32 %v2691, 0.0
        %v2829 = vmax.f32 %v1568, 0.0
        %v2830 = vmax.f32 %v1570, 0.0
        %v2831 = vmax.f32 %v1729, 0.0
        %v2832 = vmax.f32 %v1731, 0.0
        %v2833 = vmax.f32 %v1890, 0.0
        %v2834 = vmax.f32 %v1892, 0.0
        %v2835 = vmax.f32 %v2051, 0.0
        %v2836 = vmax.f32 %v2053, 0.0
        %v2837 = vmax.f32 %v2212, 0.0
        %v2838 = vmax.f32 %v2214, 0.0
        %v2839 = vmax.f32 %v2373, 0.0
        %v2840 = vmax.f32 %v2375, 0.0
        %v2841 = vmax.f32 %v2534, 0.0
        %v2842 = vmax.f32 %v2536, 0.0
        %v2843 = vmax.f32 %v2695, 0.0
        %v2844 = vmax.f32 %v2697, 0.0
        %v2845 = vmax.f32 %v1574, 0.0
        %v2846 = vmax.f32 %v1576, 0.0
        %v2847 = vmax.f32 %v1735, 0.0
        %v2848 = vmax.f32 %v1737, 0.0
        %v2849 = vmax.f32 %v1896, 0.0
        %v2850 = vmax.f32 %v1898, 0.0
        %v2851 = vmax.f32 %v2057, 0.0
        %v2852 = vmax.f32 %v2059, 0.0
        %v2853 = vmax.f32 %v2218, 0.0
        %v2854 = vmax.f32 %v2220, 0.0
        %v2855 = vmax.f32 %v2379, 0.0
        %v2856 = vmax.f32 %v2381, 0.0
        %v2857 = vmax.f32 %v2540, 0.0
        %v2858 = vmax.f32 %v2542, 0.0
        %v2859 = vmax.f32 %v2701, 0.0
        %v2860 = vmax.f32 %v2703, 0.0
        %v2861 = vmax.f32 %v1580, 0.0
        %v2862 = vmax.f32 %v1582, 0.0
        %v2863 = vmax.f32 %v1741, 0.0
        %v2864 = vmax.f32 %v1743, 0.0
        %v2865 = vmax.f32 %v1902, 0.0
        %v2866 = vmax.f32 %v1904, 0.0
        %v2867 = vmax.f32 %v2063, 0.0
        %v2868 = vmax.f32 %v2065, 0.0
        %v2869 = vmax.f32 %v2224, 0.0
        %v2870 = vmax.f32 %v2226, 0.0
        %v2871 = vmax.f32 %v2385, 0.0
        %v2872 = vmax.f32 %v2387, 0.0
        %v2873 = vmax.f32 %v2546, 0.0
        %v2874 = vmax.f32 %v2548, 0.0
        %v2875 = vmax.f32 %v2707, 0.0
        %v2876 = vmax.f32 %v2709, 0.0
        %v2877 = vmax.f32 %v1586, 0.0
        %v2878 = vmax.f32 %v1588, 0.0
        %v2879 = vmax.f32 %v1747, 0.0
        %v2880 = vmax.f32 %v1749, 0.0
        %v2881 = vmax.f32 %v1908, 0.0
        %v2882 = vmax.f32 %v1910, 0.0
        %v2883 = vmax.f32 %v2069, 0.0
        %v2884 = vmax.f32 %v2071, 0.0
        %v2885 = vmax.f32 %v2230, 0.0
        %v2886 = vmax.f32 %v2232, 0.0
        %v2887 = vmax.f32 %v2391, 0.0
        %v2888 = vmax.f32 %v2393, 0.0
        %v2889 = vmax.f32 %v2552, 0.0
        %v2890 = vmax.f32 %v2554, 0.0
        %v2891 = vmax.f32 %v2713, 0.0
        %v2892 = vmax.f32 %v2715, 0.0
        %v2893 = vmax.f32 %v1592, 0.0
        %v2894 = vmax.f32 %v1594, 0.0
        %v2895 = vmax.f32 %v1753, 0.0
        %v2896 = vmax.f32 %v1755, 0.0
        %v2897 = vmax.f32 %v1914, 0.0
        %v2898 = vmax.f32 %v1916, 0.0
        %v2899 = vmax.f32 %v2075, 0.0
        %v2900 = vmax.f32 %v2077, 0.0
        %v2901 = vmax.f32 %v2236, 0.0
        %v2902 = vmax.f32 %v2238, 0.0
        %v2903 = vmax.f32 %v2397, 0.0
        %v2904 = vmax.f32 %v2399, 0.0
        %v2905 = vmax.f32 %v2558, 0.0
        %v2906 = vmax.f32 %v2560, 0.0
        %v2907 = vmax.f32 %v2719, 0.0
        %v2908 = vmax.f32 %v2721, 0.0
        %v2909 = vmax.f32 %v1598, 0.0
        %v2910 = vmax.f32 %v1600, 0.0
        %v2911 = vmax.f32 %v1759, 0.0
        %v2912 = vmax.f32 %v1761, 0.0
        %v2913 = vmax.f32 %v1920, 0.0
        %v2914 = vmax.f32 %v1922, 0.0
        %v2915 = vmax.f32 %v2081, 0.0
        %v2916 = vmax.f32 %v2083, 0.0
        %v2917 = vmax.f32 %v2242, 0.0
        %v2918 = vmax.f32 %v2244, 0.0
        %v2919 = vmax.f32 %v2403, 0.0
        %v2920 = vmax.f32 %v2405, 0.0
        %v2921 = vmax.f32 %v2564, 0.0
        %v2922 = vmax.f32 %v2566, 0.0
        %v2923 = vmax.f32 %v2725, 0.0
        %v2924 = vmax.f32 %v2727, 0.0
        %v2925 = vmax.f32 %v1604, 0.0
        %v2926 = vmax.f32 %v1606, 0.0
        %v2927 = vmax.f32 %v1765, 0.0
        %v2928 = vmax.f32 %v1767, 0.0
        %v2929 = vmax.f32 %v1926, 0.0
        %v2930 = vmax.f32 %v1928, 0.0
        %v2931 = vmax.f32 %v2087, 0.0
        %v2932 = vmax.f32 %v2089, 0.0
        %v2933 = vmax.f32 %v2248, 0.0
        %v2934 = vmax.f32 %v2250, 0.0
        %v2935 = vmax.f32 %v2409, 0.0
        %v2936 = vmax.f32 %v2411, 0.0
        %v2937 = vmax.f32 %v2570, 0.0
        %v2938 = vmax.f32 %v2572, 0.0
        %v2939 = vmax.f32 %v2731, 0.0
        %v2940 = vmax.f32 %v2733, 0.0
        %v2941 = vmax.f32 %v1610, 0.0
        %v2942 = vmax.f32 %v1612, 0.0
        %v2943 = vmax.f32 %v1771, 0.0
        %v2944 = vmax.f32 %v1773, 0.0
        %v2945 = vmax.f32 %v1932, 0.0
        %v2946 = vmax.f32 %v1934, 0.0
        %v2947 = vmax.f32 %v2093, 0.0
        %v2948 = vmax.f32 %v2095, 0.0
        %v2949 = vmax.f32 %v2254, 0.0
        %v2950 = vmax.f32 %v2256, 0.0
        %v2951 = vmax.f32 %v2415, 0.0
        %v2952 = vmax.f32 %v2417, 0.0
        %v2953 = vmax.f32 %v2576, 0.0
        %v2954 = vmax.f32 %v2578, 0.0
        %v2955 = vmax.f32 %v2737, 0.0
        %v2956 = vmax.f32 %v2739, 0.0
        %v2957 = vmax.f32 %v1616, 0.0
        %v2958 = vmax.f32 %v1618, 0.0
        %v2959 = vmax.f32 %v1777, 0.0
        %v2960 = vmax.f32 %v1779, 0.0
        %v2961 = vmax.f32 %v1938, 0.0
        %v2962 = vmax.f32 %v1940, 0.0
        %v2963 = vmax.f32 %v2099, 0.0
        %v2964 = vmax.f32 %v2101, 0.0
        %v2965 = vmax.f32 %v2260, 0.0
        %v2966 = vmax.f32 %v2262, 0.0
        %v2967 = vmax.f32 %v2421, 0.0
        %v2968 = vmax.f32 %v2423, 0.0
        %v2969 = vmax.f32 %v2582, 0.0
        %v2970 = vmax.f32 %v2584, 0.0
        %v2971 = vmax.f32 %v2743, 0.0
        %v2972 = vmax.f32 %v2745, 0.0
        %v2973 = vmax.f32 %v1622, 0.0
        %v2974 = vmax.f32 %v1624, 0.0
        %v2975 = vmax.f32 %v1783, 0.0
        %v2976 = vmax.f32 %v1785, 0.0
        %v2977 = vmax.f32 %v1944, 0.0
        %v2978 = vmax.f32 %v1946, 0.0
        %v2979 = vmax.f32 %v2105, 0.0
        %v2980 = vmax.f32 %v2107, 0.0
        %v2981 = vmax.f32 %v2266, 0.0
        %v2982 = vmax.f32 %v2268, 0.0
        %v2983 = vmax.f32 %v2427, 0.0
        %v2984 = vmax.f32 %v2429, 0.0
        %v2985 = vmax.f32 %v2588, 0.0
        %v2986 = vmax.f32 %v2590, 0.0
        %v2987 = vmax.f32 %v2749, 0.0
        %v2988 = vmax.f32 %v2751, 0.0
        %v2989 = vmax.f32 %v1628, 0.0
        %v2990 = vmax.f32 %v1630, 0.0
        %v2991 = vmax.f32 %v1789, 0.0
        %v2992 = vmax.f32 %v1791, 0.0
        %v2993 = vmax.f32 %v1950, 0.0
        %v2994 = vmax.f32 %v1952, 0.0
        %v2995 = vmax.f32 %v2111, 0.0
        %v2996 = vmax.f32 %v2113, 0.0
        %v2997 = vmax.f32 %v2272, 0.0
        %v2998 = vmax.f32 %v2274, 0.0
        %v2999 = vmax.f32 %v2433, 0.0
        %v3000 = vmax.f32 %v2435, 0.0
        %v3001 = vmax.f32 %v2594, 0.0
        %v3002 = vmax.f32 %v2596, 0.0
        %v3003 = vmax.f32 %v2755, 0.0
        %v3004 = vmax.f32 %v2757, 0.0
        %v3005 = vmax.f32 %v1634, 0.0
        %v3006 = vmax.f32 %v1636, 0.0
        %v3007 = vmax.f32 %v1795, 0.0
        %v3008 = vmax.f32 %v1797, 0.0
        %v3009 = vmax.f32 %v1956, 0.0
        %v3010 = vmax.f32 %v1958, 0.0
        %v3011 = vmax.f32 %v2117, 0.0
        %v3012 = vmax.f32 %v2119, 0.0
        %v3013 = vmax.f32 %v2278, 0.0
        %v3014 = vmax.f32 %v2280, 0.0
        %v3015 = vmax.f32 %v2439, 0.0
        %v3016 = vmax.f32 %v2441, 0.0
        %v3017 = vmax.f32 %v2600, 0.0
        %v3018 = vmax.f32 %v2602, 0.0
        %v3019 = vmax.f32 %v2761, 0.0
        %v3020 = vmax.f32 %v2763, 0.0
        %v3021 = vld [vmem:[%s5] sm:$0xff]
        %v3022 = vld [vmem:[%s5 + $0x8] sm:$0xff]
        %v3023 = vld [vmem:[%s5 + $0x10] sm:$0xff]
        %v3024 = vld [vmem:[%s5 + $0x18] sm:$0xff]
        %v3025 = vld [vmem:[%s5 + $0x20] sm:$0xff]
        %v3026 = vld [vmem:[%s5 + $0x28] sm:$0xff]
        %v3027 = vld [vmem:[%s5 + $0x30] sm:$0xff]
        %v3028 = vld [vmem:[%s5 + $0x38] sm:$0xff]
        %v3029 = vld [vmem:[%s5 + $0x40] sm:$0xff]
        %v3030 = vld [vmem:[%s5 + $0x48] sm:$0xff]
        %v3031 = vld [vmem:[%s5 + $0x50] sm:$0xff]
        %v3032 = vld [vmem:[%s5 + $0x58] sm:$0xff]
        %v3033 = vld [vmem:[%s6] sm:$0xff]
        %v3034 = vld [vmem:[%s6 + $0x8] sm:$0xff]
        %v3035 = vld [vmem:[%s6 + $0x10] sm:$0xff]
        %v3036 = vld [vmem:[%s6 + $0x18] sm:$0xff]
        %v3037 = vld [vmem:[%s6 + $0x20] sm:$0xff]
        %v3038 = vld [vmem:[%s6 + $0x28] sm:$0xff]
        %v3039 = vld [vmem:[%s6 + $0x30] sm:$0xff]
        %v3040 = vld [vmem:[%s6 + $0x38] sm:$0xff]
        %v3041 = vld [vmem:[%s6 + $0x40] sm:$0xff]
        %v3042 = vld [vmem:[%s6 + $0x48] sm:$0xff]
        %v3043 = vld [vmem:[%s6 + $0x50] sm:$0xff]
        %v3044 = vld [vmem:[%s6 + $0x58] sm:$0xff]
        %3046 = vset.pattern.permute.xlu0 0
        %3047 = vperm.xlu0 %3046, %v3033
        %v3048 = vpop.permute.xlu0 %3047
        %3051 = vset.pattern.permute.xlu0 0
        %3052 = vperm.xlu0 %3051, %v3034
        %v3053 = vpop.permute.xlu0 %3052
        %3056 = vset.pattern.permute.xlu0 0
        %3057 = vperm.xlu0 %3056, %v3035
        %v3058 = vpop.permute.xlu0 %3057
        %3061 = vset.pattern.permute.xlu0 0
        %3062 = vperm.xlu0 %3061, %v3036
        %v3063 = vpop.permute.xlu0 %3062
        %3066 = vset.pattern.permute.xlu0 0
        %3067 = vperm.xlu0 %3066, %v3037
        %v3068 = vpop.permute.xlu0 %3067
        %3071 = vset.pattern.permute.xlu0 0
        %3072 = vperm.xlu0 %3071, %v3038
        %v3073 = vpop.permute.xlu0 %3072
        %3076 = vset.pattern.permute.xlu0 0
        %3077 = vperm.xlu0 %3076, %v3039
        %v3078 = vpop.permute.xlu0 %3077
        %3081 = vset.pattern.permute.xlu0 0
        %3082 = vperm.xlu0 %3081, %v3040
        %v3083 = vpop.permute.xlu0 %3082
        %3086 = vset.pattern.permute.xlu0 0
        %3087 = vperm.xlu0 %3086, %v3041
        %v3088 = vpop.permute.xlu0 %3087
        %3091 = vset.pattern.permute.xlu0 0
        %3092 = vperm.xlu0 %3091, %v3042
        %v3093 = vpop.permute.xlu0 %3092
        %3096 = vset.pattern.permute.xlu0 0
        %3097 = vperm.xlu0 %3096, %v3043
        %v3098 = vpop.permute.xlu0 %3097
        %3101 = vset.pattern.permute.xlu0 0
        %3102 = vperm.xlu0 %3101, %v3044
        %v3103 = vpop.permute.xlu0 %3102
        %3105 = vmatprep.subr.mxu0 %v2766
        %3106 = vmatpush1.msra.mxu0 %v2765
        %3107 = vmatprep.subr.mxu0 %v2782
        %3108 = vmatpush1.msra.mxu0 %v2781
        %3109 = vmatprep.subr.mxu0 %v2798
        %3110 = vmatpush1.msra.mxu0 %v2797
        %3111 = vmatprep.subr.mxu0 %v2814
        %3112 = vmatpush1.msra.mxu0 %v2813
        %3113 = vmatprep.subr.mxu0 %v2830
        %3114 = vmatpush1.msra.mxu0 %v2829
        %3115 = vmatprep.subr.mxu0 %v2846
        %3116 = vmatpush1.msra.mxu0 %v2845
        %3117 = vmatprep.subr.mxu0 %v2862
        %3118 = vmatpush1.msra.mxu0 %v2861
        %3119 = vmatprep.subr.mxu0 %v2878
        %3120 = vmatpush1.msra.mxu0 %v2877
        %3121 = vmatprep.subr.mxu0 %v2894
        %3122 = vmatpush1.msra.mxu0 %v2893
        %3123 = vmatprep.subr.mxu0 %v2910
        %3124 = vmatpush1.msra.mxu0 %v2909
        %3125 = vmatprep.subr.mxu0 %v2926
        %3126 = vmatpush1.msra.mxu0 %v2925
        %3127 = vmatprep.subr.mxu0 %v2942
        %3128 = vmatpush1.msra.mxu0 %v2941
        %3129 = vmatprep.subr.mxu0 %v2958
        %3130 = vmatpush1.msra.mxu0 %v2957
        %3131 = vmatprep.subr.mxu0 %v2974
        %3132 = vmatpush1.msra.mxu0 %v2973
        %3133 = vmatprep.subr.mxu0 %v2990
        %3134 = vmatpush1.msra.mxu0 %v2989
        %3135 = vmatprep.subr.mxu0 %v3006
        %3136 = vmatpush1.msra.mxu0 %v3005
        %3137 = vmatprep.subr.mxu0 0.0
        %3138 = vmatpush1.msra.mxu0 0.0
        %3139 = vmatprep.subr.mxu0 0.0
        %3140 = vmatpush1.msra.mxu0 0.0
        %3141 = vmatprep.subr.mxu0 0.0
        %3142 = vmatpush1.msra.mxu0 0.0
        %3143 = vmatprep.subr.mxu0 0.0
        %3144 = vmatpush1.msra.mxu0 0.0
        %3145 = vmatprep.subr.mxu0 0.0
        %3146 = vmatpush1.msra.mxu0 0.0
        %3147 = vmatprep.subr.mxu0 0.0
        %3148 = vmatpush1.msra.mxu0 0.0
        %3149 = vmatprep.subr.mxu0 0.0
        %3150 = vmatpush1.msra.mxu0 0.0
        %3151 = vmatprep.subr.mxu0 0.0
        %3152 = vmatpush1.msra.mxu0 0.0
        %3153 = vmatprep.subr.mxu0 0.0
        %3154 = vmatpush1.msra.mxu0 0.0
        %3155 = vmatprep.subr.mxu0 0.0
        %3156 = vmatpush1.msra.mxu0 0.0
        %3157 = vmatprep.subr.mxu0 0.0
        %3158 = vmatpush1.msra.mxu0 0.0
        %3159 = vmatprep.subr.mxu0 0.0
        %3160 = vmatpush1.msra.mxu0 0.0
        %3161 = vmatprep.subr.mxu0 0.0
        %3162 = vmatpush1.msra.mxu0 0.0
        %3163 = vmatprep.subr.mxu0 0.0
        %3164 = vmatpush1.msra.mxu0 0.0
        %3165 = vmatprep.subr.mxu0 0.0
        %3166 = vmatpush1.msra.mxu0 0.0
        %3167 = vmatprep.subr.mxu0 0.0
        %3168 = vmatpush1.msra.mxu0 0.0
        %3169 = vmatprep.mubr.f32.mxu0 0.0
        %3170 = vmatmul.mubr.f32.gmra.mrb[0].mxu0 %v3021
        %v3171 = vpop.f32.mrb[0].mxu0
        %v3172 = vadd.f32 %v3048, %v3171
        %v3173 = vpop.f32.mrb[0].mxu0
        %v3174 = vadd.f32 %v3048, %v3173
        %3175 = vmatprep.mubr.f32.mxu0 0.0
        %3176 = vmatmul.mubr.f32.gmra.mrb[0].mxu0 %v3022
        %v3177 = vpop.f32.mrb[0].mxu0
        %v3178 = vadd.f32 %v3053, %v3177
        %v3179 = vpop.f32.mrb[0].mxu0
        %v3180 = vadd.f32 %v3053, %v3179
        %3181 = vmatprep.mubr.f32.mxu0 0.0
        %3182 = vmatmul.mubr.f32.gmra.mrb[0].mxu0 %v3023
        %v3183 = vpop.f32.mrb[0].mxu0
        %v3184 = vadd.f32 %v3058, %v3183
        %v3185 = vpop.f32.mrb[0].mxu0
        %v3186 = vadd.f32 %v3058, %v3185
        %3187 = vmatprep.mubr.f32.mxu0 0.0
        %3188 = vmatmul.mubr.f32.gmra.mrb[0].mxu0 %v3024
        %v3189 = vpop.f32.mrb[0].mxu0
        %v3190 = vadd.f32 %v3063, %v3189
        %v3191 = vpop.f32.mrb[0].mxu0
        %v3192 = vadd.f32 %v3063, %v3191
        %3193 = vmatprep.mubr.f32.mxu0 0.0
        %3194 = vmatmul.mubr.f32.gmra.mrb[0].mxu0 %v3025
        %v3195 = vpop.f32.mrb[0].mxu0
        %v3196 = vadd.f32 %v3068, %v3195
        %v3197 = vpop.f32.mrb[0].mxu0
        %v3198 = vadd.f32 %v3068, %v3197
        %3199 = vmatprep.mubr.f32.mxu0 0.0
        %3200 = vmatmul.mubr.f32.gmra.mrb[0].mxu0 %v3026
        %v3201 = vpop.f32.mrb[0].mxu0
        %v3202 = vadd.f32 %v3073, %v3201
        %v3203 = vpop.f32.mrb[0].mxu0
        %v3204 = vadd.f32 %v3073, %v3203
        %3205 = vmatprep.mubr.f32.mxu0 0.0
        %3206 = vmatmul.mubr.f32.gmra.mrb[0].mxu0 %v3027
        %v3207 = vpop.f32.mrb[0].mxu0
        %v3208 = vadd.f32 %v3078, %v3207
        %v3209 = vpop.f32.mrb[0].mxu0
        %v3210 = vadd.f32 %v3078, %v3209
        %3211 = vmatprep.mubr.f32.mxu0 0.0
        %3212 = vmatmul.mubr.f32.gmra.mrb[0].mxu0 %v3028
        %v3213 = vpop.f32.mrb[0].mxu0
        %v3214 = vadd.f32 %v3083, %v3213
        %v3215 = vpop.f32.mrb[0].mxu0
        %v3216 = vadd.f32 %v3083, %v3215
        %3217 = vmatprep.mubr.f32.mxu0 0.0
        %3218 = vmatmul.mubr.f32.gmra.mrb[0].mxu0 %v3029
        %v3219 = vpop.f32.mrb[0].mxu0
        %v3220 = vadd.f32 %v3088, %v3219
        %v3221 = vpop.f32.mrb[0].mxu0
        %v3222 = vadd.f32 %v3088, %v3221
        %3223 = vmatprep.mubr.f32.mxu0 0.0
        %3224 = vmatmul.mubr.f32.gmra.mrb[0].mxu0 %v3030
        %v3225 = vpop.f32.mrb[0].mxu0
        %v3226 = vadd.f32 %v3093, %v3225
        %v3227 = vpop.f32.mrb[0].mxu0
        %v3228 = vadd.f32 %v3093, %v3227
        %3229 = vmatprep.mubr.f32.mxu0 0.0
        %3230 = vmatmul.mubr.f32.gmra.mrb[0].mxu0 %v3031
        %v3231 = vpop.f32.mrb[0].mxu0
        %v3232 = vadd.f32 %v3098, %v3231
        %v3233 = vpop.f32.mrb[0].mxu0
        %v3234 = vadd.f32 %v3098, %v3233
        %3235 = vmatprep.mubr.f32.mxu0 0.0
        %3236 = vmatmul.mubr.f32.gmra.mrb[0].mxu0 %v3032
        %v3237 = vpop.f32.mrb[0].mxu0
        %v3238 = vadd.f32 %v3103, %v3237
        %v3239 = vpop.f32.mrb[0].mxu0
        %v3240 = vadd.f32 %v3103, %v3239
        %3241 = vdwg.mxu0
        %3242 = vmatprep.subr.mxu0 %v2768
        %3243 = vmatpush1.msra.mxu0 %v2767
        %3244 = vmatprep.subr.mxu0 %v2784
        %3245 = vmatpush1.msra.mxu0 %v2783
        %3246 = vmatprep.subr.mxu0 %v2800
        %3247 = vmatpush1.msra.mxu0 %v2799
        %3248 = vmatprep.subr.mxu0 %v2816
        %3249 = vmatpush1.msra.mxu0 %v2815
        %3250 = vmatprep.subr.mxu0 %v2832
        %3251 = vmatpush1.msra.mxu0 %v2831
        %3252 = vmatprep.subr.mxu0 %v2848
        %3253 = vmatpush1.msra.mxu0 %v2847
        %3254 = vmatprep.subr.mxu0 %v2864
        %3255 = vmatpush1.msra.mxu0 %v2863
        %3256 = vmatprep.subr.mxu0 %v2880
        %3257 = vmatpush1.msra.mxu0 %v2879
        %3258 = vmatprep.subr.mxu0 %v2896
        %3259 = vmatpush1.msra.mxu0 %v2895
        %3260 = vmatprep.subr.mxu0 %v2912
        %3261 = vmatpush1.msra.mxu0 %v2911
        %3262 = vmatprep.subr.mxu0 %v2928
        %3263 = vmatpush1.msra.mxu0 %v2927
        %3264 = vmatprep.subr.mxu0 %v2944
        %3265 = vmatpush1.msra.mxu0 %v2943
        %3266 = vmatprep.subr.mxu0 %v2960
        %3267 = vmatpush1.msra.mxu0 %v2959
        %3268 = vmatprep.subr.mxu0 %v2976
        %3269 = vmatpush1.msra.mxu0 %v2975
        %3270 = vmatprep.subr.mxu0 %v2992
        %3271 = vmatpush1.msra.mxu0 %v2991
        %3272 = vmatprep.subr.mxu0 %v3008
        %3273 = vmatpush1.msra.mxu0 %v3007
        %3274 = vmatprep.subr.mxu0 0.0
        %3275 = vmatpush1.msra.mxu0 0.0
        %3276 = vmatprep.subr.mxu0 0.0
        %3277 = vmatpush1.msra.mxu0 0.0
        %3278 = vmatprep.subr.mxu0 0.0
        %3279 = vmatpush1.msra.mxu0 0.0
        %3280 = vmatprep.subr.mxu0 0.0
        %3281 = vmatpush1.msra.mxu0 0.0
        %3282 = vmatprep.subr.mxu0 0.0
        %3283 = vmatpush1.msra.mxu0 0.0
        %3284 = vmatprep.subr.mxu0 0.0
        %3285 = vmatpush1.msra.mxu0 0.0
        %3286 = vmatprep.subr.mxu0 0.0
        %3287 = vmatpush1.msra.mxu0 0.0
        %3288 = vmatprep.subr.mxu0 0.0
        %3289 = vmatpush1.msra.mxu0 0.0
        %3290 = vmatprep.subr.mxu0 0.0
        %3291 = vmatpush1.msra.mxu0 0.0
        %3292 = vmatprep.subr.mxu0 0.0
        %3293 = vmatpush1.msra.mxu0 0.0
        %3294 = vmatprep.subr.mxu0 0.0
        %3295 = vmatpush1.msra.mxu0 0.0
        %3296 = vmatprep.subr.mxu0 0.0
        %3297 = vmatpush1.msra.mxu0 0.0
        %3298 = vmatprep.subr.mxu0 0.0
        %3299 = vmatpush1.msra.mxu0 0.0
        %3300 = vmatprep.subr.mxu0 0.0
        %3301 = vmatpush1.msra.mxu0 0.0
        %3302 = vmatprep.subr.mxu0 0.0
        %3303 = vmatpush1.msra.mxu0 0.0
        %3304 = vmatprep.subr.mxu0 0.0
        %3305 = vmatpush1.msra.mxu0 0.0
        %3306 = vmatprep.mubr.f32.mxu0 0.0
        %3307 = vmatmul.mubr.f32.gmra.mrb[0].mxu0 %v3021
        %v3308 = vpop.f32.mrb[0].mxu0
        %v3309 = vadd.f32 %v3048, %v3308
        %v3310 = vpop.f32.mrb[0].mxu0
        %v3311 = vadd.f32 %v3048, %v3310
        %3312 = vmatprep.mubr.f32.mxu0 0.0
        %3313 = vmatmul.mubr.f32.gmra.mrb[0].mxu0 %v3022
        %v3314 = vpop.f32.mrb[0].mxu0
        %v3315 = vadd.f32 %v3053, %v3314
        %v3316 = vpop.f32.mrb[0].mxu0
        %v3317 = vadd.f32 %v3053, %v3316
        %3318 = vmatprep.mubr.f32.mxu0 0.0
        %3319 = vmatmul.mubr.f32.gmra.mrb[0].mxu0 %v3023
        %v3320 = vpop.f32.mrb[0].mxu0
        %v3321 = vadd.f32 %v3058, %v3320
        %v3322 = vpop.f32.mrb[0].mxu0
        %v3323 = vadd.f32 %v3058, %v3322
        %3324 = vmatprep.mubr.f32.mxu0 0.0
        %3325 = vmatmul.mubr.f32.gmra.mrb[0].mxu0 %v3024
        %v3326 = vpop.f32.mrb[0].mxu0
        %v3327 = vadd.f32 %v3063, %v3326
        %v3328 = vpop.f32.mrb[0].mxu0
        %v3329 = vadd.f32 %v3063, %v3328
        %3330 = vmatprep.mubr.f32.mxu0 0.0
        %3331 = vmatmul.mubr.f32.gmra.mrb[0].mxu0 %v3025
        %v3332 = vpop.f32.mrb[0].mxu0
        %v3333 = vadd.f32 %v3068, %v3332
        %v3334 = vpop.f32.mrb[0].mxu0
        %v3335 = vadd.f32 %v3068, %v3334
        %3336 = vmatprep.mubr.f32.mxu0 0.0
        %3337 = vmatmul.mubr.f32.gmra.mrb[0].mxu0 %v3026
        %v3338 = vpop.f32.mrb[0].mxu0
        %v3339 = vadd.f32 %v3073, %v3338
        %v3340 = vpop.f32.mrb[0].mxu0
        %v3341 = vadd.f32 %v3073, %v3340
        %3342 = vmatprep.mubr.f32.mxu0 0.0
        %3343 = vmatmul.mubr.f32.gmra.mrb[0].mxu0 %v3027
        %v3344 = vpop.f32.mrb[0].mxu0
        %v3345 = vadd.f32 %v3078, %v3344
        %v3346 = vpop.f32.mrb[0].mxu0
        %v3347 = vadd.f32 %v3078, %v3346
        %3348 = vmatprep.mubr.f32.mxu0 0.0
        %3349 = vmatmul.mubr.f32.gmra.mrb[0].mxu0 %v3028
        %v3350 = vpop.f32.mrb[0].mxu0
        %v3351 = vadd.f32 %v3083, %v3350
        %v3352 = vpop.f32.mrb[0].mxu0
        %v3353 = vadd.f32 %v3083, %v3352
        %3354 = vmatprep.mubr.f32.mxu0 0.0
        %3355 = vmatmul.mubr.f32.gmra.mrb[0].mxu0 %v3029
        %v3356 = vpop.f32.mrb[0].mxu0
        %v3357 = vadd.f32 %v3088, %v3356
        %v3358 = vpop.f32.mrb[0].mxu0
        %v3359 = vadd.f32 %v3088, %v3358
        %3360 = vmatprep.mubr.f32.mxu0 0.0
        %3361 = vmatmul.mubr.f32.gmra.mrb[0].mxu0 %v3030
        %v3362 = vpop.f32.mrb[0].mxu0
        %v3363 = vadd.f32 %v3093, %v3362
        %v3364 = vpop.f32.mrb[0].mxu0
        %v3365 = vadd.f32 %v3093, %v3364
        %3366 = vmatprep.mubr.f32.mxu0 0.0
        %3367 = vmatmul.mubr.f32.gmra.mrb[0].mxu0 %v3031
        %v3368 = vpop.f32.mrb[0].mxu0
        %v3369 = vadd.f32 %v3098, %v3368
        %v3370 = vpop.f32.mrb[0].mxu0
        %v3371 = vadd.f32 %v3098, %v3370
        %3372 = vmatprep.mubr.f32.mxu0 0.0
        %3373 = vmatmul.mubr.f32.gmra.mrb[0].mxu0 %v3032
        %v3374 = vpop.f32.mrb[0].mxu0
        %v3375 = vadd.f32 %v3103, %v3374
        %v3376 = vpop.f32.mrb[0].mxu0
        %v3377 = vadd.f32 %v3103, %v3376
        %3378 = vdwg.mxu0
        %3379 = vmatprep.subr.mxu0 %v2770
        %3380 = vmatpush1.msra.mxu0 %v2769
        %3381 = vmatprep.subr.mxu0 %v2786
        %3382 = vmatpush1.msra.mxu0 %v2785
        %3383 = vmatprep.subr.mxu0 %v2802
        %3384 = vmatpush1.msra.mxu0 %v2801
        %3385 = vmatprep.subr.mxu0 %v2818
        %3386 = vmatpush1.msra.mxu0 %v2817
        %3387 = vmatprep.subr.mxu0 %v2834
        %3388 = vmatpush1.msra.mxu0 %v2833
        %3389 = vmatprep.subr.mxu0 %v2850
        %3390 = vmatpush1.msra.mxu0 %v2849
        %3391 = vmatprep.subr.mxu0 %v2866
        %3392 = vmatpush1.msra.mxu0 %v2865
        %3393 = vmatprep.subr.mxu0 %v2882
        %3394 = vmatpush1.msra.mxu0 %v2881
        %3395 = vmatprep.subr.mxu0 %v2898
        %3396 = vmatpush1.msra.mxu0 %v2897
        %3397 = vmatprep.subr.mxu0 %v2914
        %3398 = vmatpush1.msra.mxu0 %v2913
        %3399 = vmatprep.subr.mxu0 %v2930
        %3400 = vmatpush1.msra.mxu0 %v2929
        %3401 = vmatprep.subr.mxu0 %v2946
        %3402 = vmatpush1.msra.mxu0 %v2945
        %3403 = vmatprep.subr.mxu0 %v2962
        %3404 = vmatpush1.msra.mxu0 %v2961
        %3405 = vmatprep.subr.mxu0 %v2978
        %3406 = vmatpush1.msra.mxu0 %v2977
        %3407 = vmatprep.subr.mxu0 %v2994
        %3408 = vmatpush1.msra.mxu0 %v2993
        %3409 = vmatprep.subr.mxu0 %v3010
        %3410 = vmatpush1.msra.mxu0 %v3009
        %3411 = vmatprep.subr.mxu0 0.0
        %3412 = vmatpush1.msra.mxu0 0.0
        %3413 = vmatprep.subr.mxu0 0.0
        %3414 = vmatpush1.msra.mxu0 0.0
        %3415 = vmatprep.subr.mxu0 0.0
        %3416 = vmatpush1.msra.mxu0 0.0
        %3417 = vmatprep.subr.mxu0 0.0
        %3418 = vmatpush1.msra.mxu0 0.0
        %3419 = vmatprep.subr.mxu0 0.0
        %3420 = vmatpush1.msra.mxu0 0.0
        %3421 = vmatprep.subr.mxu0 0.0
        %3422 = vmatpush1.msra.mxu0 0.0
        %3423 = vmatprep.subr.mxu0 0.0
        %3424 = vmatpush1.msra.mxu0 0.0
        %3425 = vmatprep.subr.mxu0 0.0
        %3426 = vmatpush1.msra.mxu0 0.0
        %3427 = vmatprep.subr.mxu0 0.0
        %3428 = vmatpush1.msra.mxu0 0.0
        %3429 = vmatprep.subr.mxu0 0.0
        %3430 = vmatpush1.msra.mxu0 0.0
        %3431 = vmatprep.subr.mxu0 0.0
        %3432 = vmatpush1.msra.mxu0 0.0
        %3433 = vmatprep.subr.mxu0 0.0
        %3434 = vmatpush1.msra.mxu0 0.0
        %3435 = vmatprep.subr.mxu0 0.0
        %3436 = vmatpush1.msra.mxu0 0.0
        %3437 = vmatprep.subr.mxu0 0.0
        %3438 = vmatpush1.msra.mxu0 0.0
        %3439 = vmatprep.subr.mxu0 0.0
        %3440 = vmatpush1.msra.mxu0 0.0
        %3441 = vmatprep.subr.mxu0 0.0
        %3442 = vmatpush1.msra.mxu0 0.0
        %3443 = vmatprep.mubr.f32.mxu0 0.0
        %3444 = vmatmul.mubr.f32.gmra.mrb[0].mxu0 %v3021
        %v3445 = vpop.f32.mrb[0].mxu0
        %v3446 = vadd.f32 %v3048, %v3445
        %v3447 = vpop.f32.mrb[0].mxu0
        %v3448 = vadd.f32 %v3048, %v3447
        %3449 = vmatprep.mubr.f32.mxu0 0.0
        %3450 = vmatmul.mubr.f32.gmra.mrb[0].mxu0 %v3022
        %v3451 = vpop.f32.mrb[0].mxu0
        %v3452 = vadd.f32 %v3053, %v3451
        %v3453 = vpop.f32.mrb[0].mxu0
        %v3454 = vadd.f32 %v3053, %v3453
        %3455 = vmatprep.mubr.f32.mxu0 0.0
        %3456 = vmatmul.mubr.f32.gmra.mrb[0].mxu0 %v3023
        %v3457 = vpop.f32.mrb[0].mxu0
        %v3458 = vadd.f32 %v3058, %v3457
        %v3459 = vpop.f32.mrb[0].mxu0
        %v3460 = vadd.f32 %v3058, %v3459
        %3461 = vmatprep.mubr.f32.mxu0 0.0
        %3462 = vmatmul.mubr.f32.gmra.mrb[0].mxu0 %v3024
        %v3463 = vpop.f32.mrb[0].mxu0
        %v3464 = vadd.f32 %v3063, %v3463
        %v3465 = vpop.f32.mrb[0].mxu0
        %v3466 = vadd.f32 %v3063, %v3465
        %3467 = vmatprep.mubr.f32.mxu0 0.0
        %3468 = vmatmul.mubr.f32.gmra.mrb[0].mxu0 %v3025
        %v3469 = vpop.f32.mrb[0].mxu0
        %v3470 = vadd.f32 %v3068, %v3469
        %v3471 = vpop.f32.mrb[0].mxu0
        %v3472 = vadd.f32 %v3068, %v3471
        %3473 = vmatprep.mubr.f32.mxu0 0.0
        %3474 = vmatmul.mubr.f32.gmra.mrb[0].mxu0 %v3026
        %v3475 = vpop.f32.mrb[0].mxu0
        %v3476 = vadd.f32 %v3073, %v3475
        %v3477 = vpop.f32.mrb[0].mxu0
        %v3478 = vadd.f32 %v3073, %v3477
        %3479 = vmatprep.mubr.f32.mxu0 0.0
        %3480 = vmatmul.mubr.f32.gmra.mrb[0].mxu0 %v3027
        %v3481 = vpop.f32.mrb[0].mxu0
        %v3482 = vadd.f32 %v3078, %v3481
        %v3483 = vpop.f32.mrb[0].mxu0
        %v3484 = vadd.f32 %v3078, %v3483
        %3485 = vmatprep.mubr.f32.mxu0 0.0
        %3486 = vmatmul.mubr.f32.gmra.mrb[0].mxu0 %v3028
        %v3487 = vpop.f32.mrb[0].mxu0
        %v3488 = vadd.f32 %v3083, %v3487
        %v3489 = vpop.f32.mrb[0].mxu0
        %v3490 = vadd.f32 %v3083, %v3489
        %3491 = vmatprep.mubr.f32.mxu0 0.0
        %3492 = vmatmul.mubr.f32.gmra.mrb[0].mxu0 %v3029
        %v3493 = vpop.f32.mrb[0].mxu0
        %v3494 = vadd.f32 %v3088, %v3493
        %v3495 = vpop.f32.mrb[0].mxu0
        %v3496 = vadd.f32 %v3088, %v3495
        %3497 = vmatprep.mubr.f32.mxu0 0.0
        %3498 = vmatmul.mubr.f32.gmra.mrb[0].mxu0 %v3030
        %v3499 = vpop.f32.mrb[0].mxu0
        %v3500 = vadd.f32 %v3093, %v3499
        %v3501 = vpop.f32.mrb[0].mxu0
        %v3502 = vadd.f32 %v3093, %v3501
        %3503 = vmatprep.mubr.f32.mxu0 0.0
        %3504 = vmatmul.mubr.f32.gmra.mrb[0].mxu0 %v3031
        %v3505 = vpop.f32.mrb[0].mxu0
        %v3506 = vadd.f32 %v3098, %v3505
        %v3507 = vpop.f32.mrb[0].mxu0
        %v3508 = vadd.f32 %v3098, %v3507
        %3509 = vmatprep.mubr.f32.mxu0 0.0
        %3510 = vmatmul.mubr.f32.gmra.mrb[0].mxu0 %v3032
        %v3511 = vpop.f32.mrb[0].mxu0
        %v3512 = vadd.f32 %v3103, %v3511
        %v3513 = vpop.f32.mrb[0].mxu0
        %v3514 = vadd.f32 %v3103, %v3513
        %3515 = vdwg.mxu0
        %3516 = vmatprep.subr.mxu0 %v2772
        %3517 = vmatpush1.msra.mxu0 %v2771
        %3518 = vmatprep.subr.mxu0 %v2788
        %3519 = vmatpush1.msra.mxu0 %v2787
        %3520 = vmatprep.subr.mxu0 %v2804
        %3521 = vmatpush1.msra.mxu0 %v2803
        %3522 = vmatprep.subr.mxu0 %v2820
        %3523 = vmatpush1.msra.mxu0 %v2819
        %3524 = vmatprep.subr.mxu0 %v2836
        %3525 = vmatpush1.msra.mxu0 %v2835
        %3526 = vmatprep.subr.mxu0 %v2852
        %3527 = vmatpush1.msra.mxu0 %v2851
        %3528 = vmatprep.subr.mxu0 %v2868
        %3529 = vmatpush1.msra.mxu0 %v2867
        %3530 = vmatprep.subr.mxu0 %v2884
        %3531 = vmatpush1.msra.mxu0 %v2883
        %3532 = vmatprep.subr.mxu0 %v2900
        %3533 = vmatpush1.msra.mxu0 %v2899
        %3534 = vmatprep.subr.mxu0 %v2916
        %3535 = vmatpush1.msra.mxu0 %v2915
        %3536 = vmatprep.subr.mxu0 %v2932
        %3537 = vmatpush1.msra.mxu0 %v2931
        %3538 = vmatprep.subr.mxu0 %v2948
        %3539 = vmatpush1.msra.mxu0 %v2947
        %3540 = vmatprep.subr.mxu0 %v2964
        %3541 = vmatpush1.msra.mxu0 %v2963
        %3542 = vmatprep.subr.mxu0 %v2980
        %3543 = vmatpush1.msra.mxu0 %v2979
        %3544 = vmatprep.subr.mxu0 %v2996
        %3545 = vmatpush1.msra.mxu0 %v2995
        %3546 = vmatprep.subr.mxu0 %v3012
        %3547 = vmatpush1.msra.mxu0 %v3011
        %3548 = vmatprep.subr.mxu0 0.0
        %3549 = vmatpush1.msra.mxu0 0.0
        %3550 = vmatprep.subr.mxu0 0.0
        %3551 = vmatpush1.msra.mxu0 0.0
        %3552 = vmatprep.subr.mxu0 0.0
        %3553 = vmatpush1.msra.mxu0 0.0
        %3554 = vmatprep.subr.mxu0 0.0
        %3555 = vmatpush1.msra.mxu0 0.0
        %3556 = vmatprep.subr.mxu0 0.0
        %3557 = vmatpush1.msra.mxu0 0.0
        %3558 = vmatprep.subr.mxu0 0.0
        %3559 = vmatpush1.msra.mxu0 0.0
        %3560 = vmatprep.subr.mxu0 0.0
        %3561 = vmatpush1.msra.mxu0 0.0
        %3562 = vmatprep.subr.mxu0 0.0
        %3563 = vmatpush1.msra.mxu0 0.0
        %3564 = vmatprep.subr.mxu0 0.0
        %3565 = vmatpush1.msra.mxu0 0.0
        %3566 = vmatprep.subr.mxu0 0.0
        %3567 = vmatpush1.msra.mxu0 0.0
        %3568 = vmatprep.subr.mxu0 0.0
        %3569 = vmatpush1.msra.mxu0 0.0
        %3570 = vmatprep.subr.mxu0 0.0
        %3571 = vmatpush1.msra.mxu0 0.0
        %3572 = vmatprep.subr.mxu0 0.0
        %3573 = vmatpush1.msra.mxu0 0.0
        %3574 = vmatprep.subr.mxu0 0.0
        %3575 = vmatpush1.msra.mxu0 0.0
        %3576 = vmatprep.subr.mxu0 0.0
        %3577 = vmatpush1.msra.mxu0 0.0
        %3578 = vmatprep.subr.mxu0 0.0
        %3579 = vmatpush1.msra.mxu0 0.0
        %3580 = vmatprep.mubr.f32.mxu0 0.0
        %3581 = vmatmul.mubr.f32.gmra.mrb[0].mxu0 %v3021
        %v3582 = vpop.f32.mrb[0].mxu0
        %v3583 = vadd.f32 %v3048, %v3582
        %v3584 = vpop.f32.mrb[0].mxu0
        %v3585 = vadd.f32 %v3048, %v3584
        %3586 = vmatprep.mubr.f32.mxu0 0.0
        %3587 = vmatmul.mubr.f32.gmra.mrb[0].mxu0 %v3022
        %v3588 = vpop.f32.mrb[0].mxu0
        %v3589 = vadd.f32 %v3053, %v3588
        %v3590 = vpop.f32.mrb[0].mxu0
        %v3591 = vadd.f32 %v3053, %v3590
        %3592 = vmatprep.mubr.f32.mxu0 0.0
        %3593 = vmatmul.mubr.f32.gmra.mrb[0].mxu0 %v3023
        %v3594 = vpop.f32.mrb[0].mxu0
        %v3595 = vadd.f32 %v3058, %v3594
        %v3596 = vpop.f32.mrb[0].mxu0
        %v3597 = vadd.f32 %v3058, %v3596
        %3598 = vmatprep.mubr.f32.mxu0 0.0
        %3599 = vmatmul.mubr.f32.gmra.mrb[0].mxu0 %v3024
        %v3600 = vpop.f32.mrb[0].mxu0
        %v3601 = vadd.f32 %v3063, %v3600
        %v3602 = vpop.f32.mrb[0].mxu0
        %v3603 = vadd.f32 %v3063, %v3602
        %3604 = vmatprep.mubr.f32.mxu0 0.0
        %3605 = vmatmul.mubr.f32.gmra.mrb[0].mxu0 %v3025
        %v3606 = vpop.f32.mrb[0].mxu0
        %v3607 = vadd.f32 %v3068, %v3606
        %v3608 = vpop.f32.mrb[0].mxu0
        %v3609 = vadd.f32 %v3068, %v3608
        %3610 = vmatprep.mubr.f32.mxu0 0.0
        %3611 = vmatmul.mubr.f32.gmra.mrb[0].mxu0 %v3026
        %v3612 = vpop.f32.mrb[0].mxu0
        %v3613 = vadd.f32 %v3073, %v3612
        %v3614 = vpop.f32.mrb[0].mxu0
        %v3615 = vadd.f32 %v3073, %v3614
        %3616 = vmatprep.mubr.f32.mxu0 0.0
        %3617 = vmatmul.mubr.f32.gmra.mrb[0].mxu0 %v3027
        %v3618 = vpop.f32.mrb[0].mxu0
        %v3619 = vadd.f32 %v3078, %v3618
        %v3620 = vpop.f32.mrb[0].mxu0
        %v3621 = vadd.f32 %v3078, %v3620
        %3622 = vmatprep.mubr.f32.mxu0 0.0
        %3623 = vmatmul.mubr.f32.gmra.mrb[0].mxu0 %v3028
        %v3624 = vpop.f32.mrb[0].mxu0
        %v3625 = vadd.f32 %v3083, %v3624
        %v3626 = vpop.f32.mrb[0].mxu0
        %v3627 = vadd.f32 %v3083, %v3626
        %3628 = vmatprep.mubr.f32.mxu0 0.0
        %3629 = vmatmul.mubr.f32.gmra.mrb[0].mxu0 %v3029
        %v3630 = vpop.f32.mrb[0].mxu0
        %v3631 = vadd.f32 %v3088, %v3630
        %v3632 = vpop.f32.mrb[0].mxu0
        %v3633 = vadd.f32 %v3088, %v3632
        %3634 = vmatprep.mubr.f32.mxu0 0.0
        %3635 = vmatmul.mubr.f32.gmra.mrb[0].mxu0 %v3030
        %v3636 = vpop.f32.mrb[0].mxu0
        %v3637 = vadd.f32 %v3093, %v3636
        %v3638 = vpop.f32.mrb[0].mxu0
        %v3639 = vadd.f32 %v3093, %v3638
        %3640 = vmatprep.mubr.f32.mxu0 0.0
        %3641 = vmatmul.mubr.f32.gmra.mrb[0].mxu0 %v3031
        %v3642 = vpop.f32.mrb[0].mxu0
        %v3643 = vadd.f32 %v3098, %v3642
        %v3644 = vpop.f32.mrb[0].mxu0
        %v3645 = vadd.f32 %v3098, %v3644
        %3646 = vmatprep.mubr.f32.mxu0 0.0
        %3647 = vmatmul.mubr.f32.gmra.mrb[0].mxu0 %v3032
        %v3648 = vpop.f32.mrb[0].mxu0
        %v3649 = vadd.f32 %v3103, %v3648
        %v3650 = vpop.f32.mrb[0].mxu0
        %v3651 = vadd.f32 %v3103, %v3650
        %3652 = vdwg.mxu0
        %3653 = vmatprep.subr.mxu0 %v2774
        %3654 = vmatpush1.msra.mxu0 %v2773
        %3655 = vmatprep.subr.mxu0 %v2790
        %3656 = vmatpush1.msra.mxu0 %v2789
        %3657 = vmatprep.subr.mxu0 %v2806
        %3658 = vmatpush1.msra.mxu0 %v2805
        %3659 = vmatprep.subr.mxu0 %v2822
        %3660 = vmatpush1.msra.mxu0 %v2821
        %3661 = vmatprep.subr.mxu0 %v2838
        %3662 = vmatpush1.msra.mxu0 %v2837
        %3663 = vmatprep.subr.mxu0 %v2854
        %3664 = vmatpush1.msra.mxu0 %v2853
        %3665 = vmatprep.subr.mxu0 %v2870
        %3666 = vmatpush1.msra.mxu0 %v2869
        %3667 = vmatprep.subr.mxu0 %v2886
        %3668 = vmatpush1.msra.mxu0 %v2885
        %3669 = vmatprep.subr.mxu0 %v2902
        %3670 = vmatpush1.msra.mxu0 %v2901
        %3671 = vmatprep.subr.mxu0 %v2918
        %3672 = vmatpush1.msra.mxu0 %v2917
        %3673 = vmatprep.subr.mxu0 %v2934
        %3674 = vmatpush1.msra.mxu0 %v2933
        %3675 = vmatprep.subr.mxu0 %v2950
        %3676 = vmatpush1.msra.mxu0 %v2949
        %3677 = vmatprep.subr.mxu0 %v2966
        %3678 = vmatpush1.msra.mxu0 %v2965
        %3679 = vmatprep.subr.mxu0 %v2982
        %3680 = vmatpush1.msra.mxu0 %v2981
        %3681 = vmatprep.subr.mxu0 %v2998
        %3682 = vmatpush1.msra.mxu0 %v2997
        %3683 = vmatprep.subr.mxu0 %v3014
        %3684 = vmatpush1.msra.mxu0 %v3013
        %3685 = vmatprep.subr.mxu0 0.0
        %3686 = vmatpush1.msra.mxu0 0.0
        %3687 = vmatprep.subr.mxu0 0.0
        %3688 = vmatpush1.msra.mxu0 0.0
        %3689 = vmatprep.subr.mxu0 0.0
        %3690 = vmatpush1.msra.mxu0 0.0
        %3691 = vmatprep.subr.mxu0 0.0
        %3692 = vmatpush1.msra.mxu0 0.0
        %3693 = vmatprep.subr.mxu0 0.0
        %3694 = vmatpush1.msra.mxu0 0.0
        %3695 = vmatprep.subr.mxu0 0.0
        %3696 = vmatpush1.msra.mxu0 0.0
        %3697 = vmatprep.subr.mxu0 0.0
        %3698 = vmatpush1.msra.mxu0 0.0
        %3699 = vmatprep.subr.mxu0 0.0
        %3700 = vmatpush1.msra.mxu0 0.0
        %3701 = vmatprep.subr.mxu0 0.0
        %3702 = vmatpush1.msra.mxu0 0.0
        %3703 = vmatprep.subr.mxu0 0.0
        %3704 = vmatpush1.msra.mxu0 0.0
        %3705 = vmatprep.subr.mxu0 0.0
        %3706 = vmatpush1.msra.mxu0 0.0
        %3707 = vmatprep.subr.mxu0 0.0
        %3708 = vmatpush1.msra.mxu0 0.0
        %3709 = vmatprep.subr.mxu0 0.0
        %3710 = vmatpush1.msra.mxu0 0.0
        %3711 = vmatprep.subr.mxu0 0.0
        %3712 = vmatpush1.msra.mxu0 0.0
        %3713 = vmatprep.subr.mxu0 0.0
        %3714 = vmatpush1.msra.mxu0 0.0
        %3715 = vmatprep.subr.mxu0 0.0
        %3716 = vmatpush1.msra.mxu0 0.0
        %3717 = vmatprep.mubr.f32.mxu0 0.0
        %3718 = vmatmul.mubr.f32.gmra.mrb[0].mxu0 %v3021
        %v3719 = vpop.f32.mrb[0].mxu0
        %v3720 = vadd.f32 %v3048, %v3719
        %v3721 = vpop.f32.mrb[0].mxu0
        %v3722 = vadd.f32 %v3048, %v3721
        %3723 = vmatprep.mubr.f32.mxu0 0.0
        %3724 = vmatmul.mubr.f32.gmra.mrb[0].mxu0 %v3022
        %v3725 = vpop.f32.mrb[0].mxu0
        %v3726 = vadd.f32 %v3053, %v3725
        %v3727 = vpop.f32.mrb[0].mxu0
        %v3728 = vadd.f32 %v3053, %v3727
        %3729 = vmatprep.mubr.f32.mxu0 0.0
        %3730 = vmatmul.mubr.f32.gmra.mrb[0].mxu0 %v3023
        %v3731 = vpop.f32.mrb[0].mxu0
        %v3732 = vadd.f32 %v3058, %v3731
        %v3733 = vpop.f32.mrb[0].mxu0
        %v3734 = vadd.f32 %v3058, %v3733
        %3735 = vmatprep.mubr.f32.mxu0 0.0
        %3736 = vmatmul.mubr.f32.gmra.mrb[0].mxu0 %v3024
        %v3737 = vpop.f32.mrb[0].mxu0
        %v3738 = vadd.f32 %v3063, %v3737
        %v3739 = vpop.f32.mrb[0].mxu0
        %v3740 = vadd.f32 %v3063, %v3739
        %3741 = vmatprep.mubr.f32.mxu0 0.0
        %3742 = vmatmul.mubr.f32.gmra.mrb[0].mxu0 %v3025
        %v3743 = vpop.f32.mrb[0].mxu0
        %v3744 = vadd.f32 %v3068, %v3743
        %v3745 = vpop.f32.mrb[0].mxu0
        %v3746 = vadd.f32 %v3068, %v3745
        %3747 = vmatprep.mubr.f32.mxu0 0.0
        %3748 = vmatmul.mubr.f32.gmra.mrb[0].mxu0 %v3026
        %v3749 = vpop.f32.mrb[0].mxu0
        %v3750 = vadd.f32 %v3073, %v3749
        %v3751 = vpop.f32.mrb[0].mxu0
        %v3752 = vadd.f32 %v3073, %v3751
        %3753 = vmatprep.mubr.f32.mxu0 0.0
        %3754 = vmatmul.mubr.f32.gmra.mrb[0].mxu0 %v3027
        %v3755 = vpop.f32.mrb[0].mxu0
        %v3756 = vadd.f32 %v3078, %v3755
        %v3757 = vpop.f32.mrb[0].mxu0
        %v3758 = vadd.f32 %v3078, %v3757
        %3759 = vmatprep.mubr.f32.mxu0 0.0
        %3760 = vmatmul.mubr.f32.gmra.mrb[0].mxu0 %v3028
        %v3761 = vpop.f32.mrb[0].mxu0
        %v3762 = vadd.f32 %v3083, %v3761
        %v3763 = vpop.f32.mrb[0].mxu0
        %v3764 = vadd.f32 %v3083, %v3763
        %3765 = vmatprep.mubr.f32.mxu0 0.0
        %3766 = vmatmul.mubr.f32.gmra.mrb[0].mxu0 %v3029
        %v3767 = vpop.f32.mrb[0].mxu0
        %v3768 = vadd.f32 %v3088, %v3767
        %v3769 = vpop.f32.mrb[0].mxu0
        %v3770 = vadd.f32 %v3088, %v3769
        %3771 = vmatprep.mubr.f32.mxu0 0.0
        %3772 = vmatmul.mubr.f32.gmra.mrb[0].mxu0 %v3030
        %v3773 = vpop.f32.mrb[0].mxu0
        %v3774 = vadd.f32 %v3093, %v3773
        %v3775 = vpop.f32.mrb[0].mxu0
        %v3776 = vadd.f32 %v3093, %v3775
        %3777 = vmatprep.mubr.f32.mxu0 0.0
        %3778 = vmatmul.mubr.f32.gmra.mrb[0].mxu0 %v3031
        %v3779 = vpop.f32.mrb[0].mxu0
        %v3780 = vadd.f32 %v3098, %v3779
        %v3781 = vpop.f32.mrb[0].mxu0
        %v3782 = vadd.f32 %v3098, %v3781
        %3783 = vmatprep.mubr.f32.mxu0 0.0
        %3784 = vmatmul.mubr.f32.gmra.mrb[0].mxu0 %v3032
        %v3785 = vpop.f32.mrb[0].mxu0
        %v3786 = vadd.f32 %v3103, %v3785
        %v3787 = vpop.f32.mrb[0].mxu0
        %v3788 = vadd.f32 %v3103, %v3787
        %3789 = vdwg.mxu0
        %3790 = vmatprep.subr.mxu0 %v2776
        %3791 = vmatpush1.msra.mxu0 %v2775
        %3792 = vmatprep.subr.mxu0 %v2792
        %3793 = vmatpush1.msra.mxu0 %v2791
        %3794 = vmatprep.subr.mxu0 %v2808
        %3795 = vmatpush1.msra.mxu0 %v2807
        %3796 = vmatprep.subr.mxu0 %v2824
        %3797 = vmatpush1.msra.mxu0 %v2823
        %3798 = vmatprep.subr.mxu0 %v2840
        %3799 = vmatpush1.msra.mxu0 %v2839
        %3800 = vmatprep.subr.mxu0 %v2856
        %3801 = vmatpush1.msra.mxu0 %v2855
        %3802 = vmatprep.subr.mxu0 %v2872
        %3803 = vmatpush1.msra.mxu0 %v2871
        %3804 = vmatprep.subr.mxu0 %v2888
        %3805 = vmatpush1.msra.mxu0 %v2887
        %3806 = vmatprep.subr.mxu0 %v2904
        %3807 = vmatpush1.msra.mxu0 %v2903
        %3808 = vmatprep.subr.mxu0 %v2920
        %3809 = vmatpush1.msra.mxu0 %v2919
        %3810 = vmatprep.subr.mxu0 %v2936
        %3811 = vmatpush1.msra.mxu0 %v2935
        %3812 = vmatprep.subr.mxu0 %v2952
        %3813 = vmatpush1.msra.mxu0 %v2951
        %3814 = vmatprep.subr.mxu0 %v2968
        %3815 = vmatpush1.msra.mxu0 %v2967
        %3816 = vmatprep.subr.mxu0 %v2984
        %3817 = vmatpush1.msra.mxu0 %v2983
        %3818 = vmatprep.subr.mxu0 %v3000
        %3819 = vmatpush1.msra.mxu0 %v2999
        %3820 = vmatprep.subr.mxu0 %v3016
        %3821 = vmatpush1.msra.mxu0 %v3015
        %3822 = vmatprep.subr.mxu0 0.0
        %3823 = vmatpush1.msra.mxu0 0.0
        %3824 = vmatprep.subr.mxu0 0.0
        %3825 = vmatpush1.msra.mxu0 0.0
        %3826 = vmatprep.subr.mxu0 0.0
        %3827 = vmatpush1.msra.mxu0 0.0
        %3828 = vmatprep.subr.mxu0 0.0
        %3829 = vmatpush1.msra.mxu0 0.0
        %3830 = vmatprep.subr.mxu0 0.0
        %3831 = vmatpush1.msra.mxu0 0.0
        %3832 = vmatprep.subr.mxu0 0.0
        %3833 = vmatpush1.msra.mxu0 0.0
        %3834 = vmatprep.subr.mxu0 0.0
        %3835 = vmatpush1.msra.mxu0 0.0
        %3836 = vmatprep.subr.mxu0 0.0
        %3837 = vmatpush1.msra.mxu0 0.0
        %3838 = vmatprep.subr.mxu0 0.0
        %3839 = vmatpush1.msra.mxu0 0.0
        %3840 = vmatprep.subr.mxu0 0.0
        %3841 = vmatpush1.msra.mxu0 0.0
        %3842 = vmatprep.subr.mxu0 0.0
        %3843 = vmatpush1.msra.mxu0 0.0
        %3844 = vmatprep.subr.mxu0 0.0
        %3845 = vmatpush1.msra.mxu0 0.0
        %3846 = vmatprep.subr.mxu0 0.0
        %3847 = vmatpush1.msra.mxu0 0.0
        %3848 = vmatprep.subr.mxu0 0.0
        %3849 = vmatpush1.msra.mxu0 0.0
        %3850 = vmatprep.subr.mxu0 0.0
        %3851 = vmatpush1.msra.mxu0 0.0
        %3852 = vmatprep.subr.mxu0 0.0
        %3853 = vmatpush1.msra.mxu0 0.0
        %3854 = vmatprep.mubr.f32.mxu0 0.0
        %3855 = vmatmul.mubr.f32.gmra.mrb[0].mxu0 %v3021
        %v3856 = vpop.f32.mrb[0].mxu0
        %v3857 = vadd.f32 %v3048, %v3856
        %v3858 = vpop.f32.mrb[0].mxu0
        %v3859 = vadd.f32 %v3048, %v3858
        %3860 = vmatprep.mubr.f32.mxu0 0.0
        %3861 = vmatmul.mubr.f32.gmra.mrb[0].mxu0 %v3022
        %v3862 = vpop.f32.mrb[0].mxu0
        %v3863 = vadd.f32 %v3053, %v3862
        %v3864 = vpop.f32.mrb[0].mxu0
        %v3865 = vadd.f32 %v3053, %v3864
        %3866 = vmatprep.mubr.f32.mxu0 0.0
        %3867 = vmatmul.mubr.f32.gmra.mrb[0].mxu0 %v3023
        %v3868 = vpop.f32.mrb[0].mxu0
        %v3869 = vadd.f32 %v3058, %v3868
        %v3870 = vpop.f32.mrb[0].mxu0
        %v3871 = vadd.f32 %v3058, %v3870
        %3872 = vmatprep.mubr.f32.mxu0 0.0
        %3873 = vmatmul.mubr.f32.gmra.mrb[0].mxu0 %v3024
        %v3874 = vpop.f32.mrb[0].mxu0
        %v3875 = vadd.f32 %v3063, %v3874
        %v3876 = vpop.f32.mrb[0].mxu0
        %v3877 = vadd.f32 %v3063, %v3876
        %3878 = vmatprep.mubr.f32.mxu0 0.0
        %3879 = vmatmul.mubr.f32.gmra.mrb[0].mxu0 %v3025
        %v3880 = vpop.f32.mrb[0].mxu0
        %v3881 = vadd.f32 %v3068, %v3880
        %v3882 = vpop.f32.mrb[0].mxu0
        %v3883 = vadd.f32 %v3068, %v3882
        %3884 = vmatprep.mubr.f32.mxu0 0.0
        %3885 = vmatmul.mubr.f32.gmra.mrb[0].mxu0 %v3026
        %v3886 = vpop.f32.mrb[0].mxu0
        %v3887 = vadd.f32 %v3073, %v3886
        %v3888 = vpop.f32.mrb[0].mxu0
        %v3889 = vadd.f32 %v3073, %v3888
        %3890 = vmatprep.mubr.f32.mxu0 0.0
        %3891 = vmatmul.mubr.f32.gmra.mrb[0].mxu0 %v3027
        %v3892 = vpop.f32.mrb[0].mxu0
        %v3893 = vadd.f32 %v3078, %v3892
        %v3894 = vpop.f32.mrb[0].mxu0
        %v3895 = vadd.f32 %v3078, %v3894
        %3896 = vmatprep.mubr.f32.mxu0 0.0
        %3897 = vmatmul.mubr.f32.gmra.mrb[0].mxu0 %v3028
        %v3898 = vpop.f32.mrb[0].mxu0
        %v3899 = vadd.f32 %v3083, %v3898
        %v3900 = vpop.f32.mrb[0].mxu0
        %v3901 = vadd.f32 %v3083, %v3900
        %3902 = vmatprep.mubr.f32.mxu0 0.0
        %3903 = vmatmul.mubr.f32.gmra.mrb[0].mxu0 %v3029
        %v3904 = vpop.f32.mrb[0].mxu0
        %v3905 = vadd.f32 %v3088, %v3904
        %v3906 = vpop.f32.mrb[0].mxu0
        %v3907 = vadd.f32 %v3088, %v3906
        %3908 = vmatprep.mubr.f32.mxu0 0.0
        %3909 = vmatmul.mubr.f32.gmra.mrb[0].mxu0 %v3030
        %v3910 = vpop.f32.mrb[0].mxu0
        %v3911 = vadd.f32 %v3093, %v3910
        %v3912 = vpop.f32.mrb[0].mxu0
        %v3913 = vadd.f32 %v3093, %v3912
        %3914 = vmatprep.mubr.f32.mxu0 0.0
        %3915 = vmatmul.mubr.f32.gmra.mrb[0].mxu0 %v3031
        %v3916 = vpop.f32.mrb[0].mxu0
        %v3917 = vadd.f32 %v3098, %v3916
        %v3918 = vpop.f32.mrb[0].mxu0
        %v3919 = vadd.f32 %v3098, %v3918
        %3920 = vmatprep.mubr.f32.mxu0 0.0
        %3921 = vmatmul.mubr.f32.gmra.mrb[0].mxu0 %v3032
        %v3922 = vpop.f32.mrb[0].mxu0
        %v3923 = vadd.f32 %v3103, %v3922
        %v3924 = vpop.f32.mrb[0].mxu0
        %v3925 = vadd.f32 %v3103, %v3924
        %3926 = vdwg.mxu0
        %3927 = vmatprep.subr.mxu0 %v2778
        %3928 = vmatpush1.msra.mxu0 %v2777
        %3929 = vmatprep.subr.mxu0 %v2794
        %3930 = vmatpush1.msra.mxu0 %v2793
        %3931 = vmatprep.subr.mxu0 %v2810
        %3932 = vmatpush1.msra.mxu0 %v2809
        %3933 = vmatprep.subr.mxu0 %v2826
        %3934 = vmatpush1.msra.mxu0 %v2825
        %3935 = vmatprep.subr.mxu0 %v2842
        %3936 = vmatpush1.msra.mxu0 %v2841
        %3937 = vmatprep.subr.mxu0 %v2858
        %3938 = vmatpush1.msra.mxu0 %v2857
        %3939 = vmatprep.subr.mxu0 %v2874
        %3940 = vmatpush1.msra.mxu0 %v2873
        %3941 = vmatprep.subr.mxu0 %v2890
        %3942 = vmatpush1.msra.mxu0 %v2889
        %3943 = vmatprep.subr.mxu0 %v2906
        %3944 = vmatpush1.msra.mxu0 %v2905
        %3945 = vmatprep.subr.mxu0 %v2922
        %3946 = vmatpush1.msra.mxu0 %v2921
        %3947 = vmatprep.subr.mxu0 %v2938
        %3948 = vmatpush1.msra.mxu0 %v2937
        %3949 = vmatprep.subr.mxu0 %v2954
        %3950 = vmatpush1.msra.mxu0 %v2953
        %3951 = vmatprep.subr.mxu0 %v2970
        %3952 = vmatpush1.msra.mxu0 %v2969
        %3953 = vmatprep.subr.mxu0 %v2986
        %3954 = vmatpush1.msra.mxu0 %v2985
        %3955 = vmatprep.subr.mxu0 %v3002
        %3956 = vmatpush1.msra.mxu0 %v3001
        %3957 = vmatprep.subr.mxu0 %v3018
        %3958 = vmatpush1.msra.mxu0 %v3017
        %3959 = vmatprep.subr.mxu0 0.0
        %3960 = vmatpush1.msra.mxu0 0.0
        %3961 = vmatprep.subr.mxu0 0.0
        %3962 = vmatpush1.msra.mxu0 0.0
        %3963 = vmatprep.subr.mxu0 0.0
        %3964 = vmatpush1.msra.mxu0 0.0
        %3965 = vmatprep.subr.mxu0 0.0
        %3966 = vmatpush1.msra.mxu0 0.0
        %3967 = vmatprep.subr.mxu0 0.0
        %3968 = vmatpush1.msra.mxu0 0.0
        %3969 = vmatprep.subr.mxu0 0.0
        %3970 = vmatpush1.msra.mxu0 0.0
        %3971 = vmatprep.subr.mxu0 0.0
        %3972 = vmatpush1.msra.mxu0 0.0
        %3973 = vmatprep.subr.mxu0 0.0
        %3974 = vmatpush1.msra.mxu0 0.0
        %3975 = vmatprep.subr.mxu0 0.0
        %3976 = vmatpush1.msra.mxu0 0.0
        %3977 = vmatprep.subr.mxu0 0.0
        %3978 = vmatpush1.msra.mxu0 0.0
        %3979 = vmatprep.subr.mxu0 0.0
        %3980 = vmatpush1.msra.mxu0 0.0
        %3981 = vmatprep.subr.mxu0 0.0
        %3982 = vmatpush1.msra.mxu0 0.0
        %3983 = vmatprep.subr.mxu0 0.0
        %3984 = vmatpush1.msra.mxu0 0.0
        %3985 = vmatprep.subr.mxu0 0.0
        %3986 = vmatpush1.msra.mxu0 0.0
        %3987 = vmatprep.subr.mxu0 0.0
        %3988 = vmatpush1.msra.mxu0 0.0
        %3989 = vmatprep.subr.mxu0 0.0
        %3990 = vmatpush1.msra.mxu0 0.0
        %3991 = vmatprep.mubr.f32.mxu0 0.0
        %3992 = vmatmul.mubr.f32.gmra.mrb[0].mxu0 %v3021
        %v3993 = vpop.f32.mrb[0].mxu0
        %v3994 = vadd.f32 %v3048, %v3993
        %v3995 = vpop.f32.mrb[0].mxu0
        %v3996 = vadd.f32 %v3048, %v3995
        %3997 = vmatprep.mubr.f32.mxu0 0.0
        %3998 = vmatmul.mubr.f32.gmra.mrb[0].mxu0 %v3022
        %v3999 = vpop.f32.mrb[0].mxu0
        %v4000 = vadd.f32 %v3053, %v3999
        %v4001 = vpop.f32.mrb[0].mxu0
        %v4002 = vadd.f32 %v3053, %v4001
        %4003 = vmatprep.mubr.f32.mxu0 0.0
        %4004 = vmatmul.mubr.f32.gmra.mrb[0].mxu0 %v3023
        %v4005 = vpop.f32.mrb[0].mxu0
        %v4006 = vadd.f32 %v3058, %v4005
        %v4007 = vpop.f32.mrb[0].mxu0
        %v4008 = vadd.f32 %v3058, %v4007
        %4009 = vmatprep.mubr.f32.mxu0 0.0
        %4010 = vmatmul.mubr.f32.gmra.mrb[0].mxu0 %v3024
        %v4011 = vpop.f32.mrb[0].mxu0
        %v4012 = vadd.f32 %v3063, %v4011
        %v4013 = vpop.f32.mrb[0].mxu0
        %v4014 = vadd.f32 %v3063, %v4013
        %4015 = vmatprep.mubr.f32.mxu0 0.0
        %4016 = vmatmul.mubr.f32.gmra.mrb[0].mxu0 %v3025
        %v4017 = vpop.f32.mrb[0].mxu0
        %v4018 = vadd.f32 %v3068, %v4017
        %v4019 = vpop.f32.mrb[0].mxu0
        %v4020 = vadd.f32 %v3068, %v4019
        %4021 = vmatprep.mubr.f32.mxu0 0.0
        %4022 = vmatmul.mubr.f32.gmra.mrb[0].mxu0 %v3026
        %v4023 = vpop.f32.mrb[0].mxu0
        %v4024 = vadd.f32 %v3073, %v4023
        %v4025 = vpop.f32.mrb[0].mxu0
        %v4026 = vadd.f32 %v3073, %v4025
        %4027 = vmatprep.mubr.f32.mxu0 0.0
        %4028 = vmatmul.mubr.f32.gmra.mrb[0].mxu0 %v3027
        %v4029 = vpop.f32.mrb[0].mxu0
        %v4030 = vadd.f32 %v3078, %v4029
        %v4031 = vpop.f32.mrb[0].mxu0
        %v4032 = vadd.f32 %v3078, %v4031
        %4033 = vmatprep.mubr.f32.mxu0 0.0
        %4034 = vmatmul.mubr.f32.gmra.mrb[0].mxu0 %v3028
        %v4035 = vpop.f32.mrb[0].mxu0
        %v4036 = vadd.f32 %v3083, %v4035
        %v4037 = vpop.f32.mrb[0].mxu0
        %v4038 = vadd.f32 %v3083, %v4037
        %4039 = vmatprep.mubr.f32.mxu0 0.0
        %4040 = vmatmul.mubr.f32.gmra.mrb[0].mxu0 %v3029
        %v4041 = vpop.f32.mrb[0].mxu0
        %v4042 = vadd.f32 %v3088, %v4041
        %v4043 = vpop.f32.mrb[0].mxu0
        %v4044 = vadd.f32 %v3088, %v4043
        %4045 = vmatprep.mubr.f32.mxu0 0.0
        %4046 = vmatmul.mubr.f32.gmra.mrb[0].mxu0 %v3030
        %v4047 = vpop.f32.mrb[0].mxu0
        %v4048 = vadd.f32 %v3093, %v4047
        %v4049 = vpop.f32.mrb[0].mxu0
        %v4050 = vadd.f32 %v3093, %v4049
        %4051 = vmatprep.mubr.f32.mxu0 0.0
        %4052 = vmatmul.mubr.f32.gmra.mrb[0].mxu0 %v3031
        %v4053 = vpop.f32.mrb[0].mxu0
        %v4054 = vadd.f32 %v3098, %v4053
        %v4055 = vpop.f32.mrb[0].mxu0
        %v4056 = vadd.f32 %v3098, %v4055
        %4057 = vmatprep.mubr.f32.mxu0 0.0
        %4058 = vmatmul.mubr.f32.gmra.mrb[0].mxu0 %v3032
        %v4059 = vpop.f32.mrb[0].mxu0
        %v4060 = vadd.f32 %v3103, %v4059
        %v4061 = vpop.f32.mrb[0].mxu0
        %v4062 = vadd.f32 %v3103, %v4061
        %4063 = vdwg.mxu0
        %4064 = vmatprep.subr.mxu0 %v2780
        %4065 = vmatpush1.msra.mxu0 %v2779
        %4066 = vmatprep.subr.mxu0 %v2796
        %4067 = vmatpush1.msra.mxu0 %v2795
        %4068 = vmatprep.subr.mxu0 %v2812
        %4069 = vmatpush1.msra.mxu0 %v2811
        %4070 = vmatprep.subr.mxu0 %v2828
        %4071 = vmatpush1.msra.mxu0 %v2827
        %4072 = vmatprep.subr.mxu0 %v2844
        %4073 = vmatpush1.msra.mxu0 %v2843
        %4074 = vmatprep.subr.mxu0 %v2860
        %4075 = vmatpush1.msra.mxu0 %v2859
        %4076 = vmatprep.subr.mxu0 %v2876
        %4077 = vmatpush1.msra.mxu0 %v2875
        %4078 = vmatprep.subr.mxu0 %v2892
        %4079 = vmatpush1.msra.mxu0 %v2891
        %4080 = vmatprep.subr.mxu0 %v2908
        %4081 = vmatpush1.msra.mxu0 %v2907
        %4082 = vmatprep.subr.mxu0 %v2924
        %4083 = vmatpush1.msra.mxu0 %v2923
        %4084 = vmatprep.subr.mxu0 %v2940
        %4085 = vmatpush1.msra.mxu0 %v2939
        %4086 = vmatprep.subr.mxu0 %v2956
        %4087 = vmatpush1.msra.mxu0 %v2955
        %4088 = vmatprep.subr.mxu0 %v2972
        %4089 = vmatpush1.msra.mxu0 %v2971
        %4090 = vmatprep.subr.mxu0 %v2988
        %4091 = vmatpush1.msra.mxu0 %v2987
        %4092 = vmatprep.subr.mxu0 %v3004
        %4093 = vmatpush1.msra.mxu0 %v3003
        %4094 = vmatprep.subr.mxu0 %v3020
        %4095 = vmatpush1.msra.mxu0 %v3019
        %4096 = vmatprep.subr.mxu0 0.0
        %4097 = vmatpush1.msra.mxu0 0.0
        %4098 = vmatprep.subr.mxu0 0.0
        %4099 = vmatpush1.msra.mxu0 0.0
        %4100 = vmatprep.subr.mxu0 0.0
        %4101 = vmatpush1.msra.mxu0 0.0
        %4102 = vmatprep.subr.mxu0 0.0
        %4103 = vmatpush1.msra.mxu0 0.0
        %4104 = vmatprep.subr.mxu0 0.0
        %4105 = vmatpush1.msra.mxu0 0.0
        %4106 = vmatprep.subr.mxu0 0.0
        %4107 = vmatpush1.msra.mxu0 0.0
        %4108 = vmatprep.subr.mxu0 0.0
        %4109 = vmatpush1.msra.mxu0 0.0
        %4110 = vmatprep.subr.mxu0 0.0
        %4111 = vmatpush1.msra.mxu0 0.0
        %4112 = vmatprep.subr.mxu0 0.0
        %4113 = vmatpush1.msra.mxu0 0.0
        %4114 = vmatprep.subr.mxu0 0.0
        %4115 = vmatpush1.msra.mxu0 0.0
        %4116 = vmatprep.subr.mxu0 0.0
        %4117 = vmatpush1.msra.mxu0 0.0
        %4118 = vmatprep.subr.mxu0 0.0
        %4119 = vmatpush1.msra.mxu0 0.0
        %4120 = vmatprep.subr.mxu0 0.0
        %4121 = vmatpush1.msra.mxu0 0.0
        %4122 = vmatprep.subr.mxu0 0.0
        %4123 = vmatpush1.msra.mxu0 0.0
        %4124 = vmatprep.subr.mxu0 0.0
        %4125 = vmatpush1.msra.mxu0 0.0
        %4126 = vmatprep.subr.mxu0 0.0
        %4127 = vmatpush1.msra.mxu0 0.0
        %4128 = vmatprep.mubr.f32.mxu0 0.0
        %4129 = vmatmul.mubr.f32.gmra.mrb[0].mxu0 %v3021
        %v4130 = vpop.f32.mrb[0].mxu0
        %v4131 = vadd.f32 %v3048, %v4130
        %v4132 = vpop.f32.mrb[0].mxu0
        %v4133 = vadd.f32 %v3048, %v4132
        %4134 = vmatprep.mubr.f32.mxu0 0.0
        %4135 = vmatmul.mubr.f32.gmra.mrb[0].mxu0 %v3022
        %v4136 = vpop.f32.mrb[0].mxu0
        %v4137 = vadd.f32 %v3053, %v4136
        %v4138 = vpop.f32.mrb[0].mxu0
        %v4139 = vadd.f32 %v3053, %v4138
        %4140 = vmatprep.mubr.f32.mxu0 0.0
        %4141 = vmatmul.mubr.f32.gmra.mrb[0].mxu0 %v3023
        %v4142 = vpop.f32.mrb[0].mxu0
        %v4143 = vadd.f32 %v3058, %v4142
        %v4144 = vpop.f32.mrb[0].mxu0
        %v4145 = vadd.f32 %v3058, %v4144
        %4146 = vmatprep.mubr.f32.mxu0 0.0
        %4147 = vmatmul.mubr.f32.gmra.mrb[0].mxu0 %v3024
        %v4148 = vpop.f32.mrb[0].mxu0
        %v4149 = vadd.f32 %v3063, %v4148
        %v4150 = vpop.f32.mrb[0].mxu0
        %v4151 = vadd.f32 %v3063, %v4150
        %4152 = vmatprep.mubr.f32.mxu0 0.0
        %4153 = vmatmul.mubr.f32.gmra.mrb[0].mxu0 %v3025
        %v4154 = vpop.f32.mrb[0].mxu0
        %v4155 = vadd.f32 %v3068, %v4154
        %v4156 = vpop.f32.mrb[0].mxu0
        %v4157 = vadd.f32 %v3068, %v4156
        %4158 = vmatprep.mubr.f32.mxu0 0.0
        %4159 = vmatmul.mubr.f32.gmra.mrb[0].mxu0 %v3026
        %v4160 = vpop.f32.mrb[0].mxu0
        %v4161 = vadd.f32 %v3073, %v4160
        %v4162 = vpop.f32.mrb[0].mxu0
        %v4163 = vadd.f32 %v3073, %v4162
        %4164 = vmatprep.mubr.f32.mxu0 0.0
        %4165 = vmatmul.mubr.f32.gmra.mrb[0].mxu0 %v3027
        %v4166 = vpop.f32.mrb[0].mxu0
        %v4167 = vadd.f32 %v3078, %v4166
        %v4168 = vpop.f32.mrb[0].mxu0
        %v4169 = vadd.f32 %v3078, %v4168
        %4170 = vmatprep.mubr.f32.mxu0 0.0
        %4171 = vmatmul.mubr.f32.gmra.mrb[0].mxu0 %v3028
        %v4172 = vpop.f32.mrb[0].mxu0
        %v4173 = vadd.f32 %v3083, %v4172
        %v4174 = vpop.f32.mrb[0].mxu0
        %v4175 = vadd.f32 %v3083, %v4174
        %4176 = vmatprep.mubr.f32.mxu0 0.0
        %4177 = vmatmul.mubr.f32.gmra.mrb[0].mxu0 %v3029
        %v4178 = vpop.f32.mrb[0].mxu0
        %v4179 = vadd.f32 %v3088, %v4178
        %v4180 = vpop.f32.mrb[0].mxu0
        %v4181 = vadd.f32 %v3088, %v4180
        %4182 = vmatprep.mubr.f32.mxu0 0.0
        %4183 = vmatmul.mubr.f32.gmra.mrb[0].mxu0 %v3030
        %v4184 = vpop.f32.mrb[0].mxu0
        %v4185 = vadd.f32 %v3093, %v4184
        %v4186 = vpop.f32.mrb[0].mxu0
        %v4187 = vadd.f32 %v3093, %v4186
        %4188 = vmatprep.mubr.f32.mxu0 0.0
        %4189 = vmatmul.mubr.f32.gmra.mrb[0].mxu0 %v3031
        %v4190 = vpop.f32.mrb[0].mxu0
        %v4191 = vadd.f32 %v3098, %v4190
        %v4192 = vpop.f32.mrb[0].mxu0
        %v4193 = vadd.f32 %v3098, %v4192
        %4194 = vmatprep.mubr.f32.mxu0 0.0
        %4195 = vmatmul.mubr.f32.gmra.mrb[0].mxu0 %v3032
        %v4196 = vpop.f32.mrb[0].mxu0
        %v4197 = vadd.f32 %v3103, %v4196
        %v4198 = vpop.f32.mrb[0].mxu0
        %v4199 = vadd.f32 %v3103, %v4198
        %4200 = vdwg.mxu0
        %v4201 = vxor.u32 %v3172, 2147483648
        %v4202 = vxor.u32 %v3174, 2147483648
        %v4203 = vxor.u32 %v3309, 2147483648
        %v4204 = vxor.u32 %v3311, 2147483648
        %v4205 = vxor.u32 %v3446, 2147483648
        %v4206 = vxor.u32 %v3448, 2147483648
        %v4207 = vxor.u32 %v3583, 2147483648
        %v4208 = vxor.u32 %v3585, 2147483648
        %v4209 = vxor.u32 %v3720, 2147483648
        %v4210 = vxor.u32 %v3722, 2147483648
        %v4211 = vxor.u32 %v3857, 2147483648
        %v4212 = vxor.u32 %v3859, 2147483648
        %v4213 = vxor.u32 %v3994, 2147483648
        %v4214 = vxor.u32 %v3996, 2147483648
        %v4215 = vxor.u32 %v4131, 2147483648
        %v4216 = vxor.u32 %v4133, 2147483648
        %v4217 = vxor.u32 %v3178, 2147483648
        %v4218 = vxor.u32 %v3180, 2147483648
        %v4219 = vxor.u32 %v3315, 2147483648
        %v4220 = vxor.u32 %v3317, 2147483648
        %v4221 = vxor.u32 %v3452, 2147483648
        %v4222 = vxor.u32 %v3454, 2147483648
        %v4223 = vxor.u32 %v3589, 2147483648
        %v4224 = vxor.u32 %v3591, 2147483648
        %v4225 = vxor.u32 %v3726, 2147483648
        %v4226 = vxor.u32 %v3728, 2147483648
        %v4227 = vxor.u32 %v3863, 2147483648
        %v4228 = vxor.u32 %v3865, 2147483648
        %v4229 = vxor.u32 %v4000, 2147483648
        %v4230 = vxor.u32 %v4002, 2147483648
        %v4231 = vxor.u32 %v4137, 2147483648
        %v4232 = vxor.u32 %v4139, 2147483648
        %v4233 = vxor.u32 %v3184, 2147483648
        %v4234 = vxor.u32 %v3186, 2147483648
        %v4235 = vxor.u32 %v3321, 2147483648
        %v4236 = vxor.u32 %v3323, 2147483648
        %v4237 = vxor.u32 %v3458, 2147483648
        %v4238 = vxor.u32 %v3460, 2147483648
        %v4239 = vxor.u32 %v3595, 2147483648
        %v4240 = vxor.u32 %v3597, 2147483648
        %v4241 = vxor.u32 %v3732, 2147483648
        %v4242 = vxor.u32 %v3734, 2147483648
        %v4243 = vxor.u32 %v3869, 2147483648
        %v4244 = vxor.u32 %v3871, 2147483648
        %v4245 = vxor.u32 %v4006, 2147483648
        %v4246 = vxor.u32 %v4008, 2147483648
        %v4247 = vxor.u32 %v4143, 2147483648
        %v4248 = vxor.u32 %v4145, 2147483648
        %v4249 = vxor.u32 %v3190, 2147483648
        %v4250 = vxor.u32 %v3192, 2147483648
        %v4251 = vxor.u32 %v3327, 2147483648
        %v4252 = vxor.u32 %v3329, 2147483648
        %v4253 = vxor.u32 %v3464, 2147483648
        %v4254 = vxor.u32 %v3466, 2147483648
        %v4255 = vxor.u32 %v3601, 2147483648
        %v4256 = vxor.u32 %v3603, 2147483648
        %v4257 = vxor.u32 %v3738, 2147483648
        %v4258 = vxor.u32 %v3740, 2147483648
        %v4259 = vxor.u32 %v3875, 2147483648
        %v4260 = vxor.u32 %v3877, 2147483648
        %v4261 = vxor.u32 %v4012, 2147483648
        %v4262 = vxor.u32 %v4014, 2147483648
        %v4263 = vxor.u32 %v4149, 2147483648
        %v4264 = vxor.u32 %v4151, 2147483648
        %v4265 = vxor.u32 %v3196, 2147483648
        %v4266 = vxor.u32 %v3198, 2147483648
        %v4267 = vxor.u32 %v3333, 2147483648
        %v4268 = vxor.u32 %v3335, 2147483648
        %v4269 = vxor.u32 %v3470, 2147483648
        %v4270 = vxor.u32 %v3472, 2147483648
        %v4271 = vxor.u32 %v3607, 2147483648
        %v4272 = vxor.u32 %v3609, 2147483648
        %v4273 = vxor.u32 %v3744, 2147483648
        %v4274 = vxor.u32 %v3746, 2147483648
        %v4275 = vxor.u32 %v3881, 2147483648
        %v4276 = vxor.u32 %v3883, 2147483648
        %v4277 = vxor.u32 %v4018, 2147483648
        %v4278 = vxor.u32 %v4020, 2147483648
        %v4279 = vxor.u32 %v4155, 2147483648
        %v4280 = vxor.u32 %v4157, 2147483648
        %v4281 = vxor.u32 %v3202, 2147483648
        %v4282 = vxor.u32 %v3204, 2147483648
        %v4283 = vxor.u32 %v3339, 2147483648
        %v4284 = vxor.u32 %v3341, 2147483648
        %v4285 = vxor.u32 %v3476, 2147483648
        %v4286 = vxor.u32 %v3478, 2147483648
        %v4287 = vxor.u32 %v3613, 2147483648
        %v4288 = vxor.u32 %v3615, 2147483648
        %v4289 = vxor.u32 %v3750, 2147483648
        %v4290 = vxor.u32 %v3752, 2147483648
        %v4291 = vxor.u32 %v3887, 2147483648
        %v4292 = vxor.u32 %v3889, 2147483648
        %v4293 = vxor.u32 %v4024, 2147483648
        %v4294 = vxor.u32 %v4026, 2147483648
        %v4295 = vxor.u32 %v4161, 2147483648
        %v4296 = vxor.u32 %v4163, 2147483648
        %v4297 = vxor.u32 %v3208, 2147483648
        %v4298 = vxor.u32 %v3210, 2147483648
        %v4299 = vxor.u32 %v3345, 2147483648
        %v4300 = vxor.u32 %v3347, 2147483648
        %v4301 = vxor.u32 %v3482, 2147483648
        %v4302 = vxor.u32 %v3484, 2147483648
        %v4303 = vxor.u32 %v3619, 2147483648
        %v4304 = vxor.u32 %v3621, 2147483648
        %v4305 = vxor.u32 %v3756, 2147483648
        %v4306 = vxor.u32 %v3758, 2147483648
        %v4307 = vxor.u32 %v3893, 2147483648
        %v4308 = vxor.u32 %v3895, 2147483648
        %v4309 = vxor.u32 %v4030, 2147483648
        %v4310 = vxor.u32 %v4032, 2147483648
        %v4311 = vxor.u32 %v4167, 2147483648
        %v4312 = vxor.u32 %v4169, 2147483648
        %v4313 = vxor.u32 %v3214, 2147483648
        %v4314 = vxor.u32 %v3216, 2147483648
        %v4315 = vxor.u32 %v3351, 2147483648
        %v4316 = vxor.u32 %v3353, 2147483648
        %v4317 = vxor.u32 %v3488, 2147483648
        %v4318 = vxor.u32 %v3490, 2147483648
        %v4319 = vxor.u32 %v3625, 2147483648
        %v4320 = vxor.u32 %v3627, 2147483648
        %v4321 = vxor.u32 %v3762, 2147483648
        %v4322 = vxor.u32 %v3764, 2147483648
        %v4323 = vxor.u32 %v3899, 2147483648
        %v4324 = vxor.u32 %v3901, 2147483648
        %v4325 = vxor.u32 %v4036, 2147483648
        %v4326 = vxor.u32 %v4038, 2147483648
        %v4327 = vxor.u32 %v4173, 2147483648
        %v4328 = vxor.u32 %v4175, 2147483648
        %v4329 = vxor.u32 %v3220, 2147483648
        %v4330 = vxor.u32 %v3222, 2147483648
        %v4331 = vxor.u32 %v3357, 2147483648
        %v4332 = vxor.u32 %v3359, 2147483648
        %v4333 = vxor.u32 %v3494, 2147483648
        %v4334 = vxor.u32 %v3496, 2147483648
        %v4335 = vxor.u32 %v3631, 2147483648
        %v4336 = vxor.u32 %v3633, 2147483648
        %v4337 = vxor.u32 %v3768, 2147483648
        %v4338 = vxor.u32 %v3770, 2147483648
        %v4339 = vxor.u32 %v3905, 2147483648
        %v4340 = vxor.u32 %v3907, 2147483648
        %v4341 = vxor.u32 %v4042, 2147483648
        %v4342 = vxor.u32 %v4044, 2147483648
        %v4343 = vxor.u32 %v4179, 2147483648
        %v4344 = vxor.u32 %v4181, 2147483648
        %v4345 = vxor.u32 %v3226, 2147483648
        %v4346 = vxor.u32 %v3228, 2147483648
        %v4347 = vxor.u32 %v3363, 2147483648
        %v4348 = vxor.u32 %v3365, 2147483648
        %v4349 = vxor.u32 %v3500, 2147483648
        %v4350 = vxor.u32 %v3502, 2147483648
        %v4351 = vxor.u32 %v3637, 2147483648
        %v4352 = vxor.u32 %v3639, 2147483648
        %v4353 = vxor.u32 %v3774, 2147483648
        %v4354 = vxor.u32 %v3776, 2147483648
        %v4355 = vxor.u32 %v3911, 2147483648
        %v4356 = vxor.u32 %v3913, 2147483648
        %v4357 = vxor.u32 %v4048, 2147483648
        %v4358 = vxor.u32 %v4050, 2147483648
        %v4359 = vxor.u32 %v4185, 2147483648
        %v4360 = vxor.u32 %v4187, 2147483648
        %v4361 = vxor.u32 %v3232, 2147483648
        %v4362 = vxor.u32 %v3234, 2147483648
        %v4363 = vxor.u32 %v3369, 2147483648
        %v4364 = vxor.u32 %v3371, 2147483648
        %v4365 = vxor.u32 %v3506, 2147483648
        %v4366 = vxor.u32 %v3508, 2147483648
        %v4367 = vxor.u32 %v3643, 2147483648
        %v4368 = vxor.u32 %v3645, 2147483648
        %v4369 = vxor.u32 %v3780, 2147483648
        %v4370 = vxor.u32 %v3782, 2147483648
        %v4371 = vxor.u32 %v3917, 2147483648
        %v4372 = vxor.u32 %v3919, 2147483648
        %v4373 = vxor.u32 %v4054, 2147483648
        %v4374 = vxor.u32 %v4056, 2147483648
        %v4375 = vxor.u32 %v4191, 2147483648
        %v4376 = vxor.u32 %v4193, 2147483648
        %v4377 = vxor.u32 %v3238, 2147483648
        %v4378 = vxor.u32 %v3240, 2147483648
        %v4379 = vxor.u32 %v3375, 2147483648
        %v4380 = vxor.u32 %v3377, 2147483648
        %v4381 = vxor.u32 %v3512, 2147483648
        %v4382 = vxor.u32 %v3514, 2147483648
        %v4383 = vxor.u32 %v3649, 2147483648
        %v4384 = vxor.u32 %v3651, 2147483648
        %v4385 = vxor.u32 %v3786, 2147483648
        %v4386 = vxor.u32 %v3788, 2147483648
        %v4387 = vxor.u32 %v3923, 2147483648
        %v4388 = vxor.u32 %v3925, 2147483648
        %v4389 = vxor.u32 %v4060, 2147483648
        %v4390 = vxor.u32 %v4062, 2147483648
        %v4391 = vxor.u32 %v4197, 2147483648
        %v4392 = vxor.u32 %v4199, 2147483648
        %v4393 = vmul.f32 %v4201, 1.442695
        %v4394 = vpow.pop %v4393
        %v4395 = vmul.f32 %v4202, 1.442695
        %v4396 = vpow.pop %v4395
        %v4397 = vmul.f32 %v4203, 1.442695
        %v4398 = vpow.pop %v4397
        %v4399 = vmul.f32 %v4204, 1.442695
        %v4400 = vpow.pop %v4399
        %v4401 = vmul.f32 %v4205, 1.442695
        %v4402 = vpow.pop %v4401
        %v4403 = vmul.f32 %v4206, 1.442695
        %v4404 = vpow.pop %v4403
        %v4405 = vmul.f32 %v4207, 1.442695
        %v4406 = vpow.pop %v4405
        %v4407 = vmul.f32 %v4208, 1.442695
        %v4408 = vpow.pop %v4407
        %v4409 = vmul.f32 %v4209, 1.442695
        %v4410 = vpow.pop %v4409
        %v4411 = vmul.f32 %v4210, 1.442695
        %v4412 = vpow.pop %v4411
        %v4413 = vmul.f32 %v4211, 1.442695
        %v4414 = vpow.pop %v4413
        %v4415 = vmul.f32 %v4212, 1.442695
        %v4416 = vpow.pop %v4415
        %v4417 = vmul.f32 %v4213, 1.442695
        %v4418 = vpow.pop %v4417
        %v4419 = vmul.f32 %v4214, 1.442695
        %v4420 = vpow.pop %v4419
        %v4421 = vmul.f32 %v4215, 1.442695
        %v4422 = vpow.pop %v4421
        %v4423 = vmul.f32 %v4216, 1.442695
        %v4424 = vpow.pop %v4423
        %v4425 = vmul.f32 %v4217, 1.442695
        %v4426 = vpow.pop %v4425
        %v4427 = vmul.f32 %v4218, 1.442695
        %v4428 = vpow.pop %v4427
        %v4429 = vmul.f32 %v4219, 1.442695
        %v4430 = vpow.pop %v4429
        %v4431 = vmul.f32 %v4220, 1.442695
        %v4432 = vpow.pop %v4431
        %v4433 = vmul.f32 %v4221, 1.442695
        %v4434 = vpow.pop %v4433
        %v4435 = vmul.f32 %v4222, 1.442695
        %v4436 = vpow.pop %v4435
        %v4437 = vmul.f32 %v4223, 1.442695
        %v4438 = vpow.pop %v4437
        %v4439 = vmul.f32 %v4224, 1.442695
        %v4440 = vpow.pop %v4439
        %v4441 = vmul.f32 %v4225, 1.442695
        %v4442 = vpow.pop %v4441
        %v4443 = vmul.f32 %v4226, 1.442695
        %v4444 = vpow.pop %v4443
        %v4445 = vmul.f32 %v4227, 1.442695
        %v4446 = vpow.pop %v4445
        %v4447 = vmul.f32 %v4228, 1.442695
        %v4448 = vpow.pop %v4447
        %v4449 = vmul.f32 %v4229, 1.442695
        %v4450 = vpow.pop %v4449
        %v4451 = vmul.f32 %v4230, 1.442695
        %v4452 = vpow.pop %v4451
        %v4453 = vmul.f32 %v4231, 1.442695
        %v4454 = vpow.pop %v4453
        %v4455 = vmul.f32 %v4232, 1.442695
        %v4456 = vpow.pop %v4455
        %v4457 = vmul.f32 %v4233, 1.442695
        %v4458 = vpow.pop %v4457
        %v4459 = vmul.f32 %v4234, 1.442695
        %v4460 = vpow.pop %v4459
        %v4461 = vmul.f32 %v4235, 1.442695
        %v4462 = vpow.pop %v4461
        %v4463 = vmul.f32 %v4236, 1.442695
        %v4464 = vpow.pop %v4463
        %v4465 = vmul.f32 %v4237, 1.442695
        %v4466 = vpow.pop %v4465
        %v4467 = vmul.f32 %v4238, 1.442695
        %v4468 = vpow.pop %v4467
        %v4469 = vmul.f32 %v4239, 1.442695
        %v4470 = vpow.pop %v4469
        %v4471 = vmul.f32 %v4240, 1.442695
        %v4472 = vpow.pop %v4471
        %v4473 = vmul.f32 %v4241, 1.442695
        %v4474 = vpow.pop %v4473
        %v4475 = vmul.f32 %v4242, 1.442695
        %v4476 = vpow.pop %v4475
        %v4477 = vmul.f32 %v4243, 1.442695
        %v4478 = vpow.pop %v4477
        %v4479 = vmul.f32 %v4244, 1.442695
        %v4480 = vpow.pop %v4479
        %v4481 = vmul.f32 %v4245, 1.442695
        %v4482 = vpow.pop %v4481
        %v4483 = vmul.f32 %v4246, 1.442695
        %v4484 = vpow.pop %v4483
        %v4485 = vmul.f32 %v4247, 1.442695
        %v4486 = vpow.pop %v4485
        %v4487 = vmul.f32 %v4248, 1.442695
        %v4488 = vpow.pop %v4487
        %v4489 = vmul.f32 %v4249, 1.442695
        %v4490 = vpow.pop %v4489
        %v4491 = vmul.f32 %v4250, 1.442695
        %v4492 = vpow.pop %v4491
        %v4493 = vmul.f32 %v4251, 1.442695
        %v4494 = vpow.pop %v4493
        %v4495 = vmul.f32 %v4252, 1.442695
        %v4496 = vpow.pop %v4495
        %v4497 = vmul.f32 %v4253, 1.442695
        %v4498 = vpow.pop %v4497
        %v4499 = vmul.f32 %v4254, 1.442695
        %v4500 = vpow.pop %v4499
        %v4501 = vmul.f32 %v4255, 1.442695
        %v4502 = vpow.pop %v4501
        %v4503 = vmul.f32 %v4256, 1.442695
        %v4504 = vpow.pop %v4503
        %v4505 = vmul.f32 %v4257, 1.442695
        %v4506 = vpow.pop %v4505
        %v4507 = vmul.f32 %v4258, 1.442695
        %v4508 = vpow.pop %v4507
        %v4509 = vmul.f32 %v4259, 1.442695
        %v4510 = vpow.pop %v4509
        %v4511 = vmul.f32 %v4260, 1.442695
        %v4512 = vpow.pop %v4511
        %v4513 = vmul.f32 %v4261, 1.442695
        %v4514 = vpow.pop %v4513
        %v4515 = vmul.f32 %v4262, 1.442695
        %v4516 = vpow.pop %v4515
        %v4517 = vmul.f32 %v4263, 1.442695
        %v4518 = vpow.pop %v4517
        %v4519 = vmul.f32 %v4264, 1.442695
        %v4520 = vpow.pop %v4519
        %v4521 = vmul.f32 %v4265, 1.442695
        %v4522 = vpow.pop %v4521
        %v4523 = vmul.f32 %v4266, 1.442695
        %v4524 = vpow.pop %v4523
        %v4525 = vmul.f32 %v4267, 1.442695
        %v4526 = vpow.pop %v4525
        %v4527 = vmul.f32 %v4268, 1.442695
        %v4528 = vpow.pop %v4527
        %v4529 = vmul.f32 %v4269, 1.442695
        %v4530 = vpow.pop %v4529
        %v4531 = vmul.f32 %v4270, 1.442695
        %v4532 = vpow.pop %v4531
        %v4533 = vmul.f32 %v4271, 1.442695
        %v4534 = vpow.pop %v4533
        %v4535 = vmul.f32 %v4272, 1.442695
        %v4536 = vpow.pop %v4535
        %v4537 = vmul.f32 %v4273, 1.442695
        %v4538 = vpow.pop %v4537
        %v4539 = vmul.f32 %v4274, 1.442695
        %v4540 = vpow.pop %v4539
        %v4541 = vmul.f32 %v4275, 1.442695
        %v4542 = vpow.pop %v4541
        %v4543 = vmul.f32 %v4276, 1.442695
        %v4544 = vpow.pop %v4543
        %v4545 = vmul.f32 %v4277, 1.442695
        %v4546 = vpow.pop %v4545
        %v4547 = vmul.f32 %v4278, 1.442695
        %v4548 = vpow.pop %v4547
        %v4549 = vmul.f32 %v4279, 1.442695
        %v4550 = vpow.pop %v4549
        %v4551 = vmul.f32 %v4280, 1.442695
        %v4552 = vpow.pop %v4551
        %v4553 = vmul.f32 %v4281, 1.442695
        %v4554 = vpow.pop %v4553
        %v4555 = vmul.f32 %v4282, 1.442695
        %v4556 = vpow.pop %v4555
        %v4557 = vmul.f32 %v4283, 1.442695
        %v4558 = vpow.pop %v4557
        %v4559 = vmul.f32 %v4284, 1.442695
        %v4560 = vpow.pop %v4559
        %v4561 = vmul.f32 %v4285, 1.442695
        %v4562 = vpow.pop %v4561
        %v4563 = vmul.f32 %v4286, 1.442695
        %v4564 = vpow.pop %v4563
        %v4565 = vmul.f32 %v4287, 1.442695
        %v4566 = vpow.pop %v4565
        %v4567 = vmul.f32 %v4288, 1.442695
        %v4568 = vpow.pop %v4567
        %v4569 = vmul.f32 %v4289, 1.442695
        %v4570 = vpow.pop %v4569
        %v4571 = vmul.f32 %v4290, 1.442695
        %v4572 = vpow.pop %v4571
        %v4573 = vmul.f32 %v4291, 1.442695
        %v4574 = vpow.pop %v4573
        %v4575 = vmul.f32 %v4292, 1.442695
        %v4576 = vpow.pop %v4575
        %v4577 = vmul.f32 %v4293, 1.442695
        %v4578 = vpow.pop %v4577
        %v4579 = vmul.f32 %v4294, 1.442695
        %v4580 = vpow.pop %v4579
        %v4581 = vmul.f32 %v4295, 1.442695
        %v4582 = vpow.pop %v4581
        %v4583 = vmul.f32 %v4296, 1.442695
        %v4584 = vpow.pop %v4583
        %v4585 = vmul.f32 %v4297, 1.442695
        %v4586 = vpow.pop %v4585
        %v4587 = vmul.f32 %v4298, 1.442695
        %v4588 = vpow.pop %v4587
        %v4589 = vmul.f32 %v4299, 1.442695
        %v4590 = vpow.pop %v4589
        %v4591 = vmul.f32 %v4300, 1.442695
        %v4592 = vpow.pop %v4591
        %v4593 = vmul.f32 %v4301, 1.442695
        %v4594 = vpow.pop %v4593
        %v4595 = vmul.f32 %v4302, 1.442695
        %v4596 = vpow.pop %v4595
        %v4597 = vmul.f32 %v4303, 1.442695
        %v4598 = vpow.pop %v4597
        %v4599 = vmul.f32 %v4304, 1.442695
        %v4600 = vpow.pop %v4599
        %v4601 = vmul.f32 %v4305, 1.442695
        %v4602 = vpow.pop %v4601
        %v4603 = vmul.f32 %v4306, 1.442695
        %v4604 = vpow.pop %v4603
        %v4605 = vmul.f32 %v4307, 1.442695
        %v4606 = vpow.pop %v4605
        %v4607 = vmul.f32 %v4308, 1.442695
        %v4608 = vpow.pop %v4607
        %v4609 = vmul.f32 %v4309, 1.442695
        %v4610 = vpow.pop %v4609
        %v4611 = vmul.f32 %v4310, 1.442695
        %v4612 = vpow.pop %v4611
        %v4613 = vmul.f32 %v4311, 1.442695
        %v4614 = vpow.pop %v4613
        %v4615 = vmul.f32 %v4312, 1.442695
        %v4616 = vpow.pop %v4615
        %v4617 = vmul.f32 %v4313, 1.442695
        %v4618 = vpow.pop %v4617
        %v4619 = vmul.f32 %v4314, 1.442695
        %v4620 = vpow.pop %v4619
        %v4621 = vmul.f32 %v4315, 1.442695
        %v4622 = vpow.pop %v4621
        %v4623 = vmul.f32 %v4316, 1.442695
        %v4624 = vpow.pop %v4623
        %v4625 = vmul.f32 %v4317, 1.442695
        %v4626 = vpow.pop %v4625
        %v4627 = vmul.f32 %v4318, 1.442695
        %v4628 = vpow.pop %v4627
        %v4629 = vmul.f32 %v4319, 1.442695
        %v4630 = vpow.pop %v4629
        %v4631 = vmul.f32 %v4320, 1.442695
        %v4632 = vpow.pop %v4631
        %v4633 = vmul.f32 %v4321, 1.442695
        %v4634 = vpow.pop %v4633
        %v4635 = vmul.f32 %v4322, 1.442695
        %v4636 = vpow.pop %v4635
        %v4637 = vmul.f32 %v4323, 1.442695
        %v4638 = vpow.pop %v4637
        %v4639 = vmul.f32 %v4324, 1.442695
        %v4640 = vpow.pop %v4639
        %v4641 = vmul.f32 %v4325, 1.442695
        %v4642 = vpow.pop %v4641
        %v4643 = vmul.f32 %v4326, 1.442695
        %v4644 = vpow.pop %v4643
        %v4645 = vmul.f32 %v4327, 1.442695
        %v4646 = vpow.pop %v4645
        %v4647 = vmul.f32 %v4328, 1.442695
        %v4648 = vpow.pop %v4647
        %v4649 = vmul.f32 %v4329, 1.442695
        %v4650 = vpow.pop %v4649
        %v4651 = vmul.f32 %v4330, 1.442695
        %v4652 = vpow.pop %v4651
        %v4653 = vmul.f32 %v4331, 1.442695
        %v4654 = vpow.pop %v4653
        %v4655 = vmul.f32 %v4332, 1.442695
        %v4656 = vpow.pop %v4655
        %v4657 = vmul.f32 %v4333, 1.442695
        %v4658 = vpow.pop %v4657
        %v4659 = vmul.f32 %v4334, 1.442695
        %v4660 = vpow.pop %v4659
        %v4661 = vmul.f32 %v4335, 1.442695
        %v4662 = vpow.pop %v4661
        %v4663 = vmul.f32 %v4336, 1.442695
        %v4664 = vpow.pop %v4663
        %v4665 = vmul.f32 %v4337, 1.442695
        %v4666 = vpow.pop %v4665
        %v4667 = vmul.f32 %v4338, 1.442695
        %v4668 = vpow.pop %v4667
        %v4669 = vmul.f32 %v4339, 1.442695
        %v4670 = vpow.pop %v4669
        %v4671 = vmul.f32 %v4340, 1.442695
        %v4672 = vpow.pop %v4671
        %v4673 = vmul.f32 %v4341, 1.442695
        %v4674 = vpow.pop %v4673
        %v4675 = vmul.f32 %v4342, 1.442695
        %v4676 = vpow.pop %v4675
        %v4677 = vmul.f32 %v4343, 1.442695
        %v4678 = vpow.pop %v4677
        %v4679 = vmul.f32 %v4344, 1.442695
        %v4680 = vpow.pop %v4679
        %v4681 = vmul.f32 %v4345, 1.442695
        %v4682 = vpow.pop %v4681
        %v4683 = vmul.f32 %v4346, 1.442695
        %v4684 = vpow.pop %v4683
        %v4685 = vmul.f32 %v4347, 1.442695
        %v4686 = vpow.pop %v4685
        %v4687 = vmul.f32 %v4348, 1.442695
        %v4688 = vpow.pop %v4687
        %v4689 = vmul.f32 %v4349, 1.442695
        %v4690 = vpow.pop %v4689
        %v4691 = vmul.f32 %v4350, 1.442695
        %v4692 = vpow.pop %v4691
        %v4693 = vmul.f32 %v4351, 1.442695
        %v4694 = vpow.pop %v4693
        %v4695 = vmul.f32 %v4352, 1.442695
        %v4696 = vpow.pop %v4695
        %v4697 = vmul.f32 %v4353, 1.442695
        %v4698 = vpow.pop %v4697
        %v4699 = vmul.f32 %v4354, 1.442695
        %v4700 = vpow.pop %v4699
        %v4701 = vmul.f32 %v4355, 1.442695
        %v4702 = vpow.pop %v4701
        %v4703 = vmul.f32 %v4356, 1.442695
        %v4704 = vpow.pop %v4703
        %v4705 = vmul.f32 %v4357, 1.442695
        %v4706 = vpow.pop %v4705
        %v4707 = vmul.f32 %v4358, 1.442695
        %v4708 = vpow.pop %v4707
        %v4709 = vmul.f32 %v4359, 1.442695
        %v4710 = vpow.pop %v4709
        %v4711 = vmul.f32 %v4360, 1.442695
        %v4712 = vpow.pop %v4711
        %v4713 = vmul.f32 %v4361, 1.442695
        %v4714 = vpow.pop %v4713
        %v4715 = vmul.f32 %v4362, 1.442695
        %v4716 = vpow.pop %v4715
        %v4717 = vmul.f32 %v4363, 1.442695
        %v4718 = vpow.pop %v4717
        %v4719 = vmul.f32 %v4364, 1.442695
        %v4720 = vpow.pop %v4719
        %v4721 = vmul.f32 %v4365, 1.442695
        %v4722 = vpow.pop %v4721
        %v4723 = vmul.f32 %v4366, 1.442695
        %v4724 = vpow.pop %v4723
        %v4725 = vmul.f32 %v4367, 1.442695
        %v4726 = vpow.pop %v4725
        %v4727 = vmul.f32 %v4368, 1.442695
        %v4728 = vpow.pop %v4727
        %v4729 = vmul.f32 %v4369, 1.442695
        %v4730 = vpow.pop %v4729
        %v4731 = vmul.f32 %v4370, 1.442695
        %v4732 = vpow.pop %v4731
        %v4733 = vmul.f32 %v4371, 1.442695
        %v4734 = vpow.pop %v4733
        %v4735 = vmul.f32 %v4372, 1.442695
        %v4736 = vpow.pop %v4735
        %v4737 = vmul.f32 %v4373, 1.442695
        %v4738 = vpow.pop %v4737
        %v4739 = vmul.f32 %v4374, 1.442695
        %v4740 = vpow.pop %v4739
        %v4741 = vmul.f32 %v4375, 1.442695
        %v4742 = vpow.pop %v4741
        %v4743 = vmul.f32 %v4376, 1.442695
        %v4744 = vpow.pop %v4743
        %v4745 = vmul.f32 %v4377, 1.442695
        %v4746 = vpow.pop %v4745
        %v4747 = vmul.f32 %v4378, 1.442695
        %v4748 = vpow.pop %v4747
        %v4749 = vmul.f32 %v4379, 1.442695
        %v4750 = vpow.pop %v4749
        %v4751 = vmul.f32 %v4380, 1.442695
        %v4752 = vpow.pop %v4751
        %v4753 = vmul.f32 %v4381, 1.442695
        %v4754 = vpow.pop %v4753
        %v4755 = vmul.f32 %v4382, 1.442695
        %v4756 = vpow.pop %v4755
        %v4757 = vmul.f32 %v4383, 1.442695
        %v4758 = vpow.pop %v4757
        %v4759 = vmul.f32 %v4384, 1.442695
        %v4760 = vpow.pop %v4759
        %v4761 = vmul.f32 %v4385, 1.442695
        %v4762 = vpow.pop %v4761
        %v4763 = vmul.f32 %v4386, 1.442695
        %v4764 = vpow.pop %v4763
        %v4765 = vmul.f32 %v4387, 1.442695
        %v4766 = vpow.pop %v4765
        %v4767 = vmul.f32 %v4388, 1.442695
        %v4768 = vpow.pop %v4767
        %v4769 = vmul.f32 %v4389, 1.442695
        %v4770 = vpow.pop %v4769
        %v4771 = vmul.f32 %v4390, 1.442695
        %v4772 = vpow.pop %v4771
        %v4773 = vmul.f32 %v4391, 1.442695
        %v4774 = vpow.pop %v4773
        %v4775 = vmul.f32 %v4392, 1.442695
        %v4776 = vpow.pop %v4775
        %v4777 = vadd.f32 %v4394, 1.0
        %v4778 = vadd.f32 %v4396, 1.0
        %v4779 = vadd.f32 %v4398, 1.0
        %v4780 = vadd.f32 %v4400, 1.0
        %v4781 = vadd.f32 %v4402, 1.0
        %v4782 = vadd.f32 %v4404, 1.0
        %v4783 = vadd.f32 %v4406, 1.0
        %v4784 = vadd.f32 %v4408, 1.0
        %v4785 = vadd.f32 %v4410, 1.0
        %v4786 = vadd.f32 %v4412, 1.0
        %v4787 = vadd.f32 %v4414, 1.0
        %v4788 = vadd.f32 %v4416, 1.0
        %v4789 = vadd.f32 %v4418, 1.0
        %v4790 = vadd.f32 %v4420, 1.0
        %v4791 = vadd.f32 %v4422, 1.0
        %v4792 = vadd.f32 %v4424, 1.0
        %v4793 = vadd.f32 %v4426, 1.0
        %v4794 = vadd.f32 %v4428, 1.0
        %v4795 = vadd.f32 %v4430, 1.0
        %v4796 = vadd.f32 %v4432, 1.0
        %v4797 = vadd.f32 %v4434, 1.0
        %v4798 = vadd.f32 %v4436, 1.0
        %v4799 = vadd.f32 %v4438, 1.0
        %v4800 = vadd.f32 %v4440, 1.0
        %v4801 = vadd.f32 %v4442, 1.0
        %v4802 = vadd.f32 %v4444, 1.0
        %v4803 = vadd.f32 %v4446, 1.0
        %v4804 = vadd.f32 %v4448, 1.0
        %v4805 = vadd.f32 %v4450, 1.0
        %v4806 = vadd.f32 %v4452, 1.0
        %v4807 = vadd.f32 %v4454, 1.0
        %v4808 = vadd.f32 %v4456, 1.0
        %v4809 = vadd.f32 %v4458, 1.0
        %v4810 = vadd.f32 %v4460, 1.0
        %v4811 = vadd.f32 %v4462, 1.0
        %v4812 = vadd.f32 %v4464, 1.0
        %v4813 = vadd.f32 %v4466, 1.0
        %v4814 = vadd.f32 %v4468, 1.0
        %v4815 = vadd.f32 %v4470, 1.0
        %v4816 = vadd.f32 %v4472, 1.0
        %v4817 = vadd.f32 %v4474, 1.0
        %v4818 = vadd.f32 %v4476, 1.0
        %v4819 = vadd.f32 %v4478, 1.0
        %v4820 = vadd.f32 %v4480, 1.0
        %v4821 = vadd.f32 %v4482, 1.0
        %v4822 = vadd.f32 %v4484, 1.0
        %v4823 = vadd.f32 %v4486, 1.0
        %v4824 = vadd.f32 %v4488, 1.0
        %v4825 = vadd.f32 %v4490, 1.0
        %v4826 = vadd.f32 %v4492, 1.0
        %v4827 = vadd.f32 %v4494, 1.0
        %v4828 = vadd.f32 %v4496, 1.0
        %v4829 = vadd.f32 %v4498, 1.0
        %v4830 = vadd.f32 %v4500, 1.0
        %v4831 = vadd.f32 %v4502, 1.0
        %v4832 = vadd.f32 %v4504, 1.0
        %v4833 = vadd.f32 %v4506, 1.0
        %v4834 = vadd.f32 %v4508, 1.0
        %v4835 = vadd.f32 %v4510, 1.0
        %v4836 = vadd.f32 %v4512, 1.0
        %v4837 = vadd.f32 %v4514, 1.0
        %v4838 = vadd.f32 %v4516, 1.0
        %v4839 = vadd.f32 %v4518, 1.0
        %v4840 = vadd.f32 %v4520, 1.0
        %v4841 = vadd.f32 %v4522, 1.0
        %v4842 = vadd.f32 %v4524, 1.0
        %v4843 = vadd.f32 %v4526, 1.0
        %v4844 = vadd.f32 %v4528, 1.0
        %v4845 = vadd.f32 %v4530, 1.0
        %v4846 = vadd.f32 %v4532, 1.0
        %v4847 = vadd.f32 %v4534, 1.0
        %v4848 = vadd.f32 %v4536, 1.0
        %v4849 = vadd.f32 %v4538, 1.0
        %v4850 = vadd.f32 %v4540, 1.0
        %v4851 = vadd.f32 %v4542, 1.0
        %v4852 = vadd.f32 %v4544, 1.0
        %v4853 = vadd.f32 %v4546, 1.0
        %v4854 = vadd.f32 %v4548, 1.0
        %v4855 = vadd.f32 %v4550, 1.0
        %v4856 = vadd.f32 %v4552, 1.0
        %v4857 = vadd.f32 %v4554, 1.0
        %v4858 = vadd.f32 %v4556, 1.0
        %v4859 = vadd.f32 %v4558, 1.0
        %v4860 = vadd.f32 %v4560, 1.0
        %v4861 = vadd.f32 %v4562, 1.0
        %v4862 = vadd.f32 %v4564, 1.0
        %v4863 = vadd.f32 %v4566, 1.0
        %v4864 = vadd.f32 %v4568, 1.0
        %v4865 = vadd.f32 %v4570, 1.0
        %v4866 = vadd.f32 %v4572, 1.0
        %v4867 = vadd.f32 %v4574, 1.0
        %v4868 = vadd.f32 %v4576, 1.0
        %v4869 = vadd.f32 %v4578, 1.0
        %v4870 = vadd.f32 %v4580, 1.0
        %v4871 = vadd.f32 %v4582, 1.0
        %v4872 = vadd.f32 %v4584, 1.0
        %v4873 = vadd.f32 %v4586, 1.0
        %v4874 = vadd.f32 %v4588, 1.0
        %v4875 = vadd.f32 %v4590, 1.0
        %v4876 = vadd.f32 %v4592, 1.0
        %v4877 = vadd.f32 %v4594, 1.0
        %v4878 = vadd.f32 %v4596, 1.0
        %v4879 = vadd.f32 %v4598, 1.0
        %v4880 = vadd.f32 %v4600, 1.0
        %v4881 = vadd.f32 %v4602, 1.0
        %v4882 = vadd.f32 %v4604, 1.0
        %v4883 = vadd.f32 %v4606, 1.0
        %v4884 = vadd.f32 %v4608, 1.0
        %v4885 = vadd.f32 %v4610, 1.0
        %v4886 = vadd.f32 %v4612, 1.0
        %v4887 = vadd.f32 %v4614, 1.0
        %v4888 = vadd.f32 %v4616, 1.0
        %v4889 = vadd.f32 %v4618, 1.0
        %v4890 = vadd.f32 %v4620, 1.0
        %v4891 = vadd.f32 %v4622, 1.0
        %v4892 = vadd.f32 %v4624, 1.0
        %v4893 = vadd.f32 %v4626, 1.0
        %v4894 = vadd.f32 %v4628, 1.0
        %v4895 = vadd.f32 %v4630, 1.0
        %v4896 = vadd.f32 %v4632, 1.0
        %v4897 = vadd.f32 %v4634, 1.0
        %v4898 = vadd.f32 %v4636, 1.0
        %v4899 = vadd.f32 %v4638, 1.0
        %v4900 = vadd.f32 %v4640, 1.0
        %v4901 = vadd.f32 %v4642, 1.0
        %v4902 = vadd.f32 %v4644, 1.0
        %v4903 = vadd.f32 %v4646, 1.0
        %v4904 = vadd.f32 %v4648, 1.0
        %v4905 = vadd.f32 %v4650, 1.0
        %v4906 = vadd.f32 %v4652, 1.0
        %v4907 = vadd.f32 %v4654, 1.0
        %v4908 = vadd.f32 %v4656, 1.0
        %v4909 = vadd.f32 %v4658, 1.0
        %v4910 = vadd.f32 %v4660, 1.0
        %v4911 = vadd.f32 %v4662, 1.0
        %v4912 = vadd.f32 %v4664, 1.0
        %v4913 = vadd.f32 %v4666, 1.0
        %v4914 = vadd.f32 %v4668, 1.0
        %v4915 = vadd.f32 %v4670, 1.0
        %v4916 = vadd.f32 %v4672, 1.0
        %v4917 = vadd.f32 %v4674, 1.0
        %v4918 = vadd.f32 %v4676, 1.0
        %v4919 = vadd.f32 %v4678, 1.0
        %v4920 = vadd.f32 %v4680, 1.0
        %v4921 = vadd.f32 %v4682, 1.0
        %v4922 = vadd.f32 %v4684, 1.0
        %v4923 = vadd.f32 %v4686, 1.0
        %v4924 = vadd.f32 %v4688, 1.0
        %v4925 = vadd.f32 %v4690, 1.0
        %v4926 = vadd.f32 %v4692, 1.0
        %v4927 = vadd.f32 %v4694, 1.0
        %v4928 = vadd.f32 %v4696, 1.0
        %v4929 = vadd.f32 %v4698, 1.0
        %v4930 = vadd.f32 %v4700, 1.0
        %v4931 = vadd.f32 %v4702, 1.0
        %v4932 = vadd.f32 %v4704, 1.0
        %v4933 = vadd.f32 %v4706, 1.0
        %v4934 = vadd.f32 %v4708, 1.0
        %v4935 = vadd.f32 %v4710, 1.0
        %v4936 = vadd.f32 %v4712, 1.0
        %v4937 = vadd.f32 %v4714, 1.0
        %v4938 = vadd.f32 %v4716, 1.0
        %v4939 = vadd.f32 %v4718, 1.0
        %v4940 = vadd.f32 %v4720, 1.0
        %v4941 = vadd.f32 %v4722, 1.0
        %v4942 = vadd.f32 %v4724, 1.0
        %v4943 = vadd.f32 %v4726, 1.0
        %v4944 = vadd.f32 %v4728, 1.0
        %v4945 = vadd.f32 %v4730, 1.0
        %v4946 = vadd.f32 %v4732, 1.0
        %v4947 = vadd.f32 %v4734, 1.0
        %v4948 = vadd.f32 %v4736, 1.0
        %v4949 = vadd.f32 %v4738, 1.0
        %v4950 = vadd.f32 %v4740, 1.0
        %v4951 = vadd.f32 %v4742, 1.0
        %v4952 = vadd.f32 %v4744, 1.0
        %v4953 = vadd.f32 %v4746, 1.0
        %v4954 = vadd.f32 %v4748, 1.0
        %v4955 = vadd.f32 %v4750, 1.0
        %v4956 = vadd.f32 %v4752, 1.0
        %v4957 = vadd.f32 %v4754, 1.0
        %v4958 = vadd.f32 %v4756, 1.0
        %v4959 = vadd.f32 %v4758, 1.0
        %v4960 = vadd.f32 %v4760, 1.0
        %v4961 = vadd.f32 %v4762, 1.0
        %v4962 = vadd.f32 %v4764, 1.0
        %v4963 = vadd.f32 %v4766, 1.0
        %v4964 = vadd.f32 %v4768, 1.0
        %v4965 = vadd.f32 %v4770, 1.0
        %v4966 = vadd.f32 %v4772, 1.0
        %v4967 = vadd.f32 %v4774, 1.0
        %v4968 = vadd.f32 %v4776, 1.0
        %v4969 = vrcp.pop %v4777
        %v4970 = vmul.f32 1.0, %v4969
        %v4971 = vrcp.pop %v4778
        %v4972 = vmul.f32 1.0, %v4971
        %v4973 = vrcp.pop %v4779
        %v4974 = vmul.f32 1.0, %v4973
        %v4975 = vrcp.pop %v4780
        %v4976 = vmul.f32 1.0, %v4975
        %v4977 = vrcp.pop %v4781
        %v4978 = vmul.f32 1.0, %v4977
        %v4979 = vrcp.pop %v4782
        %v4980 = vmul.f32 1.0, %v4979
        %v4981 = vrcp.pop %v4783
        %v4982 = vmul.f32 1.0, %v4981
        %v4983 = vrcp.pop %v4784
        %v4984 = vmul.f32 1.0, %v4983
        %v4985 = vrcp.pop %v4785
        %v4986 = vmul.f32 1.0, %v4985
        %v4987 = vrcp.pop %v4786
        %v4988 = vmul.f32 1.0, %v4987
        %v4989 = vrcp.pop %v4787
        %v4990 = vmul.f32 1.0, %v4989
        %v4991 = vrcp.pop %v4788
        %v4992 = vmul.f32 1.0, %v4991
        %v4993 = vrcp.pop %v4789
        %v4994 = vmul.f32 1.0, %v4993
        %v4995 = vrcp.pop %v4790
        %v4996 = vmul.f32 1.0, %v4995
        %v4997 = vrcp.pop %v4791
        %v4998 = vmul.f32 1.0, %v4997
        %v4999 = vrcp.pop %v4792
        %v5000 = vmul.f32 1.0, %v4999
        %v5001 = vrcp.pop %v4793
        %v5002 = vmul.f32 1.0, %v5001
        %v5003 = vrcp.pop %v4794
        %v5004 = vmul.f32 1.0, %v5003
        %v5005 = vrcp.pop %v4795
        %v5006 = vmul.f32 1.0, %v5005
        %v5007 = vrcp.pop %v4796
        %v5008 = vmul.f32 1.0, %v5007
        %v5009 = vrcp.pop %v4797
        %v5010 = vmul.f32 1.0, %v5009
        %v5011 = vrcp.pop %v4798
        %v5012 = vmul.f32 1.0, %v5011
        %v5013 = vrcp.pop %v4799
        %v5014 = vmul.f32 1.0, %v5013
        %v5015 = vrcp.pop %v4800
        %v5016 = vmul.f32 1.0, %v5015
        %v5017 = vrcp.pop %v4801
        %v5018 = vmul.f32 1.0, %v5017
        %v5019 = vrcp.pop %v4802
        %v5020 = vmul.f32 1.0, %v5019
        %v5021 = vrcp.pop %v4803
        %v5022 = vmul.f32 1.0, %v5021
        %v5023 = vrcp.pop %v4804
        %v5024 = vmul.f32 1.0, %v5023
        %v5025 = vrcp.pop %v4805
        %v5026 = vmul.f32 1.0, %v5025
        %v5027 = vrcp.pop %v4806
        %v5028 = vmul.f32 1.0, %v5027
        %v5029 = vrcp.pop %v4807
        %v5030 = vmul.f32 1.0, %v5029
        %v5031 = vrcp.pop %v4808
        %v5032 = vmul.f32 1.0, %v5031
        %v5033 = vrcp.pop %v4809
        %v5034 = vmul.f32 1.0, %v5033
        %v5035 = vrcp.pop %v4810
        %v5036 = vmul.f32 1.0, %v5035
        %v5037 = vrcp.pop %v4811
        %v5038 = vmul.f32 1.0, %v5037
        %v5039 = vrcp.pop %v4812
        %v5040 = vmul.f32 1.0, %v5039
        %v5041 = vrcp.pop %v4813
        %v5042 = vmul.f32 1.0, %v5041
        %v5043 = vrcp.pop %v4814
        %v5044 = vmul.f32 1.0, %v5043
        %v5045 = vrcp.pop %v4815
        %v5046 = vmul.f32 1.0, %v5045
        %v5047 = vrcp.pop %v4816
        %v5048 = vmul.f32 1.0, %v5047
        %v5049 = vrcp.pop %v4817
        %v5050 = vmul.f32 1.0, %v5049
        %v5051 = vrcp.pop %v4818
        %v5052 = vmul.f32 1.0, %v5051
        %v5053 = vrcp.pop %v4819
        %v5054 = vmul.f32 1.0, %v5053
        %v5055 = vrcp.pop %v4820
        %v5056 = vmul.f32 1.0, %v5055
        %v5057 = vrcp.pop %v4821
        %v5058 = vmul.f32 1.0, %v5057
        %v5059 = vrcp.pop %v4822
        %v5060 = vmul.f32 1.0, %v5059
        %v5061 = vrcp.pop %v4823
        %v5062 = vmul.f32 1.0, %v5061
        %v5063 = vrcp.pop %v4824
        %v5064 = vmul.f32 1.0, %v5063
        %v5065 = vrcp.pop %v4825
        %v5066 = vmul.f32 1.0, %v5065
        %v5067 = vrcp.pop %v4826
        %v5068 = vmul.f32 1.0, %v5067
        %v5069 = vrcp.pop %v4827
        %v5070 = vmul.f32 1.0, %v5069
        %v5071 = vrcp.pop %v4828
        %v5072 = vmul.f32 1.0, %v5071
        %v5073 = vrcp.pop %v4829
        %v5074 = vmul.f32 1.0, %v5073
        %v5075 = vrcp.pop %v4830
        %v5076 = vmul.f32 1.0, %v5075
        %v5077 = vrcp.pop %v4831
        %v5078 = vmul.f32 1.0, %v5077
        %v5079 = vrcp.pop %v4832
        %v5080 = vmul.f32 1.0, %v5079
        %v5081 = vrcp.pop %v4833
        %v5082 = vmul.f32 1.0, %v5081
        %v5083 = vrcp.pop %v4834
        %v5084 = vmul.f32 1.0, %v5083
        %v5085 = vrcp.pop %v4835
        %v5086 = vmul.f32 1.0, %v5085
        %v5087 = vrcp.pop %v4836
        %v5088 = vmul.f32 1.0, %v5087
        %v5089 = vrcp.pop %v4837
        %v5090 = vmul.f32 1.0, %v5089
        %v5091 = vrcp.pop %v4838
        %v5092 = vmul.f32 1.0, %v5091
        %v5093 = vrcp.pop %v4839
        %v5094 = vmul.f32 1.0, %v5093
        %v5095 = vrcp.pop %v4840
        %v5096 = vmul.f32 1.0, %v5095
        %v5097 = vrcp.pop %v4841
        %v5098 = vmul.f32 1.0, %v5097
        %v5099 = vrcp.pop %v4842
        %v5100 = vmul.f32 1.0, %v5099
        %v5101 = vrcp.pop %v4843
        %v5102 = vmul.f32 1.0, %v5101
        %v5103 = vrcp.pop %v4844
        %v5104 = vmul.f32 1.0, %v5103
        %v5105 = vrcp.pop %v4845
        %v5106 = vmul.f32 1.0, %v5105
        %v5107 = vrcp.pop %v4846
        %v5108 = vmul.f32 1.0, %v5107
        %v5109 = vrcp.pop %v4847
        %v5110 = vmul.f32 1.0, %v5109
        %v5111 = vrcp.pop %v4848
        %v5112 = vmul.f32 1.0, %v5111
        %v5113 = vrcp.pop %v4849
        %v5114 = vmul.f32 1.0, %v5113
        %v5115 = vrcp.pop %v4850
        %v5116 = vmul.f32 1.0, %v5115
        %v5117 = vrcp.pop %v4851
        %v5118 = vmul.f32 1.0, %v5117
        %v5119 = vrcp.pop %v4852
        %v5120 = vmul.f32 1.0, %v5119
        %v5121 = vrcp.pop %v4853
        %v5122 = vmul.f32 1.0, %v5121
        %v5123 = vrcp.pop %v4854
        %v5124 = vmul.f32 1.0, %v5123
        %v5125 = vrcp.pop %v4855
        %v5126 = vmul.f32 1.0, %v5125
        %v5127 = vrcp.pop %v4856
        %v5128 = vmul.f32 1.0, %v5127
        %v5129 = vrcp.pop %v4857
        %v5130 = vmul.f32 1.0, %v5129
        %v5131 = vrcp.pop %v4858
        %v5132 = vmul.f32 1.0, %v5131
        %v5133 = vrcp.pop %v4859
        %v5134 = vmul.f32 1.0, %v5133
        %v5135 = vrcp.pop %v4860
        %v5136 = vmul.f32 1.0, %v5135
        %v5137 = vrcp.pop %v4861
        %v5138 = vmul.f32 1.0, %v5137
        %v5139 = vrcp.pop %v4862
        %v5140 = vmul.f32 1.0, %v5139
        %v5141 = vrcp.pop %v4863
        %v5142 = vmul.f32 1.0, %v5141
        %v5143 = vrcp.pop %v4864
        %v5144 = vmul.f32 1.0, %v5143
        %v5145 = vrcp.pop %v4865
        %v5146 = vmul.f32 1.0, %v5145
        %v5147 = vrcp.pop %v4866
        %v5148 = vmul.f32 1.0, %v5147
        %v5149 = vrcp.pop %v4867
        %v5150 = vmul.f32 1.0, %v5149
        %v5151 = vrcp.pop %v4868
        %v5152 = vmul.f32 1.0, %v5151
        %v5153 = vrcp.pop %v4869
        %v5154 = vmul.f32 1.0, %v5153
        %v5155 = vrcp.pop %v4870
        %v5156 = vmul.f32 1.0, %v5155
        %v5157 = vrcp.pop %v4871
        %v5158 = vmul.f32 1.0, %v5157
        %v5159 = vrcp.pop %v4872
        %v5160 = vmul.f32 1.0, %v5159
        %v5161 = vrcp.pop %v4873
        %v5162 = vmul.f32 1.0, %v5161
        %v5163 = vrcp.pop %v4874
        %v5164 = vmul.f32 1.0, %v5163
        %v5165 = vrcp.pop %v4875
        %v5166 = vmul.f32 1.0, %v5165
        %v5167 = vrcp.pop %v4876
        %v5168 = vmul.f32 1.0, %v5167
        %v5169 = vrcp.pop %v4877
        %v5170 = vmul.f32 1.0, %v5169
        %v5171 = vrcp.pop %v4878
        %v5172 = vmul.f32 1.0, %v5171
        %v5173 = vrcp.pop %v4879
        %v5174 = vmul.f32 1.0, %v5173
        %v5175 = vrcp.pop %v4880
        %v5176 = vmul.f32 1.0, %v5175
        %v5177 = vrcp.pop %v4881
        %v5178 = vmul.f32 1.0, %v5177
        %v5179 = vrcp.pop %v4882
        %v5180 = vmul.f32 1.0, %v5179
        %v5181 = vrcp.pop %v4883
        %v5182 = vmul.f32 1.0, %v5181
        %v5183 = vrcp.pop %v4884
        %v5184 = vmul.f32 1.0, %v5183
        %v5185 = vrcp.pop %v4885
        %v5186 = vmul.f32 1.0, %v5185
        %v5187 = vrcp.pop %v4886
        %v5188 = vmul.f32 1.0, %v5187
        %v5189 = vrcp.pop %v4887
        %v5190 = vmul.f32 1.0, %v5189
        %v5191 = vrcp.pop %v4888
        %v5192 = vmul.f32 1.0, %v5191
        %v5193 = vrcp.pop %v4889
        %v5194 = vmul.f32 1.0, %v5193
        %v5195 = vrcp.pop %v4890
        %v5196 = vmul.f32 1.0, %v5195
        %v5197 = vrcp.pop %v4891
        %v5198 = vmul.f32 1.0, %v5197
        %v5199 = vrcp.pop %v4892
        %v5200 = vmul.f32 1.0, %v5199
        %v5201 = vrcp.pop %v4893
        %v5202 = vmul.f32 1.0, %v5201
        %v5203 = vrcp.pop %v4894
        %v5204 = vmul.f32 1.0, %v5203
        %v5205 = vrcp.pop %v4895
        %v5206 = vmul.f32 1.0, %v5205
        %v5207 = vrcp.pop %v4896
        %v5208 = vmul.f32 1.0, %v5207
        %v5209 = vrcp.pop %v4897
        %v5210 = vmul.f32 1.0, %v5209
        %v5211 = vrcp.pop %v4898
        %v5212 = vmul.f32 1.0, %v5211
        %v5213 = vrcp.pop %v4899
        %v5214 = vmul.f32 1.0, %v5213
        %v5215 = vrcp.pop %v4900
        %v5216 = vmul.f32 1.0, %v5215
        %v5217 = vrcp.pop %v4901
        %v5218 = vmul.f32 1.0, %v5217
        %v5219 = vrcp.pop %v4902
        %v5220 = vmul.f32 1.0, %v5219
        %v5221 = vrcp.pop %v4903
        %v5222 = vmul.f32 1.0, %v5221
        %v5223 = vrcp.pop %v4904
        %v5224 = vmul.f32 1.0, %v5223
        %v5225 = vrcp.pop %v4905
        %v5226 = vmul.f32 1.0, %v5225
        %v5227 = vrcp.pop %v4906
        %v5228 = vmul.f32 1.0, %v5227
        %v5229 = vrcp.pop %v4907
        %v5230 = vmul.f32 1.0, %v5229
        %v5231 = vrcp.pop %v4908
        %v5232 = vmul.f32 1.0, %v5231
        %v5233 = vrcp.pop %v4909
        %v5234 = vmul.f32 1.0, %v5233
        %v5235 = vrcp.pop %v4910
        %v5236 = vmul.f32 1.0, %v5235
        %v5237 = vrcp.pop %v4911
        %v5238 = vmul.f32 1.0, %v5237
        %v5239 = vrcp.pop %v4912
        %v5240 = vmul.f32 1.0, %v5239
        %v5241 = vrcp.pop %v4913
        %v5242 = vmul.f32 1.0, %v5241
        %v5243 = vrcp.pop %v4914
        %v5244 = vmul.f32 1.0, %v5243
        %v5245 = vrcp.pop %v4915
        %v5246 = vmul.f32 1.0, %v5245
        %v5247 = vrcp.pop %v4916
        %v5248 = vmul.f32 1.0, %v5247
        %v5249 = vrcp.pop %v4917
        %v5250 = vmul.f32 1.0, %v5249
        %v5251 = vrcp.pop %v4918
        %v5252 = vmul.f32 1.0, %v5251
        %v5253 = vrcp.pop %v4919
        %v5254 = vmul.f32 1.0, %v5253
        %v5255 = vrcp.pop %v4920
        %v5256 = vmul.f32 1.0, %v5255
        %v5257 = vrcp.pop %v4921
        %v5258 = vmul.f32 1.0, %v5257
        %v5259 = vrcp.pop %v4922
        %v5260 = vmul.f32 1.0, %v5259
        %v5261 = vrcp.pop %v4923
        %v5262 = vmul.f32 1.0, %v5261
        %v5263 = vrcp.pop %v4924
        %v5264 = vmul.f32 1.0, %v5263
        %v5265 = vrcp.pop %v4925
        %v5266 = vmul.f32 1.0, %v5265
        %v5267 = vrcp.pop %v4926
        %v5268 = vmul.f32 1.0, %v5267
        %v5269 = vrcp.pop %v4927
        %v5270 = vmul.f32 1.0, %v5269
        %v5271 = vrcp.pop %v4928
        %v5272 = vmul.f32 1.0, %v5271
        %v5273 = vrcp.pop %v4929
        %v5274 = vmul.f32 1.0, %v5273
        %v5275 = vrcp.pop %v4930
        %v5276 = vmul.f32 1.0, %v5275
        %v5277 = vrcp.pop %v4931
        %v5278 = vmul.f32 1.0, %v5277
        %v5279 = vrcp.pop %v4932
        %v5280 = vmul.f32 1.0, %v5279
        %v5281 = vrcp.pop %v4933
        %v5282 = vmul.f32 1.0, %v5281
        %v5283 = vrcp.pop %v4934
        %v5284 = vmul.f32 1.0, %v5283
        %v5285 = vrcp.pop %v4935
        %v5286 = vmul.f32 1.0, %v5285
        %v5287 = vrcp.pop %v4936
        %v5288 = vmul.f32 1.0, %v5287
        %v5289 = vrcp.pop %v4937
        %v5290 = vmul.f32 1.0, %v5289
        %v5291 = vrcp.pop %v4938
        %v5292 = vmul.f32 1.0, %v5291
        %v5293 = vrcp.pop %v4939
        %v5294 = vmul.f32 1.0, %v5293
        %v5295 = vrcp.pop %v4940
        %v5296 = vmul.f32 1.0, %v5295
        %v5297 = vrcp.pop %v4941
        %v5298 = vmul.f32 1.0, %v5297
        %v5299 = vrcp.pop %v4942
        %v5300 = vmul.f32 1.0, %v5299
        %v5301 = vrcp.pop %v4943
        %v5302 = vmul.f32 1.0, %v5301
        %v5303 = vrcp.pop %v4944
        %v5304 = vmul.f32 1.0, %v5303
        %v5305 = vrcp.pop %v4945
        %v5306 = vmul.f32 1.0, %v5305
        %v5307 = vrcp.pop %v4946
        %v5308 = vmul.f32 1.0, %v5307
        %v5309 = vrcp.pop %v4947
        %v5310 = vmul.f32 1.0, %v5309
        %v5311 = vrcp.pop %v4948
        %v5312 = vmul.f32 1.0, %v5311
        %v5313 = vrcp.pop %v4949
        %v5314 = vmul.f32 1.0, %v5313
        %v5315 = vrcp.pop %v4950
        %v5316 = vmul.f32 1.0, %v5315
        %v5317 = vrcp.pop %v4951
        %v5318 = vmul.f32 1.0, %v5317
        %v5319 = vrcp.pop %v4952
        %v5320 = vmul.f32 1.0, %v5319
        %v5321 = vrcp.pop %v4953
        %v5322 = vmul.f32 1.0, %v5321
        %v5323 = vrcp.pop %v4954
        %v5324 = vmul.f32 1.0, %v5323
        %v5325 = vrcp.pop %v4955
        %v5326 = vmul.f32 1.0, %v5325
        %v5327 = vrcp.pop %v4956
        %v5328 = vmul.f32 1.0, %v5327
        %v5329 = vrcp.pop %v4957
        %v5330 = vmul.f32 1.0, %v5329
        %v5331 = vrcp.pop %v4958
        %v5332 = vmul.f32 1.0, %v5331
        %v5333 = vrcp.pop %v4959
        %v5334 = vmul.f32 1.0, %v5333
        %v5335 = vrcp.pop %v4960
        %v5336 = vmul.f32 1.0, %v5335
        %v5337 = vrcp.pop %v4961
        %v5338 = vmul.f32 1.0, %v5337
        %v5339 = vrcp.pop %v4962
        %v5340 = vmul.f32 1.0, %v5339
        %v5341 = vrcp.pop %v4963
        %v5342 = vmul.f32 1.0, %v5341
        %v5343 = vrcp.pop %v4964
        %v5344 = vmul.f32 1.0, %v5343
        %v5345 = vrcp.pop %v4965
        %v5346 = vmul.f32 1.0, %v5345
        %v5347 = vrcp.pop %v4966
        %v5348 = vmul.f32 1.0, %v5347
        %v5349 = vrcp.pop %v4967
        %v5350 = vmul.f32 1.0, %v5349
        %v5351 = vrcp.pop %v4968
        %v5352 = vmul.f32 1.0, %v5351
        %v5353 = vmul.f32 %v1252, %v4970
        %v5354 = vmul.f32 %v1253, %v4972
        %v5355 = vmul.f32 %v1254, %v4974
        %v5356 = vmul.f32 %v1255, %v4976
        %v5357 = vmul.f32 %v1256, %v4978
        %v5358 = vmul.f32 %v1257, %v4980
        %v5359 = vmul.f32 %v1258, %v4982
        %v5360 = vmul.f32 %v1259, %v4984
        %v5361 = vmul.f32 %v1260, %v4986
        %v5362 = vmul.f32 %v1261, %v4988
        %v5363 = vmul.f32 %v1262, %v4990
        %v5364 = vmul.f32 %v1263, %v4992
        %v5365 = vmul.f32 %v1264, %v4994
        %v5366 = vmul.f32 %v1265, %v4996
        %v5367 = vmul.f32 %v1266, %v4998
        %v5368 = vmul.f32 %v1267, %v5000
        %v5369 = vmul.f32 %v1268, %v5002
        %v5370 = vmul.f32 %v1269, %v5004
        %v5371 = vmul.f32 %v1270, %v5006
        %v5372 = vmul.f32 %v1271, %v5008
        %v5373 = vmul.f32 %v1272, %v5010
        %v5374 = vmul.f32 %v1273, %v5012
        %v5375 = vmul.f32 %v1274, %v5014
        %v5376 = vmul.f32 %v1275, %v5016
        %v5377 = vmul.f32 %v1276, %v5018
        %v5378 = vmul.f32 %v1277, %v5020
        %v5379 = vmul.f32 %v1278, %v5022
        %v5380 = vmul.f32 %v1279, %v5024
        %v5381 = vmul.f32 %v1280, %v5026
        %v5382 = vmul.f32 %v1281, %v5028
        %v5383 = vmul.f32 %v1282, %v5030
        %v5384 = vmul.f32 %v1283, %v5032
        %v5385 = vmul.f32 %v1284, %v5034
        %v5386 = vmul.f32 %v1285, %v5036
        %v5387 = vmul.f32 %v1286, %v5038
        %v5388 = vmul.f32 %v1287, %v5040
        %v5389 = vmul.f32 %v1288, %v5042
        %v5390 = vmul.f32 %v1289, %v5044
        %v5391 = vmul.f32 %v1290, %v5046
        %v5392 = vmul.f32 %v1291, %v5048
        %v5393 = vmul.f32 %v1292, %v5050
        %v5394 = vmul.f32 %v1293, %v5052
        %v5395 = vmul.f32 %v1294, %v5054
        %v5396 = vmul.f32 %v1295, %v5056
        %v5397 = vmul.f32 %v1296, %v5058
        %v5398 = vmul.f32 %v1297, %v5060
        %v5399 = vmul.f32 %v1298, %v5062
        %v5400 = vmul.f32 %v1299, %v5064
        %v5401 = vmul.f32 %v1300, %v5066
        %v5402 = vmul.f32 %v1301, %v5068
        %v5403 = vmul.f32 %v1302, %v5070
        %v5404 = vmul.f32 %v1303, %v5072
        %v5405 = vmul.f32 %v1304, %v5074
        %v5406 = vmul.f32 %v1305, %v5076
        %v5407 = vmul.f32 %v1306, %v5078
        %v5408 = vmul.f32 %v1307, %v5080
        %v5409 = vmul.f32 %v1308, %v5082
        %v5410 = vmul.f32 %v1309, %v5084
        %v5411 = vmul.f32 %v1310, %v5086
        %v5412 = vmul.f32 %v1311, %v5088
        %v5413 = vmul.f32 %v1312, %v5090
        %v5414 = vmul.f32 %v1313, %v5092
        %v5415 = vmul.f32 %v1314, %v5094
        %v5416 = vmul.f32 %v1315, %v5096
        %v5417 = vld [vmem:[%s7] sm:$0xff]
        %v5418 = vld [vmem:[%s7 + $0x8] sm:$0xff]
        %v5419 = vld [vmem:[%s7 + $0x10] sm:$0xff]
        %v5420 = vld [vmem:[%s7 + $0x18] sm:$0xff]
        %v5421 = vld [vmem:[%s8] sm:$0xff]
        %v5422 = vld [vmem:[%s8 + $0x8] sm:$0xff]
        %v5423 = vld [vmem:[%s8 + $0x10] sm:$0xff]
        %v5424 = vld [vmem:[%s8 + $0x18] sm:$0xff]
        %5426 = vset.pattern.permute.xlu0 0
        %5427 = vperm.xlu0 %5426, %v5421
        %v5428 = vpop.permute.xlu0 %5427
        %5431 = vset.pattern.permute.xlu0 0
        %5432 = vperm.xlu0 %5431, %v5422
        %v5433 = vpop.permute.xlu0 %5432
        %5436 = vset.pattern.permute.xlu0 0
        %5437 = vperm.xlu0 %5436, %v5423
        %v5438 = vpop.permute.xlu0 %5437
        %5441 = vset.pattern.permute.xlu0 0
        %5442 = vperm.xlu0 %5441, %v5424
        %v5443 = vpop.permute.xlu0 %5442
        %v5446 = vsel %vm1428, %v5417, 0
        %v5449 = vsel %vm1428, %v5418, 0
        %v5452 = vsel %vm1428, %v5419, 0
        %v5455 = vsel %vm1428, %v5420, 0
        %5457 = vmatprep.subr.mxu0 %v5354
        %5458 = vmatpush1.msra.mxu0 %v5353
        %5459 = vmatprep.subr.mxu0 %v5370
        %5460 = vmatpush1.msra.mxu0 %v5369
        %5461 = vmatprep.subr.mxu0 %v5386
        %5462 = vmatpush1.msra.mxu0 %v5385
        %5463 = vmatprep.subr.mxu0 %v5402
        %5464 = vmatpush1.msra.mxu0 %v5401
        %5465 = vmatprep.subr.mxu0 0.0
        %5466 = vmatpush1.msra.mxu0 0.0
        %5467 = vmatprep.subr.mxu0 0.0
        %5468 = vmatpush1.msra.mxu0 0.0
        %5469 = vmatprep.subr.mxu0 0.0
        %5470 = vmatpush1.msra.mxu0 0.0
        %5471 = vmatprep.subr.mxu0 0.0
        %5472 = vmatpush1.msra.mxu0 0.0
        %5473 = vmatprep.subr.mxu0 0.0
        %5474 = vmatpush1.msra.mxu0 0.0
        %5475 = vmatprep.subr.mxu0 0.0
        %5476 = vmatpush1.msra.mxu0 0.0
        %5477 = vmatprep.subr.mxu0 0.0
        %5478 = vmatpush1.msra.mxu0 0.0
        %5479 = vmatprep.subr.mxu0 0.0
        %5480 = vmatpush1.msra.mxu0 0.0
        %5481 = vmatprep.subr.mxu0 0.0
        %5482 = vmatpush1.msra.mxu0 0.0
        %5483 = vmatprep.subr.mxu0 0.0
        %5484 = vmatpush1.msra.mxu0 0.0
        %5485 = vmatprep.subr.mxu0 0.0
        %5486 = vmatpush1.msra.mxu0 0.0
        %5487 = vmatprep.subr.mxu0 0.0
        %5488 = vmatpush1.msra.mxu0 0.0
        %5489 = vmatprep.subr.mxu0 0.0
        %5490 = vmatpush1.msra.mxu0 0.0
        %5491 = vmatprep.subr.mxu0 0.0
        %5492 = vmatpush1.msra.mxu0 0.0
        %5493 = vmatprep.subr.mxu0 0.0
        %5494 = vmatpush1.msra.mxu0 0.0
        %5495 = vmatprep.subr.mxu0 0.0
        %5496 = vmatpush1.msra.mxu0 0.0
        %5497 = vmatprep.subr.mxu0 0.0
        %5498 = vmatpush1.msra.mxu0 0.0
        %5499 = vmatprep.subr.mxu0 0.0
        %5500 = vmatpush1.msra.mxu0 0.0
        %5501 = vmatprep.subr.mxu0 0.0
        %5502 = vmatpush1.msra.mxu0 0.0
        %5503 = vmatprep.subr.mxu0 0.0
        %5504 = vmatpush1.msra.mxu0 0.0
        %5505 = vmatprep.subr.mxu0 0.0
        %5506 = vmatpush1.msra.mxu0 0.0
        %5507 = vmatprep.subr.mxu0 0.0
        %5508 = vmatpush1.msra.mxu0 0.0
        %5509 = vmatprep.subr.mxu0 0.0
        %5510 = vmatpush1.msra.mxu0 0.0
        %5511 = vmatprep.subr.mxu0 0.0
        %5512 = vmatpush1.msra.mxu0 0.0
        %5513 = vmatprep.subr.mxu0 0.0
        %5514 = vmatpush1.msra.mxu0 0.0
        %5515 = vmatprep.subr.mxu0 0.0
        %5516 = vmatpush1.msra.mxu0 0.0
        %5517 = vmatprep.subr.mxu0 0.0
        %5518 = vmatpush1.msra.mxu0 0.0
        %5519 = vmatprep.subr.mxu0 0.0
        %5520 = vmatpush1.msra.mxu0 0.0
        %5521 = vmatprep.mubr.f32.mxu0 0.0
        %5522 = vmatmul.mubr.f32.gmra.mrb[0].mxu0 %v5446
        %v5523 = vpop.f32.mrb[0].mxu0
        %v5524 = vadd.f32 %v5428, %v5523
        %v5525 = vpop.f32.mrb[0].mxu0
        %v5526 = vadd.f32 %v5428, %v5525
        %5527 = vmatprep.mubr.f32.mxu0 0.0
        %5528 = vmatmul.mubr.f32.gmra.mrb[0].mxu0 %v5449
        %v5529 = vpop.f32.mrb[0].mxu0
        %v5530 = vadd.f32 %v5433, %v5529
        %v5531 = vpop.f32.mrb[0].mxu0
        %v5532 = vadd.f32 %v5433, %v5531
        %5533 = vmatprep.mubr.f32.mxu0 0.0
        %5534 = vmatmul.mubr.f32.gmra.mrb[0].mxu0 %v5452
        %v5535 = vpop.f32.mrb[0].mxu0
        %v5536 = vadd.f32 %v5438, %v5535
        %v5537 = vpop.f32.mrb[0].mxu0
        %v5538 = vadd.f32 %v5438, %v5537
        %5539 = vmatprep.mubr.f32.mxu0 0.0
        %5540 = vmatmul.mubr.f32.gmra.mrb[0].mxu0 %v5455
        %v5541 = vpop.f32.mrb[0].mxu0
        %v5542 = vadd.f32 %v5443, %v5541
        %v5543 = vpop.f32.mrb[0].mxu0
        %v5544 = vadd.f32 %v5443, %v5543
        %5545 = vdwg.mxu0
        %5546 = vmatprep.subr.mxu0 %v5356
        %5547 = vmatpush1.msra.mxu0 %v5355
        %5548 = vmatprep.subr.mxu0 %v5372
        %5549 = vmatpush1.msra.mxu0 %v5371
        %5550 = vmatprep.subr.mxu0 %v5388
        %5551 = vmatpush1.msra.mxu0 %v5387
        %5552 = vmatprep.subr.mxu0 %v5404
        %5553 = vmatpush1.msra.mxu0 %v5403
        %5554 = vmatprep.subr.mxu0 0.0
        %5555 = vmatpush1.msra.mxu0 0.0
        %5556 = vmatprep.subr.mxu0 0.0
        %5557 = vmatpush1.msra.mxu0 0.0
        %5558 = vmatprep.subr.mxu0 0.0
        %5559 = vmatpush1.msra.mxu0 0.0
        %5560 = vmatprep.subr.mxu0 0.0
        %5561 = vmatpush1.msra.mxu0 0.0
        %5562 = vmatprep.subr.mxu0 0.0
        %5563 = vmatpush1.msra.mxu0 0.0
        %5564 = vmatprep.subr.mxu0 0.0
        %5565 = vmatpush1.msra.mxu0 0.0
        %5566 = vmatprep.subr.mxu0 0.0
        %5567 = vmatpush1.msra.mxu0 0.0
        %5568 = vmatprep.subr.mxu0 0.0
        %5569 = vmatpush1.msra.mxu0 0.0
        %5570 = vmatprep.subr.mxu0 0.0
        %5571 = vmatpush1.msra.mxu0 0.0
        %5572 = vmatprep.subr.mxu0 0.0
        %5573 = vmatpush1.msra.mxu0 0.0
        %5574 = vmatprep.subr.mxu0 0.0
        %5575 = vmatpush1.msra.mxu0 0.0
        %5576 = vmatprep.subr.mxu0 0.0
        %5577 = vmatpush1.msra.mxu0 0.0
        %5578 = vmatprep.subr.mxu0 0.0
        %5579 = vmatpush1.msra.mxu0 0.0
        %5580 = vmatprep.subr.mxu0 0.0
        %5581 = vmatpush1.msra.mxu0 0.0
        %5582 = vmatprep.subr.mxu0 0.0
        %5583 = vmatpush1.msra.mxu0 0.0
        %5584 = vmatprep.subr.mxu0 0.0
        %5585 = vmatpush1.msra.mxu0 0.0
        %5586 = vmatprep.subr.mxu0 0.0
        %5587 = vmatpush1.msra.mxu0 0.0
        %5588 = vmatprep.subr.mxu0 0.0
        %5589 = vmatpush1.msra.mxu0 0.0
        %5590 = vmatprep.subr.mxu0 0.0
        %5591 = vmatpush1.msra.mxu0 0.0
        %5592 = vmatprep.subr.mxu0 0.0
        %5593 = vmatpush1.msra.mxu0 0.0
        %5594 = vmatprep.subr.mxu0 0.0
        %5595 = vmatpush1.msra.mxu0 0.0
        %5596 = vmatprep.subr.mxu0 0.0
        %5597 = vmatpush1.msra.mxu0 0.0
        %5598 = vmatprep.subr.mxu0 0.0
        %5599 = vmatpush1.msra.mxu0 0.0
        %5600 = vmatprep.subr.mxu0 0.0
        %5601 = vmatpush1.msra.mxu0 0.0
        %5602 = vmatprep.subr.mxu0 0.0
        %5603 = vmatpush1.msra.mxu0 0.0
        %5604 = vmatprep.subr.mxu0 0.0
        %5605 = vmatpush1.msra.mxu0 0.0
        %5606 = vmatprep.subr.mxu0 0.0
        %5607 = vmatpush1.msra.mxu0 0.0
        %5608 = vmatprep.subr.mxu0 0.0
        %5609 = vmatpush1.msra.mxu0 0.0
        %5610 = vmatprep.mubr.f32.mxu0 0.0
        %5611 = vmatmul.mubr.f32.gmra.mrb[0].mxu0 %v5446
        %v5612 = vpop.f32.mrb[0].mxu0
        %v5613 = vadd.f32 %v5428, %v5612
        %v5614 = vpop.f32.mrb[0].mxu0
        %v5615 = vadd.f32 %v5428, %v5614
        %5616 = vmatprep.mubr.f32.mxu0 0.0
        %5617 = vmatmul.mubr.f32.gmra.mrb[0].mxu0 %v5449
        %v5618 = vpop.f32.mrb[0].mxu0
        %v5619 = vadd.f32 %v5433, %v5618
        %v5620 = vpop.f32.mrb[0].mxu0
        %v5621 = vadd.f32 %v5433, %v5620
        %5622 = vmatprep.mubr.f32.mxu0 0.0
        %5623 = vmatmul.mubr.f32.gmra.mrb[0].mxu0 %v5452
        %v5624 = vpop.f32.mrb[0].mxu0
        %v5625 = vadd.f32 %v5438, %v5624
        %v5626 = vpop.f32.mrb[0].mxu0
        %v5627 = vadd.f32 %v5438, %v5626
        %5628 = vmatprep.mubr.f32.mxu0 0.0
        %5629 = vmatmul.mubr.f32.gmra.mrb[0].mxu0 %v5455
        %v5630 = vpop.f32.mrb[0].mxu0
        %v5631 = vadd.f32 %v5443, %v5630
        %v5632 = vpop.f32.mrb[0].mxu0
        %v5633 = vadd.f32 %v5443, %v5632
        %5634 = vdwg.mxu0
        %5635 = vmatprep.subr.mxu0 %v5358
        %5636 = vmatpush1.msra.mxu0 %v5357
        %5637 = vmatprep.subr.mxu0 %v5374
        %5638 = vmatpush1.msra.mxu0 %v5373
        %5639 = vmatprep.subr.mxu0 %v5390
        %5640 = vmatpush1.msra.mxu0 %v5389
        %5641 = vmatprep.subr.mxu0 %v5406
        %5642 = vmatpush1.msra.mxu0 %v5405
        %5643 = vmatprep.subr.mxu0 0.0
        %5644 = vmatpush1.msra.mxu0 0.0
        %5645 = vmatprep.subr.mxu0 0.0
        %5646 = vmatpush1.msra.mxu0 0.0
        %5647 = vmatprep.subr.mxu0 0.0
        %5648 = vmatpush1.msra.mxu0 0.0
        %5649 = vmatprep.subr.mxu0 0.0
        %5650 = vmatpush1.msra.mxu0 0.0
        %5651 = vmatprep.subr.mxu0 0.0
        %5652 = vmatpush1.msra.mxu0 0.0
        %5653 = vmatprep.subr.mxu0 0.0
        %5654 = vmatpush1.msra.mxu0 0.0
        %5655 = vmatprep.subr.mxu0 0.0
        %5656 = vmatpush1.msra.mxu0 0.0
        %5657 = vmatprep.subr.mxu0 0.0
        %5658 = vmatpush1.msra.mxu0 0.0
        %5659 = vmatprep.subr.mxu0 0.0
        %5660 = vmatpush1.msra.mxu0 0.0
        %5661 = vmatprep.subr.mxu0 0.0
        %5662 = vmatpush1.msra.mxu0 0.0
        %5663 = vmatprep.subr.mxu0 0.0
        %5664 = vmatpush1.msra.mxu0 0.0
        %5665 = vmatprep.subr.mxu0 0.0
        %5666 = vmatpush1.msra.mxu0 0.0
        %5667 = vmatprep.subr.mxu0 0.0
        %5668 = vmatpush1.msra.mxu0 0.0
        %5669 = vmatprep.subr.mxu0 0.0
        %5670 = vmatpush1.msra.mxu0 0.0
        %5671 = vmatprep.subr.mxu0 0.0
        %5672 = vmatpush1.msra.mxu0 0.0
        %5673 = vmatprep.subr.mxu0 0.0
        %5674 = vmatpush1.msra.mxu0 0.0
        %5675 = vmatprep.subr.mxu0 0.0
        %5676 = vmatpush1.msra.mxu0 0.0
        %5677 = vmatprep.subr.mxu0 0.0
        %5678 = vmatpush1.msra.mxu0 0.0
        %5679 = vmatprep.subr.mxu0 0.0
        %5680 = vmatpush1.msra.mxu0 0.0
        %5681 = vmatprep.subr.mxu0 0.0
        %5682 = vmatpush1.msra.mxu0 0.0
        %5683 = vmatprep.subr.mxu0 0.0
        %5684 = vmatpush1.msra.mxu0 0.0
        %5685 = vmatprep.subr.mxu0 0.0
        %5686 = vmatpush1.msra.mxu0 0.0
        %5687 = vmatprep.subr.mxu0 0.0
        %5688 = vmatpush1.msra.mxu0 0.0
        %5689 = vmatprep.subr.mxu0 0.0
        %5690 = vmatpush1.msra.mxu0 0.0
        %5691 = vmatprep.subr.mxu0 0.0
        %5692 = vmatpush1.msra.mxu0 0.0
        %5693 = vmatprep.subr.mxu0 0.0
        %5694 = vmatpush1.msra.mxu0 0.0
        %5695 = vmatprep.subr.mxu0 0.0
        %5696 = vmatpush1.msra.mxu0 0.0
        %5697 = vmatprep.subr.mxu0 0.0
        %5698 = vmatpush1.msra.mxu0 0.0
        %5699 = vmatprep.mubr.f32.mxu0 0.0
        %5700 = vmatmul.mubr.f32.gmra.mrb[0].mxu0 %v5446
        %v5701 = vpop.f32.mrb[0].mxu0
        %v5702 = vadd.f32 %v5428, %v5701
        %v5703 = vpop.f32.mrb[0].mxu0
        %v5704 = vadd.f32 %v5428, %v5703
        %5705 = vmatprep.mubr.f32.mxu0 0.0
        %5706 = vmatmul.mubr.f32.gmra.mrb[0].mxu0 %v5449
        %v5707 = vpop.f32.mrb[0].mxu0
        %v5708 = vadd.f32 %v5433, %v5707
        %v5709 = vpop.f32.mrb[0].mxu0
        %v5710 = vadd.f32 %v5433, %v5709
        %5711 = vmatprep.mubr.f32.mxu0 0.0
        %5712 = vmatmul.mubr.f32.gmra.mrb[0].mxu0 %v5452
        %v5713 = vpop.f32.mrb[0].mxu0
        %v5714 = vadd.f32 %v5438, %v5713
        %v5715 = vpop.f32.mrb[0].mxu0
        %v5716 = vadd.f32 %v5438, %v5715
        %5717 = vmatprep.mubr.f32.mxu0 0.0
        %5718 = vmatmul.mubr.f32.gmra.mrb[0].mxu0 %v5455
        %v5719 = vpop.f32.mrb[0].mxu0
        %v5720 = vadd.f32 %v5443, %v5719
        %v5721 = vpop.f32.mrb[0].mxu0
        %v5722 = vadd.f32 %v5443, %v5721
        %5723 = vdwg.mxu0
        %5724 = vmatprep.subr.mxu0 %v5360
        %5725 = vmatpush1.msra.mxu0 %v5359
        %5726 = vmatprep.subr.mxu0 %v5376
        %5727 = vmatpush1.msra.mxu0 %v5375
        %5728 = vmatprep.subr.mxu0 %v5392
        %5729 = vmatpush1.msra.mxu0 %v5391
        %5730 = vmatprep.subr.mxu0 %v5408
        %5731 = vmatpush1.msra.mxu0 %v5407
        %5732 = vmatprep.subr.mxu0 0.0
        %5733 = vmatpush1.msra.mxu0 0.0
        %5734 = vmatprep.subr.mxu0 0.0
        %5735 = vmatpush1.msra.mxu0 0.0
        %5736 = vmatprep.subr.mxu0 0.0
        %5737 = vmatpush1.msra.mxu0 0.0
        %5738 = vmatprep.subr.mxu0 0.0
        %5739 = vmatpush1.msra.mxu0 0.0
        %5740 = vmatprep.subr.mxu0 0.0
        %5741 = vmatpush1.msra.mxu0 0.0
        %5742 = vmatprep.subr.mxu0 0.0
        %5743 = vmatpush1.msra.mxu0 0.0
        %5744 = vmatprep.subr.mxu0 0.0
        %5745 = vmatpush1.msra.mxu0 0.0
        %5746 = vmatprep.subr.mxu0 0.0
        %5747 = vmatpush1.msra.mxu0 0.0
        %5748 = vmatprep.subr.mxu0 0.0
        %5749 = vmatpush1.msra.mxu0 0.0
        %5750 = vmatprep.subr.mxu0 0.0
        %5751 = vmatpush1.msra.mxu0 0.0
        %5752 = vmatprep.subr.mxu0 0.0
        %5753 = vmatpush1.msra.mxu0 0.0
        %5754 = vmatprep.subr.mxu0 0.0
        %5755 = vmatpush1.msra.mxu0 0.0
        %5756 = vmatprep.subr.mxu0 0.0
        %5757 = vmatpush1.msra.mxu0 0.0
        %5758 = vmatprep.subr.mxu0 0.0
        %5759 = vmatpush1.msra.mxu0 0.0
        %5760 = vmatprep.subr.mxu0 0.0
        %5761 = vmatpush1.msra.mxu0 0.0
        %5762 = vmatprep.subr.mxu0 0.0
        %5763 = vmatpush1.msra.mxu0 0.0
        %5764 = vmatprep.subr.mxu0 0.0
        %5765 = vmatpush1.msra.mxu0 0.0
        %5766 = vmatprep.subr.mxu0 0.0
        %5767 = vmatpush1.msra.mxu0 0.0
        %5768 = vmatprep.subr.mxu0 0.0
        %5769 = vmatpush1.msra.mxu0 0.0
        %5770 = vmatprep.subr.mxu0 0.0
        %5771 = vmatpush1.msra.mxu0 0.0
        %5772 = vmatprep.subr.mxu0 0.0
        %5773 = vmatpush1.msra.mxu0 0.0
        %5774 = vmatprep.subr.mxu0 0.0
        %5775 = vmatpush1.msra.mxu0 0.0
        %5776 = vmatprep.subr.mxu0 0.0
        %5777 = vmatpush1.msra.mxu0 0.0
        %5778 = vmatprep.subr.mxu0 0.0
        %5779 = vmatpush1.msra.mxu0 0.0
        %5780 = vmatprep.subr.mxu0 0.0
        %5781 = vmatpush1.msra.mxu0 0.0
        %5782 = vmatprep.subr.mxu0 0.0
        %5783 = vmatpush1.msra.mxu0 0.0
        %5784 = vmatprep.subr.mxu0 0.0
        %5785 = vmatpush1.msra.mxu0 0.0
        %5786 = vmatprep.subr.mxu0 0.0
        %5787 = vmatpush1.msra.mxu0 0.0
        %5788 = vmatprep.mubr.f32.mxu0 0.0
        %5789 = vmatmul.mubr.f32.gmra.mrb[0].mxu0 %v5446
        %v5790 = vpop.f32.mrb[0].mxu0
        %v5791 = vadd.f32 %v5428, %v5790
        %v5792 = vpop.f32.mrb[0].mxu0
        %v5793 = vadd.f32 %v5428, %v5792
        %5794 = vmatprep.mubr.f32.mxu0 0.0
        %5795 = vmatmul.mubr.f32.gmra.mrb[0].mxu0 %v5449
        %v5796 = vpop.f32.mrb[0].mxu0
        %v5797 = vadd.f32 %v5433, %v5796
        %v5798 = vpop.f32.mrb[0].mxu0
        %v5799 = vadd.f32 %v5433, %v5798
        %5800 = vmatprep.mubr.f32.mxu0 0.0
        %5801 = vmatmul.mubr.f32.gmra.mrb[0].mxu0 %v5452
        %v5802 = vpop.f32.mrb[0].mxu0
        %v5803 = vadd.f32 %v5438, %v5802
        %v5804 = vpop.f32.mrb[0].mxu0
        %v5805 = vadd.f32 %v5438, %v5804
        %5806 = vmatprep.mubr.f32.mxu0 0.0
        %5807 = vmatmul.mubr.f32.gmra.mrb[0].mxu0 %v5455
        %v5808 = vpop.f32.mrb[0].mxu0
        %v5809 = vadd.f32 %v5443, %v5808
        %v5810 = vpop.f32.mrb[0].mxu0
        %v5811 = vadd.f32 %v5443, %v5810
        %5812 = vdwg.mxu0
        %5813 = vmatprep.subr.mxu0 %v5362
        %5814 = vmatpush1.msra.mxu0 %v5361
        %5815 = vmatprep.subr.mxu0 %v5378
        %5816 = vmatpush1.msra.mxu0 %v5377
        %5817 = vmatprep.subr.mxu0 %v5394
        %5818 = vmatpush1.msra.mxu0 %v5393
        %5819 = vmatprep.subr.mxu0 %v5410
        %5820 = vmatpush1.msra.mxu0 %v5409
        %5821 = vmatprep.subr.mxu0 0.0
        %5822 = vmatpush1.msra.mxu0 0.0
        %5823 = vmatprep.subr.mxu0 0.0
        %5824 = vmatpush1.msra.mxu0 0.0
        %5825 = vmatprep.subr.mxu0 0.0
        %5826 = vmatpush1.msra.mxu0 0.0
        %5827 = vmatprep.subr.mxu0 0.0
        %5828 = vmatpush1.msra.mxu0 0.0
        %5829 = vmatprep.subr.mxu0 0.0
        %5830 = vmatpush1.msra.mxu0 0.0
        %5831 = vmatprep.subr.mxu0 0.0
        %5832 = vmatpush1.msra.mxu0 0.0
        %5833 = vmatprep.subr.mxu0 0.0
        %5834 = vmatpush1.msra.mxu0 0.0
        %5835 = vmatprep.subr.mxu0 0.0
        %5836 = vmatpush1.msra.mxu0 0.0
        %5837 = vmatprep.subr.mxu0 0.0
        %5838 = vmatpush1.msra.mxu0 0.0
        %5839 = vmatprep.subr.mxu0 0.0
        %5840 = vmatpush1.msra.mxu0 0.0
        %5841 = vmatprep.subr.mxu0 0.0
        %5842 = vmatpush1.msra.mxu0 0.0
        %5843 = vmatprep.subr.mxu0 0.0
        %5844 = vmatpush1.msra.mxu0 0.0
        %5845 = vmatprep.subr.mxu0 0.0
        %5846 = vmatpush1.msra.mxu0 0.0
        %5847 = vmatprep.subr.mxu0 0.0
        %5848 = vmatpush1.msra.mxu0 0.0
        %5849 = vmatprep.subr.mxu0 0.0
        %5850 = vmatpush1.msra.mxu0 0.0
        %5851 = vmatprep.subr.mxu0 0.0
        %5852 = vmatpush1.msra.mxu0 0.0
        %5853 = vmatprep.subr.mxu0 0.0
        %5854 = vmatpush1.msra.mxu0 0.0
        %5855 = vmatprep.subr.mxu0 0.0
        %5856 = vmatpush1.msra.mxu0 0.0
        %5857 = vmatprep.subr.mxu0 0.0
        %5858 = vmatpush1.msra.mxu0 0.0
        %5859 = vmatprep.subr.mxu0 0.0
        %5860 = vmatpush1.msra.mxu0 0.0
        %5861 = vmatprep.subr.mxu0 0.0
        %5862 = vmatpush1.msra.mxu0 0.0
        %5863 = vmatprep.subr.mxu0 0.0
        %5864 = vmatpush1.msra.mxu0 0.0
        %5865 = vmatprep.subr.mxu0 0.0
        %5866 = vmatpush1.msra.mxu0 0.0
        %5867 = vmatprep.subr.mxu0 0.0
        %5868 = vmatpush1.msra.mxu0 0.0
        %5869 = vmatprep.subr.mxu0 0.0
        %5870 = vmatpush1.msra.mxu0 0.0
        %5871 = vmatprep.subr.mxu0 0.0
        %5872 = vmatpush1.msra.mxu0 0.0
        %5873 = vmatprep.subr.mxu0 0.0
        %5874 = vmatpush1.msra.mxu0 0.0
        %5875 = vmatprep.subr.mxu0 0.0
        %5876 = vmatpush1.msra.mxu0 0.0
        %5877 = vmatprep.mubr.f32.mxu0 0.0
        %5878 = vmatmul.mubr.f32.gmra.mrb[0].mxu0 %v5446
        %v5879 = vpop.f32.mrb[0].mxu0
        %v5880 = vadd.f32 %v5428, %v5879
        %v5881 = vpop.f32.mrb[0].mxu0
        %v5882 = vadd.f32 %v5428, %v5881
        %5883 = vmatprep.mubr.f32.mxu0 0.0
        %5884 = vmatmul.mubr.f32.gmra.mrb[0].mxu0 %v5449
        %v5885 = vpop.f32.mrb[0].mxu0
        %v5886 = vadd.f32 %v5433, %v5885
        %v5887 = vpop.f32.mrb[0].mxu0
        %v5888 = vadd.f32 %v5433, %v5887
        %5889 = vmatprep.mubr.f32.mxu0 0.0
        %5890 = vmatmul.mubr.f32.gmra.mrb[0].mxu0 %v5452
        %v5891 = vpop.f32.mrb[0].mxu0
        %v5892 = vadd.f32 %v5438, %v5891
        %v5893 = vpop.f32.mrb[0].mxu0
        %v5894 = vadd.f32 %v5438, %v5893
        %5895 = vmatprep.mubr.f32.mxu0 0.0
        %5896 = vmatmul.mubr.f32.gmra.mrb[0].mxu0 %v5455
        %v5897 = vpop.f32.mrb[0].mxu0
        %v5898 = vadd.f32 %v5443, %v5897
        %v5899 = vpop.f32.mrb[0].mxu0
        %v5900 = vadd.f32 %v5443, %v5899
        %5901 = vdwg.mxu0
        %5902 = vmatprep.subr.mxu0 %v5364
        %5903 = vmatpush1.msra.mxu0 %v5363
        %5904 = vmatprep.subr.mxu0 %v5380
        %5905 = vmatpush1.msra.mxu0 %v5379
        %5906 = vmatprep.subr.mxu0 %v5396
        %5907 = vmatpush1.msra.mxu0 %v5395
        %5908 = vmatprep.subr.mxu0 %v5412
        %5909 = vmatpush1.msra.mxu0 %v5411
        %5910 = vmatprep.subr.mxu0 0.0
        %5911 = vmatpush1.msra.mxu0 0.0
        %5912 = vmatprep.subr.mxu0 0.0
        %5913 = vmatpush1.msra.mxu0 0.0
        %5914 = vmatprep.subr.mxu0 0.0
        %5915 = vmatpush1.msra.mxu0 0.0
        %5916 = vmatprep.subr.mxu0 0.0
        %5917 = vmatpush1.msra.mxu0 0.0
        %5918 = vmatprep.subr.mxu0 0.0
        %5919 = vmatpush1.msra.mxu0 0.0
        %5920 = vmatprep.subr.mxu0 0.0
        %5921 = vmatpush1.msra.mxu0 0.0
        %5922 = vmatprep.subr.mxu0 0.0
        %5923 = vmatpush1.msra.mxu0 0.0
        %5924 = vmatprep.subr.mxu0 0.0
        %5925 = vmatpush1.msra.mxu0 0.0
        %5926 = vmatprep.subr.mxu0 0.0
        %5927 = vmatpush1.msra.mxu0 0.0
        %5928 = vmatprep.subr.mxu0 0.0
        %5929 = vmatpush1.msra.mxu0 0.0
        %5930 = vmatprep.subr.mxu0 0.0
        %5931 = vmatpush1.msra.mxu0 0.0
        %5932 = vmatprep.subr.mxu0 0.0
        %5933 = vmatpush1.msra.mxu0 0.0
        %5934 = vmatprep.subr.mxu0 0.0
        %5935 = vmatpush1.msra.mxu0 0.0
        %5936 = vmatprep.subr.mxu0 0.0
        %5937 = vmatpush1.msra.mxu0 0.0
        %5938 = vmatprep.subr.mxu0 0.0
        %5939 = vmatpush1.msra.mxu0 0.0
        %5940 = vmatprep.subr.mxu0 0.0
        %5941 = vmatpush1.msra.mxu0 0.0
        %5942 = vmatprep.subr.mxu0 0.0
        %5943 = vmatpush1.msra.mxu0 0.0
        %5944 = vmatprep.subr.mxu0 0.0
        %5945 = vmatpush1.msra.mxu0 0.0
        %5946 = vmatprep.subr.mxu0 0.0
        %5947 = vmatpush1.msra.mxu0 0.0
        %5948 = vmatprep.subr.mxu0 0.0
        %5949 = vmatpush1.msra.mxu0 0.0
        %5950 = vmatprep.subr.mxu0 0.0
        %5951 = vmatpush1.msra.mxu0 0.0
        %5952 = vmatprep.subr.mxu0 0.0
        %5953 = vmatpush1.msra.mxu0 0.0
        %5954 = vmatprep.subr.mxu0 0.0
        %5955 = vmatpush1.msra.mxu0 0.0
        %5956 = vmatprep.subr.mxu0 0.0
        %5957 = vmatpush1.msra.mxu0 0.0
        %5958 = vmatprep.subr.mxu0 0.0
        %5959 = vmatpush1.msra.mxu0 0.0
        %5960 = vmatprep.subr.mxu0 0.0
        %5961 = vmatpush1.msra.mxu0 0.0
        %5962 = vmatprep.subr.mxu0 0.0
        %5963 = vmatpush1.msra.mxu0 0.0
        %5964 = vmatprep.subr.mxu0 0.0
        %5965 = vmatpush1.msra.mxu0 0.0
        %5966 = vmatprep.mubr.f32.mxu0 0.0
        %5967 = vmatmul.mubr.f32.gmra.mrb[0].mxu0 %v5446
        %v5968 = vpop.f32.mrb[0].mxu0
        %v5969 = vadd.f32 %v5428, %v5968
        %v5970 = vpop.f32.mrb[0].mxu0
        %v5971 = vadd.f32 %v5428, %v5970
        %5972 = vmatprep.mubr.f32.mxu0 0.0
        %5973 = vmatmul.mubr.f32.gmra.mrb[0].mxu0 %v5449
        %v5974 = vpop.f32.mrb[0].mxu0
        %v5975 = vadd.f32 %v5433, %v5974
        %v5976 = vpop.f32.mrb[0].mxu0
        %v5977 = vadd.f32 %v5433, %v5976
        %5978 = vmatprep.mubr.f32.mxu0 0.0
        %5979 = vmatmul.mubr.f32.gmra.mrb[0].mxu0 %v5452
        %v5980 = vpop.f32.mrb[0].mxu0
        %v5981 = vadd.f32 %v5438, %v5980
        %v5982 = vpop.f32.mrb[0].mxu0
        %v5983 = vadd.f32 %v5438, %v5982
        %5984 = vmatprep.mubr.f32.mxu0 0.0
        %5985 = vmatmul.mubr.f32.gmra.mrb[0].mxu0 %v5455
        %v5986 = vpop.f32.mrb[0].mxu0
        %v5987 = vadd.f32 %v5443, %v5986
        %v5988 = vpop.f32.mrb[0].mxu0
        %v5989 = vadd.f32 %v5443, %v5988
        %5990 = vdwg.mxu0
        %5991 = vmatprep.subr.mxu0 %v5366
        %5992 = vmatpush1.msra.mxu0 %v5365
        %5993 = vmatprep.subr.mxu0 %v5382
        %5994 = vmatpush1.msra.mxu0 %v5381
        %5995 = vmatprep.subr.mxu0 %v5398
        %5996 = vmatpush1.msra.mxu0 %v5397
        %5997 = vmatprep.subr.mxu0 %v5414
        %5998 = vmatpush1.msra.mxu0 %v5413
        %5999 = vmatprep.subr.mxu0 0.0
        %6000 = vmatpush1.msra.mxu0 0.0
        %6001 = vmatprep.subr.mxu0 0.0
        %6002 = vmatpush1.msra.mxu0 0.0
        %6003 = vmatprep.subr.mxu0 0.0
        %6004 = vmatpush1.msra.mxu0 0.0
        %6005 = vmatprep.subr.mxu0 0.0
        %6006 = vmatpush1.msra.mxu0 0.0
        %6007 = vmatprep.subr.mxu0 0.0
        %6008 = vmatpush1.msra.mxu0 0.0
        %6009 = vmatprep.subr.mxu0 0.0
        %6010 = vmatpush1.msra.mxu0 0.0
        %6011 = vmatprep.subr.mxu0 0.0
        %6012 = vmatpush1.msra.mxu0 0.0
        %6013 = vmatprep.subr.mxu0 0.0
        %6014 = vmatpush1.msra.mxu0 0.0
        %6015 = vmatprep.subr.mxu0 0.0
        %6016 = vmatpush1.msra.mxu0 0.0
        %6017 = vmatprep.subr.mxu0 0.0
        %6018 = vmatpush1.msra.mxu0 0.0
        %6019 = vmatprep.subr.mxu0 0.0
        %6020 = vmatpush1.msra.mxu0 0.0
        %6021 = vmatprep.subr.mxu0 0.0
        %6022 = vmatpush1.msra.mxu0 0.0
        %6023 = vmatprep.subr.mxu0 0.0
        %6024 = vmatpush1.msra.mxu0 0.0
        %6025 = vmatprep.subr.mxu0 0.0
        %6026 = vmatpush1.msra.mxu0 0.0
        %6027 = vmatprep.subr.mxu0 0.0
        %6028 = vmatpush1.msra.mxu0 0.0
        %6029 = vmatprep.subr.mxu0 0.0
        %6030 = vmatpush1.msra.mxu0 0.0
        %6031 = vmatprep.subr.mxu0 0.0
        %6032 = vmatpush1.msra.mxu0 0.0
        %6033 = vmatprep.subr.mxu0 0.0
        %6034 = vmatpush1.msra.mxu0 0.0
        %6035 = vmatprep.subr.mxu0 0.0
        %6036 = vmatpush1.msra.mxu0 0.0
        %6037 = vmatprep.subr.mxu0 0.0
        %6038 = vmatpush1.msra.mxu0 0.0
        %6039 = vmatprep.subr.mxu0 0.0
        %6040 = vmatpush1.msra.mxu0 0.0
        %6041 = vmatprep.subr.mxu0 0.0
        %6042 = vmatpush1.msra.mxu0 0.0
        %6043 = vmatprep.subr.mxu0 0.0
        %6044 = vmatpush1.msra.mxu0 0.0
        %6045 = vmatprep.subr.mxu0 0.0
        %6046 = vmatpush1.msra.mxu0 0.0
        %6047 = vmatprep.subr.mxu0 0.0
        %6048 = vmatpush1.msra.mxu0 0.0
        %6049 = vmatprep.subr.mxu0 0.0
        %6050 = vmatpush1.msra.mxu0 0.0
        %6051 = vmatprep.subr.mxu0 0.0
        %6052 = vmatpush1.msra.mxu0 0.0
        %6053 = vmatprep.subr.mxu0 0.0
        %6054 = vmatpush1.msra.mxu0 0.0
        %6055 = vmatprep.mubr.f32.mxu0 0.0
        %6056 = vmatmul.mubr.f32.gmra.mrb[0].mxu0 %v5446
        %v6057 = vpop.f32.mrb[0].mxu0
        %v6058 = vadd.f32 %v5428, %v6057
        %v6059 = vpop.f32.mrb[0].mxu0
        %v6060 = vadd.f32 %v5428, %v6059
        %6061 = vmatprep.mubr.f32.mxu0 0.0
        %6062 = vmatmul.mubr.f32.gmra.mrb[0].mxu0 %v5449
        %v6063 = vpop.f32.mrb[0].mxu0
        %v6064 = vadd.f32 %v5433, %v6063
        %v6065 = vpop.f32.mrb[0].mxu0
        %v6066 = vadd.f32 %v5433, %v6065
        %6067 = vmatprep.mubr.f32.mxu0 0.0
        %6068 = vmatmul.mubr.f32.gmra.mrb[0].mxu0 %v5452
        %v6069 = vpop.f32.mrb[0].mxu0
        %v6070 = vadd.f32 %v5438, %v6069
        %v6071 = vpop.f32.mrb[0].mxu0
        %v6072 = vadd.f32 %v5438, %v6071
        %6073 = vmatprep.mubr.f32.mxu0 0.0
        %6074 = vmatmul.mubr.f32.gmra.mrb[0].mxu0 %v5455
        %v6075 = vpop.f32.mrb[0].mxu0
        %v6076 = vadd.f32 %v5443, %v6075
        %v6077 = vpop.f32.mrb[0].mxu0
        %v6078 = vadd.f32 %v5443, %v6077
        %6079 = vdwg.mxu0
        %6080 = vmatprep.subr.mxu0 %v5368
        %6081 = vmatpush1.msra.mxu0 %v5367
        %6082 = vmatprep.subr.mxu0 %v5384
        %6083 = vmatpush1.msra.mxu0 %v5383
        %6084 = vmatprep.subr.mxu0 %v5400
        %6085 = vmatpush1.msra.mxu0 %v5399
        %6086 = vmatprep.subr.mxu0 %v5416
        %6087 = vmatpush1.msra.mxu0 %v5415
        %6088 = vmatprep.subr.mxu0 0.0
        %6089 = vmatpush1.msra.mxu0 0.0
        %6090 = vmatprep.subr.mxu0 0.0
        %6091 = vmatpush1.msra.mxu0 0.0
        %6092 = vmatprep.subr.mxu0 0.0
        %6093 = vmatpush1.msra.mxu0 0.0
        %6094 = vmatprep.subr.mxu0 0.0
        %6095 = vmatpush1.msra.mxu0 0.0
        %6096 = vmatprep.subr.mxu0 0.0
        %6097 = vmatpush1.msra.mxu0 0.0
        %6098 = vmatprep.subr.mxu0 0.0
        %6099 = vmatpush1.msra.mxu0 0.0
        %6100 = vmatprep.subr.mxu0 0.0
        %6101 = vmatpush1.msra.mxu0 0.0
        %6102 = vmatprep.subr.mxu0 0.0
        %6103 = vmatpush1.msra.mxu0 0.0
        %6104 = vmatprep.subr.mxu0 0.0
        %6105 = vmatpush1.msra.mxu0 0.0
        %6106 = vmatprep.subr.mxu0 0.0
        %6107 = vmatpush1.msra.mxu0 0.0
        %6108 = vmatprep.subr.mxu0 0.0
        %6109 = vmatpush1.msra.mxu0 0.0
        %6110 = vmatprep.subr.mxu0 0.0
        %6111 = vmatpush1.msra.mxu0 0.0
        %6112 = vmatprep.subr.mxu0 0.0
        %6113 = vmatpush1.msra.mxu0 0.0
        %6114 = vmatprep.subr.mxu0 0.0
        %6115 = vmatpush1.msra.mxu0 0.0
        %6116 = vmatprep.subr.mxu0 0.0
        %6117 = vmatpush1.msra.mxu0 0.0
        %6118 = vmatprep.subr.mxu0 0.0
        %6119 = vmatpush1.msra.mxu0 0.0
        %6120 = vmatprep.subr.mxu0 0.0
        %6121 = vmatpush1.msra.mxu0 0.0
        %6122 = vmatprep.subr.mxu0 0.0
        %6123 = vmatpush1.msra.mxu0 0.0
        %6124 = vmatprep.subr.mxu0 0.0
        %6125 = vmatpush1.msra.mxu0 0.0
        %6126 = vmatprep.subr.mxu0 0.0
        %6127 = vmatpush1.msra.mxu0 0.0
        %6128 = vmatprep.subr.mxu0 0.0
        %6129 = vmatpush1.msra.mxu0 0.0
        %6130 = vmatprep.subr.mxu0 0.0
        %6131 = vmatpush1.msra.mxu0 0.0
        %6132 = vmatprep.subr.mxu0 0.0
        %6133 = vmatpush1.msra.mxu0 0.0
        %6134 = vmatprep.subr.mxu0 0.0
        %6135 = vmatpush1.msra.mxu0 0.0
        %6136 = vmatprep.subr.mxu0 0.0
        %6137 = vmatpush1.msra.mxu0 0.0
        %6138 = vmatprep.subr.mxu0 0.0
        %6139 = vmatpush1.msra.mxu0 0.0
        %6140 = vmatprep.subr.mxu0 0.0
        %6141 = vmatpush1.msra.mxu0 0.0
        %6142 = vmatprep.subr.mxu0 0.0
        %6143 = vmatpush1.msra.mxu0 0.0
        %6144 = vmatprep.mubr.f32.mxu0 0.0
        %6145 = vmatmul.mubr.f32.gmra.mrb[0].mxu0 %v5446
        %v6146 = vpop.f32.mrb[0].mxu0
        %v6147 = vadd.f32 %v5428, %v6146
        %v6148 = vpop.f32.mrb[0].mxu0
        %v6149 = vadd.f32 %v5428, %v6148
        %6150 = vmatprep.mubr.f32.mxu0 0.0
        %6151 = vmatmul.mubr.f32.gmra.mrb[0].mxu0 %v5449
        %v6152 = vpop.f32.mrb[0].mxu0
        %v6153 = vadd.f32 %v5433, %v6152
        %v6154 = vpop.f32.mrb[0].mxu0
        %v6155 = vadd.f32 %v5433, %v6154
        %6156 = vmatprep.mubr.f32.mxu0 0.0
        %6157 = vmatmul.mubr.f32.gmra.mrb[0].mxu0 %v5452
        %v6158 = vpop.f32.mrb[0].mxu0
        %v6159 = vadd.f32 %v5438, %v6158
        %v6160 = vpop.f32.mrb[0].mxu0
        %v6161 = vadd.f32 %v5438, %v6160
        %6162 = vmatprep.mubr.f32.mxu0 0.0
        %6163 = vmatmul.mubr.f32.gmra.mrb[0].mxu0 %v5455
        %v6164 = vpop.f32.mrb[0].mxu0
        %v6165 = vadd.f32 %v5443, %v6164
        %v6166 = vpop.f32.mrb[0].mxu0
        %v6167 = vadd.f32 %v5443, %v6166
        %6168 = vdwg.mxu0
        %v6169 = vadd.f32 %v5353, %v5524
        %v6170 = vadd.f32 %v5354, %v5526
        %v6171 = vadd.f32 %v5355, %v5613
        %v6172 = vadd.f32 %v5356, %v5615
        %v6173 = vadd.f32 %v5357, %v5702
        %v6174 = vadd.f32 %v5358, %v5704
        %v6175 = vadd.f32 %v5359, %v5791
        %v6176 = vadd.f32 %v5360, %v5793
        %v6177 = vadd.f32 %v5361, %v5880
        %v6178 = vadd.f32 %v5362, %v5882
        %v6179 = vadd.f32 %v5363, %v5969
        %v6180 = vadd.f32 %v5364, %v5971
        %v6181 = vadd.f32 %v5365, %v6058
        %v6182 = vadd.f32 %v5366, %v6060
        %v6183 = vadd.f32 %v5367, %v6147
        %v6184 = vadd.f32 %v5368, %v6149
        %v6185 = vadd.f32 %v5369, %v5530
        %v6186 = vadd.f32 %v5370, %v5532
        %v6187 = vadd.f32 %v5371, %v5619
        %v6188 = vadd.f32 %v5372, %v5621
        %v6189 = vadd.f32 %v5373, %v5708
        %v6190 = vadd.f32 %v5374, %v5710
        %v6191 = vadd.f32 %v5375, %v5797
        %v6192 = vadd.f32 %v5376, %v5799
        %v6193 = vadd.f32 %v5377, %v5886
        %v6194 = vadd.f32 %v5378, %v5888
        %v6195 = vadd.f32 %v5379, %v5975
        %v6196 = vadd.f32 %v5380, %v5977
        %v6197 = vadd.f32 %v5381, %v6064
        %v6198 = vadd.f32 %v5382, %v6066
        %v6199 = vadd.f32 %v5383, %v6153
        %v6200 = vadd.f32 %v5384, %v6155
        %v6201 = vadd.f32 %v5385, %v5536
        %v6202 = vadd.f32 %v5386, %v5538
        %v6203 = vadd.f32 %v5387, %v5625
        %v6204 = vadd.f32 %v5388, %v5627
        %v6205 = vadd.f32 %v5389, %v5714
        %v6206 = vadd.f32 %v5390, %v5716
        %v6207 = vadd.f32 %v5391, %v5803
        %v6208 = vadd.f32 %v5392, %v5805
        %v6209 = vadd.f32 %v5393, %v5892
        %v6210 = vadd.f32 %v5394, %v5894
        %v6211 = vadd.f32 %v5395, %v5981
        %v6212 = vadd.f32 %v5396, %v5983
        %v6213 = vadd.f32 %v5397, %v6070
        %v6214 = vadd.f32 %v5398, %v6072
        %v6215 = vadd.f32 %v5399, %v6159
        %v6216 = vadd.f32 %v5400, %v6161
        %v6217 = vadd.f32 %v5401, %v5542
        %v6218 = vadd.f32 %v5402, %v5544
        %v6219 = vadd.f32 %v5403, %v5631
        %v6220 = vadd.f32 %v5404, %v5633
        %v6221 = vadd.f32 %v5405, %v5720
        %v6222 = vadd.f32 %v5406, %v5722
        %v6223 = vadd.f32 %v5407, %v5809
        %v6224 = vadd.f32 %v5408, %v5811
        %v6225 = vadd.f32 %v5409, %v5898
        %v6226 = vadd.f32 %v5410, %v5900
        %v6227 = vadd.f32 %v5411, %v5987
        %v6228 = vadd.f32 %v5412, %v5989
        %v6229 = vadd.f32 %v5413, %v6076
        %v6230 = vadd.f32 %v5414, %v6078
        %v6231 = vadd.f32 %v5415, %v6165
        %v6232 = vadd.f32 %v5416, %v6167
        %v6233 = vtanh.pop %v6169
        %v6234 = vtanh.pop %v6170
        %v6235 = vtanh.pop %v6171
        %v6236 = vtanh.pop %v6172
        %v6237 = vtanh.pop %v6173
        %v6238 = vtanh.pop %v6174
        %v6239 = vtanh.pop %v6175
        %v6240 = vtanh.pop %v6176
        %v6241 = vtanh.pop %v6177
        %v6242 = vtanh.pop %v6178
        %v6243 = vtanh.pop %v6179
        %v6244 = vtanh.pop %v6180
        %v6245 = vtanh.pop %v6181
        %v6246 = vtanh.pop %v6182
        %v6247 = vtanh.pop %v6183
        %v6248 = vtanh.pop %v6184
        %v6249 = vtanh.pop %v6185
        %v6250 = vtanh.pop %v6186
        %v6251 = vtanh.pop %v6187
        %v6252 = vtanh.pop %v6188
        %v6253 = vtanh.pop %v6189
        %v6254 = vtanh.pop %v6190
        %v6255 = vtanh.pop %v6191
        %v6256 = vtanh.pop %v6192
        %v6257 = vtanh.pop %v6193
        %v6258 = vtanh.pop %v6194
        %v6259 = vtanh.pop %v6195
        %v6260 = vtanh.pop %v6196
        %v6261 = vtanh.pop %v6197
        %v6262 = vtanh.pop %v6198
        %v6263 = vtanh.pop %v6199
        %v6264 = vtanh.pop %v6200
        %v6265 = vtanh.pop %v6201
        %v6266 = vtanh.pop %v6202
        %v6267 = vtanh.pop %v6203
        %v6268 = vtanh.pop %v6204
        %v6269 = vtanh.pop %v6205
        %v6270 = vtanh.pop %v6206
        %v6271 = vtanh.pop %v6207
        %v6272 = vtanh.pop %v6208
        %v6273 = vtanh.pop %v6209
        %v6274 = vtanh.pop %v6210
        %v6275 = vtanh.pop %v6211
        %v6276 = vtanh.pop %v6212
        %v6277 = vtanh.pop %v6213
        %v6278 = vtanh.pop %v6214
        %v6279 = vtanh.pop %v6215
        %v6280 = vtanh.pop %v6216
        %v6281 = vtanh.pop %v6217
        %v6282 = vtanh.pop %v6218
        %v6283 = vtanh.pop %v6219
        %v6284 = vtanh.pop %v6220
        %v6285 = vtanh.pop %v6221
        %v6286 = vtanh.pop %v6222
        %v6287 = vtanh.pop %v6223
        %v6288 = vtanh.pop %v6224
        %v6289 = vtanh.pop %v6225
        %v6290 = vtanh.pop %v6226
        %v6291 = vtanh.pop %v6227
        %v6292 = vtanh.pop %v6228
        %v6293 = vtanh.pop %v6229
        %v6294 = vtanh.pop %v6230
        %v6295 = vtanh.pop %v6231
        %v6296 = vtanh.pop %v6232
        %v6297 = vmul.f32 %v6233, %v5098
        %v6298 = vmul.f32 %v6234, %v5100
        %v6299 = vmul.f32 %v6235, %v5102
        %v6300 = vmul.f32 %v6236, %v5104
        %v6301 = vmul.f32 %v6237, %v5106
        %v6302 = vmul.f32 %v6238, %v5108
        %v6303 = vmul.f32 %v6239, %v5110
        %v6304 = vmul.f32 %v6240, %v5112
        %v6305 = vmul.f32 %v6241, %v5114
        %v6306 = vmul.f32 %v6242, %v5116
        %v6307 = vmul.f32 %v6243, %v5118
        %v6308 = vmul.f32 %v6244, %v5120
        %v6309 = vmul.f32 %v6245, %v5122
        %v6310 = vmul.f32 %v6246, %v5124
        %v6311 = vmul.f32 %v6247, %v5126
        %v6312 = vmul.f32 %v6248, %v5128
        %v6313 = vmul.f32 %v6249, %v5130
        %v6314 = vmul.f32 %v6250, %v5132
        %v6315 = vmul.f32 %v6251, %v5134
        %v6316 = vmul.f32 %v6252, %v5136
        %v6317 = vmul.f32 %v6253, %v5138
        %v6318 = vmul.f32 %v6254, %v5140
        %v6319 = vmul.f32 %v6255, %v5142
        %v6320 = vmul.f32 %v6256, %v5144
        %v6321 = vmul.f32 %v6257, %v5146
        %v6322 = vmul.f32 %v6258, %v5148
        %v6323 = vmul.f32 %v6259, %v5150
        %v6324 = vmul.f32 %v6260, %v5152
        %v6325 = vmul.f32 %v6261, %v5154
        %v6326 = vmul.f32 %v6262, %v5156
        %v6327 = vmul.f32 %v6263, %v5158
        %v6328 = vmul.f32 %v6264, %v5160
        %v6329 = vmul.f32 %v6265, %v5162
        %v6330 = vmul.f32 %v6266, %v5164
        %v6331 = vmul.f32 %v6267, %v5166
        %v6332 = vmul.f32 %v6268, %v5168
        %v6333 = vmul.f32 %v6269, %v5170
        %v6334 = vmul.f32 %v6270, %v5172
        %v6335 = vmul.f32 %v6271, %v5174
        %v6336 = vmul.f32 %v6272, %v5176
        %v6337 = vmul.f32 %v6273, %v5178
        %v6338 = vmul.f32 %v6274, %v5180
        %v6339 = vmul.f32 %v6275, %v5182
        %v6340 = vmul.f32 %v6276, %v5184
        %v6341 = vmul.f32 %v6277, %v5186
        %v6342 = vmul.f32 %v6278, %v5188
        %v6343 = vmul.f32 %v6279, %v5190
        %v6344 = vmul.f32 %v6280, %v5192
        %v6345 = vmul.f32 %v6281, %v5194
        %v6346 = vmul.f32 %v6282, %v5196
        %v6347 = vmul.f32 %v6283, %v5198
        %v6348 = vmul.f32 %v6284, %v5200
        %v6349 = vmul.f32 %v6285, %v5202
        %v6350 = vmul.f32 %v6286, %v5204
        %v6351 = vmul.f32 %v6287, %v5206
        %v6352 = vmul.f32 %v6288, %v5208
        %v6353 = vmul.f32 %v6289, %v5210
        %v6354 = vmul.f32 %v6290, %v5212
        %v6355 = vmul.f32 %v6291, %v5214
        %v6356 = vmul.f32 %v6292, %v5216
        %v6357 = vmul.f32 %v6293, %v5218
        %v6358 = vmul.f32 %v6294, %v5220
        %v6359 = vmul.f32 %v6295, %v5222
        %v6360 = vmul.f32 %v6296, %v5224
        %s6361 = scalar_lea.vmem %s7, 32
        %v6362 = vld [vmem:[%s6361] sm:$0xff]
        %v6363 = vld [vmem:[%s6361 + $0x8] sm:$0xff]
        %v6364 = vld [vmem:[%s6361 + $0x10] sm:$0xff]
        %v6365 = vld [vmem:[%s6361 + $0x18] sm:$0xff]
        %s6366 = scalar_lea.vmem %s8, 32
        %v6367 = vld [vmem:[%s6366] sm:$0xff]
        %v6368 = vld [vmem:[%s6366 + $0x8] sm:$0xff]
        %v6369 = vld [vmem:[%s6366 + $0x10] sm:$0xff]
        %v6370 = vld [vmem:[%s6366 + $0x18] sm:$0xff]
        %6372 = vset.pattern.permute.xlu0 0
        %6373 = vperm.xlu0 %6372, %v6367
        %v6374 = vpop.permute.xlu0 %6373
        %6377 = vset.pattern.permute.xlu0 0
        %6378 = vperm.xlu0 %6377, %v6368
        %v6379 = vpop.permute.xlu0 %6378
        %6382 = vset.pattern.permute.xlu0 0
        %6383 = vperm.xlu0 %6382, %v6369
        %v6384 = vpop.permute.xlu0 %6383
        %6387 = vset.pattern.permute.xlu0 0
        %6388 = vperm.xlu0 %6387, %v6370
        %v6389 = vpop.permute.xlu0 %6388
        %v6392 = vsel %vm1428, %v6362, 0
        %v6395 = vsel %vm1428, %v6363, 0
        %v6398 = vsel %vm1428, %v6364, 0
        %v6401 = vsel %vm1428, %v6365, 0
        %6403 = vmatprep.subr.mxu0 %v6298
        %6404 = vmatpush1.msra.mxu0 %v6297
        %6405 = vmatprep.subr.mxu0 %v6314
        %6406 = vmatpush1.msra.mxu0 %v6313
        %6407 = vmatprep.subr.mxu0 %v6330
        %6408 = vmatpush1.msra.mxu0 %v6329
        %6409 = vmatprep.subr.mxu0 %v6346
        %6410 = vmatpush1.msra.mxu0 %v6345
        %6411 = vmatprep.subr.mxu0 0.0
        %6412 = vmatpush1.msra.mxu0 0.0
        %6413 = vmatprep.subr.mxu0 0.0
        %6414 = vmatpush1.msra.mxu0 0.0
        %6415 = vmatprep.subr.mxu0 0.0
        %6416 = vmatpush1.msra.mxu0 0.0
        %6417 = vmatprep.subr.mxu0 0.0
        %6418 = vmatpush1.msra.mxu0 0.0
        %6419 = vmatprep.subr.mxu0 0.0
        %6420 = vmatpush1.msra.mxu0 0.0
        %6421 = vmatprep.subr.mxu0 0.0
        %6422 = vmatpush1.msra.mxu0 0.0
        %6423 = vmatprep.subr.mxu0 0.0
        %6424 = vmatpush1.msra.mxu0 0.0
        %6425 = vmatprep.subr.mxu0 0.0
        %6426 = vmatpush1.msra.mxu0 0.0
        %6427 = vmatprep.subr.mxu0 0.0
        %6428 = vmatpush1.msra.mxu0 0.0
        %6429 = vmatprep.subr.mxu0 0.0
        %6430 = vmatpush1.msra.mxu0 0.0
        %6431 = vmatprep.subr.mxu0 0.0
        %6432 = vmatpush1.msra.mxu0 0.0
        %6433 = vmatprep.subr.mxu0 0.0
        %6434 = vmatpush1.msra.mxu0 0.0
        %6435 = vmatprep.subr.mxu0 0.0
        %6436 = vmatpush1.msra.mxu0 0.0
        %6437 = vmatprep.subr.mxu0 0.0
        %6438 = vmatpush1.msra.mxu0 0.0
        %6439 = vmatprep.subr.mxu0 0.0
        %6440 = vmatpush1.msra.mxu0 0.0
        %6441 = vmatprep.subr.mxu0 0.0
        %6442 = vmatpush1.msra.mxu0 0.0
        %6443 = vmatprep.subr.mxu0 0.0
        %6444 = vmatpush1.msra.mxu0 0.0
        %6445 = vmatprep.subr.mxu0 0.0
        %6446 = vmatpush1.msra.mxu0 0.0
        %6447 = vmatprep.subr.mxu0 0.0
        %6448 = vmatpush1.msra.mxu0 0.0
        %6449 = vmatprep.subr.mxu0 0.0
        %6450 = vmatpush1.msra.mxu0 0.0
        %6451 = vmatprep.subr.mxu0 0.0
        %6452 = vmatpush1.msra.mxu0 0.0
        %6453 = vmatprep.subr.mxu0 0.0
        %6454 = vmatpush1.msra.mxu0 0.0
        %6455 = vmatprep.subr.mxu0 0.0
        %6456 = vmatpush1.msra.mxu0 0.0
        %6457 = vmatprep.subr.mxu0 0.0
        %6458 = vmatpush1.msra.mxu0 0.0
        %6459 = vmatprep.subr.mxu0 0.0
        %6460 = vmatpush1.msra.mxu0 0.0
        %6461 = vmatprep.subr.mxu0 0.0
        %6462 = vmatpush1.msra.mxu0 0.0
        %6463 = vmatprep.subr.mxu0 0.0
        %6464 = vmatpush1.msra.mxu0 0.0
        %6465 = vmatprep.subr.mxu0 0.0
        %6466 = vmatpush1.msra.mxu0 0.0
        %6467 = vmatprep.mubr.f32.mxu0 0.0
        %6468 = vmatmul.mubr.f32.gmra.mrb[0].mxu0 %v6392
        %v6469 = vpop.f32.mrb[0].mxu0
        %v6470 = vadd.f32 %v6374, %v6469
        %v6471 = vpop.f32.mrb[0].mxu0
        %v6472 = vadd.f32 %v6374, %v6471
        %6473 = vmatprep.mubr.f32.mxu0 0.0
        %6474 = vmatmul.mubr.f32.gmra.mrb[0].mxu0 %v6395
        %v6475 = vpop.f32.mrb[0].mxu0
        %v6476 = vadd.f32 %v6379, %v6475
        %v6477 = vpop.f32.mrb[0].mxu0
        %v6478 = vadd.f32 %v6379, %v6477
        %6479 = vmatprep.mubr.f32.mxu0 0.0
        %6480 = vmatmul.mubr.f32.gmra.mrb[0].mxu0 %v6398
        %v6481 = vpop.f32.mrb[0].mxu0
        %v6482 = vadd.f32 %v6384, %v6481
        %v6483 = vpop.f32.mrb[0].mxu0
        %v6484 = vadd.f32 %v6384, %v6483
        %6485 = vmatprep.mubr.f32.mxu0 0.0
        %6486 = vmatmul.mubr.f32.gmra.mrb[0].mxu0 %v6401
        %v6487 = vpop.f32.mrb[0].mxu0
        %v6488 = vadd.f32 %v6389, %v6487
        %v6489 = vpop.f32.mrb[0].mxu0
        %v6490 = vadd.f32 %v6389, %v6489
        %6491 = vdwg.mxu0
        %6492 = vmatprep.subr.mxu0 %v6300
        %6493 = vmatpush1.msra.mxu0 %v6299
        %6494 = vmatprep.subr.mxu0 %v6316
        %6495 = vmatpush1.msra.mxu0 %v6315
        %6496 = vmatprep.subr.mxu0 %v6332
        %6497 = vmatpush1.msra.mxu0 %v6331
        %6498 = vmatprep.subr.mxu0 %v6348
        %6499 = vmatpush1.msra.mxu0 %v6347
        %6500 = vmatprep.subr.mxu0 0.0
        %6501 = vmatpush1.msra.mxu0 0.0
        %6502 = vmatprep.subr.mxu0 0.0
        %6503 = vmatpush1.msra.mxu0 0.0
        %6504 = vmatprep.subr.mxu0 0.0
        %6505 = vmatpush1.msra.mxu0 0.0
        %6506 = vmatprep.subr.mxu0 0.0
        %6507 = vmatpush1.msra.mxu0 0.0
        %6508 = vmatprep.subr.mxu0 0.0
        %6509 = vmatpush1.msra.mxu0 0.0
        %6510 = vmatprep.subr.mxu0 0.0
        %6511 = vmatpush1.msra.mxu0 0.0
        %6512 = vmatprep.subr.mxu0 0.0
        %6513 = vmatpush1.msra.mxu0 0.0
        %6514 = vmatprep.subr.mxu0 0.0
        %6515 = vmatpush1.msra.mxu0 0.0
        %6516 = vmatprep.subr.mxu0 0.0
        %6517 = vmatpush1.msra.mxu0 0.0
        %6518 = vmatprep.subr.mxu0 0.0
        %6519 = vmatpush1.msra.mxu0 0.0
        %6520 = vmatprep.subr.mxu0 0.0
        %6521 = vmatpush1.msra.mxu0 0.0
        %6522 = vmatprep.subr.mxu0 0.0
        %6523 = vmatpush1.msra.mxu0 0.0
        %6524 = vmatprep.subr.mxu0 0.0
        %6525 = vmatpush1.msra.mxu0 0.0
        %6526 = vmatprep.subr.mxu0 0.0
        %6527 = vmatpush1.msra.mxu0 0.0
        %6528 = vmatprep.subr.mxu0 0.0
        %6529 = vmatpush1.msra.mxu0 0.0
        %6530 = vmatprep.subr.mxu0 0.0
        %6531 = vmatpush1.msra.mxu0 0.0
        %6532 = vmatprep.subr.mxu0 0.0
        %6533 = vmatpush1.msra.mxu0 0.0
        %6534 = vmatprep.subr.mxu0 0.0
        %6535 = vmatpush1.msra.mxu0 0.0
        %6536 = vmatprep.subr.mxu0 0.0
        %6537 = vmatpush1.msra.mxu0 0.0
        %6538 = vmatprep.subr.mxu0 0.0
        %6539 = vmatpush1.msra.mxu0 0.0
        %6540 = vmatprep.subr.mxu0 0.0
        %6541 = vmatpush1.msra.mxu0 0.0
        %6542 = vmatprep.subr.mxu0 0.0
        %6543 = vmatpush1.msra.mxu0 0.0
        %6544 = vmatprep.subr.mxu0 0.0
        %6545 = vmatpush1.msra.mxu0 0.0
        %6546 = vmatprep.subr.mxu0 0.0
        %6547 = vmatpush1.msra.mxu0 0.0
        %6548 = vmatprep.subr.mxu0 0.0
        %6549 = vmatpush1.msra.mxu0 0.0
        %6550 = vmatprep.subr.mxu0 0.0
        %6551 = vmatpush1.msra.mxu0 0.0
        %6552 = vmatprep.subr.mxu0 0.0
        %6553 = vmatpush1.msra.mxu0 0.0
        %6554 = vmatprep.subr.mxu0 0.0
        %6555 = vmatpush1.msra.mxu0 0.0
        %6556 = vmatprep.mubr.f32.mxu0 0.0
        %6557 = vmatmul.mubr.f32.gmra.mrb[0].mxu0 %v6392
        %v6558 = vpop.f32.mrb[0].mxu0
        %v6559 = vadd.f32 %v6374, %v6558
        %v6560 = vpop.f32.mrb[0].mxu0
        %v6561 = vadd.f32 %v6374, %v6560
        %6562 = vmatprep.mubr.f32.mxu0 0.0
        %6563 = vmatmul.mubr.f32.gmra.mrb[0].mxu0 %v6395
        %v6564 = vpop.f32.mrb[0].mxu0
        %v6565 = vadd.f32 %v6379, %v6564
        %v6566 = vpop.f32.mrb[0].mxu0
        %v6567 = vadd.f32 %v6379, %v6566
        %6568 = vmatprep.mubr.f32.mxu0 0.0
        %6569 = vmatmul.mubr.f32.gmra.mrb[0].mxu0 %v6398
        %v6570 = vpop.f32.mrb[0].mxu0
        %v6571 = vadd.f32 %v6384, %v6570
        %v6572 = vpop.f32.mrb[0].mxu0
        %v6573 = vadd.f32 %v6384, %v6572
        %6574 = vmatprep.mubr.f32.mxu0 0.0
        %6575 = vmatmul.mubr.f32.gmra.mrb[0].mxu0 %v6401
        %v6576 = vpop.f32.mrb[0].mxu0
        %v6577 = vadd.f32 %v6389, %v6576
        %v6578 = vpop.f32.mrb[0].mxu0
        %v6579 = vadd.f32 %v6389, %v6578
        %6580 = vdwg.mxu0
        %6581 = vmatprep.subr.mxu0 %v6302
        %6582 = vmatpush1.msra.mxu0 %v6301
        %6583 = vmatprep.subr.mxu0 %v6318
        %6584 = vmatpush1.msra.mxu0 %v6317
        %6585 = vmatprep.subr.mxu0 %v6334
        %6586 = vmatpush1.msra.mxu0 %v6333
        %6587 = vmatprep.subr.mxu0 %v6350
        %6588 = vmatpush1.msra.mxu0 %v6349
        %6589 = vmatprep.subr.mxu0 0.0
        %6590 = vmatpush1.msra.mxu0 0.0
        %6591 = vmatprep.subr.mxu0 0.0
        %6592 = vmatpush1.msra.mxu0 0.0
        %6593 = vmatprep.subr.mxu0 0.0
        %6594 = vmatpush1.msra.mxu0 0.0
        %6595 = vmatprep.subr.mxu0 0.0
        %6596 = vmatpush1.msra.mxu0 0.0
        %6597 = vmatprep.subr.mxu0 0.0
        %6598 = vmatpush1.msra.mxu0 0.0
        %6599 = vmatprep.subr.mxu0 0.0
        %6600 = vmatpush1.msra.mxu0 0.0
        %6601 = vmatprep.subr.mxu0 0.0
        %6602 = vmatpush1.msra.mxu0 0.0
        %6603 = vmatprep.subr.mxu0 0.0
        %6604 = vmatpush1.msra.mxu0 0.0
        %6605 = vmatprep.subr.mxu0 0.0
        %6606 = vmatpush1.msra.mxu0 0.0
        %6607 = vmatprep.subr.mxu0 0.0
        %6608 = vmatpush1.msra.mxu0 0.0
        %6609 = vmatprep.subr.mxu0 0.0
        %6610 = vmatpush1.msra.mxu0 0.0
        %6611 = vmatprep.subr.mxu0 0.0
        %6612 = vmatpush1.msra.mxu0 0.0
        %6613 = vmatprep.subr.mxu0 0.0
        %6614 = vmatpush1.msra.mxu0 0.0
        %6615 = vmatprep.subr.mxu0 0.0
        %6616 = vmatpush1.msra.mxu0 0.0
        %6617 = vmatprep.subr.mxu0 0.0
        %6618 = vmatpush1.msra.mxu0 0.0
        %6619 = vmatprep.subr.mxu0 0.0
        %6620 = vmatpush1.msra.mxu0 0.0
        %6621 = vmatprep.subr.mxu0 0.0
        %6622 = vmatpush1.msra.mxu0 0.0
        %6623 = vmatprep.subr.mxu0 0.0
        %6624 = vmatpush1.msra.mxu0 0.0
        %6625 = vmatprep.subr.mxu0 0.0
        %6626 = vmatpush1.msra.mxu0 0.0
        %6627 = vmatprep.subr.mxu0 0.0
        %6628 = vmatpush1.msra.mxu0 0.0
        %6629 = vmatprep.subr.mxu0 0.0
        %6630 = vmatpush1.msra.mxu0 0.0
        %6631 = vmatprep.subr.mxu0 0.0
        %6632 = vmatpush1.msra.mxu0 0.0
        %6633 = vmatprep.subr.mxu0 0.0
        %6634 = vmatpush1.msra.mxu0 0.0
        %6635 = vmatprep.subr.mxu0 0.0
        %6636 = vmatpush1.msra.mxu0 0.0
        %6637 = vmatprep.subr.mxu0 0.0
        %6638 = vmatpush1.msra.mxu0 0.0
        %6639 = vmatprep.subr.mxu0 0.0
        %6640 = vmatpush1.msra.mxu0 0.0
        %6641 = vmatprep.subr.mxu0 0.0
        %6642 = vmatpush1.msra.mxu0 0.0
        %6643 = vmatprep.subr.mxu0 0.0
        %6644 = vmatpush1.msra.mxu0 0.0
        %6645 = vmatprep.mubr.f32.mxu0 0.0
        %6646 = vmatmul.mubr.f32.gmra.mrb[0].mxu0 %v6392
        %v6647 = vpop.f32.mrb[0].mxu0
        %v6648 = vadd.f32 %v6374, %v6647
        %v6649 = vpop.f32.mrb[0].mxu0
        %v6650 = vadd.f32 %v6374, %v6649
        %6651 = vmatprep.mubr.f32.mxu0 0.0
        %6652 = vmatmul.mubr.f32.gmra.mrb[0].mxu0 %v6395
        %v6653 = vpop.f32.mrb[0].mxu0
        %v6654 = vadd.f32 %v6379, %v6653
        %v6655 = vpop.f32.mrb[0].mxu0
        %v6656 = vadd.f32 %v6379, %v6655
        %6657 = vmatprep.mubr.f32.mxu0 0.0
        %6658 = vmatmul.mubr.f32.gmra.mrb[0].mxu0 %v6398
        %v6659 = vpop.f32.mrb[0].mxu0
        %v6660 = vadd.f32 %v6384, %v6659
        %v6661 = vpop.f32.mrb[0].mxu0
        %v6662 = vadd.f32 %v6384, %v6661
        %6663 = vmatprep.mubr.f32.mxu0 0.0
        %6664 = vmatmul.mubr.f32.gmra.mrb[0].mxu0 %v6401
        %v6665 = vpop.f32.mrb[0].mxu0
        %v6666 = vadd.f32 %v6389, %v6665
        %v6667 = vpop.f32.mrb[0].mxu0
        %v6668 = vadd.f32 %v6389, %v6667
        %6669 = vdwg.mxu0
        %6670 = vmatprep.subr.mxu0 %v6304
        %6671 = vmatpush1.msra.mxu0 %v6303
        %6672 = vmatprep.subr.mxu0 %v6320
        %6673 = vmatpush1.msra.mxu0 %v6319
        %6674 = vmatprep.subr.mxu0 %v6336
        %6675 = vmatpush1.msra.mxu0 %v6335
        %6676 = vmatprep.subr.mxu0 %v6352
        %6677 = vmatpush1.msra.mxu0 %v6351
        %6678 = vmatprep.subr.mxu0 0.0
        %6679 = vmatpush1.msra.mxu0 0.0
        %6680 = vmatprep.subr.mxu0 0.0
        %6681 = vmatpush1.msra.mxu0 0.0
        %6682 = vmatprep.subr.mxu0 0.0
        %6683 = vmatpush1.msra.mxu0 0.0
        %6684 = vmatprep.subr.mxu0 0.0
        %6685 = vmatpush1.msra.mxu0 0.0
        %6686 = vmatprep.subr.mxu0 0.0
        %6687 = vmatpush1.msra.mxu0 0.0
        %6688 = vmatprep.subr.mxu0 0.0
        %6689 = vmatpush1.msra.mxu0 0.0
        %6690 = vmatprep.subr.mxu0 0.0
        %6691 = vmatpush1.msra.mxu0 0.0
        %6692 = vmatprep.subr.mxu0 0.0
        %6693 = vmatpush1.msra.mxu0 0.0
        %6694 = vmatprep.subr.mxu0 0.0
        %6695 = vmatpush1.msra.mxu0 0.0
        %6696 = vmatprep.subr.mxu0 0.0
        %6697 = vmatpush1.msra.mxu0 0.0
        %6698 = vmatprep.subr.mxu0 0.0
        %6699 = vmatpush1.msra.mxu0 0.0
        %6700 = vmatprep.subr.mxu0 0.0
        %6701 = vmatpush1.msra.mxu0 0.0
        %6702 = vmatprep.subr.mxu0 0.0
        %6703 = vmatpush1.msra.mxu0 0.0
        %6704 = vmatprep.subr.mxu0 0.0
        %6705 = vmatpush1.msra.mxu0 0.0
        %6706 = vmatprep.subr.mxu0 0.0
        %6707 = vmatpush1.msra.mxu0 0.0
        %6708 = vmatprep.subr.mxu0 0.0
        %6709 = vmatpush1.msra.mxu0 0.0
        %6710 = vmatprep.subr.mxu0 0.0
        %6711 = vmatpush1.msra.mxu0 0.0
        %6712 = vmatprep.subr.mxu0 0.0
        %6713 = vmatpush1.msra.mxu0 0.0
        %6714 = vmatprep.subr.mxu0 0.0
        %6715 = vmatpush1.msra.mxu0 0.0
        %6716 = vmatprep.subr.mxu0 0.0
        %6717 = vmatpush1.msra.mxu0 0.0
        %6718 = vmatprep.subr.mxu0 0.0
        %6719 = vmatpush1.msra.mxu0 0.0
        %6720 = vmatprep.subr.mxu0 0.0
        %6721 = vmatpush1.msra.mxu0 0.0
        %6722 = vmatprep.subr.mxu0 0.0
        %6723 = vmatpush1.msra.mxu0 0.0
        %6724 = vmatprep.subr.mxu0 0.0
        %6725 = vmatpush1.msra.mxu0 0.0
        %6726 = vmatprep.subr.mxu0 0.0
        %6727 = vmatpush1.msra.mxu0 0.0
        %6728 = vmatprep.subr.mxu0 0.0
        %6729 = vmatpush1.msra.mxu0 0.0
        %6730 = vmatprep.subr.mxu0 0.0
        %6731 = vmatpush1.msra.mxu0 0.0
        %6732 = vmatprep.subr.mxu0 0.0
        %6733 = vmatpush1.msra.mxu0 0.0
        %6734 = vmatprep.mubr.f32.mxu0 0.0
        %6735 = vmatmul.mubr.f32.gmra.mrb[0].mxu0 %v6392
        %v6736 = vpop.f32.mrb[0].mxu0
        %v6737 = vadd.f32 %v6374, %v6736
        %v6738 = vpop.f32.mrb[0].mxu0
        %v6739 = vadd.f32 %v6374, %v6738
        %6740 = vmatprep.mubr.f32.mxu0 0.0
        %6741 = vmatmul.mubr.f32.gmra.mrb[0].mxu0 %v6395
        %v6742 = vpop.f32.mrb[0].mxu0
        %v6743 = vadd.f32 %v6379, %v6742
        %v6744 = vpop.f32.mrb[0].mxu0
        %v6745 = vadd.f32 %v6379, %v6744
        %6746 = vmatprep.mubr.f32.mxu0 0.0
        %6747 = vmatmul.mubr.f32.gmra.mrb[0].mxu0 %v6398
        %v6748 = vpop.f32.mrb[0].mxu0
        %v6749 = vadd.f32 %v6384, %v6748
        %v6750 = vpop.f32.mrb[0].mxu0
        %v6751 = vadd.f32 %v6384, %v6750
        %6752 = vmatprep.mubr.f32.mxu0 0.0
        %6753 = vmatmul.mubr.f32.gmra.mrb[0].mxu0 %v6401
        %v6754 = vpop.f32.mrb[0].mxu0
        %v6755 = vadd.f32 %v6389, %v6754
        %v6756 = vpop.f32.mrb[0].mxu0
        %v6757 = vadd.f32 %v6389, %v6756
        %6758 = vdwg.mxu0
        %6759 = vmatprep.subr.mxu0 %v6306
        %6760 = vmatpush1.msra.mxu0 %v6305
        %6761 = vmatprep.subr.mxu0 %v6322
        %6762 = vmatpush1.msra.mxu0 %v6321
        %6763 = vmatprep.subr.mxu0 %v6338
        %6764 = vmatpush1.msra.mxu0 %v6337
        %6765 = vmatprep.subr.mxu0 %v6354
        %6766 = vmatpush1.msra.mxu0 %v6353
        %6767 = vmatprep.subr.mxu0 0.0
        %6768 = vmatpush1.msra.mxu0 0.0
        %6769 = vmatprep.subr.mxu0 0.0
        %6770 = vmatpush1.msra.mxu0 0.0
        %6771 = vmatprep.subr.mxu0 0.0
        %6772 = vmatpush1.msra.mxu0 0.0
        %6773 = vmatprep.subr.mxu0 0.0
        %6774 = vmatpush1.msra.mxu0 0.0
        %6775 = vmatprep.subr.mxu0 0.0
        %6776 = vmatpush1.msra.mxu0 0.0
        %6777 = vmatprep.subr.mxu0 0.0
        %6778 = vmatpush1.msra.mxu0 0.0
        %6779 = vmatprep.subr.mxu0 0.0
        %6780 = vmatpush1.msra.mxu0 0.0
        %6781 = vmatprep.subr.mxu0 0.0
        %6782 = vmatpush1.msra.mxu0 0.0
        %6783 = vmatprep.subr.mxu0 0.0
        %6784 = vmatpush1.msra.mxu0 0.0
        %6785 = vmatprep.subr.mxu0 0.0
        %6786 = vmatpush1.msra.mxu0 0.0
        %6787 = vmatprep.subr.mxu0 0.0
        %6788 = vmatpush1.msra.mxu0 0.0
        %6789 = vmatprep.subr.mxu0 0.0
        %6790 = vmatpush1.msra.mxu0 0.0
        %6791 = vmatprep.subr.mxu0 0.0
        %6792 = vmatpush1.msra.mxu0 0.0
        %6793 = vmatprep.subr.mxu0 0.0
        %6794 = vmatpush1.msra.mxu0 0.0
        %6795 = vmatprep.subr.mxu0 0.0
        %6796 = vmatpush1.msra.mxu0 0.0
        %6797 = vmatprep.subr.mxu0 0.0
        %6798 = vmatpush1.msra.mxu0 0.0
        %6799 = vmatprep.subr.mxu0 0.0
        %6800 = vmatpush1.msra.mxu0 0.0
        %6801 = vmatprep.subr.mxu0 0.0
        %6802 = vmatpush1.msra.mxu0 0.0
        %6803 = vmatprep.subr.mxu0 0.0
        %6804 = vmatpush1.msra.mxu0 0.0
        %6805 = vmatprep.subr.mxu0 0.0
        %6806 = vmatpush1.msra.mxu0 0.0
        %6807 = vmatprep.subr.mxu0 0.0
        %6808 = vmatpush1.msra.mxu0 0.0
        %6809 = vmatprep.subr.mxu0 0.0
        %6810 = vmatpush1.msra.mxu0 0.0
        %6811 = vmatprep.subr.mxu0 0.0
        %6812 = vmatpush1.msra.mxu0 0.0
        %6813 = vmatprep.subr.mxu0 0.0
        %6814 = vmatpush1.msra.mxu0 0.0
        %6815 = vmatprep.subr.mxu0 0.0
        %6816 = vmatpush1.msra.mxu0 0.0
        %6817 = vmatprep.subr.mxu0 0.0
        %6818 = vmatpush1.msra.mxu0 0.0
        %6819 = vmatprep.subr.mxu0 0.0
        %6820 = vmatpush1.msra.mxu0 0.0
        %6821 = vmatprep.subr.mxu0 0.0
        %6822 = vmatpush1.msra.mxu0 0.0
        %6823 = vmatprep.mubr.f32.mxu0 0.0
        %6824 = vmatmul.mubr.f32.gmra.mrb[0].mxu0 %v6392
        %v6825 = vpop.f32.mrb[0].mxu0
        %v6826 = vadd.f32 %v6374, %v6825
        %v6827 = vpop.f32.mrb[0].mxu0
        %v6828 = vadd.f32 %v6374, %v6827
        %6829 = vmatprep.mubr.f32.mxu0 0.0
        %6830 = vmatmul.mubr.f32.gmra.mrb[0].mxu0 %v6395
        %v6831 = vpop.f32.mrb[0].mxu0
        %v6832 = vadd.f32 %v6379, %v6831
        %v6833 = vpop.f32.mrb[0].mxu0
        %v6834 = vadd.f32 %v6379, %v6833
        %6835 = vmatprep.mubr.f32.mxu0 0.0
        %6836 = vmatmul.mubr.f32.gmra.mrb[0].mxu0 %v6398
        %v6837 = vpop.f32.mrb[0].mxu0
        %v6838 = vadd.f32 %v6384, %v6837
        %v6839 = vpop.f32.mrb[0].mxu0
        %v6840 = vadd.f32 %v6384, %v6839
        %6841 = vmatprep.mubr.f32.mxu0 0.0
        %6842 = vmatmul.mubr.f32.gmra.mrb[0].mxu0 %v6401
        %v6843 = vpop.f32.mrb[0].mxu0
        %v6844 = vadd.f32 %v6389, %v6843
        %v6845 = vpop.f32.mrb[0].mxu0
        %v6846 = vadd.f32 %v6389, %v6845
        %6847 = vdwg.mxu0
        %6848 = vmatprep.subr.mxu0 %v6308
        %6849 = vmatpush1.msra.mxu0 %v6307
        %6850 = vmatprep.subr.mxu0 %v6324
        %6851 = vmatpush1.msra.mxu0 %v6323
        %6852 = vmatprep.subr.mxu0 %v6340
        %6853 = vmatpush1.msra.mxu0 %v6339
        %6854 = vmatprep.subr.mxu0 %v6356
        %6855 = vmatpush1.msra.mxu0 %v6355
        %6856 = vmatprep.subr.mxu0 0.0
        %6857 = vmatpush1.msra.mxu0 0.0
        %6858 = vmatprep.subr.mxu0 0.0
        %6859 = vmatpush1.msra.mxu0 0.0
        %6860 = vmatprep.subr.mxu0 0.0
        %6861 = vmatpush1.msra.mxu0 0.0
        %6862 = vmatprep.subr.mxu0 0.0
        %6863 = vmatpush1.msra.mxu0 0.0
        %6864 = vmatprep.subr.mxu0 0.0
        %6865 = vmatpush1.msra.mxu0 0.0
        %6866 = vmatprep.subr.mxu0 0.0
        %6867 = vmatpush1.msra.mxu0 0.0
        %6868 = vmatprep.subr.mxu0 0.0
        %6869 = vmatpush1.msra.mxu0 0.0
        %6870 = vmatprep.subr.mxu0 0.0
        %6871 = vmatpush1.msra.mxu0 0.0
        %6872 = vmatprep.subr.mxu0 0.0
        %6873 = vmatpush1.msra.mxu0 0.0
        %6874 = vmatprep.subr.mxu0 0.0
        %6875 = vmatpush1.msra.mxu0 0.0
        %6876 = vmatprep.subr.mxu0 0.0
        %6877 = vmatpush1.msra.mxu0 0.0
        %6878 = vmatprep.subr.mxu0 0.0
        %6879 = vmatpush1.msra.mxu0 0.0
        %6880 = vmatprep.subr.mxu0 0.0
        %6881 = vmatpush1.msra.mxu0 0.0
        %6882 = vmatprep.subr.mxu0 0.0
        %6883 = vmatpush1.msra.mxu0 0.0
        %6884 = vmatprep.subr.mxu0 0.0
        %6885 = vmatpush1.msra.mxu0 0.0
        %6886 = vmatprep.subr.mxu0 0.0
        %6887 = vmatpush1.msra.mxu0 0.0
        %6888 = vmatprep.subr.mxu0 0.0
        %6889 = vmatpush1.msra.mxu0 0.0
        %6890 = vmatprep.subr.mxu0 0.0
        %6891 = vmatpush1.msra.mxu0 0.0
        %6892 = vmatprep.subr.mxu0 0.0
        %6893 = vmatpush1.msra.mxu0 0.0
        %6894 = vmatprep.subr.mxu0 0.0
        %6895 = vmatpush1.msra.mxu0 0.0
        %6896 = vmatprep.subr.mxu0 0.0
        %6897 = vmatpush1.msra.mxu0 0.0
        %6898 = vmatprep.subr.mxu0 0.0
        %6899 = vmatpush1.msra.mxu0 0.0
        %6900 = vmatprep.subr.mxu0 0.0
        %6901 = vmatpush1.msra.mxu0 0.0
        %6902 = vmatprep.subr.mxu0 0.0
        %6903 = vmatpush1.msra.mxu0 0.0
        %6904 = vmatprep.subr.mxu0 0.0
        %6905 = vmatpush1.msra.mxu0 0.0
        %6906 = vmatprep.subr.mxu0 0.0
        %6907 = vmatpush1.msra.mxu0 0.0
        %6908 = vmatprep.subr.mxu0 0.0
        %6909 = vmatpush1.msra.mxu0 0.0
        %6910 = vmatprep.subr.mxu0 0.0
        %6911 = vmatpush1.msra.mxu0 0.0
        %6912 = vmatprep.mubr.f32.mxu0 0.0
        %6913 = vmatmul.mubr.f32.gmra.mrb[0].mxu0 %v6392
        %v6914 = vpop.f32.mrb[0].mxu0
        %v6915 = vadd.f32 %v6374, %v6914
        %v6916 = vpop.f32.mrb[0].mxu0
        %v6917 = vadd.f32 %v6374, %v6916
        %6918 = vmatprep.mubr.f32.mxu0 0.0
        %6919 = vmatmul.mubr.f32.gmra.mrb[0].mxu0 %v6395
        %v6920 = vpop.f32.mrb[0].mxu0
        %v6921 = vadd.f32 %v6379, %v6920
        %v6922 = vpop.f32.mrb[0].mxu0
        %v6923 = vadd.f32 %v6379, %v6922
        %6924 = vmatprep.mubr.f32.mxu0 0.0
        %6925 = vmatmul.mubr.f32.gmra.mrb[0].mxu0 %v6398
        %v6926 = vpop.f32.mrb[0].mxu0
        %v6927 = vadd.f32 %v6384, %v6926
        %v6928 = vpop.f32.mrb[0].mxu0
        %v6929 = vadd.f32 %v6384, %v6928
        %6930 = vmatprep.mubr.f32.mxu0 0.0
        %6931 = vmatmul.mubr.f32.gmra.mrb[0].mxu0 %v6401
        %v6932 = vpop.f32.mrb[0].mxu0
        %v6933 = vadd.f32 %v6389, %v6932
        %v6934 = vpop.f32.mrb[0].mxu0
        %v6935 = vadd.f32 %v6389, %v6934
        %6936 = vdwg.mxu0
        %6937 = vmatprep.subr.mxu0 %v6310
        %6938 = vmatpush1.msra.mxu0 %v6309
        %6939 = vmatprep.subr.mxu0 %v6326
        %6940 = vmatpush1.msra.mxu0 %v6325
        %6941 = vmatprep.subr.mxu0 %v6342
        %6942 = vmatpush1.msra.mxu0 %v6341
        %6943 = vmatprep.subr.mxu0 %v6358
        %6944 = vmatpush1.msra.mxu0 %v6357
        %6945 = vmatprep.subr.mxu0 0.0
        %6946 = vmatpush1.msra.mxu0 0.0
        %6947 = vmatprep.subr.mxu0 0.0
        %6948 = vmatpush1.msra.mxu0 0.0
        %6949 = vmatprep.subr.mxu0 0.0
        %6950 = vmatpush1.msra.mxu0 0.0
        %6951 = vmatprep.subr.mxu0 0.0
        %6952 = vmatpush1.msra.mxu0 0.0
        %6953 = vmatprep.subr.mxu0 0.0
        %6954 = vmatpush1.msra.mxu0 0.0
        %6955 = vmatprep.subr.mxu0 0.0
        %6956 = vmatpush1.msra.mxu0 0.0
        %6957 = vmatprep.subr.mxu0 0.0
        %6958 = vmatpush1.msra.mxu0 0.0
        %6959 = vmatprep.subr.mxu0 0.0
        %6960 = vmatpush1.msra.mxu0 0.0
        %6961 = vmatprep.subr.mxu0 0.0
        %6962 = vmatpush1.msra.mxu0 0.0
        %6963 = vmatprep.subr.mxu0 0.0
        %6964 = vmatpush1.msra.mxu0 0.0
        %6965 = vmatprep.subr.mxu0 0.0
        %6966 = vmatpush1.msra.mxu0 0.0
        %6967 = vmatprep.subr.mxu0 0.0
        %6968 = vmatpush1.msra.mxu0 0.0
        %6969 = vmatprep.subr.mxu0 0.0
        %6970 = vmatpush1.msra.mxu0 0.0
        %6971 = vmatprep.subr.mxu0 0.0
        %6972 = vmatpush1.msra.mxu0 0.0
        %6973 = vmatprep.subr.mxu0 0.0
        %6974 = vmatpush1.msra.mxu0 0.0
        %6975 = vmatprep.subr.mxu0 0.0
        %6976 = vmatpush1.msra.mxu0 0.0
        %6977 = vmatprep.subr.mxu0 0.0
        %6978 = vmatpush1.msra.mxu0 0.0
        %6979 = vmatprep.subr.mxu0 0.0
        %6980 = vmatpush1.msra.mxu0 0.0
        %6981 = vmatprep.subr.mxu0 0.0
        %6982 = vmatpush1.msra.mxu0 0.0
        %6983 = vmatprep.subr.mxu0 0.0
        %6984 = vmatpush1.msra.mxu0 0.0
        %6985 = vmatprep.subr.mxu0 0.0
        %6986 = vmatpush1.msra.mxu0 0.0
        %6987 = vmatprep.subr.mxu0 0.0
        %6988 = vmatpush1.msra.mxu0 0.0
        %6989 = vmatprep.subr.mxu0 0.0
        %6990 = vmatpush1.msra.mxu0 0.0
        %6991 = vmatprep.subr.mxu0 0.0
        %6992 = vmatpush1.msra.mxu0 0.0
        %6993 = vmatprep.subr.mxu0 0.0
        %6994 = vmatpush1.msra.mxu0 0.0
        %6995 = vmatprep.subr.mxu0 0.0
        %6996 = vmatpush1.msra.mxu0 0.0
        %6997 = vmatprep.subr.mxu0 0.0
        %6998 = vmatpush1.msra.mxu0 0.0
        %6999 = vmatprep.subr.mxu0 0.0
        %7000 = vmatpush1.msra.mxu0 0.0
        %7001 = vmatprep.mubr.f32.mxu0 0.0
        %7002 = vmatmul.mubr.f32.gmra.mrb[0].mxu0 %v6392
        %v7003 = vpop.f32.mrb[0].mxu0
        %v7004 = vadd.f32 %v6374, %v7003
        %v7005 = vpop.f32.mrb[0].mxu0
        %v7006 = vadd.f32 %v6374, %v7005
        %7007 = vmatprep.mubr.f32.mxu0 0.0
        %7008 = vmatmul.mubr.f32.gmra.mrb[0].mxu0 %v6395
        %v7009 = vpop.f32.mrb[0].mxu0
        %v7010 = vadd.f32 %v6379, %v7009
        %v7011 = vpop.f32.mrb[0].mxu0
        %v7012 = vadd.f32 %v6379, %v7011
        %7013 = vmatprep.mubr.f32.mxu0 0.0
        %7014 = vmatmul.mubr.f32.gmra.mrb[0].mxu0 %v6398
        %v7015 = vpop.f32.mrb[0].mxu0
        %v7016 = vadd.f32 %v6384, %v7015
        %v7017 = vpop.f32.mrb[0].mxu0
        %v7018 = vadd.f32 %v6384, %v7017
        %7019 = vmatprep.mubr.f32.mxu0 0.0
        %7020 = vmatmul.mubr.f32.gmra.mrb[0].mxu0 %v6401
        %v7021 = vpop.f32.mrb[0].mxu0
        %v7022 = vadd.f32 %v6389, %v7021
        %v7023 = vpop.f32.mrb[0].mxu0
        %v7024 = vadd.f32 %v6389, %v7023
        %7025 = vdwg.mxu0
        %7026 = vmatprep.subr.mxu0 %v6312
        %7027 = vmatpush1.msra.mxu0 %v6311
        %7028 = vmatprep.subr.mxu0 %v6328
        %7029 = vmatpush1.msra.mxu0 %v6327
        %7030 = vmatprep.subr.mxu0 %v6344
        %7031 = vmatpush1.msra.mxu0 %v6343
        %7032 = vmatprep.subr.mxu0 %v6360
        %7033 = vmatpush1.msra.mxu0 %v6359
        %7034 = vmatprep.subr.mxu0 0.0
        %7035 = vmatpush1.msra.mxu0 0.0
        %7036 = vmatprep.subr.mxu0 0.0
        %7037 = vmatpush1.msra.mxu0 0.0
        %7038 = vmatprep.subr.mxu0 0.0
        %7039 = vmatpush1.msra.mxu0 0.0
        %7040 = vmatprep.subr.mxu0 0.0
        %7041 = vmatpush1.msra.mxu0 0.0
        %7042 = vmatprep.subr.mxu0 0.0
        %7043 = vmatpush1.msra.mxu0 0.0
        %7044 = vmatprep.subr.mxu0 0.0
        %7045 = vmatpush1.msra.mxu0 0.0
        %7046 = vmatprep.subr.mxu0 0.0
        %7047 = vmatpush1.msra.mxu0 0.0
        %7048 = vmatprep.subr.mxu0 0.0
        %7049 = vmatpush1.msra.mxu0 0.0
        %7050 = vmatprep.subr.mxu0 0.0
        %7051 = vmatpush1.msra.mxu0 0.0
        %7052 = vmatprep.subr.mxu0 0.0
        %7053 = vmatpush1.msra.mxu0 0.0
        %7054 = vmatprep.subr.mxu0 0.0
        %7055 = vmatpush1.msra.mxu0 0.0
        %7056 = vmatprep.subr.mxu0 0.0
        %7057 = vmatpush1.msra.mxu0 0.0
        %7058 = vmatprep.subr.mxu0 0.0
        %7059 = vmatpush1.msra.mxu0 0.0
        %7060 = vmatprep.subr.mxu0 0.0
        %7061 = vmatpush1.msra.mxu0 0.0
        %7062 = vmatprep.subr.mxu0 0.0
        %7063 = vmatpush1.msra.mxu0 0.0
        %7064 = vmatprep.subr.mxu0 0.0
        %7065 = vmatpush1.msra.mxu0 0.0
        %7066 = vmatprep.subr.mxu0 0.0
        %7067 = vmatpush1.msra.mxu0 0.0
        %7068 = vmatprep.subr.mxu0 0.0
        %7069 = vmatpush1.msra.mxu0 0.0
        %7070 = vmatprep.subr.mxu0 0.0
        %7071 = vmatpush1.msra.mxu0 0.0
        %7072 = vmatprep.subr.mxu0 0.0
        %7073 = vmatpush1.msra.mxu0 0.0
        %7074 = vmatprep.subr.mxu0 0.0
        %7075 = vmatpush1.msra.mxu0 0.0
        %7076 = vmatprep.subr.mxu0 0.0
        %7077 = vmatpush1.msra.mxu0 0.0
        %7078 = vmatprep.subr.mxu0 0.0
        %7079 = vmatpush1.msra.mxu0 0.0
        %7080 = vmatprep.subr.mxu0 0.0
        %7081 = vmatpush1.msra.mxu0 0.0
        %7082 = vmatprep.subr.mxu0 0.0
        %7083 = vmatpush1.msra.mxu0 0.0
        %7084 = vmatprep.subr.mxu0 0.0
        %7085 = vmatpush1.msra.mxu0 0.0
        %7086 = vmatprep.subr.mxu0 0.0
        %7087 = vmatpush1.msra.mxu0 0.0
        %7088 = vmatprep.subr.mxu0 0.0
        %7089 = vmatpush1.msra.mxu0 0.0
        %7090 = vmatprep.mubr.f32.mxu0 0.0
        %7091 = vmatmul.mubr.f32.gmra.mrb[0].mxu0 %v6392
        %v7092 = vpop.f32.mrb[0].mxu0
        %v7093 = vadd.f32 %v6374, %v7092
        %v7094 = vpop.f32.mrb[0].mxu0
        %v7095 = vadd.f32 %v6374, %v7094
        %7096 = vmatprep.mubr.f32.mxu0 0.0
        %7097 = vmatmul.mubr.f32.gmra.mrb[0].mxu0 %v6395
        %v7098 = vpop.f32.mrb[0].mxu0
        %v7099 = vadd.f32 %v6379, %v7098
        %v7100 = vpop.f32.mrb[0].mxu0
        %v7101 = vadd.f32 %v6379, %v7100
        %7102 = vmatprep.mubr.f32.mxu0 0.0
        %7103 = vmatmul.mubr.f32.gmra.mrb[0].mxu0 %v6398
        %v7104 = vpop.f32.mrb[0].mxu0
        %v7105 = vadd.f32 %v6384, %v7104
        %v7106 = vpop.f32.mrb[0].mxu0
        %v7107 = vadd.f32 %v6384, %v7106
        %7108 = vmatprep.mubr.f32.mxu0 0.0
        %7109 = vmatmul.mubr.f32.gmra.mrb[0].mxu0 %v6401
        %v7110 = vpop.f32.mrb[0].mxu0
        %v7111 = vadd.f32 %v6389, %v7110
        %v7112 = vpop.f32.mrb[0].mxu0
        %v7113 = vadd.f32 %v6389, %v7112
        %7114 = vdwg.mxu0
        %v7115 = vadd.f32 %v6297, %v6470
        %v7116 = vadd.f32 %v6298, %v6472
        %v7117 = vadd.f32 %v6299, %v6559
        %v7118 = vadd.f32 %v6300, %v6561
        %v7119 = vadd.f32 %v6301, %v6648
        %v7120 = vadd.f32 %v6302, %v6650
        %v7121 = vadd.f32 %v6303, %v6737
        %v7122 = vadd.f32 %v6304, %v6739
        %v7123 = vadd.f32 %v6305, %v6826
        %v7124 = vadd.f32 %v6306, %v6828
        %v7125 = vadd.f32 %v6307, %v6915
        %v7126 = vadd.f32 %v6308, %v6917
        %v7127 = vadd.f32 %v6309, %v7004
        %v7128 = vadd.f32 %v6310, %v7006
        %v7129 = vadd.f32 %v6311, %v7093
        %v7130 = vadd.f32 %v6312, %v7095
        %v7131 = vadd.f32 %v6313, %v6476
        %v7132 = vadd.f32 %v6314, %v6478
        %v7133 = vadd.f32 %v6315, %v6565
        %v7134 = vadd.f32 %v6316, %v6567
        %v7135 = vadd.f32 %v6317, %v6654
        %v7136 = vadd.f32 %v6318, %v6656
        %v7137 = vadd.f32 %v6319, %v6743
        %v7138 = vadd.f32 %v6320, %v6745
        %v7139 = vadd.f32 %v6321, %v6832
        %v7140 = vadd.f32 %v6322, %v6834
        %v7141 = vadd.f32 %v6323, %v6921
        %v7142 = vadd.f32 %v6324, %v6923
        %v7143 = vadd.f32 %v6325, %v7010
        %v7144 = vadd.f32 %v6326, %v7012
        %v7145 = vadd.f32 %v6327, %v7099
        %v7146 = vadd.f32 %v6328, %v7101
        %v7147 = vadd.f32 %v6329, %v6482
        %v7148 = vadd.f32 %v6330, %v6484
        %v7149 = vadd.f32 %v6331, %v6571
        %v7150 = vadd.f32 %v6332, %v6573
        %v7151 = vadd.f32 %v6333, %v6660
        %v7152 = vadd.f32 %v6334, %v6662
        %v7153 = vadd.f32 %v6335, %v6749
        %v7154 = vadd.f32 %v6336, %v6751
        %v7155 = vadd.f32 %v6337, %v6838
        %v7156 = vadd.f32 %v6338, %v6840
        %v7157 = vadd.f32 %v6339, %v6927
        %v7158 = vadd.f32 %v6340, %v6929
        %v7159 = vadd.f32 %v6341, %v7016
        %v7160 = vadd.f32 %v6342, %v7018
        %v7161 = vadd.f32 %v6343, %v7105
        %v7162 = vadd.f32 %v6344, %v7107
        %v7163 = vadd.f32 %v6345, %v6488
        %v7164 = vadd.f32 %v6346, %v6490
        %v7165 = vadd.f32 %v6347, %v6577
        %v7166 = vadd.f32 %v6348, %v6579
        %v7167 = vadd.f32 %v6349, %v6666
        %v7168 = vadd.f32 %v6350, %v6668
        %v7169 = vadd.f32 %v6351, %v6755
        %v7170 = vadd.f32 %v6352, %v6757
        %v7171 = vadd.f32 %v6353, %v6844
        %v7172 = vadd.f32 %v6354, %v6846
        %v7173 = vadd.f32 %v6355, %v6933
        %v7174 = vadd.f32 %v6356, %v6935
        %v7175 = vadd.f32 %v6357, %v7022
        %v7176 = vadd.f32 %v6358, %v7024
        %v7177 = vadd.f32 %v6359, %v7111
        %v7178 = vadd.f32 %v6360, %v7113
        %v7179 = vtanh.pop %v7115
        %v7180 = vtanh.pop %v7116
        %v7181 = vtanh.pop %v7117
        %v7182 = vtanh.pop %v7118
        %v7183 = vtanh.pop %v7119
        %v7184 = vtanh.pop %v7120
        %v7185 = vtanh.pop %v7121
        %v7186 = vtanh.pop %v7122
        %v7187 = vtanh.pop %v7123
        %v7188 = vtanh.pop %v7124
        %v7189 = vtanh.pop %v7125
        %v7190 = vtanh.pop %v7126
        %v7191 = vtanh.pop %v7127
        %v7192 = vtanh.pop %v7128
        %v7193 = vtanh.pop %v7129
        %v7194 = vtanh.pop %v7130
        %v7195 = vtanh.pop %v7131
        %v7196 = vtanh.pop %v7132
        %v7197 = vtanh.pop %v7133
        %v7198 = vtanh.pop %v7134
        %v7199 = vtanh.pop %v7135
        %v7200 = vtanh.pop %v7136
        %v7201 = vtanh.pop %v7137
        %v7202 = vtanh.pop %v7138
        %v7203 = vtanh.pop %v7139
        %v7204 = vtanh.pop %v7140
        %v7205 = vtanh.pop %v7141
        %v7206 = vtanh.pop %v7142
        %v7207 = vtanh.pop %v7143
        %v7208 = vtanh.pop %v7144
        %v7209 = vtanh.pop %v7145
        %v7210 = vtanh.pop %v7146
        %v7211 = vtanh.pop %v7147
        %v7212 = vtanh.pop %v7148
        %v7213 = vtanh.pop %v7149
        %v7214 = vtanh.pop %v7150
        %v7215 = vtanh.pop %v7151
        %v7216 = vtanh.pop %v7152
        %v7217 = vtanh.pop %v7153
        %v7218 = vtanh.pop %v7154
        %v7219 = vtanh.pop %v7155
        %v7220 = vtanh.pop %v7156
        %v7221 = vtanh.pop %v7157
        %v7222 = vtanh.pop %v7158
        %v7223 = vtanh.pop %v7159
        %v7224 = vtanh.pop %v7160
        %v7225 = vtanh.pop %v7161
        %v7226 = vtanh.pop %v7162
        %v7227 = vtanh.pop %v7163
        %v7228 = vtanh.pop %v7164
        %v7229 = vtanh.pop %v7165
        %v7230 = vtanh.pop %v7166
        %v7231 = vtanh.pop %v7167
        %v7232 = vtanh.pop %v7168
        %v7233 = vtanh.pop %v7169
        %v7234 = vtanh.pop %v7170
        %v7235 = vtanh.pop %v7171
        %v7236 = vtanh.pop %v7172
        %v7237 = vtanh.pop %v7173
        %v7238 = vtanh.pop %v7174
        %v7239 = vtanh.pop %v7175
        %v7240 = vtanh.pop %v7176
        %v7241 = vtanh.pop %v7177
        %v7242 = vtanh.pop %v7178
        %v7243 = vmul.f32 %v7179, %v5226
        %v7244 = vmul.f32 %v7180, %v5228
        %v7245 = vmul.f32 %v7181, %v5230
        %v7246 = vmul.f32 %v7182, %v5232
        %v7247 = vmul.f32 %v7183, %v5234
        %v7248 = vmul.f32 %v7184, %v5236
        %v7249 = vmul.f32 %v7185, %v5238
        %v7250 = vmul.f32 %v7186, %v5240
        %v7251 = vmul.f32 %v7187, %v5242
        %v7252 = vmul.f32 %v7188, %v5244
        %v7253 = vmul.f32 %v7189, %v5246
        %v7254 = vmul.f32 %v7190, %v5248
        %v7255 = vmul.f32 %v7191, %v5250
        %v7256 = vmul.f32 %v7192, %v5252
        %v7257 = vmul.f32 %v7193, %v5254
        %v7258 = vmul.f32 %v7194, %v5256
        %v7259 = vmul.f32 %v7195, %v5258
        %v7260 = vmul.f32 %v7196, %v5260
        %v7261 = vmul.f32 %v7197, %v5262
        %v7262 = vmul.f32 %v7198, %v5264
        %v7263 = vmul.f32 %v7199, %v5266
        %v7264 = vmul.f32 %v7200, %v5268
        %v7265 = vmul.f32 %v7201, %v5270
        %v7266 = vmul.f32 %v7202, %v5272
        %v7267 = vmul.f32 %v7203, %v5274
        %v7268 = vmul.f32 %v7204, %v5276
        %v7269 = vmul.f32 %v7205, %v5278
        %v7270 = vmul.f32 %v7206, %v5280
        %v7271 = vmul.f32 %v7207, %v5282
        %v7272 = vmul.f32 %v7208, %v5284
        %v7273 = vmul.f32 %v7209, %v5286
        %v7274 = vmul.f32 %v7210, %v5288
        %v7275 = vmul.f32 %v7211, %v5290
        %v7276 = vmul.f32 %v7212, %v5292
        %v7277 = vmul.f32 %v7213, %v5294
        %v7278 = vmul.f32 %v7214, %v5296
        %v7279 = vmul.f32 %v7215, %v5298
        %v7280 = vmul.f32 %v7216, %v5300
        %v7281 = vmul.f32 %v7217, %v5302
        %v7282 = vmul.f32 %v7218, %v5304
        %v7283 = vmul.f32 %v7219, %v5306
        %v7284 = vmul.f32 %v7220, %v5308
        %v7285 = vmul.f32 %v7221, %v5310
        %v7286 = vmul.f32 %v7222, %v5312
        %v7287 = vmul.f32 %v7223, %v5314
        %v7288 = vmul.f32 %v7224, %v5316
        %v7289 = vmul.f32 %v7225, %v5318
        %v7290 = vmul.f32 %v7226, %v5320
        %v7291 = vmul.f32 %v7227, %v5322
        %v7292 = vmul.f32 %v7228, %v5324
        %v7293 = vmul.f32 %v7229, %v5326
        %v7294 = vmul.f32 %v7230, %v5328
        %v7295 = vmul.f32 %v7231, %v5330
        %v7296 = vmul.f32 %v7232, %v5332
        %v7297 = vmul.f32 %v7233, %v5334
        %v7298 = vmul.f32 %v7234, %v5336
        %v7299 = vmul.f32 %v7235, %v5338
        %v7300 = vmul.f32 %v7236, %v5340
        %v7301 = vmul.f32 %v7237, %v5342
        %v7302 = vmul.f32 %v7238, %v5344
        %v7303 = vmul.f32 %v7239, %v5346
        %v7304 = vmul.f32 %v7240, %v5348
        %v7305 = vmul.f32 %v7241, %v5350
        %v7306 = vmul.f32 %v7242, %v5352
        %s7307 = scalar_lea.vmem %s7, 64
        %v7308 = vld [vmem:[%s7307] sm:$0xff]
        %v7309 = vld [vmem:[%s7307 + $0x8] sm:$0xff]
        %v7310 = vld [vmem:[%s7307 + $0x10] sm:$0xff]
        %v7311 = vld [vmem:[%s7307 + $0x18] sm:$0xff]
        %s7312 = scalar_lea.vmem %s8, 64
        %v7313 = vld [vmem:[%s7312] sm:$0xff]
        %v7314 = vld [vmem:[%s7312 + $0x8] sm:$0xff]
        %v7315 = vld [vmem:[%s7312 + $0x10] sm:$0xff]
        %v7316 = vld [vmem:[%s7312 + $0x18] sm:$0xff]
        %7318 = vset.pattern.permute.xlu0 0
        %7319 = vperm.xlu0 %7318, %v7313
        %v7320 = vpop.permute.xlu0 %7319
        %7323 = vset.pattern.permute.xlu0 0
        %7324 = vperm.xlu0 %7323, %v7314
        %v7325 = vpop.permute.xlu0 %7324
        %7328 = vset.pattern.permute.xlu0 0
        %7329 = vperm.xlu0 %7328, %v7315
        %v7330 = vpop.permute.xlu0 %7329
        %7333 = vset.pattern.permute.xlu0 0
        %7334 = vperm.xlu0 %7333, %v7316
        %v7335 = vpop.permute.xlu0 %7334
        %v7338 = vsel %vm1428, %v7308, 0
        %v7341 = vsel %vm1428, %v7309, 0
        %v7344 = vsel %vm1428, %v7310, 0
        %v7347 = vsel %vm1428, %v7311, 0
        %7349 = vmatprep.subr.mxu0 %v7244
        %7350 = vmatpush1.msra.mxu0 %v7243
        %7351 = vmatprep.subr.mxu0 %v7260
        %7352 = vmatpush1.msra.mxu0 %v7259
        %7353 = vmatprep.subr.mxu0 %v7276
        %7354 = vmatpush1.msra.mxu0 %v7275
        %7355 = vmatprep.subr.mxu0 %v7292
        %7356 = vmatpush1.msra.mxu0 %v7291
        %7357 = vmatprep.subr.mxu0 0.0
        %7358 = vmatpush1.msra.mxu0 0.0
        %7359 = vmatprep.subr.mxu0 0.0
        %7360 = vmatpush1.msra.mxu0 0.0
        %7361 = vmatprep.subr.mxu0 0.0
        %7362 = vmatpush1.msra.mxu0 0.0
        %7363 = vmatprep.subr.mxu0 0.0
        %7364 = vmatpush1.msra.mxu0 0.0
        %7365 = vmatprep.subr.mxu0 0.0
        %7366 = vmatpush1.msra.mxu0 0.0
        %7367 = vmatprep.subr.mxu0 0.0
        %7368 = vmatpush1.msra.mxu0 0.0
        %7369 = vmatprep.subr.mxu0 0.0
        %7370 = vmatpush1.msra.mxu0 0.0
        %7371 = vmatprep.subr.mxu0 0.0
        %7372 = vmatpush1.msra.mxu0 0.0
        %7373 = vmatprep.subr.mxu0 0.0
        %7374 = vmatpush1.msra.mxu0 0.0
        %7375 = vmatprep.subr.mxu0 0.0
        %7376 = vmatpush1.msra.mxu0 0.0
        %7377 = vmatprep.subr.mxu0 0.0
        %7378 = vmatpush1.msra.mxu0 0.0
        %7379 = vmatprep.subr.mxu0 0.0
        %7380 = vmatpush1.msra.mxu0 0.0
        %7381 = vmatprep.subr.mxu0 0.0
        %7382 = vmatpush1.msra.mxu0 0.0
        %7383 = vmatprep.subr.mxu0 0.0
        %7384 = vmatpush1.msra.mxu0 0.0
        %7385 = vmatprep.subr.mxu0 0.0
        %7386 = vmatpush1.msra.mxu0 0.0
        %7387 = vmatprep.subr.mxu0 0.0
        %7388 = vmatpush1.msra.mxu0 0.0
        %7389 = vmatprep.subr.mxu0 0.0
        %7390 = vmatpush1.msra.mxu0 0.0
        %7391 = vmatprep.subr.mxu0 0.0
        %7392 = vmatpush1.msra.mxu0 0.0
        %7393 = vmatprep.subr.mxu0 0.0
        %7394 = vmatpush1.msra.mxu0 0.0
        %7395 = vmatprep.subr.mxu0 0.0
        %7396 = vmatpush1.msra.mxu0 0.0
        %7397 = vmatprep.subr.mxu0 0.0
        %7398 = vmatpush1.msra.mxu0 0.0
        %7399 = vmatprep.subr.mxu0 0.0
        %7400 = vmatpush1.msra.mxu0 0.0
        %7401 = vmatprep.subr.mxu0 0.0
        %7402 = vmatpush1.msra.mxu0 0.0
        %7403 = vmatprep.subr.mxu0 0.0
        %7404 = vmatpush1.msra.mxu0 0.0
        %7405 = vmatprep.subr.mxu0 0.0
        %7406 = vmatpush1.msra.mxu0 0.0
        %7407 = vmatprep.subr.mxu0 0.0
        %7408 = vmatpush1.msra.mxu0 0.0
        %7409 = vmatprep.subr.mxu0 0.0
        %7410 = vmatpush1.msra.mxu0 0.0
        %7411 = vmatprep.subr.mxu0 0.0
        %7412 = vmatpush1.msra.mxu0 0.0
        %7413 = vmatprep.mubr.f32.mxu0 0.0
        %7414 = vmatmul.mubr.f32.gmra.mrb[0].mxu0 %v7338
        %v7415 = vpop.f32.mrb[0].mxu0
        %v7416 = vadd.f32 %v7320, %v7415
        %v7417 = vpop.f32.mrb[0].mxu0
        %v7418 = vadd.f32 %v7320, %v7417
        %7419 = vmatprep.mubr.f32.mxu0 0.0
        %7420 = vmatmul.mubr.f32.gmra.mrb[0].mxu0 %v7341
        %v7421 = vpop.f32.mrb[0].mxu0
        %v7422 = vadd.f32 %v7325, %v7421
        %v7423 = vpop.f32.mrb[0].mxu0
        %v7424 = vadd.f32 %v7325, %v7423
        %7425 = vmatprep.mubr.f32.mxu0 0.0
        %7426 = vmatmul.mubr.f32.gmra.mrb[0].mxu0 %v7344
        %v7427 = vpop.f32.mrb[0].mxu0
        %v7428 = vadd.f32 %v7330, %v7427
        %v7429 = vpop.f32.mrb[0].mxu0
        %v7430 = vadd.f32 %v7330, %v7429
        %7431 = vmatprep.mubr.f32.mxu0 0.0
        %7432 = vmatmul.mubr.f32.gmra.mrb[0].mxu0 %v7347
        %v7433 = vpop.f32.mrb[0].mxu0
        %v7434 = vadd.f32 %v7335, %v7433
        %v7435 = vpop.f32.mrb[0].mxu0
        %v7436 = vadd.f32 %v7335, %v7435
        %7437 = vdwg.mxu0
        %7438 = vmatprep.subr.mxu0 %v7246
        %7439 = vmatpush1.msra.mxu0 %v7245
        %7440 = vmatprep.subr.mxu0 %v7262
        %7441 = vmatpush1.msra.mxu0 %v7261
        %7442 = vmatprep.subr.mxu0 %v7278
        %7443 = vmatpush1.msra.mxu0 %v7277
        %7444 = vmatprep.subr.mxu0 %v7294
        %7445 = vmatpush1.msra.mxu0 %v7293
        %7446 = vmatprep.subr.mxu0 0.0
        %7447 = vmatpush1.msra.mxu0 0.0
        %7448 = vmatprep.subr.mxu0 0.0
        %7449 = vmatpush1.msra.mxu0 0.0
        %7450 = vmatprep.subr.mxu0 0.0
        %7451 = vmatpush1.msra.mxu0 0.0
        %7452 = vmatprep.subr.mxu0 0.0
        %7453 = vmatpush1.msra.mxu0 0.0
        %7454 = vmatprep.subr.mxu0 0.0
        %7455 = vmatpush1.msra.mxu0 0.0
        %7456 = vmatprep.subr.mxu0 0.0
        %7457 = vmatpush1.msra.mxu0 0.0
        %7458 = vmatprep.subr.mxu0 0.0
        %7459 = vmatpush1.msra.mxu0 0.0
        %7460 = vmatprep.subr.mxu0 0.0
        %7461 = vmatpush1.msra.mxu0 0.0
        %7462 = vmatprep.subr.mxu0 0.0
        %7463 = vmatpush1.msra.mxu0 0.0
        %7464 = vmatprep.subr.mxu0 0.0
        %7465 = vmatpush1.msra.mxu0 0.0
        %7466 = vmatprep.subr.mxu0 0.0
        %7467 = vmatpush1.msra.mxu0 0.0
        %7468 = vmatprep.subr.mxu0 0.0
        %7469 = vmatpush1.msra.mxu0 0.0
        %7470 = vmatprep.subr.mxu0 0.0
        %7471 = vmatpush1.msra.mxu0 0.0
        %7472 = vmatprep.subr.mxu0 0.0
        %7473 = vmatpush1.msra.mxu0 0.0
        %7474 = vmatprep.subr.mxu0 0.0
        %7475 = vmatpush1.msra.mxu0 0.0
        %7476 = vmatprep.subr.mxu0 0.0
        %7477 = vmatpush1.msra.mxu0 0.0
        %7478 = vmatprep.subr.mxu0 0.0
        %7479 = vmatpush1.msra.mxu0 0.0
        %7480 = vmatprep.subr.mxu0 0.0
        %7481 = vmatpush1.msra.mxu0 0.0
        %7482 = vmatprep.subr.mxu0 0.0
        %7483 = vmatpush1.msra.mxu0 0.0
        %7484 = vmatprep.subr.mxu0 0.0
        %7485 = vmatpush1.msra.mxu0 0.0
        %7486 = vmatprep.subr.mxu0 0.0
        %7487 = vmatpush1.msra.mxu0 0.0
        %7488 = vmatprep.subr.mxu0 0.0
        %7489 = vmatpush1.msra.mxu0 0.0
        %7490 = vmatprep.subr.mxu0 0.0
        %7491 = vmatpush1.msra.mxu0 0.0
        %7492 = vmatprep.subr.mxu0 0.0
        %7493 = vmatpush1.msra.mxu0 0.0
        %7494 = vmatprep.subr.mxu0 0.0
        %7495 = vmatpush1.msra.mxu0 0.0
        %7496 = vmatprep.subr.mxu0 0.0
        %7497 = vmatpush1.msra.mxu0 0.0
        %7498 = vmatprep.subr.mxu0 0.0
        %7499 = vmatpush1.msra.mxu0 0.0
        %7500 = vmatprep.subr.mxu0 0.0
        %7501 = vmatpush1.msra.mxu0 0.0
        %7502 = vmatprep.mubr.f32.mxu0 0.0
        %7503 = vmatmul.mubr.f32.gmra.mrb[0].mxu0 %v7338
        %v7504 = vpop.f32.mrb[0].mxu0
        %v7505 = vadd.f32 %v7320, %v7504
        %v7506 = vpop.f32.mrb[0].mxu0
        %v7507 = vadd.f32 %v7320, %v7506
        %7508 = vmatprep.mubr.f32.mxu0 0.0
        %7509 = vmatmul.mubr.f32.gmra.mrb[0].mxu0 %v7341
        %v7510 = vpop.f32.mrb[0].mxu0
        %v7511 = vadd.f32 %v7325, %v7510
        %v7512 = vpop.f32.mrb[0].mxu0
        %v7513 = vadd.f32 %v7325, %v7512
        %7514 = vmatprep.mubr.f32.mxu0 0.0
        %7515 = vmatmul.mubr.f32.gmra.mrb[0].mxu0 %v7344
        %v7516 = vpop.f32.mrb[0].mxu0
        %v7517 = vadd.f32 %v7330, %v7516
        %v7518 = vpop.f32.mrb[0].mxu0
        %v7519 = vadd.f32 %v7330, %v7518
        %7520 = vmatprep.mubr.f32.mxu0 0.0
        %7521 = vmatmul.mubr.f32.gmra.mrb[0].mxu0 %v7347
        %v7522 = vpop.f32.mrb[0].mxu0
        %v7523 = vadd.f32 %v7335, %v7522
        %v7524 = vpop.f32.mrb[0].mxu0
        %v7525 = vadd.f32 %v7335, %v7524
        %7526 = vdwg.mxu0
        %7527 = vmatprep.subr.mxu0 %v7248
        %7528 = vmatpush1.msra.mxu0 %v7247
        %7529 = vmatprep.subr.mxu0 %v7264
        %7530 = vmatpush1.msra.mxu0 %v7263
        %7531 = vmatprep.subr.mxu0 %v7280
        %7532 = vmatpush1.msra.mxu0 %v7279
        %7533 = vmatprep.subr.mxu0 %v7296
        %7534 = vmatpush1.msra.mxu0 %v7295
        %7535 = vmatprep.subr.mxu0 0.0
        %7536 = vmatpush1.msra.mxu0 0.0
        %7537 = vmatprep.subr.mxu0 0.0
        %7538 = vmatpush1.msra.mxu0 0.0
        %7539 = vmatprep.subr.mxu0 0.0
        %7540 = vmatpush1.msra.mxu0 0.0
        %7541 = vmatprep.subr.mxu0 0.0
        %7542 = vmatpush1.msra.mxu0 0.0
        %7543 = vmatprep.subr.mxu0 0.0
        %7544 = vmatpush1.msra.mxu0 0.0
        %7545 = vmatprep.subr.mxu0 0.0
        %7546 = vmatpush1.msra.mxu0 0.0
        %7547 = vmatprep.subr.mxu0 0.0
        %7548 = vmatpush1.msra.mxu0 0.0
        %7549 = vmatprep.subr.mxu0 0.0
        %7550 = vmatpush1.msra.mxu0 0.0
        %7551 = vmatprep.subr.mxu0 0.0
        %7552 = vmatpush1.msra.mxu0 0.0
        %7553 = vmatprep.subr.mxu0 0.0
        %7554 = vmatpush1.msra.mxu0 0.0
        %7555 = vmatprep.subr.mxu0 0.0
        %7556 = vmatpush1.msra.mxu0 0.0
        %7557 = vmatprep.subr.mxu0 0.0
        %7558 = vmatpush1.msra.mxu0 0.0
        %7559 = vmatprep.subr.mxu0 0.0
        %7560 = vmatpush1.msra.mxu0 0.0
        %7561 = vmatprep.subr.mxu0 0.0
        %7562 = vmatpush1.msra.mxu0 0.0
        %7563 = vmatprep.subr.mxu0 0.0
        %7564 = vmatpush1.msra.mxu0 0.0
        %7565 = vmatprep.subr.mxu0 0.0
        %7566 = vmatpush1.msra.mxu0 0.0
        %7567 = vmatprep.subr.mxu0 0.0
        %7568 = vmatpush1.msra.mxu0 0.0
        %7569 = vmatprep.subr.mxu0 0.0
        %7570 = vmatpush1.msra.mxu0 0.0
        %7571 = vmatprep.subr.mxu0 0.0
        %7572 = vmatpush1.msra.mxu0 0.0
        %7573 = vmatprep.subr.mxu0 0.0
        %7574 = vmatpush1.msra.mxu0 0.0
        %7575 = vmatprep.subr.mxu0 0.0
        %7576 = vmatpush1.msra.mxu0 0.0
        %7577 = vmatprep.subr.mxu0 0.0
        %7578 = vmatpush1.msra.mxu0 0.0
        %7579 = vmatprep.subr.mxu0 0.0
        %7580 = vmatpush1.msra.mxu0 0.0
        %7581 = vmatprep.subr.mxu0 0.0
        %7582 = vmatpush1.msra.mxu0 0.0
        %7583 = vmatprep.subr.mxu0 0.0
        %7584 = vmatpush1.msra.mxu0 0.0
        %7585 = vmatprep.subr.mxu0 0.0
        %7586 = vmatpush1.msra.mxu0 0.0
        %7587 = vmatprep.subr.mxu0 0.0
        %7588 = vmatpush1.msra.mxu0 0.0
        %7589 = vmatprep.subr.mxu0 0.0
        %7590 = vmatpush1.msra.mxu0 0.0
        %7591 = vmatprep.mubr.f32.mxu0 0.0
        %7592 = vmatmul.mubr.f32.gmra.mrb[0].mxu0 %v7338
        %v7593 = vpop.f32.mrb[0].mxu0
        %v7594 = vadd.f32 %v7320, %v7593
        %v7595 = vpop.f32.mrb[0].mxu0
        %v7596 = vadd.f32 %v7320, %v7595
        %7597 = vmatprep.mubr.f32.mxu0 0.0
        %7598 = vmatmul.mubr.f32.gmra.mrb[0].mxu0 %v7341
        %v7599 = vpop.f32.mrb[0].mxu0
        %v7600 = vadd.f32 %v7325, %v7599
        %v7601 = vpop.f32.mrb[0].mxu0
        %v7602 = vadd.f32 %v7325, %v7601
        %7603 = vmatprep.mubr.f32.mxu0 0.0
        %7604 = vmatmul.mubr.f32.gmra.mrb[0].mxu0 %v7344
        %v7605 = vpop.f32.mrb[0].mxu0
        %v7606 = vadd.f32 %v7330, %v7605
        %v7607 = vpop.f32.mrb[0].mxu0
        %v7608 = vadd.f32 %v7330, %v7607
        %7609 = vmatprep.mubr.f32.mxu0 0.0
        %7610 = vmatmul.mubr.f32.gmra.mrb[0].mxu0 %v7347
        %v7611 = vpop.f32.mrb[0].mxu0
        %v7612 = vadd.f32 %v7335, %v7611
        %v7613 = vpop.f32.mrb[0].mxu0
        %v7614 = vadd.f32 %v7335, %v7613
        %7615 = vdwg.mxu0
        %7616 = vmatprep.subr.mxu0 %v7250
        %7617 = vmatpush1.msra.mxu0 %v7249
        %7618 = vmatprep.subr.mxu0 %v7266
        %7619 = vmatpush1.msra.mxu0 %v7265
        %7620 = vmatprep.subr.mxu0 %v7282
        %7621 = vmatpush1.msra.mxu0 %v7281
        %7622 = vmatprep.subr.mxu0 %v7298
        %7623 = vmatpush1.msra.mxu0 %v7297
        %7624 = vmatprep.subr.mxu0 0.0
        %7625 = vmatpush1.msra.mxu0 0.0
        %7626 = vmatprep.subr.mxu0 0.0
        %7627 = vmatpush1.msra.mxu0 0.0
        %7628 = vmatprep.subr.mxu0 0.0
        %7629 = vmatpush1.msra.mxu0 0.0
        %7630 = vmatprep.subr.mxu0 0.0
        %7631 = vmatpush1.msra.mxu0 0.0
        %7632 = vmatprep.subr.mxu0 0.0
        %7633 = vmatpush1.msra.mxu0 0.0
        %7634 = vmatprep.subr.mxu0 0.0
        %7635 = vmatpush1.msra.mxu0 0.0
        %7636 = vmatprep.subr.mxu0 0.0
        %7637 = vmatpush1.msra.mxu0 0.0
        %7638 = vmatprep.subr.mxu0 0.0
        %7639 = vmatpush1.msra.mxu0 0.0
        %7640 = vmatprep.subr.mxu0 0.0
        %7641 = vmatpush1.msra.mxu0 0.0
        %7642 = vmatprep.subr.mxu0 0.0
        %7643 = vmatpush1.msra.mxu0 0.0
        %7644 = vmatprep.subr.mxu0 0.0
        %7645 = vmatpush1.msra.mxu0 0.0
        %7646 = vmatprep.subr.mxu0 0.0
        %7647 = vmatpush1.msra.mxu0 0.0
        %7648 = vmatprep.subr.mxu0 0.0
        %7649 = vmatpush1.msra.mxu0 0.0
        %7650 = vmatprep.subr.mxu0 0.0
        %7651 = vmatpush1.msra.mxu0 0.0
        %7652 = vmatprep.subr.mxu0 0.0
        %7653 = vmatpush1.msra.mxu0 0.0
        %7654 = vmatprep.subr.mxu0 0.0
        %7655 = vmatpush1.msra.mxu0 0.0
        %7656 = vmatprep.subr.mxu0 0.0
        %7657 = vmatpush1.msra.mxu0 0.0
        %7658 = vmatprep.subr.mxu0 0.0
        %7659 = vmatpush1.msra.mxu0 0.0
        %7660 = vmatprep.subr.mxu0 0.0
        %7661 = vmatpush1.msra.mxu0 0.0
        %7662 = vmatprep.subr.mxu0 0.0
        %7663 = vmatpush1.msra.mxu0 0.0
        %7664 = vmatprep.subr.mxu0 0.0
        %7665 = vmatpush1.msra.mxu0 0.0
        %7666 = vmatprep.subr.mxu0 0.0
        %7667 = vmatpush1.msra.mxu0 0.0
        %7668 = vmatprep.subr.mxu0 0.0
        %7669 = vmatpush1.msra.mxu0 0.0
        %7670 = vmatprep.subr.mxu0 0.0
        %7671 = vmatpush1.msra.mxu0 0.0
        %7672 = vmatprep.subr.mxu0 0.0
        %7673 = vmatpush1.msra.mxu0 0.0
        %7674 = vmatprep.subr.mxu0 0.0
        %7675 = vmatpush1.msra.mxu0 0.0
        %7676 = vmatprep.subr.mxu0 0.0
        %7677 = vmatpush1.msra.mxu0 0.0
        %7678 = vmatprep.subr.mxu0 0.0
        %7679 = vmatpush1.msra.mxu0 0.0
        %7680 = vmatprep.mubr.f32.mxu0 0.0
        %7681 = vmatmul.mubr.f32.gmra.mrb[0].mxu0 %v7338
        %v7682 = vpop.f32.mrb[0].mxu0
        %v7683 = vadd.f32 %v7320, %v7682
        %v7684 = vpop.f32.mrb[0].mxu0
        %v7685 = vadd.f32 %v7320, %v7684
        %7686 = vmatprep.mubr.f32.mxu0 0.0
        %7687 = vmatmul.mubr.f32.gmra.mrb[0].mxu0 %v7341
        %v7688 = vpop.f32.mrb[0].mxu0
        %v7689 = vadd.f32 %v7325, %v7688
        %v7690 = vpop.f32.mrb[0].mxu0
        %v7691 = vadd.f32 %v7325, %v7690
        %7692 = vmatprep.mubr.f32.mxu0 0.0
        %7693 = vmatmul.mubr.f32.gmra.mrb[0].mxu0 %v7344
        %v7694 = vpop.f32.mrb[0].mxu0
        %v7695 = vadd.f32 %v7330, %v7694
        %v7696 = vpop.f32.mrb[0].mxu0
        %v7697 = vadd.f32 %v7330, %v7696
        %7698 = vmatprep.mubr.f32.mxu0 0.0
        %7699 = vmatmul.mubr.f32.gmra.mrb[0].mxu0 %v7347
        %v7700 = vpop.f32.mrb[0].mxu0
        %v7701 = vadd.f32 %v7335, %v7700
        %v7702 = vpop.f32.mrb[0].mxu0
        %v7703 = vadd.f32 %v7335, %v7702
        %7704 = vdwg.mxu0
        %7705 = vmatprep.subr.mxu0 %v7252
        %7706 = vmatpush1.msra.mxu0 %v7251
        %7707 = vmatprep.subr.mxu0 %v7268
        %7708 = vmatpush1.msra.mxu0 %v7267
        %7709 = vmatprep.subr.mxu0 %v7284
        %7710 = vmatpush1.msra.mxu0 %v7283
        %7711 = vmatprep.subr.mxu0 %v7300
        %7712 = vmatpush1.msra.mxu0 %v7299
        %7713 = vmatprep.subr.mxu0 0.0
        %7714 = vmatpush1.msra.mxu0 0.0
        %7715 = vmatprep.subr.mxu0 0.0
        %7716 = vmatpush1.msra.mxu0 0.0
        %7717 = vmatprep.subr.mxu0 0.0
        %7718 = vmatpush1.msra.mxu0 0.0
        %7719 = vmatprep.subr.mxu0 0.0
        %7720 = vmatpush1.msra.mxu0 0.0
        %7721 = vmatprep.subr.mxu0 0.0
        %7722 = vmatpush1.msra.mxu0 0.0
        %7723 = vmatprep.subr.mxu0 0.0
        %7724 = vmatpush1.msra.mxu0 0.0
        %7725 = vmatprep.subr.mxu0 0.0
        %7726 = vmatpush1.msra.mxu0 0.0
        %7727 = vmatprep.subr.mxu0 0.0
        %7728 = vmatpush1.msra.mxu0 0.0
        %7729 = vmatprep.subr.mxu0 0.0
        %7730 = vmatpush1.msra.mxu0 0.0
        %7731 = vmatprep.subr.mxu0 0.0
        %7732 = vmatpush1.msra.mxu0 0.0
        %7733 = vmatprep.subr.mxu0 0.0
        %7734 = vmatpush1.msra.mxu0 0.0
        %7735 = vmatprep.subr.mxu0 0.0
        %7736 = vmatpush1.msra.mxu0 0.0
        %7737 = vmatprep.subr.mxu0 0.0
        %7738 = vmatpush1.msra.mxu0 0.0
        %7739 = vmatprep.subr.mxu0 0.0
        %7740 = vmatpush1.msra.mxu0 0.0
        %7741 = vmatprep.subr.mxu0 0.0
        %7742 = vmatpush1.msra.mxu0 0.0
        %7743 = vmatprep.subr.mxu0 0.0
        %7744 = vmatpush1.msra.mxu0 0.0
        %7745 = vmatprep.subr.mxu0 0.0
        %7746 = vmatpush1.msra.mxu0 0.0
        %7747 = vmatprep.subr.mxu0 0.0
        %7748 = vmatpush1.msra.mxu0 0.0
        %7749 = vmatprep.subr.mxu0 0.0
        %7750 = vmatpush1.msra.mxu0 0.0
        %7751 = vmatprep.subr.mxu0 0.0
        %7752 = vmatpush1.msra.mxu0 0.0
        %7753 = vmatprep.subr.mxu0 0.0
        %7754 = vmatpush1.msra.mxu0 0.0
        %7755 = vmatprep.subr.mxu0 0.0
        %7756 = vmatpush1.msra.mxu0 0.0
        %7757 = vmatprep.subr.mxu0 0.0
        %7758 = vmatpush1.msra.mxu0 0.0
        %7759 = vmatprep.subr.mxu0 0.0
        %7760 = vmatpush1.msra.mxu0 0.0
        %7761 = vmatprep.subr.mxu0 0.0
        %7762 = vmatpush1.msra.mxu0 0.0
        %7763 = vmatprep.subr.mxu0 0.0
        %7764 = vmatpush1.msra.mxu0 0.0
        %7765 = vmatprep.subr.mxu0 0.0
        %7766 = vmatpush1.msra.mxu0 0.0
        %7767 = vmatprep.subr.mxu0 0.0
        %7768 = vmatpush1.msra.mxu0 0.0
        %7769 = vmatprep.mubr.f32.mxu0 0.0
        %7770 = vmatmul.mubr.f32.gmra.mrb[0].mxu0 %v7338
        %v7771 = vpop.f32.mrb[0].mxu0
        %v7772 = vadd.f32 %v7320, %v7771
        %v7773 = vpop.f32.mrb[0].mxu0
        %v7774 = vadd.f32 %v7320, %v7773
        %7775 = vmatprep.mubr.f32.mxu0 0.0
        %7776 = vmatmul.mubr.f32.gmra.mrb[0].mxu0 %v7341
        %v7777 = vpop.f32.mrb[0].mxu0
        %v7778 = vadd.f32 %v7325, %v7777
        %v7779 = vpop.f32.mrb[0].mxu0
        %v7780 = vadd.f32 %v7325, %v7779
        %7781 = vmatprep.mubr.f32.mxu0 0.0
        %7782 = vmatmul.mubr.f32.gmra.mrb[0].mxu0 %v7344
        %v7783 = vpop.f32.mrb[0].mxu0
        %v7784 = vadd.f32 %v7330, %v7783
        %v7785 = vpop.f32.mrb[0].mxu0
        %v7786 = vadd.f32 %v7330, %v7785
        %7787 = vmatprep.mubr.f32.mxu0 0.0
        %7788 = vmatmul.mubr.f32.gmra.mrb[0].mxu0 %v7347
        %v7789 = vpop.f32.mrb[0].mxu0
        %v7790 = vadd.f32 %v7335, %v7789
        %v7791 = vpop.f32.mrb[0].mxu0
        %v7792 = vadd.f32 %v7335, %v7791
        %7793 = vdwg.mxu0
        %7794 = vmatprep.subr.mxu0 %v7254
        %7795 = vmatpush1.msra.mxu0 %v7253
        %7796 = vmatprep.subr.mxu0 %v7270
        %7797 = vmatpush1.msra.mxu0 %v7269
        %7798 = vmatprep.subr.mxu0 %v7286
        %7799 = vmatpush1.msra.mxu0 %v7285
        %7800 = vmatprep.subr.mxu0 %v7302
        %7801 = vmatpush1.msra.mxu0 %v7301
        %7802 = vmatprep.subr.mxu0 0.0
        %7803 = vmatpush1.msra.mxu0 0.0
        %7804 = vmatprep.subr.mxu0 0.0
        %7805 = vmatpush1.msra.mxu0 0.0
        %7806 = vmatprep.subr.mxu0 0.0
        %7807 = vmatpush1.msra.mxu0 0.0
        %7808 = vmatprep.subr.mxu0 0.0
        %7809 = vmatpush1.msra.mxu0 0.0
        %7810 = vmatprep.subr.mxu0 0.0
        %7811 = vmatpush1.msra.mxu0 0.0
        %7812 = vmatprep.subr.mxu0 0.0
        %7813 = vmatpush1.msra.mxu0 0.0
        %7814 = vmatprep.subr.mxu0 0.0
        %7815 = vmatpush1.msra.mxu0 0.0
        %7816 = vmatprep.subr.mxu0 0.0
        %7817 = vmatpush1.msra.mxu0 0.0
        %7818 = vmatprep.subr.mxu0 0.0
        %7819 = vmatpush1.msra.mxu0 0.0
        %7820 = vmatprep.subr.mxu0 0.0
        %7821 = vmatpush1.msra.mxu0 0.0
        %7822 = vmatprep.subr.mxu0 0.0
        %7823 = vmatpush1.msra.mxu0 0.0
        %7824 = vmatprep.subr.mxu0 0.0
        %7825 = vmatpush1.msra.mxu0 0.0
        %7826 = vmatprep.subr.mxu0 0.0
        %7827 = vmatpush1.msra.mxu0 0.0
        %7828 = vmatprep.subr.mxu0 0.0
        %7829 = vmatpush1.msra.mxu0 0.0
        %7830 = vmatprep.subr.mxu0 0.0
        %7831 = vmatpush1.msra.mxu0 0.0
        %7832 = vmatprep.subr.mxu0 0.0
        %7833 = vmatpush1.msra.mxu0 0.0
        %7834 = vmatprep.subr.mxu0 0.0
        %7835 = vmatpush1.msra.mxu0 0.0
        %7836 = vmatprep.subr.mxu0 0.0
        %7837 = vmatpush1.msra.mxu0 0.0
        %7838 = vmatprep.subr.mxu0 0.0
        %7839 = vmatpush1.msra.mxu0 0.0
        %7840 = vmatprep.subr.mxu0 0.0
        %7841 = vmatpush1.msra.mxu0 0.0
        %7842 = vmatprep.subr.mxu0 0.0
        %7843 = vmatpush1.msra.mxu0 0.0
        %7844 = vmatprep.subr.mxu0 0.0
        %7845 = vmatpush1.msra.mxu0 0.0
        %7846 = vmatprep.subr.mxu0 0.0
        %7847 = vmatpush1.msra.mxu0 0.0
        %7848 = vmatprep.subr.mxu0 0.0
        %7849 = vmatpush1.msra.mxu0 0.0
        %7850 = vmatprep.subr.mxu0 0.0
        %7851 = vmatpush1.msra.mxu0 0.0
        %7852 = vmatprep.subr.mxu0 0.0
        %7853 = vmatpush1.msra.mxu0 0.0
        %7854 = vmatprep.subr.mxu0 0.0
        %7855 = vmatpush1.msra.mxu0 0.0
        %7856 = vmatprep.subr.mxu0 0.0
        %7857 = vmatpush1.msra.mxu0 0.0
        %7858 = vmatprep.mubr.f32.mxu0 0.0
        %7859 = vmatmul.mubr.f32.gmra.mrb[0].mxu0 %v7338
        %v7860 = vpop.f32.mrb[0].mxu0
        %v7861 = vadd.f32 %v7320, %v7860
        %v7862 = vpop.f32.mrb[0].mxu0
        %v7863 = vadd.f32 %v7320, %v7862
        %7864 = vmatprep.mubr.f32.mxu0 0.0
        %7865 = vmatmul.mubr.f32.gmra.mrb[0].mxu0 %v7341
        %v7866 = vpop.f32.mrb[0].mxu0
        %v7867 = vadd.f32 %v7325, %v7866
        %v7868 = vpop.f32.mrb[0].mxu0
        %v7869 = vadd.f32 %v7325, %v7868
        %7870 = vmatprep.mubr.f32.mxu0 0.0
        %7871 = vmatmul.mubr.f32.gmra.mrb[0].mxu0 %v7344
        %v7872 = vpop.f32.mrb[0].mxu0
        %v7873 = vadd.f32 %v7330, %v7872
        %v7874 = vpop.f32.mrb[0].mxu0
        %v7875 = vadd.f32 %v7330, %v7874
        %7876 = vmatprep.mubr.f32.mxu0 0.0
        %7877 = vmatmul.mubr.f32.gmra.mrb[0].mxu0 %v7347
        %v7878 = vpop.f32.mrb[0].mxu0
        %v7879 = vadd.f32 %v7335, %v7878
        %v7880 = vpop.f32.mrb[0].mxu0
        %v7881 = vadd.f32 %v7335, %v7880
        %7882 = vdwg.mxu0
        %7883 = vmatprep.subr.mxu0 %v7256
        %7884 = vmatpush1.msra.mxu0 %v7255
        %7885 = vmatprep.subr.mxu0 %v7272
        %7886 = vmatpush1.msra.mxu0 %v7271
        %7887 = vmatprep.subr.mxu0 %v7288
        %7888 = vmatpush1.msra.mxu0 %v7287
        %7889 = vmatprep.subr.mxu0 %v7304
        %7890 = vmatpush1.msra.mxu0 %v7303
        %7891 = vmatprep.subr.mxu0 0.0
        %7892 = vmatpush1.msra.mxu0 0.0
        %7893 = vmatprep.subr.mxu0 0.0
        %7894 = vmatpush1.msra.mxu0 0.0
        %7895 = vmatprep.subr.mxu0 0.0
        %7896 = vmatpush1.msra.mxu0 0.0
        %7897 = vmatprep.subr.mxu0 0.0
        %7898 = vmatpush1.msra.mxu0 0.0
        %7899 = vmatprep.subr.mxu0 0.0
        %7900 = vmatpush1.msra.mxu0 0.0
        %7901 = vmatprep.subr.mxu0 0.0
        %7902 = vmatpush1.msra.mxu0 0.0
        %7903 = vmatprep.subr.mxu0 0.0
        %7904 = vmatpush1.msra.mxu0 0.0
        %7905 = vmatprep.subr.mxu0 0.0
        %7906 = vmatpush1.msra.mxu0 0.0
        %7907 = vmatprep.subr.mxu0 0.0
        %7908 = vmatpush1.msra.mxu0 0.0
        %7909 = vmatprep.subr.mxu0 0.0
        %7910 = vmatpush1.msra.mxu0 0.0
        %7911 = vmatprep.subr.mxu0 0.0
        %7912 = vmatpush1.msra.mxu0 0.0
        %7913 = vmatprep.subr.mxu0 0.0
        %7914 = vmatpush1.msra.mxu0 0.0
        %7915 = vmatprep.subr.mxu0 0.0
        %7916 = vmatpush1.msra.mxu0 0.0
        %7917 = vmatprep.subr.mxu0 0.0
        %7918 = vmatpush1.msra.mxu0 0.0
        %7919 = vmatprep.subr.mxu0 0.0
        %7920 = vmatpush1.msra.mxu0 0.0
        %7921 = vmatprep.subr.mxu0 0.0
        %7922 = vmatpush1.msra.mxu0 0.0
        %7923 = vmatprep.subr.mxu0 0.0
        %7924 = vmatpush1.msra.mxu0 0.0
        %7925 = vmatprep.subr.mxu0 0.0
        %7926 = vmatpush1.msra.mxu0 0.0
        %7927 = vmatprep.subr.mxu0 0.0
        %7928 = vmatpush1.msra.mxu0 0.0
        %7929 = vmatprep.subr.mxu0 0.0
        %7930 = vmatpush1.msra.mxu0 0.0
        %7931 = vmatprep.subr.mxu0 0.0
        %7932 = vmatpush1.msra.mxu0 0.0
        %7933 = vmatprep.subr.mxu0 0.0
        %7934 = vmatpush1.msra.mxu0 0.0
        %7935 = vmatprep.subr.mxu0 0.0
        %7936 = vmatpush1.msra.mxu0 0.0
        %7937 = vmatprep.subr.mxu0 0.0
        %7938 = vmatpush1.msra.mxu0 0.0
        %7939 = vmatprep.subr.mxu0 0.0
        %7940 = vmatpush1.msra.mxu0 0.0
        %7941 = vmatprep.subr.mxu0 0.0
        %7942 = vmatpush1.msra.mxu0 0.0
        %7943 = vmatprep.subr.mxu0 0.0
        %7944 = vmatpush1.msra.mxu0 0.0
        %7945 = vmatprep.subr.mxu0 0.0
        %7946 = vmatpush1.msra.mxu0 0.0
        %7947 = vmatprep.mubr.f32.mxu0 0.0
        %7948 = vmatmul.mubr.f32.gmra.mrb[0].mxu0 %v7338
        %v7949 = vpop.f32.mrb[0].mxu0
        %v7950 = vadd.f32 %v7320, %v7949
        %v7951 = vpop.f32.mrb[0].mxu0
        %v7952 = vadd.f32 %v7320, %v7951
        %7953 = vmatprep.mubr.f32.mxu0 0.0
        %7954 = vmatmul.mubr.f32.gmra.mrb[0].mxu0 %v7341
        %v7955 = vpop.f32.mrb[0].mxu0
        %v7956 = vadd.f32 %v7325, %v7955
        %v7957 = vpop.f32.mrb[0].mxu0
        %v7958 = vadd.f32 %v7325, %v7957
        %7959 = vmatprep.mubr.f32.mxu0 0.0
        %7960 = vmatmul.mubr.f32.gmra.mrb[0].mxu0 %v7344
        %v7961 = vpop.f32.mrb[0].mxu0
        %v7962 = vadd.f32 %v7330, %v7961
        %v7963 = vpop.f32.mrb[0].mxu0
        %v7964 = vadd.f32 %v7330, %v7963
        %7965 = vmatprep.mubr.f32.mxu0 0.0
        %7966 = vmatmul.mubr.f32.gmra.mrb[0].mxu0 %v7347
        %v7967 = vpop.f32.mrb[0].mxu0
        %v7968 = vadd.f32 %v7335, %v7967
        %v7969 = vpop.f32.mrb[0].mxu0
        %v7970 = vadd.f32 %v7335, %v7969
        %7971 = vdwg.mxu0
        %7972 = vmatprep.subr.mxu0 %v7258
        %7973 = vmatpush1.msra.mxu0 %v7257
        %7974 = vmatprep.subr.mxu0 %v7274
        %7975 = vmatpush1.msra.mxu0 %v7273
        %7976 = vmatprep.subr.mxu0 %v7290
        %7977 = vmatpush1.msra.mxu0 %v7289
        %7978 = vmatprep.subr.mxu0 %v7306
        %7979 = vmatpush1.msra.mxu0 %v7305
        %7980 = vmatprep.subr.mxu0 0.0
        %7981 = vmatpush1.msra.mxu0 0.0
        %7982 = vmatprep.subr.mxu0 0.0
        %7983 = vmatpush1.msra.mxu0 0.0
        %7984 = vmatprep.subr.mxu0 0.0
        %7985 = vmatpush1.msra.mxu0 0.0
        %7986 = vmatprep.subr.mxu0 0.0
        %7987 = vmatpush1.msra.mxu0 0.0
        %7988 = vmatprep.subr.mxu0 0.0
        %7989 = vmatpush1.msra.mxu0 0.0
        %7990 = vmatprep.subr.mxu0 0.0
        %7991 = vmatpush1.msra.mxu0 0.0
        %7992 = vmatprep.subr.mxu0 0.0
        %7993 = vmatpush1.msra.mxu0 0.0
        %7994 = vmatprep.subr.mxu0 0.0
        %7995 = vmatpush1.msra.mxu0 0.0
        %7996 = vmatprep.subr.mxu0 0.0
        %7997 = vmatpush1.msra.mxu0 0.0
        %7998 = vmatprep.subr.mxu0 0.0
        %7999 = vmatpush1.msra.mxu0 0.0
        %8000 = vmatprep.subr.mxu0 0.0
        %8001 = vmatpush1.msra.mxu0 0.0
        %8002 = vmatprep.subr.mxu0 0.0
        %8003 = vmatpush1.msra.mxu0 0.0
        %8004 = vmatprep.subr.mxu0 0.0
        %8005 = vmatpush1.msra.mxu0 0.0
        %8006 = vmatprep.subr.mxu0 0.0
        %8007 = vmatpush1.msra.mxu0 0.0
        %8008 = vmatprep.subr.mxu0 0.0
        %8009 = vmatpush1.msra.mxu0 0.0
        %8010 = vmatprep.subr.mxu0 0.0
        %8011 = vmatpush1.msra.mxu0 0.0
        %8012 = vmatprep.subr.mxu0 0.0
        %8013 = vmatpush1.msra.mxu0 0.0
        %8014 = vmatprep.subr.mxu0 0.0
        %8015 = vmatpush1.msra.mxu0 0.0
        %8016 = vmatprep.subr.mxu0 0.0
        %8017 = vmatpush1.msra.mxu0 0.0
        %8018 = vmatprep.subr.mxu0 0.0
        %8019 = vmatpush1.msra.mxu0 0.0
        %8020 = vmatprep.subr.mxu0 0.0
        %8021 = vmatpush1.msra.mxu0 0.0
        %8022 = vmatprep.subr.mxu0 0.0
        %8023 = vmatpush1.msra.mxu0 0.0
        %8024 = vmatprep.subr.mxu0 0.0
        %8025 = vmatpush1.msra.mxu0 0.0
        %8026 = vmatprep.subr.mxu0 0.0
        %8027 = vmatpush1.msra.mxu0 0.0
        %8028 = vmatprep.subr.mxu0 0.0
        %8029 = vmatpush1.msra.mxu0 0.0
        %8030 = vmatprep.subr.mxu0 0.0
        %8031 = vmatpush1.msra.mxu0 0.0
        %8032 = vmatprep.subr.mxu0 0.0
        %8033 = vmatpush1.msra.mxu0 0.0
        %8034 = vmatprep.subr.mxu0 0.0
        %8035 = vmatpush1.msra.mxu0 0.0
        %8036 = vmatprep.mubr.f32.mxu0 0.0
        %8037 = vmatmul.mubr.f32.gmra.mrb[0].mxu0 %v7338
        %v8038 = vpop.f32.mrb[0].mxu0
        %v8039 = vadd.f32 %v7320, %v8038
        %v8040 = vpop.f32.mrb[0].mxu0
        %v8041 = vadd.f32 %v7320, %v8040
        %8042 = vmatprep.mubr.f32.mxu0 0.0
        %8043 = vmatmul.mubr.f32.gmra.mrb[0].mxu0 %v7341
        %v8044 = vpop.f32.mrb[0].mxu0
        %v8045 = vadd.f32 %v7325, %v8044
        %v8046 = vpop.f32.mrb[0].mxu0
        %v8047 = vadd.f32 %v7325, %v8046
        %8048 = vmatprep.mubr.f32.mxu0 0.0
        %8049 = vmatmul.mubr.f32.gmra.mrb[0].mxu0 %v7344
        %v8050 = vpop.f32.mrb[0].mxu0
        %v8051 = vadd.f32 %v7330, %v8050
        %v8052 = vpop.f32.mrb[0].mxu0
        %v8053 = vadd.f32 %v7330, %v8052
        %8054 = vmatprep.mubr.f32.mxu0 0.0
        %8055 = vmatmul.mubr.f32.gmra.mrb[0].mxu0 %v7347
        %v8056 = vpop.f32.mrb[0].mxu0
        %v8057 = vadd.f32 %v7335, %v8056
        %v8058 = vpop.f32.mrb[0].mxu0
        %v8059 = vadd.f32 %v7335, %v8058
        %8060 = vdwg.mxu0
        %v8061 = vadd.f32 %v7243, %v7416
        %v8062 = vadd.f32 %v7244, %v7418
        %v8063 = vadd.f32 %v7245, %v7505
        %v8064 = vadd.f32 %v7246, %v7507
        %v8065 = vadd.f32 %v7247, %v7594
        %v8066 = vadd.f32 %v7248, %v7596
        %v8067 = vadd.f32 %v7249, %v7683
        %v8068 = vadd.f32 %v7250, %v7685
        %v8069 = vadd.f32 %v7251, %v7772
        %v8070 = vadd.f32 %v7252, %v7774
        %v8071 = vadd.f32 %v7253, %v7861
        %v8072 = vadd.f32 %v7254, %v7863
        %v8073 = vadd.f32 %v7255, %v7950
        %v8074 = vadd.f32 %v7256, %v7952
        %v8075 = vadd.f32 %v7257, %v8039
        %v8076 = vadd.f32 %v7258, %v8041
        %v8077 = vadd.f32 %v7259, %v7422
        %v8078 = vadd.f32 %v7260, %v7424
        %v8079 = vadd.f32 %v7261, %v7511
        %v8080 = vadd.f32 %v7262, %v7513
        %v8081 = vadd.f32 %v7263, %v7600
        %v8082 = vadd.f32 %v7264, %v7602
        %v8083 = vadd.f32 %v7265, %v7689
        %v8084 = vadd.f32 %v7266, %v7691
        %v8085 = vadd.f32 %v7267, %v7778
        %v8086 = vadd.f32 %v7268, %v7780
        %v8087 = vadd.f32 %v7269, %v7867
        %v8088 = vadd.f32 %v7270, %v7869
        %v8089 = vadd.f32 %v7271, %v7956
        %v8090 = vadd.f32 %v7272, %v7958
        %v8091 = vadd.f32 %v7273, %v8045
        %v8092 = vadd.f32 %v7274, %v8047
        %v8093 = vadd.f32 %v7275, %v7428
        %v8094 = vadd.f32 %v7276, %v7430
        %v8095 = vadd.f32 %v7277, %v7517
        %v8096 = vadd.f32 %v7278, %v7519
        %v8097 = vadd.f32 %v7279, %v7606
        %v8098 = vadd.f32 %v7280, %v7608
        %v8099 = vadd.f32 %v7281, %v7695
        %v8100 = vadd.f32 %v7282, %v7697
        %v8101 = vadd.f32 %v7283, %v7784
        %v8102 = vadd.f32 %v7284, %v7786
        %v8103 = vadd.f32 %v7285, %v7873
        %v8104 = vadd.f32 %v7286, %v7875
        %v8105 = vadd.f32 %v7287, %v7962
        %v8106 = vadd.f32 %v7288, %v7964
        %v8107 = vadd.f32 %v7289, %v8051
        %v8108 = vadd.f32 %v7290, %v8053
        %v8109 = vadd.f32 %v7291, %v7434
        %v8110 = vadd.f32 %v7292, %v7436
        %v8111 = vadd.f32 %v7293, %v7523
        %v8112 = vadd.f32 %v7294, %v7525
        %v8113 = vadd.f32 %v7295, %v7612
        %v8114 = vadd.f32 %v7296, %v7614
        %v8115 = vadd.f32 %v7297, %v7701
        %v8116 = vadd.f32 %v7298, %v7703
        %v8117 = vadd.f32 %v7299, %v7790
        %v8118 = vadd.f32 %v7300, %v7792
        %v8119 = vadd.f32 %v7301, %v7879
        %v8120 = vadd.f32 %v7302, %v7881
        %v8121 = vadd.f32 %v7303, %v7968
        %v8122 = vadd.f32 %v7304, %v7970
        %v8123 = vadd.f32 %v7305, %v8057
        %v8124 = vadd.f32 %v7306, %v8059
        %v8125 = vtanh.pop %v8061
        %v8126 = vtanh.pop %v8062
        %v8127 = vtanh.pop %v8063
        %v8128 = vtanh.pop %v8064
        %v8129 = vtanh.pop %v8065
        %v8130 = vtanh.pop %v8066
        %v8131 = vtanh.pop %v8067
        %v8132 = vtanh.pop %v8068
        %v8133 = vtanh.pop %v8069
        %v8134 = vtanh.pop %v8070
        %v8135 = vtanh.pop %v8071
        %v8136 = vtanh.pop %v8072
        %v8137 = vtanh.pop %v8073
        %v8138 = vtanh.pop %v8074
        %v8139 = vtanh.pop %v8075
        %v8140 = vtanh.pop %v8076
        %v8141 = vtanh.pop %v8077
        %v8142 = vtanh.pop %v8078
        %v8143 = vtanh.pop %v8079
        %v8144 = vtanh.pop %v8080
        %v8145 = vtanh.pop %v8081
        %v8146 = vtanh.pop %v8082
        %v8147 = vtanh.pop %v8083
        %v8148 = vtanh.pop %v8084
        %v8149 = vtanh.pop %v8085
        %v8150 = vtanh.pop %v8086
        %v8151 = vtanh.pop %v8087
        %v8152 = vtanh.pop %v8088
        %v8153 = vtanh.pop %v8089
        %v8154 = vtanh.pop %v8090
        %v8155 = vtanh.pop %v8091
        %v8156 = vtanh.pop %v8092
        %v8157 = vtanh.pop %v8093
        %v8158 = vtanh.pop %v8094
        %v8159 = vtanh.pop %v8095
        %v8160 = vtanh.pop %v8096
        %v8161 = vtanh.pop %v8097
        %v8162 = vtanh.pop %v8098
        %v8163 = vtanh.pop %v8099
        %v8164 = vtanh.pop %v8100
        %v8165 = vtanh.pop %v8101
        %v8166 = vtanh.pop %v8102
        %v8167 = vtanh.pop %v8103
        %v8168 = vtanh.pop %v8104
        %v8169 = vtanh.pop %v8105
        %v8170 = vtanh.pop %v8106
        %v8171 = vtanh.pop %v8107
        %v8172 = vtanh.pop %v8108
        %v8173 = vtanh.pop %v8109
        %v8174 = vtanh.pop %v8110
        %v8175 = vtanh.pop %v8111
        %v8176 = vtanh.pop %v8112
        %v8177 = vtanh.pop %v8113
        %v8178 = vtanh.pop %v8114
        %v8179 = vtanh.pop %v8115
        %v8180 = vtanh.pop %v8116
        %v8181 = vtanh.pop %v8117
        %v8182 = vtanh.pop %v8118
        %v8183 = vtanh.pop %v8119
        %v8184 = vtanh.pop %v8120
        %v8185 = vtanh.pop %v8121
        %v8186 = vtanh.pop %v8122
        %v8187 = vtanh.pop %v8123
        %v8188 = vtanh.pop %v8124
        %v8189 = vld [vmem:[%s9] sm:$0x1]
        %v8190 = vld [vmem:[#allocation2] sm:$0x1]
        %8192 = vset.pattern.permute.xlu0 0
        %8193 = vperm.xlu0 %8192, %v8190
        %v8194 = vpop.permute.xlu0 %8193
        %v8196 = vlaneseq
        %v8197 = vshrl.u32 %v8196, 7
        %v8198 = vsub.s32 0, %v8197
        %v8199 = vrot.slane %v8194, %v8198
        %v8201 = vsel %vm1428, %v8189, 0
        %8203 = vmatprep.subr.mxu0 %v8126
        %8204 = vmatpush1.msra.mxu0 %v8125
        %8205 = vmatprep.subr.mxu0 %v8142
        %8206 = vmatpush1.msra.mxu0 %v8141
        %8207 = vmatprep.subr.mxu0 %v8158
        %8208 = vmatpush1.msra.mxu0 %v8157
        %8209 = vmatprep.subr.mxu0 %v8174
        %8210 = vmatpush1.msra.mxu0 %v8173
        %8211 = vmatprep.subr.mxu0 0.0
        %8212 = vmatpush1.msra.mxu0 0.0
        %8213 = vmatprep.subr.mxu0 0.0
        %8214 = vmatpush1.msra.mxu0 0.0
        %8215 = vmatprep.subr.mxu0 0.0
        %8216 = vmatpush1.msra.mxu0 0.0
        %8217 = vmatprep.subr.mxu0 0.0
        %8218 = vmatpush1.msra.mxu0 0.0
        %8219 = vmatprep.subr.mxu0 0.0
        %8220 = vmatpush1.msra.mxu0 0.0
        %8221 = vmatprep.subr.mxu0 0.0
        %8222 = vmatpush1.msra.mxu0 0.0
        %8223 = vmatprep.subr.mxu0 0.0
        %8224 = vmatpush1.msra.mxu0 0.0
        %8225 = vmatprep.subr.mxu0 0.0
        %8226 = vmatpush1.msra.mxu0 0.0
        %8227 = vmatprep.subr.mxu0 0.0
        %8228 = vmatpush1.msra.mxu0 0.0
        %8229 = vmatprep.subr.mxu0 0.0
        %8230 = vmatpush1.msra.mxu0 0.0
        %8231 = vmatprep.subr.mxu0 0.0
        %8232 = vmatpush1.msra.mxu0 0.0
        %8233 = vmatprep.subr.mxu0 0.0
        %8234 = vmatpush1.msra.mxu0 0.0
        %8235 = vmatprep.subr.mxu0 0.0
        %8236 = vmatpush1.msra.mxu0 0.0
        %8237 = vmatprep.subr.mxu0 0.0
        %8238 = vmatpush1.msra.mxu0 0.0
        %8239 = vmatprep.subr.mxu0 0.0
        %8240 = vmatpush1.msra.mxu0 0.0
        %8241 = vmatprep.subr.mxu0 0.0
        %8242 = vmatpush1.msra.mxu0 0.0
        %8243 = vmatprep.subr.mxu0 0.0
        %8244 = vmatpush1.msra.mxu0 0.0
        %8245 = vmatprep.subr.mxu0 0.0
        %8246 = vmatpush1.msra.mxu0 0.0
        %8247 = vmatprep.subr.mxu0 0.0
        %8248 = vmatpush1.msra.mxu0 0.0
        %8249 = vmatprep.subr.mxu0 0.0
        %8250 = vmatpush1.msra.mxu0 0.0
        %8251 = vmatprep.subr.mxu0 0.0
        %8252 = vmatpush1.msra.mxu0 0.0
        %8253 = vmatprep.subr.mxu0 0.0
        %8254 = vmatpush1.msra.mxu0 0.0
        %8255 = vmatprep.subr.mxu0 0.0
        %8256 = vmatpush1.msra.mxu0 0.0
        %8257 = vmatprep.subr.mxu0 0.0
        %8258 = vmatpush1.msra.mxu0 0.0
        %8259 = vmatprep.subr.mxu0 0.0
        %8260 = vmatpush1.msra.mxu0 0.0
        %8261 = vmatprep.subr.mxu0 0.0
        %8262 = vmatpush1.msra.mxu0 0.0
        %8263 = vmatprep.subr.mxu0 0.0
        %8264 = vmatpush1.msra.mxu0 0.0
        %8265 = vmatprep.subr.mxu0 0.0
        %8266 = vmatpush1.msra.mxu0 0.0
        %8267 = vmatprep.mubr.f32.mxu0 0.0
        %8268 = vmatmul.mubr.f32.gmra.mrb[0].mxu0 %v8201
        %v8269 = vpop.f32.mrb[0].mxu0
        %v8270 = vadd.f32 %v8199, %v8269
        %v8271 = vpop.f32.mrb[0].mxu0
        %v8272 = vadd.f32 %v8199, %v8271
        %8273 = vdwg.mxu0
        %8274 = vmatprep.subr.mxu0 %v8128
        %8275 = vmatpush1.msra.mxu0 %v8127
        %8276 = vmatprep.subr.mxu0 %v8144
        %8277 = vmatpush1.msra.mxu0 %v8143
        %8278 = vmatprep.subr.mxu0 %v8160
        %8279 = vmatpush1.msra.mxu0 %v8159
        %8280 = vmatprep.subr.mxu0 %v8176
        %8281 = vmatpush1.msra.mxu0 %v8175
        %8282 = vmatprep.subr.mxu0 0.0
        %8283 = vmatpush1.msra.mxu0 0.0
        %8284 = vmatprep.subr.mxu0 0.0
        %8285 = vmatpush1.msra.mxu0 0.0
        %8286 = vmatprep.subr.mxu0 0.0
        %8287 = vmatpush1.msra.mxu0 0.0
        %8288 = vmatprep.subr.mxu0 0.0
        %8289 = vmatpush1.msra.mxu0 0.0
        %8290 = vmatprep.subr.mxu0 0.0
        %8291 = vmatpush1.msra.mxu0 0.0
        %8292 = vmatprep.subr.mxu0 0.0
        %8293 = vmatpush1.msra.mxu0 0.0
        %8294 = vmatprep.subr.mxu0 0.0
        %8295 = vmatpush1.msra.mxu0 0.0
        %8296 = vmatprep.subr.mxu0 0.0
        %8297 = vmatpush1.msra.mxu0 0.0
        %8298 = vmatprep.subr.mxu0 0.0
        %8299 = vmatpush1.msra.mxu0 0.0
        %8300 = vmatprep.subr.mxu0 0.0
        %8301 = vmatpush1.msra.mxu0 0.0
        %8302 = vmatprep.subr.mxu0 0.0
        %8303 = vmatpush1.msra.mxu0 0.0
        %8304 = vmatprep.subr.mxu0 0.0
        %8305 = vmatpush1.msra.mxu0 0.0
        %8306 = vmatprep.subr.mxu0 0.0
        %8307 = vmatpush1.msra.mxu0 0.0
        %8308 = vmatprep.subr.mxu0 0.0
        %8309 = vmatpush1.msra.mxu0 0.0
        %8310 = vmatprep.subr.mxu0 0.0
        %8311 = vmatpush1.msra.mxu0 0.0
        %8312 = vmatprep.subr.mxu0 0.0
        %8313 = vmatpush1.msra.mxu0 0.0
        %8314 = vmatprep.subr.mxu0 0.0
        %8315 = vmatpush1.msra.mxu0 0.0
        %8316 = vmatprep.subr.mxu0 0.0
        %8317 = vmatpush1.msra.mxu0 0.0
        %8318 = vmatprep.subr.mxu0 0.0
        %8319 = vmatpush1.msra.mxu0 0.0
        %8320 = vmatprep.subr.mxu0 0.0
        %8321 = vmatpush1.msra.mxu0 0.0
        %8322 = vmatprep.subr.mxu0 0.0
        %8323 = vmatpush1.msra.mxu0 0.0
        %8324 = vmatprep.subr.mxu0 0.0
        %8325 = vmatpush1.msra.mxu0 0.0
        %8326 = vmatprep.subr.mxu0 0.0
        %8327 = vmatpush1.msra.mxu0 0.0
        %8328 = vmatprep.subr.mxu0 0.0
        %8329 = vmatpush1.msra.mxu0 0.0
        %8330 = vmatprep.subr.mxu0 0.0
        %8331 = vmatpush1.msra.mxu0 0.0
        %8332 = vmatprep.subr.mxu0 0.0
        %8333 = vmatpush1.msra.mxu0 0.0
        %8334 = vmatprep.subr.mxu0 0.0
        %8335 = vmatpush1.msra.mxu0 0.0
        %8336 = vmatprep.subr.mxu0 0.0
        %8337 = vmatpush1.msra.mxu0 0.0
        %8338 = vmatprep.mubr.f32.mxu0 0.0
        %8339 = vmatmul.mubr.f32.gmra.mrb[0].mxu0 %v8201
        %v8340 = vpop.f32.mrb[0].mxu0
        %v8341 = vadd.f32 %v8199, %v8340
        %v8342 = vpop.f32.mrb[0].mxu0
        %v8343 = vadd.f32 %v8199, %v8342
        %8344 = vdwg.mxu0
        %8345 = vmatprep.subr.mxu0 %v8130
        %8346 = vmatpush1.msra.mxu0 %v8129
        %8347 = vmatprep.subr.mxu0 %v8146
        %8348 = vmatpush1.msra.mxu0 %v8145
        %8349 = vmatprep.subr.mxu0 %v8162
        %8350 = vmatpush1.msra.mxu0 %v8161
        %8351 = vmatprep.subr.mxu0 %v8178
        %8352 = vmatpush1.msra.mxu0 %v8177
        %8353 = vmatprep.subr.mxu0 0.0
        %8354 = vmatpush1.msra.mxu0 0.0
        %8355 = vmatprep.subr.mxu0 0.0
        %8356 = vmatpush1.msra.mxu0 0.0
        %8357 = vmatprep.subr.mxu0 0.0
        %8358 = vmatpush1.msra.mxu0 0.0
        %8359 = vmatprep.subr.mxu0 0.0
        %8360 = vmatpush1.msra.mxu0 0.0
        %8361 = vmatprep.subr.mxu0 0.0
        %8362 = vmatpush1.msra.mxu0 0.0
        %8363 = vmatprep.subr.mxu0 0.0
        %8364 = vmatpush1.msra.mxu0 0.0
        %8365 = vmatprep.subr.mxu0 0.0
        %8366 = vmatpush1.msra.mxu0 0.0
        %8367 = vmatprep.subr.mxu0 0.0
        %8368 = vmatpush1.msra.mxu0 0.0
        %8369 = vmatprep.subr.mxu0 0.0
        %8370 = vmatpush1.msra.mxu0 0.0
        %8371 = vmatprep.subr.mxu0 0.0
        %8372 = vmatpush1.msra.mxu0 0.0
        %8373 = vmatprep.subr.mxu0 0.0
        %8374 = vmatpush1.msra.mxu0 0.0
        %8375 = vmatprep.subr.mxu0 0.0
        %8376 = vmatpush1.msra.mxu0 0.0
        %8377 = vmatprep.subr.mxu0 0.0
        %8378 = vmatpush1.msra.mxu0 0.0
        %8379 = vmatprep.subr.mxu0 0.0
        %8380 = vmatpush1.msra.mxu0 0.0
        %8381 = vmatprep.subr.mxu0 0.0
        %8382 = vmatpush1.msra.mxu0 0.0
        %8383 = vmatprep.subr.mxu0 0.0
        %8384 = vmatpush1.msra.mxu0 0.0
        %8385 = vmatprep.subr.mxu0 0.0
        %8386 = vmatpush1.msra.mxu0 0.0
        %8387 = vmatprep.subr.mxu0 0.0
        %8388 = vmatpush1.msra.mxu0 0.0
        %8389 = vmatprep.subr.mxu0 0.0
        %8390 = vmatpush1.msra.mxu0 0.0
        %8391 = vmatprep.subr.mxu0 0.0
        %8392 = vmatpush1.msra.mxu0 0.0
        %8393 = vmatprep.subr.mxu0 0.0
        %8394 = vmatpush1.msra.mxu0 0.0
        %8395 = vmatprep.subr.mxu0 0.0
        %8396 = vmatpush1.msra.mxu0 0.0
        %8397 = vmatprep.subr.mxu0 0.0
        %8398 = vmatpush1.msra.mxu0 0.0
        %8399 = vmatprep.subr.mxu0 0.0
        %8400 = vmatpush1.msra.mxu0 0.0
        %8401 = vmatprep.subr.mxu0 0.0
        %8402 = vmatpush1.msra.mxu0 0.0
        %8403 = vmatprep.subr.mxu0 0.0
        %8404 = vmatpush1.msra.mxu0 0.0
        %8405 = vmatprep.subr.mxu0 0.0
        %8406 = vmatpush1.msra.mxu0 0.0
        %8407 = vmatprep.subr.mxu0 0.0
        %8408 = vmatpush1.msra.mxu0 0.0
        %8409 = vmatprep.mubr.f32.mxu0 0.0
        %8410 = vmatmul.mubr.f32.gmra.mrb[0].mxu0 %v8201
        %v8411 = vpop.f32.mrb[0].mxu0
        %v8412 = vadd.f32 %v8199, %v8411
        %v8413 = vpop.f32.mrb[0].mxu0
        %v8414 = vadd.f32 %v8199, %v8413
        %8415 = vdwg.mxu0
        %8416 = vmatprep.subr.mxu0 %v8132
        %8417 = vmatpush1.msra.mxu0 %v8131
        %8418 = vmatprep.subr.mxu0 %v8148
        %8419 = vmatpush1.msra.mxu0 %v8147
        %8420 = vmatprep.subr.mxu0 %v8164
        %8421 = vmatpush1.msra.mxu0 %v8163
        %8422 = vmatprep.subr.mxu0 %v8180
        %8423 = vmatpush1.msra.mxu0 %v8179
        %8424 = vmatprep.subr.mxu0 0.0
        %8425 = vmatpush1.msra.mxu0 0.0
        %8426 = vmatprep.subr.mxu0 0.0
        %8427 = vmatpush1.msra.mxu0 0.0
        %8428 = vmatprep.subr.mxu0 0.0
        %8429 = vmatpush1.msra.mxu0 0.0
        %8430 = vmatprep.subr.mxu0 0.0
        %8431 = vmatpush1.msra.mxu0 0.0
        %8432 = vmatprep.subr.mxu0 0.0
        %8433 = vmatpush1.msra.mxu0 0.0
        %8434 = vmatprep.subr.mxu0 0.0
        %8435 = vmatpush1.msra.mxu0 0.0
        %8436 = vmatprep.subr.mxu0 0.0
        %8437 = vmatpush1.msra.mxu0 0.0
        %8438 = vmatprep.subr.mxu0 0.0
        %8439 = vmatpush1.msra.mxu0 0.0
        %8440 = vmatprep.subr.mxu0 0.0
        %8441 = vmatpush1.msra.mxu0 0.0
        %8442 = vmatprep.subr.mxu0 0.0
        %8443 = vmatpush1.msra.mxu0 0.0
        %8444 = vmatprep.subr.mxu0 0.0
        %8445 = vmatpush1.msra.mxu0 0.0
        %8446 = vmatprep.subr.mxu0 0.0
        %8447 = vmatpush1.msra.mxu0 0.0
        %8448 = vmatprep.subr.mxu0 0.0
        %8449 = vmatpush1.msra.mxu0 0.0
        %8450 = vmatprep.subr.mxu0 0.0
        %8451 = vmatpush1.msra.mxu0 0.0
        %8452 = vmatprep.subr.mxu0 0.0
        %8453 = vmatpush1.msra.mxu0 0.0
        %8454 = vmatprep.subr.mxu0 0.0
        %8455 = vmatpush1.msra.mxu0 0.0
        %8456 = vmatprep.subr.mxu0 0.0
        %8457 = vmatpush1.msra.mxu0 0.0
        %8458 = vmatprep.subr.mxu0 0.0
        %8459 = vmatpush1.msra.mxu0 0.0
        %8460 = vmatprep.subr.mxu0 0.0
        %8461 = vmatpush1.msra.mxu0 0.0
        %8462 = vmatprep.subr.mxu0 0.0
        %8463 = vmatpush1.msra.mxu0 0.0
        %8464 = vmatprep.subr.mxu0 0.0
        %8465 = vmatpush1.msra.mxu0 0.0
        %8466 = vmatprep.subr.mxu0 0.0
        %8467 = vmatpush1.msra.mxu0 0.0
        %8468 = vmatprep.subr.mxu0 0.0
        %8469 = vmatpush1.msra.mxu0 0.0
        %8470 = vmatprep.subr.mxu0 0.0
        %8471 = vmatpush1.msra.mxu0 0.0
        %8472 = vmatprep.subr.mxu0 0.0
        %8473 = vmatpush1.msra.mxu0 0.0
        %8474 = vmatprep.subr.mxu0 0.0
        %8475 = vmatpush1.msra.mxu0 0.0
        %8476 = vmatprep.subr.mxu0 0.0
        %8477 = vmatpush1.msra.mxu0 0.0
        %8478 = vmatprep.subr.mxu0 0.0
        %8479 = vmatpush1.msra.mxu0 0.0
        %8480 = vmatprep.mubr.f32.mxu0 0.0
        %8481 = vmatmul.mubr.f32.gmra.mrb[0].mxu0 %v8201
        %v8482 = vpop.f32.mrb[0].mxu0
        %v8483 = vadd.f32 %v8199, %v8482
        %v8484 = vpop.f32.mrb[0].mxu0
        %v8485 = vadd.f32 %v8199, %v8484
        %8486 = vdwg.mxu0
        %8487 = vmatprep.subr.mxu0 %v8134
        %8488 = vmatpush1.msra.mxu0 %v8133
        %8489 = vmatprep.subr.mxu0 %v8150
        %8490 = vmatpush1.msra.mxu0 %v8149
        %8491 = vmatprep.subr.mxu0 %v8166
        %8492 = vmatpush1.msra.mxu0 %v8165
        %8493 = vmatprep.subr.mxu0 %v8182
        %8494 = vmatpush1.msra.mxu0 %v8181
        %8495 = vmatprep.subr.mxu0 0.0
        %8496 = vmatpush1.msra.mxu0 0.0
        %8497 = vmatprep.subr.mxu0 0.0
        %8498 = vmatpush1.msra.mxu0 0.0
        %8499 = vmatprep.subr.mxu0 0.0
        %8500 = vmatpush1.msra.mxu0 0.0
        %8501 = vmatprep.subr.mxu0 0.0
        %8502 = vmatpush1.msra.mxu0 0.0
        %8503 = vmatprep.subr.mxu0 0.0
        %8504 = vmatpush1.msra.mxu0 0.0
        %8505 = vmatprep.subr.mxu0 0.0
        %8506 = vmatpush1.msra.mxu0 0.0
        %8507 = vmatprep.subr.mxu0 0.0
        %8508 = vmatpush1.msra.mxu0 0.0
        %8509 = vmatprep.subr.mxu0 0.0
        %8510 = vmatpush1.msra.mxu0 0.0
        %8511 = vmatprep.subr.mxu0 0.0
        %8512 = vmatpush1.msra.mxu0 0.0
        %8513 = vmatprep.subr.mxu0 0.0
        %8514 = vmatpush1.msra.mxu0 0.0
        %8515 = vmatprep.subr.mxu0 0.0
        %8516 = vmatpush1.msra.mxu0 0.0
        %8517 = vmatprep.subr.mxu0 0.0
        %8518 = vmatpush1.msra.mxu0 0.0
        %8519 = vmatprep.subr.mxu0 0.0
        %8520 = vmatpush1.msra.mxu0 0.0
        %8521 = vmatprep.subr.mxu0 0.0
        %8522 = vmatpush1.msra.mxu0 0.0
        %8523 = vmatprep.subr.mxu0 0.0
        %8524 = vmatpush1.msra.mxu0 0.0
        %8525 = vmatprep.subr.mxu0 0.0
        %8526 = vmatpush1.msra.mxu0 0.0
        %8527 = vmatprep.subr.mxu0 0.0
        %8528 = vmatpush1.msra.mxu0 0.0
        %8529 = vmatprep.subr.mxu0 0.0
        %8530 = vmatpush1.msra.mxu0 0.0
        %8531 = vmatprep.subr.mxu0 0.0
        %8532 = vmatpush1.msra.mxu0 0.0
        %8533 = vmatprep.subr.mxu0 0.0
        %8534 = vmatpush1.msra.mxu0 0.0
        %8535 = vmatprep.subr.mxu0 0.0
        %8536 = vmatpush1.msra.mxu0 0.0
        %8537 = vmatprep.subr.mxu0 0.0
        %8538 = vmatpush1.msra.mxu0 0.0
        %8539 = vmatprep.subr.mxu0 0.0
        %8540 = vmatpush1.msra.mxu0 0.0
        %8541 = vmatprep.subr.mxu0 0.0
        %8542 = vmatpush1.msra.mxu0 0.0
        %8543 = vmatprep.subr.mxu0 0.0
        %8544 = vmatpush1.msra.mxu0 0.0
        %8545 = vmatprep.subr.mxu0 0.0
        %8546 = vmatpush1.msra.mxu0 0.0
        %8547 = vmatprep.subr.mxu0 0.0
        %8548 = vmatpush1.msra.mxu0 0.0
        %8549 = vmatprep.subr.mxu0 0.0
        %8550 = vmatpush1.msra.mxu0 0.0
        %8551 = vmatprep.mubr.f32.mxu0 0.0
        %8552 = vmatmul.mubr.f32.gmra.mrb[0].mxu0 %v8201
        %v8553 = vpop.f32.mrb[0].mxu0
        %v8554 = vadd.f32 %v8199, %v8553
        %v8555 = vpop.f32.mrb[0].mxu0
        %v8556 = vadd.f32 %v8199, %v8555
        %8557 = vdwg.mxu0
        %8558 = vmatprep.subr.mxu0 %v8136
        %8559 = vmatpush1.msra.mxu0 %v8135
        %8560 = vmatprep.subr.mxu0 %v8152
        %8561 = vmatpush1.msra.mxu0 %v8151
        %8562 = vmatprep.subr.mxu0 %v8168
        %8563 = vmatpush1.msra.mxu0 %v8167
        %8564 = vmatprep.subr.mxu0 %v8184
        %8565 = vmatpush1.msra.mxu0 %v8183
        %8566 = vmatprep.subr.mxu0 0.0
        %8567 = vmatpush1.msra.mxu0 0.0
        %8568 = vmatprep.subr.mxu0 0.0
        %8569 = vmatpush1.msra.mxu0 0.0
        %8570 = vmatprep.subr.mxu0 0.0
        %8571 = vmatpush1.msra.mxu0 0.0
        %8572 = vmatprep.subr.mxu0 0.0
        %8573 = vmatpush1.msra.mxu0 0.0
        %8574 = vmatprep.subr.mxu0 0.0
        %8575 = vmatpush1.msra.mxu0 0.0
        %8576 = vmatprep.subr.mxu0 0.0
        %8577 = vmatpush1.msra.mxu0 0.0
        %8578 = vmatprep.subr.mxu0 0.0
        %8579 = vmatpush1.msra.mxu0 0.0
        %8580 = vmatprep.subr.mxu0 0.0
        %8581 = vmatpush1.msra.mxu0 0.0
        %8582 = vmatprep.subr.mxu0 0.0
        %8583 = vmatpush1.msra.mxu0 0.0
        %8584 = vmatprep.subr.mxu0 0.0
        %8585 = vmatpush1.msra.mxu0 0.0
        %8586 = vmatprep.subr.mxu0 0.0
        %8587 = vmatpush1.msra.mxu0 0.0
        %8588 = vmatprep.subr.mxu0 0.0
        %8589 = vmatpush1.msra.mxu0 0.0
        %8590 = vmatprep.subr.mxu0 0.0
        %8591 = vmatpush1.msra.mxu0 0.0
        %8592 = vmatprep.subr.mxu0 0.0
        %8593 = vmatpush1.msra.mxu0 0.0
        %8594 = vmatprep.subr.mxu0 0.0
        %8595 = vmatpush1.msra.mxu0 0.0
        %8596 = vmatprep.subr.mxu0 0.0
        %8597 = vmatpush1.msra.mxu0 0.0
        %8598 = vmatprep.subr.mxu0 0.0
        %8599 = vmatpush1.msra.mxu0 0.0
        %8600 = vmatprep.subr.mxu0 0.0
        %8601 = vmatpush1.msra.mxu0 0.0
        %8602 = vmatprep.subr.mxu0 0.0
        %8603 = vmatpush1.msra.mxu0 0.0
        %8604 = vmatprep.subr.mxu0 0.0
        %8605 = vmatpush1.msra.mxu0 0.0
        %8606 = vmatprep.subr.mxu0 0.0
        %8607 = vmatpush1.msra.mxu0 0.0
        %8608 = vmatprep.subr.mxu0 0.0
        %8609 = vmatpush1.msra.mxu0 0.0
        %8610 = vmatprep.subr.mxu0 0.0
        %8611 = vmatpush1.msra.mxu0 0.0
        %8612 = vmatprep.subr.mxu0 0.0
        %8613 = vmatpush1.msra.mxu0 0.0
        %8614 = vmatprep.subr.mxu0 0.0
        %8615 = vmatpush1.msra.mxu0 0.0
        %8616 = vmatprep.subr.mxu0 0.0
        %8617 = vmatpush1.msra.mxu0 0.0
        %8618 = vmatprep.subr.mxu0 0.0
        %8619 = vmatpush1.msra.mxu0 0.0
        %8620 = vmatprep.subr.mxu0 0.0
        %8621 = vmatpush1.msra.mxu0 0.0
        %8622 = vmatprep.mubr.f32.mxu0 0.0
        %8623 = vmatmul.mubr.f32.gmra.mrb[0].mxu0 %v8201
        %v8624 = vpop.f32.mrb[0].mxu0
        %v8625 = vadd.f32 %v8199, %v8624
        %v8626 = vpop.f32.mrb[0].mxu0
        %v8627 = vadd.f32 %v8199, %v8626
        %8628 = vdwg.mxu0
        %8629 = vmatprep.subr.mxu0 %v8138
        %8630 = vmatpush1.msra.mxu0 %v8137
        %8631 = vmatprep.subr.mxu0 %v8154
        %8632 = vmatpush1.msra.mxu0 %v8153
        %8633 = vmatprep.subr.mxu0 %v8170
        %8634 = vmatpush1.msra.mxu0 %v8169
        %8635 = vmatprep.subr.mxu0 %v8186
        %8636 = vmatpush1.msra.mxu0 %v8185
        %8637 = vmatprep.subr.mxu0 0.0
        %8638 = vmatpush1.msra.mxu0 0.0
        %8639 = vmatprep.subr.mxu0 0.0
        %8640 = vmatpush1.msra.mxu0 0.0
        %8641 = vmatprep.subr.mxu0 0.0
        %8642 = vmatpush1.msra.mxu0 0.0
        %8643 = vmatprep.subr.mxu0 0.0
        %8644 = vmatpush1.msra.mxu0 0.0
        %8645 = vmatprep.subr.mxu0 0.0
        %8646 = vmatpush1.msra.mxu0 0.0
        %8647 = vmatprep.subr.mxu0 0.0
        %8648 = vmatpush1.msra.mxu0 0.0
        %8649 = vmatprep.subr.mxu0 0.0
        %8650 = vmatpush1.msra.mxu0 0.0
        %8651 = vmatprep.subr.mxu0 0.0
        %8652 = vmatpush1.msra.mxu0 0.0
        %8653 = vmatprep.subr.mxu0 0.0
        %8654 = vmatpush1.msra.mxu0 0.0
        %8655 = vmatprep.subr.mxu0 0.0
        %8656 = vmatpush1.msra.mxu0 0.0
        %8657 = vmatprep.subr.mxu0 0.0
        %8658 = vmatpush1.msra.mxu0 0.0
        %8659 = vmatprep.subr.mxu0 0.0
        %8660 = vmatpush1.msra.mxu0 0.0
        %8661 = vmatprep.subr.mxu0 0.0
        %8662 = vmatpush1.msra.mxu0 0.0
        %8663 = vmatprep.subr.mxu0 0.0
        %8664 = vmatpush1.msra.mxu0 0.0
        %8665 = vmatprep.subr.mxu0 0.0
        %8666 = vmatpush1.msra.mxu0 0.0
        %8667 = vmatprep.subr.mxu0 0.0
        %8668 = vmatpush1.msra.mxu0 0.0
        %8669 = vmatprep.subr.mxu0 0.0
        %8670 = vmatpush1.msra.mxu0 0.0
        %8671 = vmatprep.subr.mxu0 0.0
        %8672 = vmatpush1.msra.mxu0 0.0
        %8673 = vmatprep.subr.mxu0 0.0
        %8674 = vmatpush1.msra.mxu0 0.0
        %8675 = vmatprep.subr.mxu0 0.0
        %8676 = vmatpush1.msra.mxu0 0.0
        %8677 = vmatprep.subr.mxu0 0.0
        %8678 = vmatpush1.msra.mxu0 0.0
        %8679 = vmatprep.subr.mxu0 0.0
        %8680 = vmatpush1.msra.mxu0 0.0
        %8681 = vmatprep.subr.mxu0 0.0
        %8682 = vmatpush1.msra.mxu0 0.0
        %8683 = vmatprep.subr.mxu0 0.0
        %8684 = vmatpush1.msra.mxu0 0.0
        %8685 = vmatprep.subr.mxu0 0.0
        %8686 = vmatpush1.msra.mxu0 0.0
        %8687 = vmatprep.subr.mxu0 0.0
        %8688 = vmatpush1.msra.mxu0 0.0
        %8689 = vmatprep.subr.mxu0 0.0
        %8690 = vmatpush1.msra.mxu0 0.0
        %8691 = vmatprep.subr.mxu0 0.0
        %8692 = vmatpush1.msra.mxu0 0.0
        %8693 = vmatprep.mubr.f32.mxu0 0.0
        %8694 = vmatmul.mubr.f32.gmra.mrb[0].mxu0 %v8201
        %v8695 = vpop.f32.mrb[0].mxu0
        %v8696 = vadd.f32 %v8199, %v8695
        %v8697 = vpop.f32.mrb[0].mxu0
        %v8698 = vadd.f32 %v8199, %v8697
        %8699 = vdwg.mxu0
        %8700 = vmatprep.subr.mxu0 %v8140
        %8701 = vmatpush1.msra.mxu0 %v8139
        %8702 = vmatprep.subr.mxu0 %v8156
        %8703 = vmatpush1.msra.mxu0 %v8155
        %8704 = vmatprep.subr.mxu0 %v8172
        %8705 = vmatpush1.msra.mxu0 %v8171
        %8706 = vmatprep.subr.mxu0 %v8188
        %8707 = vmatpush1.msra.mxu0 %v8187
        %8708 = vmatprep.subr.mxu0 0.0
        %8709 = vmatpush1.msra.mxu0 0.0
        %8710 = vmatprep.subr.mxu0 0.0
        %8711 = vmatpush1.msra.mxu0 0.0
        %8712 = vmatprep.subr.mxu0 0.0
        %8713 = vmatpush1.msra.mxu0 0.0
        %8714 = vmatprep.subr.mxu0 0.0
        %8715 = vmatpush1.msra.mxu0 0.0
        %8716 = vmatprep.subr.mxu0 0.0
        %8717 = vmatpush1.msra.mxu0 0.0
        %8718 = vmatprep.subr.mxu0 0.0
        %8719 = vmatpush1.msra.mxu0 0.0
        %8720 = vmatprep.subr.mxu0 0.0
        %8721 = vmatpush1.msra.mxu0 0.0
        %8722 = vmatprep.subr.mxu0 0.0
        %8723 = vmatpush1.msra.mxu0 0.0
        %8724 = vmatprep.subr.mxu0 0.0
        %8725 = vmatpush1.msra.mxu0 0.0
        %8726 = vmatprep.subr.mxu0 0.0
        %8727 = vmatpush1.msra.mxu0 0.0
        %8728 = vmatprep.subr.mxu0 0.0
        %8729 = vmatpush1.msra.mxu0 0.0
        %8730 = vmatprep.subr.mxu0 0.0
        %8731 = vmatpush1.msra.mxu0 0.0
        %8732 = vmatprep.subr.mxu0 0.0
        %8733 = vmatpush1.msra.mxu0 0.0
        %8734 = vmatprep.subr.mxu0 0.0
        %8735 = vmatpush1.msra.mxu0 0.0
        %8736 = vmatprep.subr.mxu0 0.0
        %8737 = vmatpush1.msra.mxu0 0.0
        %8738 = vmatprep.subr.mxu0 0.0
        %8739 = vmatpush1.msra.mxu0 0.0
        %8740 = vmatprep.subr.mxu0 0.0
        %8741 = vmatpush1.msra.mxu0 0.0
        %8742 = vmatprep.subr.mxu0 0.0
        %8743 = vmatpush1.msra.mxu0 0.0
        %8744 = vmatprep.subr.mxu0 0.0
        %8745 = vmatpush1.msra.mxu0 0.0
        %8746 = vmatprep.subr.mxu0 0.0
        %8747 = vmatpush1.msra.mxu0 0.0
        %8748 = vmatprep.subr.mxu0 0.0
        %8749 = vmatpush1.msra.mxu0 0.0
        %8750 = vmatprep.subr.mxu0 0.0
        %8751 = vmatpush1.msra.mxu0 0.0
        %8752 = vmatprep.subr.mxu0 0.0
        %8753 = vmatpush1.msra.mxu0 0.0
        %8754 = vmatprep.subr.mxu0 0.0
        %8755 = vmatpush1.msra.mxu0 0.0
        %8756 = vmatprep.subr.mxu0 0.0
        %8757 = vmatpush1.msra.mxu0 0.0
        %8758 = vmatprep.subr.mxu0 0.0
        %8759 = vmatpush1.msra.mxu0 0.0
        %8760 = vmatprep.subr.mxu0 0.0
        %8761 = vmatpush1.msra.mxu0 0.0
        %8762 = vmatprep.subr.mxu0 0.0
        %8763 = vmatpush1.msra.mxu0 0.0
        %8764 = vmatprep.mubr.f32.mxu0 0.0
        %8765 = vmatmul.mubr.f32.gmra.mrb[0].mxu0 %v8201
        %v8766 = vpop.f32.mrb[0].mxu0
        %v8767 = vadd.f32 %v8199, %v8766
        %v8768 = vpop.f32.mrb[0].mxu0
        %v8769 = vadd.f32 %v8199, %v8768
        %8770 = vdwg.mxu0
        %v8787 = vcombine.low %v8270, %v8272
        %v8788 = vcombine.low %v8341, %v8343
        %v8789 = vcombine.low %v8412, %v8414
        %v8790 = vcombine.low %v8483, %v8485
        %v8792 = vunpack.c.l.s4 1966171168
        %v8793 = vunpack.c.0.s8 %v8792
        %v8794 = vlaneseq
        %v8795 = vshrl.u32 %v8794, 7
        %v8796 = vsub.s32 %v8793, %v8795
        %v8797 = vrot.slane %v8787, %v8796
        %v8799 = vunpack.c.l.s4 1966171168
        %v8800 = vunpack.c.0.s8 %v8799
        %v8801 = vlaneseq
        %v8802 = vshrl.u32 %v8801, 7
        %v8803 = vsub.s32 %v8800, %v8802
        %v8804 = vrot.slane %v8788, %v8803
        %v8806 = vunpack.c.l.s4 1966171168
        %v8807 = vunpack.c.0.s8 %v8806
        %v8808 = vlaneseq
        %v8809 = vshrl.u32 %v8808, 7
        %v8810 = vsub.s32 %v8807, %v8809
        %v8811 = vrot.slane %v8789, %v8810
        %v8813 = vunpack.c.l.s4 1966171168
        %v8814 = vunpack.c.0.s8 %v8813
        %v8815 = vlaneseq
        %v8816 = vshrl.u32 %v8815, 7
        %v8817 = vsub.s32 %v8814, %v8816
        %v8818 = vrot.slane %v8790, %v8817
        %v8819 = vcombine.low %v8797, %v8804
        %v8820 = vcombine.low %v8811, %v8818
        %v8822 = vunpack.c.l.s4 1966171168
        %v8823 = vunpack.c.0.s8 %v8822
        %v8824 = vlaneseq
        %v8825 = vshrl.u32 %v8824, 7
        %v8826 = vsub.s32 %v8823, %v8825
        %v8827 = vrot.slane %v8819, %v8826
        %v8829 = vunpack.c.l.s4 1966171168
        %v8830 = vunpack.c.0.s8 %v8829
        %v8831 = vlaneseq
        %v8832 = vshrl.u32 %v8831, 7
        %v8833 = vsub.s32 %v8830, %v8832
        %v8834 = vrot.slane %v8820, %v8833
        %v8835 = vcombine.low %v8827, %v8834
        %v8836 = vcombine.low %v8554, %v8556
        %v8837 = vcombine.low %v8625, %v8627
        %v8838 = vcombine.low %v8696, %v8698
        %v8839 = vcombine.low %v8767, %v8769
        %v8841 = vunpack.c.l.s4 1966171168
        %v8842 = vunpack.c.0.s8 %v8841
        %v8843 = vlaneseq
        %v8844 = vshrl.u32 %v8843, 7
        %v8845 = vsub.s32 %v8842, %v8844
        %v8846 = vrot.slane %v8836, %v8845
        %v8848 = vunpack.c.l.s4 1966171168
        %v8849 = vunpack.c.0.s8 %v8848
        %v8850 = vlaneseq
        %v8851 = vshrl.u32 %v8850, 7
        %v8852 = vsub.s32 %v8849, %v8851
        %v8853 = vrot.slane %v8837, %v8852
        %v8855 = vunpack.c.l.s4 1966171168
        %v8856 = vunpack.c.0.s8 %v8855
        %v8857 = vlaneseq
        %v8858 = vshrl.u32 %v8857, 7
        %v8859 = vsub.s32 %v8856, %v8858
        %v8860 = vrot.slane %v8838, %v8859
        %v8862 = vunpack.c.l.s4 1966171168
        %v8863 = vunpack.c.0.s8 %v8862
        %v8864 = vlaneseq
        %v8865 = vshrl.u32 %v8864, 7
        %v8866 = vsub.s32 %v8863, %v8865
        %v8867 = vrot.slane %v8839, %v8866
        %v8868 = vcombine.low %v8846, %v8853
        %v8869 = vcombine.low %v8860, %v8867
        %v8871 = vunpack.c.l.s4 1966171168
        %v8872 = vunpack.c.0.s8 %v8871
        %v8873 = vlaneseq
        %v8874 = vshrl.u32 %v8873, 7
        %v8875 = vsub.s32 %v8872, %v8874
        %v8876 = vrot.slane %v8868, %v8875
        %v8878 = vunpack.c.l.s4 1966171168
        %v8879 = vunpack.c.0.s8 %v8878
        %v8880 = vlaneseq
        %v8881 = vshrl.u32 %v8880, 7
        %v8882 = vsub.s32 %v8879, %v8881
        %v8883 = vrot.slane %v8869, %v8882
        %v8884 = vcombine.low %v8876, %v8883
        %8887 = vst [vmem:[%s382] sm:$0xff] %v8835
        %8888 = vst [vmem:[%s382 + $0x8] sm:$0xff] %v8884
        %s8889 = sand.u32 %s271, 1
        %s8890 = scalar_lea.sflag [#allocation4], %s8889
        %s8891 = sand.u32 %s271, 1
        %s8892 = smul.addr %s8891, 16
        %s8893 = scalar_lea.vmem [#allocation3], %s8892
        // Predicated region
        $region65: #{tpu_custom_call.1} parent=63 // pred_check
          %p8894 = pneg %p281
        $region66: #{tpu_custom_call.1} parent=63 // pred_check_branch
          %8896 = sbr.rel (%p8894) target = $region68
        $region67: #{tpu_custom_call.1} parent=63 // pred_region
          %s8897 = smul.u32 16, %s27
          %s8899 = ssub.s32 256, 256
          %8900 = vsyncadd %s8890, %s8899
          %s8901 = smul.addr %s8897, 16
          %s8902 = scalar_lea.hbm %s11, %s8901
          %s8904 = sshll.u32 %s8893, 4
          %s8905 = int_to_ptr.vmem [resolvable:$true] %s8904
          %8907 = dma.vmem_to_hbm [thread:$0]  %s8905, 256, %s8902, %s8890
        $region68: #{tpu_custom_call.1} parent=63 // pred_fallthru
          _
      $region64: #{tpu_custom_call.1} parent=5 // pred_fallthru
        _
      %p8908 = scmp.le.s32.totalorder 2, %s22
      // Predicated region
      $region69: #{tpu_custom_call.1} parent=5 // pred_check
        %p8909 = pneg %p8908
      $region70: #{tpu_custom_call.1} parent=5 // pred_check_branch
        %8911 = sbr.rel (%p8909) target = $region72
      $region71: #{tpu_custom_call.1} parent=5 // pred_region
        %s8912 = ssub.s32 %s22, 2
        // Predicated region
        $region73: #{tpu_custom_call.1} parent=71 // pred_check
          %p8913 = pneg %p287
        $region74: #{tpu_custom_call.1} parent=71 // pred_check_branch
          %8915 = sbr.rel (%p8913) target = $region76
        $region75: #{tpu_custom_call.1} parent=71 // pred_region
          %s8916 = sand.u32 %s272, 1
          %s8917 = scalar_lea.sflag [#allocation4], %s8916
          %s8918 = sand.u32 %s272, 1
          %s8919 = smul.addr %s8918, 16
          %s8920 = scalar_lea.vmem [#allocation3], %s8919
          %8921 = dma.done %s8917, 256
        $region76: #{tpu_custom_call.1} parent=71 // pred_fallthru
          _
      $region72: #{tpu_custom_call.1} parent=5 // pred_fallthru
        _
    $region6: #{tpu_custom_call.1} parent=1 // loop_footer
      %s26 = sadd.s32 1, %s22
    $region7: #{tpu_custom_call.1} parent=1 // loop_footer_branch
      %21 = sbr.rel target = $region3
    $region8: #{tpu_custom_call.1} parent=1 // loop_exit
      _
    %8922 = vsyncpa [#allocation4], 1
    %s8923 = scalar_lea.sflag [#allocation4], 1
    %8924 = vsyncpa %s8923, 1

</llo_original>
